<compile_context>
chip_gen: v7x
topology: tpu7x:2x2x1
jax: 0.10.0
libtpu: 0.0.40
codegen_flags: <defaults>
</compile_context>

<pallas_src>
import math

import jax
import jax.numpy as jnp
from jax.experimental import pallas as pl
from jax.experimental.pallas import tpu as pltpu

# ----------------- config (small, consistent with NERE) -----------------
ENTITY_TAG_NUM = 3
RELATION_TAG_NUM = 2
MAX_ENTITY_NUM = 10
MAX_RELATION_NUM = 10
D_MODEL = 32
N_HEADS = 4
HEAD_DIM = D_MODEL // N_HEADS
FFN_DIM = 64
VOCAB = 64
MAX_POS = 16            # stand-in for config.max_position_embeddings (entity_start/end logits)
POS_TABLE = 32          # learned positional-embedding table size
NEG_INF = -1e9

ENT_OUT = 2 * MAX_POS + ENTITY_TAG_NUM + 1          # fused entity head width  (16+16+4 = 36)
REL_OUT = 2 * MAX_ENTITY_NUM + RELATION_TAG_NUM + 1  # fused relation head width (10+10+3 = 23)

PARAM_DTYPE = jnp.bfloat16
ACT_DTYPE = jnp.bfloat16

# canonical weight orderings shared by the wrappers and the kernels
_ENC_W = ("emb_ln_g", "emb_ln_b",
          "self_wqkv", "self_bqkv", "self_wo", "self_bo",
          "ln1_g", "ln1_b",
          "ffn_w1", "ffn_b1", "ffn_w2", "ffn_b2",
          "ln2_g", "ln2_b")
_DEC_W = ("emb_ln_g", "emb_ln_b",
          "self_wqkv", "self_bqkv", "self_wo", "self_bo",
          "ln1_g", "ln1_b",
          "cross_wq", "cross_bq", "cross_wkv", "cross_bkv", "cross_wo", "cross_bo",
          "ln2_g", "ln2_b",
          "ffn_w1", "ffn_b1", "ffn_w2", "ffn_b2",
          "ln3_g", "ln3_b")
N_ENC_W = len(_ENC_W)   # 14
N_DEC_W = len(_DEC_W)   # 22


# ----------------- in-kernel building blocks (all math in f32, MXU operands bf16) -----------------
def _ln(x, g_ref, b_ref, eps=1e-5):
    mu = jnp.mean(x, axis=-1, keepdims=True)
    xc = x - mu
    var = jnp.mean(xc * xc, axis=-1, keepdims=True)
    return (xc * jax.lax.rsqrt(var + eps) * g_ref[...].astype(jnp.float32)
            + b_ref[...].astype(jnp.float32))


def _linear(x_f32, w_ref, b_ref, act=None):
    acc = jnp.dot(x_f32.astype(jnp.bfloat16), w_ref[...],
                  preferred_element_type=jnp.float32)
    acc = acc + b_ref[...].astype(jnp.float32)
    if act == "gelu":
        acc = jax.nn.gelu(acc)
    return acc


def _mha_heads(q, k, v, bias):
    """All heads of one batch element inside a single program.
    q: (Lq, D) f32, k/v: (Lk, D) f32, bias: broadcastable to (Lq, Lk) f32."""
    scale = 1.0 / math.sqrt(HEAD_DIM)
    outs = []
    for h in range(N_HEADS):
        lo, hi = h * HEAD_DIM, (h + 1) * HEAD_DIM
        qh = (q[:, lo:hi] * scale).astype(jnp.bfloat16)
        kh = k[:, lo:hi].astype(jnp.bfloat16)
        vh = v[:, lo:hi].astype(jnp.bfloat16)
        s = jax.lax.dot_general(qh, kh, (((1,), (1,)), ((), ())),
                                preferred_element_type=jnp.float32)
        s = s + bias
        s = s - jnp.max(s, axis=-1, keepdims=True)
        p = jnp.exp(s)
        p = p * pl.reciprocal(jnp.sum(p, axis=-1, keepdims=True), approx=True)
        outs.append(jnp.dot(p.astype(jnp.bfloat16), vh, preferred_element_type=jnp.float32))
    return jnp.concatenate(outs, axis=-1)


def _row_argmax(x):
    """First index of the row-max; x: (R, N) f32 -> (R, 1) int32."""
    n = x.shape[-1]
    mx = jnp.max(x, axis=-1, keepdims=True)
    col = jax.lax.broadcasted_iota(jnp.int32, x.shape, 1).astype(jnp.float32)
    idx = jnp.min(jnp.where(x >= mx, col, float(n)), axis=-1, keepdims=True)
    return idx.astype(jnp.int32)


def _decoder_core(x, mem, mem_bias, w):
    """Post-LN BART decoder layer on one batch element.
    x: (Lq, D) raw query embeds f32, mem: (Lk, D) f32, mem_bias: (1, Lk) f32,
    w: list of 22 weight refs in _DEC_W order."""
    Lq = x.shape[0]
    x = _ln(x, w[0], w[1])
    # --- causal self-attention (fused QKV) ---
    qkv = _linear(x, w[2], w[3])
    q, k, v = qkv[:, :D_MODEL], qkv[:, D_MODEL:2 * D_MODEL], qkv[:, 2 * D_MODEL:]
    row = jax.lax.broadcasted_iota(jnp.int32, (Lq, Lq), 0)
    col = jax.lax.broadcasted_iota(jnp.int32, (Lq, Lq), 1)
    causal_bias = jnp.where(row >= col, 0.0, NEG_INF).astype(jnp.float32)
    a = _mha_heads(q, k, v, causal_bias)
    a = _linear(a, w[4], w[5])
    x = _ln(x + a, w[6], w[7])
    # --- cross-attention (fused KV) ---
    q = _linear(x, w[8], w[9])
    kv = _linear(mem, w[10], w[11])
    k, v = kv[:, :D_MODEL], kv[:, D_MODEL:]
    c = _mha_heads(q, k, v, mem_bias)
    c = _linear(c, w[12], w[13])
    x = _ln(x + c, w[14], w[15])
    # --- FFN ---
    f = _linear(x, w[16], w[17], act="gelu")
    f = _linear(f, w[18], w[19])
    return _ln(x + f, w[20], w[21])


# ----------------- fused layer kernels -----------------
def _encoder_layer_kernel(*refs):
    x_ref, mask_ref = refs[0], refs[1]
    w = refs[2:2 + N_ENC_W]
    o_ref = refs[2 + N_ENC_W]

    x = x_ref[0].astype(jnp.float32)                                       # (T, D)
    key_bias = jnp.where(mask_ref[0].astype(jnp.float32) > 0.0, 0.0, NEG_INF)  # (1, T)

    x = _ln(x, w[0], w[1])
    qkv = _linear(x, w[2], w[3])
    q, k, v = qkv[:, :D_MODEL], qkv[:, D_MODEL:2 * D_MODEL], qkv[:, 2 * D_MODEL:]
    a = _mha_heads(q, k, v, key_bias)
    a = _linear(a, w[4], w[5])
    x = _ln(x + a, w[6], w[7])
    f = _linear(x, w[8], w[9], act="gelu")
    f = _linear(f, w[10], w[11])
    x = _ln(x + f, w[12], w[13])
    o_ref[0] = x.astype(o_ref.dtype)


def _entity_decoder_kernel(*refs):
    qemb_ref, enc_ref, mask_ref = refs[0], refs[1], refs[2]
    w = refs[3:3 + N_DEC_W]
    whead_ref, bhead_ref = refs[3 + N_DEC_W], refs[4 + N_DEC_W]
    logits_ref, means_ref, valid_ref = refs[5 + N_DEC_W], refs[6 + N_DEC_W], refs[7 + N_DEC_W]

    enc = enc_ref[0].astype(jnp.float32)                                   # (T, D)
    mem_bias = jnp.where(mask_ref[0].astype(jnp.float32) > 0.0, 0.0, NEG_INF)  # (1, T)
    x = qemb_ref[0].astype(jnp.float32)                                    # (E, D)

    dec = _decoder_core(x, enc, mem_bias, w)                               # (E, D)

    # fused entity heads: [start(16) | end(16) | tag(4)]
    logits = _linear(dec, whead_ref, bhead_ref)                            # (E, 36)
    logits_ref[0] = logits.astype(logits_ref.dtype)

    start_l = logits[:, :MAX_POS]
    end_l = logits[:, MAX_POS:2 * MAX_POS]
    tag_l = logits[:, 2 * MAX_POS:]
    s_idx = _row_argmax(start_l)                                           # (E, 1) int32
    e_idx = _row_argmax(end_l)
    t_idx = _row_argmax(tag_l)
    valid = jnp.logical_and(t_idx < ENTITY_TAG_NUM, s_idx < e_idx)
    valid_ref[0] = valid.astype(jnp.int32)

    # span-mean pooling of encoder hiddens over each predicted [start, end)
    T = enc.shape[0]
    pos = jax.lax.broadcasted_iota(jnp.int32, (MAX_ENTITY_NUM, T), 1)
    m = jnp.logical_and(pos >= s_idx, pos < e_idx).astype(jnp.float32)     # (E, T)
    cnt = jnp.sum(m, axis=-1, keepdims=True)
    acc = jnp.dot(m.astype(jnp.bfloat16), enc.astype(jnp.bfloat16),
                  preferred_element_type=jnp.float32)                      # (E, D)
    # TODO(synk): torch.mean over an empty slice is NaN; we return 0 for empty spans
    #             (such slots are masked out by `valid` downstream anyway).
    means_ref[0] = (acc / jnp.maximum(cnt, 1.0)).astype(means_ref.dtype)


def _relation_decoder_kernel(*refs):
    qemb_ref, mem_ref, mask_ref = refs[0], refs[1], refs[2]
    w = refs[3:3 + N_DEC_W]
    whead_ref, bhead_ref = refs[3 + N_DEC_W], refs[4 + N_DEC_W]
    logits_ref = refs[5 + N_DEC_W]

    mem = mem_ref[0].astype(jnp.float32)                                   # (E, D)
    mem_bias = jnp.where(mask_ref[0].astype(jnp.float32) > 0.0, 0.0, NEG_INF)  # (1, E)
    x = qemb_ref[0].astype(jnp.float32)                                    # (R, D)

    dec = _decoder_core(x, mem, mem_bias, w)                               # (R, D)
    # fused relation heads: [head(10) | tail(10) | tag(3)]
    logits_ref[0] = _linear(dec, whead_ref, bhead_ref).astype(logits_ref.dtype)


# ----------------- pallas_call wrappers -----------------
def _wspec(arr):
    nd = arr.ndim
    return pl.BlockSpec(arr.shape, lambda b, _nd=nd: (0,) * _nd)


def _weights(p, prefix, order):
    return [p[f"{prefix}_{name}"] for name in order]


def encoder_layer(p, emb, mask_f32):
    B, T, D = emb.shape
    weights = _weights(p, "enc", _ENC_W)
    in_specs = ([pl.BlockSpec((1, T, D), lambda b: (b, 0, 0)),
                 pl.BlockSpec((1, 1, T), lambda b: (b, 0, 0))]
                + [_wspec(w) for w in weights])
    return pl.pallas_call(
        _encoder_layer_kernel,
        out_shape=jax.ShapeDtypeStruct((B, T, D), ACT_DTYPE),
        grid=(B,),
        in_specs=in_specs,
        out_specs=pl.BlockSpec((1, T, D), lambda b: (b, 0, 0)),
        compiler_params=pltpu.CompilerParams(dimension_semantics=("parallel",)),
    )(emb, mask_f32, *weights)


def entity_decoder(p, qemb, enc, enc_mask_f32):
    """qemb: (1, E, D) batch-invariant entity queries; enc: (B, T, D); enc_mask: (B, 1, T)."""
    B, T, D = enc.shape
    E = qemb.shape[1]
    weights = _weights(p, "edec", _DEC_W) + [p["ent_out_w"], p["ent_out_b"]]
    in_specs = ([pl.BlockSpec((1, E, D), lambda b: (0, 0, 0)),
                 pl.BlockSpec((1, T, D), lambda b: (b, 0, 0)),
                 pl.BlockSpec((1, 1, T), lambda b: (b, 0, 0))]
                + [_wspec(w) for w in weights])
    out_shape = (jax.ShapeDtypeStruct((B, E, ENT_OUT), jnp.float32),
                 jax.ShapeDtypeStruct((B, E, D), ACT_DTYPE),
                 jax.ShapeDtypeStruct((B, E, 1), jnp.int32))
    out_specs = (pl.BlockSpec((1, E, ENT_OUT), lambda b: (b, 0, 0)),
                 pl.BlockSpec((1, E, D), lambda b: (b, 0, 0)),
                 pl.BlockSpec((1, E, 1), lambda b: (b, 0, 0)))
    return pl.pallas_call(
        _entity_decoder_kernel,
        out_shape=out_shape,
        grid=(B,),
        in_specs=in_specs,
        out_specs=out_specs,
        compiler_params=pltpu.CompilerParams(dimension_semantics=("parallel",)),
    )(qemb, enc, enc_mask_f32, *weights)


def relation_decoder(p, qemb, ent_hidden, ent_mask_f32):
    """qemb: (1, R, D); ent_hidden: (B, E, D); ent_mask: (B, 1, E)."""
    B, E, D = ent_hidden.shape
    R = qemb.shape[1]
    weights = _weights(p, "rdec", _DEC_W) + [p["rel_out_w"], p["rel_out_b"]]
    in_specs = ([pl.BlockSpec((1, R, D), lambda b: (0, 0, 0)),
                 pl.BlockSpec((1, E, D), lambda b: (b, 0, 0)),
                 pl.BlockSpec((1, 1, E), lambda b: (b, 0, 0))]
                + [_wspec(w) for w in weights])
    return pl.pallas_call(
        _relation_decoder_kernel,
        out_shape=jax.ShapeDtypeStruct((B, R, REL_OUT), jnp.float32),
        grid=(B,),
        in_specs=in_specs,
        out_specs=pl.BlockSpec((1, R, REL_OUT), lambda b: (b, 0, 0)),
        compiler_params=pltpu.CompilerParams(dimension_semantics=("parallel",)),
    )(qemb, ent_hidden, ent_mask_f32, *weights)


# ----------------- NERE forward -----------------
def nere_forward(p, input_ids, attention_mask):
    B, T = input_ids.shape

    # --- encoder (embedding gathers stay in XLA; one fused Pallas layer) ---
    emb = p["tok_embed"][input_ids] + p["pos_embed"][:T][None]             # (B, T, D) bf16
    enc_mask = attention_mask.astype(jnp.float32).reshape(B, 1, T)
    enc = encoder_layer(p, emb, enc_mask)                                  # (B, T, D) bf16

    # --- entity decoder + entity heads + argmax + span-mean, all in one kernel ---
    ent_qemb = (p["entity_embed"] + p["edec_pos_embed"][:MAX_ENTITY_NUM])[None]   # (1, E, D)
    ent_logits, means, valid = entity_decoder(p, ent_qemb, enc, enc_mask)

    entity_start = ent_logits[..., :MAX_POS]
    entity_end = ent_logits[..., MAX_POS:2 * MAX_POS]
    entity_tag = ent_logits[..., 2 * MAX_POS:]

    # --- compact valid entities to the front (torch.masked_select equivalent), pad with ones ---
    valid_b = valid[..., 0] > 0                                            # (B, E)
    order = jnp.argsort(jnp.logical_not(valid_b).astype(jnp.int32), axis=-1, stable=True)
    gathered = jnp.take_along_axis(means, order[..., None], axis=1)        # (B, E, D)
    n_valid = jnp.sum(valid_b.astype(jnp.int32), axis=-1)                  # (B,)
    keep = jnp.arange(MAX_ENTITY_NUM)[None, :] < n_valid[:, None]          # (B, E)
    entities_hidden = jnp.where(keep[..., None], gathered, jnp.ones_like(gathered))
    base_mask = keep.astype(jnp.float32)
    fallback = jnp.zeros((MAX_ENTITY_NUM,), jnp.float32).at[-1].set(1.0)
    entities_mask = jnp.where((n_valid > 0)[:, None], base_mask, fallback[None, :])
    entities_mask = entities_mask.reshape(B, 1, MAX_ENTITY_NUM)

    # --- relation decoder + relation heads in one kernel ---
    rel_qemb = (p["relation_embed"] + p["rdec_pos_embed"][:MAX_RELATION_NUM])[None]  # (1, R, D)
    rel_logits = relation_decoder(p, rel_qemb, entities_hidden, entities_mask)

    relation_head = rel_logits[..., :MAX_ENTITY_NUM]
    relation_tail = rel_logits[..., MAX_ENTITY_NUM:2 * MAX_ENTITY_NUM]
    relation_tag = rel_logits[..., 2 * MAX_ENTITY_NUM:]
    return entity_start, entity_end, entity_tag, relation_head, relation_tail, relation_tag


# ----------------- deterministic parameter init -----------------
def _encoder_shapes():
    D, F = D_MODEL, FFN_DIM
    return {
        "enc_emb_ln_g": (1, D), "enc_emb_ln_b": (1, D),
        "enc_self_wqkv": (D, 3 * D), "enc_self_bqkv": (1, 3 * D),
        "enc_self_wo": (D, D), "enc_self_bo": (1, D),
        "enc_ln1_g": (1, D), "enc_ln1_b": (1, D),
        "enc_ffn_w1": (D, F), "enc_ffn_b1": (1, F),
        "enc_ffn_w2": (F, D), "enc_ffn_b2": (1, D),
        "enc_ln2_g": (1, D), "enc_ln2_b": (1, D),
    }


def _decoder_shapes(prefix):
    D, F = D_MODEL, FFN_DIM
    return {
        f"{prefix}_emb_ln_g": (1, D), f"{prefix}_emb_ln_b": (1, D),
        f"{prefix}_self_wqkv": (D, 3 * D), f"{prefix}_self_bqkv": (1, 3 * D),
        f"{prefix}_self_wo": (D, D), f"{prefix}_self_bo": (1, D),
        f"{prefix}_ln1_g": (1, D), f"{prefix}_ln1_b": (1, D),
        f"{prefix}_cross_wq": (D, D), f"{prefix}_cross_bq": (1, D),
        f"{prefix}_cross_wkv": (D, 2 * D), f"{prefix}_cross_bkv": (1, 2 * D),
        f"{prefix}_cross_wo": (D, D), f"{prefix}_cross_bo": (1, D),
        f"{prefix}_ln2_g": (1, D), f"{prefix}_ln2_b": (1, D),
        f"{prefix}_ffn_w1": (D, F), f"{prefix}_ffn_b1": (1, F),
        f"{prefix}_ffn_w2": (F, D), f"{prefix}_ffn_b2": (1, D),
        f"{prefix}_ln3_g": (1, D), f"{prefix}_ln3_b": (1, D),
    }


def init_params(key):
    shapes = {
        "tok_embed": (VOCAB, D_MODEL),
        "pos_embed": (POS_TABLE, D_MODEL),
        "edec_pos_embed": (POS_TABLE, D_MODEL),
        "rdec_pos_embed": (POS_TABLE, D_MODEL),
        "entity_embed": (MAX_ENTITY_NUM, D_MODEL),
        "relation_embed": (MAX_RELATION_NUM, D_MODEL),
        # fused heads: [start|end|tag] and [head|tail|tag]
        "ent_out_w": (D_MODEL, ENT_OUT), "ent_out_b": (1, ENT_OUT),
        "rel_out_w": (D_MODEL, REL_OUT), "rel_out_b": (1, REL_OUT),
    }
    shapes.update(_encoder_shapes())
    shapes.update(_decoder_shapes("edec"))
    shapes.update(_decoder_shapes("rdec"))

    params = {}
    names = sorted(shapes)
    keys = jax.random.split(key, len(names))
    for name, k in zip(names, keys):
        shape = shapes[name]
        if "ln" in name and name.endswith("_g"):
            params[name] = jnp.ones(shape, PARAM_DTYPE)
        elif "ln" in name and name.endswith("_b"):
            params[name] = jnp.zeros(shape, PARAM_DTYPE)
        else:
            params[name] = (jax.random.normal(k, shape, jnp.float32) * 0.02).astype(PARAM_DTYPE)
    return params


if __name__ == "__main__":
    key = jax.random.PRNGKey(0)
    pkey, ikey = jax.random.split(key)
    params = init_params(pkey)

    B, T = 2, 8
    input_ids = jax.random.randint(ikey, (B, T), 0, VOCAB, dtype=jnp.int32)
    attention_mask = jnp.ones((B, T), jnp.int32)

    fwd = jax.jit(nere_forward)
    outs = fwd(params, input_ids, attention_mask)
    jax.block_until_ready(outs)
    assert outs[0].shape == (B, MAX_ENTITY_NUM, MAX_POS)
    assert outs[1].shape == (B, MAX_ENTITY_NUM, MAX_POS)
    assert outs[2].shape == (B, MAX_ENTITY_NUM, ENTITY_TAG_NUM + 1)
    assert outs[3].shape == (B, MAX_RELATION_NUM, MAX_ENTITY_NUM)
    assert outs[4].shape == (B, MAX_RELATION_NUM, MAX_ENTITY_NUM)
    assert outs[5].shape == (B, MAX_RELATION_NUM, RELATION_TAG_NUM + 1)
    for o in outs:
        assert not bool(jnp.any(jnp.isnan(o)))
    print("KERNEL_OK")
</pallas_src>

<mosaic_0001>
module attributes {stable_mosaic.version = 11 : i64} {
  func.func @_encoder_layer_kernel(%arg0: i32, %arg1: memref<1x8x32xbf16, #tpu.memory_space<vmem>>, %arg2: memref<1x1x8xf32, #tpu.memory_space<vmem>>, %arg3: memref<1x32xbf16, #tpu.memory_space<vmem>>, %arg4: memref<1x32xbf16, #tpu.memory_space<vmem>>, %arg5: memref<32x96xbf16, #tpu.memory_space<vmem>>, %arg6: memref<1x96xbf16, #tpu.memory_space<vmem>>, %arg7: memref<32x32xbf16, #tpu.memory_space<vmem>>, %arg8: memref<1x32xbf16, #tpu.memory_space<vmem>>, %arg9: memref<1x32xbf16, #tpu.memory_space<vmem>>, %arg10: memref<1x32xbf16, #tpu.memory_space<vmem>>, %arg11: memref<32x64xbf16, #tpu.memory_space<vmem>>, %arg12: memref<1x64xbf16, #tpu.memory_space<vmem>>, %arg13: memref<64x32xbf16, #tpu.memory_space<vmem>>, %arg14: memref<1x32xbf16, #tpu.memory_space<vmem>>, %arg15: memref<1x32xbf16, #tpu.memory_space<vmem>>, %arg16: memref<1x32xbf16, #tpu.memory_space<vmem>>, %arg17: memref<1x8x32xbf16, #tpu.memory_space<vmem>>) attributes {dimension_semantics = [#tpu.dimension_semantics<parallel>], iteration_bounds = array<i64: 2>, scalar_prefetch = 0 : i64, scratch_operands = 0 : i64, tpu.core_type = #tpu.core_type<tc>, window_params = [{transform_indices = @transform_0, window_bounds = array<i64: 1, 8, 32>}, {transform_indices = @transform_1, window_bounds = array<i64: 1, 1, 8>}, {pipeline_mode = #tpu.pipeline_mode<synchronous>, transform_indices = @transform_2, window_bounds = array<i64: 1, 32>}, {pipeline_mode = #tpu.pipeline_mode<synchronous>, transform_indices = @transform_3, window_bounds = array<i64: 1, 32>}, {pipeline_mode = #tpu.pipeline_mode<synchronous>, transform_indices = @transform_4, window_bounds = array<i64: 32, 96>}, {pipeline_mode = #tpu.pipeline_mode<synchronous>, transform_indices = @transform_5, window_bounds = array<i64: 1, 96>}, {pipeline_mode = #tpu.pipeline_mode<synchronous>, transform_indices = @transform_6, window_bounds = array<i64: 32, 32>}, {pipeline_mode = #tpu.pipeline_mode<synchronous>, transform_indices = @transform_7, window_bounds = array<i64: 1, 32>}, {pipeline_mode = #tpu.pipeline_mode<synchronous>, transform_indices = @transform_8, window_bounds = array<i64: 1, 32>}, {pipeline_mode = #tpu.pipeline_mode<synchronous>, transform_indices = @transform_9, window_bounds = array<i64: 1, 32>}, {pipeline_mode = #tpu.pipeline_mode<synchronous>, transform_indices = @transform_10, window_bounds = array<i64: 32, 64>}, {pipeline_mode = #tpu.pipeline_mode<synchronous>, transform_indices = @transform_11, window_bounds = array<i64: 1, 64>}, {pipeline_mode = #tpu.pipeline_mode<synchronous>, transform_indices = @transform_12, window_bounds = array<i64: 64, 32>}, {pipeline_mode = #tpu.pipeline_mode<synchronous>, transform_indices = @transform_13, window_bounds = array<i64: 1, 32>}, {pipeline_mode = #tpu.pipeline_mode<synchronous>, transform_indices = @transform_14, window_bounds = array<i64: 1, 32>}, {pipeline_mode = #tpu.pipeline_mode<synchronous>, transform_indices = @transform_15, window_bounds = array<i64: 1, 32>}, {transform_indices = @transform_16, window_bounds = array<i64: 1, 8, 32>}]} {
    %c0 = arith.constant 0 : index
    %c0_0 = arith.constant 0 : index
    %c0_1 = arith.constant 0 : index
    %0 = vector.load %arg1[%c0, %c0_0, %c0_1] : memref<1x8x32xbf16, #tpu.memory_space<vmem>>, vector<1x8x32xbf16>
    %1 = vector.shape_cast %0 : vector<1x8x32xbf16> to vector<8x32xbf16>
    %2 = arith.extf %1 : vector<8x32xbf16> to vector<8x32xf32>
    %c0_2 = arith.constant 0 : index
    %c0_3 = arith.constant 0 : index
    %c0_4 = arith.constant 0 : index
    %3 = vector.load %arg2[%c0_2, %c0_3, %c0_4] : memref<1x1x8xf32, #tpu.memory_space<vmem>>, vector<1x1x8xf32>
    %4 = vector.shape_cast %3 : vector<1x1x8xf32> to vector<1x8xf32>
    %cst = arith.constant 0.000000e+00 : f32
    %5 = vector.broadcast %cst : f32 to vector<1x8xf32>
    %6 = arith.cmpf ogt, %4, %5 : vector<1x8xf32>
    %cst_5 = arith.constant 0.000000e+00 : f32
    %cst_6 = arith.constant -1.000000e+09 : f32
    %7 = vector.broadcast %cst_5 : f32 to vector<1x8xf32>
    %8 = vector.broadcast %cst_6 : f32 to vector<1x8xf32>
    %9 = arith.select %6, %7, %8 : vector<1x8xi1>, vector<1x8xf32>
    %cst_7 = arith.constant dense<0.000000e+00> : vector<8xf32>
    %10 = vector.multi_reduction <add>, %2, %cst_7 [1] : vector<8x32xf32> to vector<8xf32>
    %11 = vector.shape_cast %10 : vector<8xf32> to vector<8x1xf32>
    %cst_8 = arith.constant 3.200000e+01 : f32
    %12 = vector.broadcast %cst_8 : f32 to vector<8x1xf32>
    %13 = arith.divf %11, %12 : vector<8x1xf32>
    %14 = vector.broadcast %13 : vector<8x1xf32> to vector<8x32xf32>
    %15 = arith.subf %2, %14 : vector<8x32xf32>
    %16 = arith.mulf %15, %15 : vector<8x32xf32>
    %cst_9 = arith.constant dense<0.000000e+00> : vector<8xf32>
    %17 = vector.multi_reduction <add>, %16, %cst_9 [1] : vector<8x32xf32> to vector<8xf32>
    %18 = vector.shape_cast %17 : vector<8xf32> to vector<8x1xf32>
    %cst_10 = arith.constant 3.200000e+01 : f32
    %19 = vector.broadcast %cst_10 : f32 to vector<8x1xf32>
    %20 = arith.divf %18, %19 : vector<8x1xf32>
    %cst_11 = arith.constant 9.99999974E-6 : f32
    %21 = vector.broadcast %cst_11 : f32 to vector<8x1xf32>
    %22 = arith.addf %20, %21 : vector<8x1xf32>
    %23 = math.rsqrt %22 : vector<8x1xf32>
    %24 = vector.broadcast %23 : vector<8x1xf32> to vector<8x32xf32>
    %25 = arith.mulf %15, %24 : vector<8x32xf32>
    %c0_12 = arith.constant 0 : index
    %c0_13 = arith.constant 0 : index
    %26 = vector.load %arg3[%c0_12, %c0_13] : memref<1x32xbf16, #tpu.memory_space<vmem>>, vector<1x32xbf16>
    %27 = arith.extf %26 : vector<1x32xbf16> to vector<1x32xf32>
    %28 = vector.broadcast %27 : vector<1x32xf32> to vector<8x32xf32>
    %29 = arith.mulf %25, %28 : vector<8x32xf32>
    %c0_14 = arith.constant 0 : index
    %c0_15 = arith.constant 0 : index
    %30 = vector.load %arg4[%c0_14, %c0_15] : memref<1x32xbf16, #tpu.memory_space<vmem>>, vector<1x32xbf16>
    %31 = arith.extf %30 : vector<1x32xbf16> to vector<1x32xf32>
    %32 = vector.broadcast %31 : vector<1x32xf32> to vector<8x32xf32>
    %33 = arith.addf %29, %32 : vector<8x32xf32>
    %34 = arith.truncf %33 : vector<8x32xf32> to vector<8x32xbf16>
    %c0_16 = arith.constant 0 : index
    %c0_17 = arith.constant 0 : index
    %35 = vector.load %arg5[%c0_16, %c0_17] : memref<32x96xbf16, #tpu.memory_space<vmem>>, vector<32x96xbf16>
    %cst_18 = arith.constant dense<0.000000e+00> : vector<8x96xf32>
    %36 = tpu.matmul %34, %35, %cst_18 {dimension_numbers = #tpu.dot_dimension_numbers<[1], [0], [0], [1], [0, 0, 1, 1], [], []>} : vector<8x32xbf16>, vector<32x96xbf16>, vector<8x96xf32> -> vector<8x96xf32>
    %c0_19 = arith.constant 0 : index
    %c0_20 = arith.constant 0 : index
    %37 = vector.load %arg6[%c0_19, %c0_20] : memref<1x96xbf16, #tpu.memory_space<vmem>>, vector<1x96xbf16>
    %38 = arith.extf %37 : vector<1x96xbf16> to vector<1x96xf32>
    %39 = vector.broadcast %38 : vector<1x96xf32> to vector<8x96xf32>
    %40 = arith.addf %36, %39 : vector<8x96xf32>
    %41 = vector.extract_strided_slice %40 {offsets = [0, 0], sizes = [8, 32], strides = [1, 1]} : vector<8x96xf32> to vector<8x32xf32>
    %42 = vector.extract_strided_slice %40 {offsets = [0, 32], sizes = [8, 32], strides = [1, 1]} : vector<8x96xf32> to vector<8x32xf32>
    %43 = vector.extract_strided_slice %40 {offsets = [0, 64], sizes = [8, 32], strides = [1, 1]} : vector<8x96xf32> to vector<8x32xf32>
    %44 = vector.extract_strided_slice %41 {offsets = [0, 0], sizes = [8, 8], strides = [1, 1]} : vector<8x32xf32> to vector<8x8xf32>
    %cst_21 = arith.constant 0.353553385 : f32
    %45 = vector.broadcast %cst_21 : f32 to vector<8x8xf32>
    %46 = arith.mulf %44, %45 : vector<8x8xf32>
    %47 = arith.truncf %46 : vector<8x8xf32> to vector<8x8xbf16>
    %48 = vector.extract_strided_slice %42 {offsets = [0, 0], sizes = [8, 8], strides = [1, 1]} : vector<8x32xf32> to vector<8x8xf32>
    %49 = arith.truncf %48 : vector<8x8xf32> to vector<8x8xbf16>
    %50 = vector.extract_strided_slice %43 {offsets = [0, 0], sizes = [8, 8], strides = [1, 1]} : vector<8x32xf32> to vector<8x8xf32>
    %51 = arith.truncf %50 : vector<8x8xf32> to vector<8x8xbf16>
    %cst_22 = arith.constant dense<0.000000e+00> : vector<8x8xf32>
    %52 = tpu.matmul %47, %49, %cst_22 {dimension_numbers = #tpu.dot_dimension_numbers<[1], [1], [0], [0], [0, 0, 1, 0], [], []>} : vector<8x8xbf16>, vector<8x8xbf16>, vector<8x8xf32> -> vector<8x8xf32>
    %53 = vector.broadcast %9 : vector<1x8xf32> to vector<8x8xf32>
    %54 = arith.addf %52, %53 : vector<8x8xf32>
    %cst_23 = arith.constant dense<0xFF800000> : vector<8xf32>
    %55 = vector.multi_reduction <maximumf>, %54, %cst_23 [1] : vector<8x8xf32> to vector<8xf32>
    %56 = vector.shape_cast %55 : vector<8xf32> to vector<8x1xf32>
    %57 = vector.broadcast %56 : vector<8x1xf32> to vector<8x8xf32>
    %58 = arith.subf %54, %57 : vector<8x8xf32>
    %59 = math.exp %58 : vector<8x8xf32>
    %cst_24 = arith.constant dense<0.000000e+00> : vector<8xf32>
    %60 = vector.multi_reduction <add>, %59, %cst_24 [1] : vector<8x8xf32> to vector<8xf32>
    %61 = vector.shape_cast %60 : vector<8xf32> to vector<8x1xf32>
    %62 = tpu.reciprocal %61 {approx = true} : vector<8x1xf32> -> vector<8x1xf32>
    %63 = vector.broadcast %62 : vector<8x1xf32> to vector<8x8xf32>
    %64 = arith.mulf %59, %63 : vector<8x8xf32>
    %65 = arith.truncf %64 : vector<8x8xf32> to vector<8x8xbf16>
    %cst_25 = arith.constant dense<0.000000e+00> : vector<8x8xf32>
    %66 = tpu.matmul %65, %51, %cst_25 {dimension_numbers = #tpu.dot_dimension_numbers<[1], [0], [0], [1], [0, 0, 1, 1], [], []>} : vector<8x8xbf16>, vector<8x8xbf16>, vector<8x8xf32> -> vector<8x8xf32>
    %67 = vector.extract_strided_slice %41 {offsets = [0, 8], sizes = [8, 8], strides = [1, 1]} : vector<8x32xf32> to vector<8x8xf32>
    %cst_26 = arith.constant 0.353553385 : f32
    %68 = vector.broadcast %cst_26 : f32 to vector<8x8xf32>
    %69 = arith.mulf %67, %68 : vector<8x8xf32>
    %70 = arith.truncf %69 : vector<8x8xf32> to vector<8x8xbf16>
    %71 = vector.extract_strided_slice %42 {offsets = [0, 8], sizes = [8, 8], strides = [1, 1]} : vector<8x32xf32> to vector<8x8xf32>
    %72 = arith.truncf %71 : vector<8x8xf32> to vector<8x8xbf16>
    %73 = vector.extract_strided_slice %43 {offsets = [0, 8], sizes = [8, 8], strides = [1, 1]} : vector<8x32xf32> to vector<8x8xf32>
    %74 = arith.truncf %73 : vector<8x8xf32> to vector<8x8xbf16>
    %cst_27 = arith.constant dense<0.000000e+00> : vector<8x8xf32>
    %75 = tpu.matmul %70, %72, %cst_27 {dimension_numbers = #tpu.dot_dimension_numbers<[1], [1], [0], [0], [0, 0, 1, 0], [], []>} : vector<8x8xbf16>, vector<8x8xbf16>, vector<8x8xf32> -> vector<8x8xf32>
    %76 = vector.broadcast %9 : vector<1x8xf32> to vector<8x8xf32>
    %77 = arith.addf %75, %76 : vector<8x8xf32>
    %cst_28 = arith.constant dense<0xFF800000> : vector<8xf32>
    %78 = vector.multi_reduction <maximumf>, %77, %cst_28 [1] : vector<8x8xf32> to vector<8xf32>
    %79 = vector.shape_cast %78 : vector<8xf32> to vector<8x1xf32>
    %80 = vector.broadcast %79 : vector<8x1xf32> to vector<8x8xf32>
    %81 = arith.subf %77, %80 : vector<8x8xf32>
    %82 = math.exp %81 : vector<8x8xf32>
    %cst_29 = arith.constant dense<0.000000e+00> : vector<8xf32>
    %83 = vector.multi_reduction <add>, %82, %cst_29 [1] : vector<8x8xf32> to vector<8xf32>
    %84 = vector.shape_cast %83 : vector<8xf32> to vector<8x1xf32>
    %85 = tpu.reciprocal %84 {approx = true} : vector<8x1xf32> -> vector<8x1xf32>
    %86 = vector.broadcast %85 : vector<8x1xf32> to vector<8x8xf32>
    %87 = arith.mulf %82, %86 : vector<8x8xf32>
    %88 = arith.truncf %87 : vector<8x8xf32> to vector<8x8xbf16>
    %cst_30 = arith.constant dense<0.000000e+00> : vector<8x8xf32>
    %89 = tpu.matmul %88, %74, %cst_30 {dimension_numbers = #tpu.dot_dimension_numbers<[1], [0], [0], [1], [0, 0, 1, 1], [], []>} : vector<8x8xbf16>, vector<8x8xbf16>, vector<8x8xf32> -> vector<8x8xf32>
    %90 = vector.extract_strided_slice %41 {offsets = [0, 16], sizes = [8, 8], strides = [1, 1]} : vector<8x32xf32> to vector<8x8xf32>
    %cst_31 = arith.constant 0.353553385 : f32
    %91 = vector.broadcast %cst_31 : f32 to vector<8x8xf32>
    %92 = arith.mulf %90, %91 : vector<8x8xf32>
    %93 = arith.truncf %92 : vector<8x8xf32> to vector<8x8xbf16>
    %94 = vector.extract_strided_slice %42 {offsets = [0, 16], sizes = [8, 8], strides = [1, 1]} : vector<8x32xf32> to vector<8x8xf32>
    %95 = arith.truncf %94 : vector<8x8xf32> to vector<8x8xbf16>
    %96 = vector.extract_strided_slice %43 {offsets = [0, 16], sizes = [8, 8], strides = [1, 1]} : vector<8x32xf32> to vector<8x8xf32>
    %97 = arith.truncf %96 : vector<8x8xf32> to vector<8x8xbf16>
    %cst_32 = arith.constant dense<0.000000e+00> : vector<8x8xf32>
    %98 = tpu.matmul %93, %95, %cst_32 {dimension_numbers = #tpu.dot_dimension_numbers<[1], [1], [0], [0], [0, 0, 1, 0], [], []>} : vector<8x8xbf16>, vector<8x8xbf16>, vector<8x8xf32> -> vector<8x8xf32>
    %99 = vector.broadcast %9 : vector<1x8xf32> to vector<8x8xf32>
    %100 = arith.addf %98, %99 : vector<8x8xf32>
    %cst_33 = arith.constant dense<0xFF800000> : vector<8xf32>
    %101 = vector.multi_reduction <maximumf>, %100, %cst_33 [1] : vector<8x8xf32> to vector<8xf32>
    %102 = vector.shape_cast %101 : vector<8xf32> to vector<8x1xf32>
    %103 = vector.broadcast %102 : vector<8x1xf32> to vector<8x8xf32>
    %104 = arith.subf %100, %103 : vector<8x8xf32>
    %105 = math.exp %104 : vector<8x8xf32>
    %cst_34 = arith.constant dense<0.000000e+00> : vector<8xf32>
    %106 = vector.multi_reduction <add>, %105, %cst_34 [1] : vector<8x8xf32> to vector<8xf32>
    %107 = vector.shape_cast %106 : vector<8xf32> to vector<8x1xf32>
    %108 = tpu.reciprocal %107 {approx = true} : vector<8x1xf32> -> vector<8x1xf32>
    %109 = vector.broadcast %108 : vector<8x1xf32> to vector<8x8xf32>
    %110 = arith.mulf %105, %109 : vector<8x8xf32>
    %111 = arith.truncf %110 : vector<8x8xf32> to vector<8x8xbf16>
    %cst_35 = arith.constant dense<0.000000e+00> : vector<8x8xf32>
    %112 = tpu.matmul %111, %97, %cst_35 {dimension_numbers = #tpu.dot_dimension_numbers<[1], [0], [0], [1], [0, 0, 1, 1], [], []>} : vector<8x8xbf16>, vector<8x8xbf16>, vector<8x8xf32> -> vector<8x8xf32>
    %113 = vector.extract_strided_slice %41 {offsets = [0, 24], sizes = [8, 8], strides = [1, 1]} : vector<8x32xf32> to vector<8x8xf32>
    %cst_36 = arith.constant 0.353553385 : f32
    %114 = vector.broadcast %cst_36 : f32 to vector<8x8xf32>
    %115 = arith.mulf %113, %114 : vector<8x8xf32>
    %116 = arith.truncf %115 : vector<8x8xf32> to vector<8x8xbf16>
    %117 = vector.extract_strided_slice %42 {offsets = [0, 24], sizes = [8, 8], strides = [1, 1]} : vector<8x32xf32> to vector<8x8xf32>
    %118 = arith.truncf %117 : vector<8x8xf32> to vector<8x8xbf16>
    %119 = vector.extract_strided_slice %43 {offsets = [0, 24], sizes = [8, 8], strides = [1, 1]} : vector<8x32xf32> to vector<8x8xf32>
    %120 = arith.truncf %119 : vector<8x8xf32> to vector<8x8xbf16>
    %cst_37 = arith.constant dense<0.000000e+00> : vector<8x8xf32>
    %121 = tpu.matmul %116, %118, %cst_37 {dimension_numbers = #tpu.dot_dimension_numbers<[1], [1], [0], [0], [0, 0, 1, 0], [], []>} : vector<8x8xbf16>, vector<8x8xbf16>, vector<8x8xf32> -> vector<8x8xf32>
    %122 = vector.broadcast %9 : vector<1x8xf32> to vector<8x8xf32>
    %123 = arith.addf %121, %122 : vector<8x8xf32>
    %cst_38 = arith.constant dense<0xFF800000> : vector<8xf32>
    %124 = vector.multi_reduction <maximumf>, %123, %cst_38 [1] : vector<8x8xf32> to vector<8xf32>
    %125 = vector.shape_cast %124 : vector<8xf32> to vector<8x1xf32>
    %126 = vector.broadcast %125 : vector<8x1xf32> to vector<8x8xf32>
    %127 = arith.subf %123, %126 : vector<8x8xf32>
    %128 = math.exp %127 : vector<8x8xf32>
    %cst_39 = arith.constant dense<0.000000e+00> : vector<8xf32>
    %129 = vector.multi_reduction <add>, %128, %cst_39 [1] : vector<8x8xf32> to vector<8xf32>
    %130 = vector.shape_cast %129 : vector<8xf32> to vector<8x1xf32>
    %131 = tpu.reciprocal %130 {approx = true} : vector<8x1xf32> -> vector<8x1xf32>
    %132 = vector.broadcast %131 : vector<8x1xf32> to vector<8x8xf32>
    %133 = arith.mulf %128, %132 : vector<8x8xf32>
    %134 = arith.truncf %133 : vector<8x8xf32> to vector<8x8xbf16>
    %cst_40 = arith.constant dense<0.000000e+00> : vector<8x8xf32>
    %135 = tpu.matmul %134, %120, %cst_40 {dimension_numbers = #tpu.dot_dimension_numbers<[1], [0], [0], [1], [0, 0, 1, 1], [], []>} : vector<8x8xbf16>, vector<8x8xbf16>, vector<8x8xf32> -> vector<8x8xf32>
    %136 = tpu.concatenate %66, %89, %112, %135 in 1 : vector<8x8xf32>, vector<8x8xf32>, vector<8x8xf32>, vector<8x8xf32> -> vector<8x32xf32>
    %137 = arith.truncf %136 : vector<8x32xf32> to vector<8x32xbf16>
    %c0_41 = arith.constant 0 : index
    %c0_42 = arith.constant 0 : index
    %138 = vector.load %arg7[%c0_41, %c0_42] : memref<32x32xbf16, #tpu.memory_space<vmem>>, vector<32x32xbf16>
    %cst_43 = arith.constant dense<0.000000e+00> : vector<8x32xf32>
    %139 = tpu.matmul %137, %138, %cst_43 {dimension_numbers = #tpu.dot_dimension_numbers<[1], [0], [0], [1], [0, 0, 1, 1], [], []>} : vector<8x32xbf16>, vector<32x32xbf16>, vector<8x32xf32> -> vector<8x32xf32>
    %c0_44 = arith.constant 0 : index
    %c0_45 = arith.constant 0 : index
    %140 = vector.load %arg8[%c0_44, %c0_45] : memref<1x32xbf16, #tpu.memory_space<vmem>>, vector<1x32xbf16>
    %141 = arith.extf %140 : vector<1x32xbf16> to vector<1x32xf32>
    %142 = vector.broadcast %141 : vector<1x32xf32> to vector<8x32xf32>
    %143 = arith.addf %139, %142 : vector<8x32xf32>
    %144 = arith.addf %33, %143 : vector<8x32xf32>
    %cst_46 = arith.constant dense<0.000000e+00> : vector<8xf32>
    %145 = vector.multi_reduction <add>, %144, %cst_46 [1] : vector<8x32xf32> to vector<8xf32>
    %146 = vector.shape_cast %145 : vector<8xf32> to vector<8x1xf32>
    %cst_47 = arith.constant 3.200000e+01 : f32
    %147 = vector.broadcast %cst_47 : f32 to vector<8x1xf32>
    %148 = arith.divf %146, %147 : vector<8x1xf32>
    %149 = vector.broadcast %148 : vector<8x1xf32> to vector<8x32xf32>
    %150 = arith.subf %144, %149 : vector<8x32xf32>
    %151 = arith.mulf %150, %150 : vector<8x32xf32>
    %cst_48 = arith.constant dense<0.000000e+00> : vector<8xf32>
    %152 = vector.multi_reduction <add>, %151, %cst_48 [1] : vector<8x32xf32> to vector<8xf32>
    %153 = vector.shape_cast %152 : vector<8xf32> to vector<8x1xf32>
    %cst_49 = arith.constant 3.200000e+01 : f32
    %154 = vector.broadcast %cst_49 : f32 to vector<8x1xf32>
    %155 = arith.divf %153, %154 : vector<8x1xf32>
    %cst_50 = arith.constant 9.99999974E-6 : f32
    %156 = vector.broadcast %cst_50 : f32 to vector<8x1xf32>
    %157 = arith.addf %155, %156 : vector<8x1xf32>
    %158 = math.rsqrt %157 : vector<8x1xf32>
    %159 = vector.broadcast %158 : vector<8x1xf32> to vector<8x32xf32>
    %160 = arith.mulf %150, %159 : vector<8x32xf32>
    %c0_51 = arith.constant 0 : index
    %c0_52 = arith.constant 0 : index
    %161 = vector.load %arg9[%c0_51, %c0_52] : memref<1x32xbf16, #tpu.memory_space<vmem>>, vector<1x32xbf16>
    %162 = arith.extf %161 : vector<1x32xbf16> to vector<1x32xf32>
    %163 = vector.broadcast %162 : vector<1x32xf32> to vector<8x32xf32>
    %164 = arith.mulf %160, %163 : vector<8x32xf32>
    %c0_53 = arith.constant 0 : index
    %c0_54 = arith.constant 0 : index
    %165 = vector.load %arg10[%c0_53, %c0_54] : memref<1x32xbf16, #tpu.memory_space<vmem>>, vector<1x32xbf16>
    %166 = arith.extf %165 : vector<1x32xbf16> to vector<1x32xf32>
    %167 = vector.broadcast %166 : vector<1x32xf32> to vector<8x32xf32>
    %168 = arith.addf %164, %167 : vector<8x32xf32>
    %169 = arith.truncf %168 : vector<8x32xf32> to vector<8x32xbf16>
    %c0_55 = arith.constant 0 : index
    %c0_56 = arith.constant 0 : index
    %170 = vector.load %arg11[%c0_55, %c0_56] : memref<32x64xbf16, #tpu.memory_space<vmem>>, vector<32x64xbf16>
    %cst_57 = arith.constant dense<0.000000e+00> : vector<8x64xf32>
    %171 = tpu.matmul %169, %170, %cst_57 {dimension_numbers = #tpu.dot_dimension_numbers<[1], [0], [0], [1], [0, 0, 1, 1], [], []>} : vector<8x32xbf16>, vector<32x64xbf16>, vector<8x64xf32> -> vector<8x64xf32>
    %c0_58 = arith.constant 0 : index
    %c0_59 = arith.constant 0 : index
    %172 = vector.load %arg12[%c0_58, %c0_59] : memref<1x64xbf16, #tpu.memory_space<vmem>>, vector<1x64xbf16>
    %173 = arith.extf %172 : vector<1x64xbf16> to vector<1x64xf32>
    %174 = vector.broadcast %173 : vector<1x64xf32> to vector<8x64xf32>
    %175 = arith.addf %171, %174 : vector<8x64xf32>
    %176 = arith.mulf %175, %175 : vector<8x64xf32>
    %177 = arith.mulf %175, %176 : vector<8x64xf32>
    %cst_60 = arith.constant 4.471500e-02 : f32
    %178 = vector.broadcast %cst_60 : f32 to vector<8x64xf32>
    %179 = arith.mulf %178, %177 : vector<8x64xf32>
    %180 = arith.addf %175, %179 : vector<8x64xf32>
    %cst_61 = arith.constant 0.797884583 : f32
    %181 = vector.broadcast %cst_61 : f32 to vector<8x64xf32>
    %182 = arith.mulf %181, %180 : vector<8x64xf32>
    %183 = math.tanh %182 : vector<8x64xf32>
    %cst_62 = arith.constant 1.000000e+00 : f32
    %184 = vector.broadcast %cst_62 : f32 to vector<8x64xf32>
    %185 = arith.addf %184, %183 : vector<8x64xf32>
    %cst_63 = arith.constant 5.000000e-01 : f32
    %186 = vector.broadcast %cst_63 : f32 to vector<8x64xf32>
    %187 = arith.mulf %186, %185 : vector<8x64xf32>
    %188 = arith.mulf %175, %187 : vector<8x64xf32>
    %189 = arith.truncf %188 : vector<8x64xf32> to vector<8x64xbf16>
    %c0_64 = arith.constant 0 : index
    %c0_65 = arith.constant 0 : index
    %190 = vector.load %arg13[%c0_64, %c0_65] : memref<64x32xbf16, #tpu.memory_space<vmem>>, vector<64x32xbf16>
    %cst_66 = arith.constant dense<0.000000e+00> : vector<8x32xf32>
    %191 = tpu.matmul %189, %190, %cst_66 {dimension_numbers = #tpu.dot_dimension_numbers<[1], [0], [0], [1], [0, 0, 1, 1], [], []>} : vector<8x64xbf16>, vector<64x32xbf16>, vector<8x32xf32> -> vector<8x32xf32>
    %c0_67 = arith.constant 0 : index
    %c0_68 = arith.constant 0 : index
    %192 = vector.load %arg14[%c0_67, %c0_68] : memref<1x32xbf16, #tpu.memory_space<vmem>>, vector<1x32xbf16>
    %193 = arith.extf %192 : vector<1x32xbf16> to vector<1x32xf32>
    %194 = vector.broadcast %193 : vector<1x32xf32> to vector<8x32xf32>
    %195 = arith.addf %191, %194 : vector<8x32xf32>
    %196 = arith.addf %168, %195 : vector<8x32xf32>
    %cst_69 = arith.constant dense<0.000000e+00> : vector<8xf32>
    %197 = vector.multi_reduction <add>, %196, %cst_69 [1] : vector<8x32xf32> to vector<8xf32>
    %198 = vector.shape_cast %197 : vector<8xf32> to vector<8x1xf32>
    %cst_70 = arith.constant 3.200000e+01 : f32
    %199 = vector.broadcast %cst_70 : f32 to vector<8x1xf32>
    %200 = arith.divf %198, %199 : vector<8x1xf32>
    %201 = vector.broadcast %200 : vector<8x1xf32> to vector<8x32xf32>
    %202 = arith.subf %196, %201 : vector<8x32xf32>
    %203 = arith.mulf %202, %202 : vector<8x32xf32>
    %cst_71 = arith.constant dense<0.000000e+00> : vector<8xf32>
    %204 = vector.multi_reduction <add>, %203, %cst_71 [1] : vector<8x32xf32> to vector<8xf32>
    %205 = vector.shape_cast %204 : vector<8xf32> to vector<8x1xf32>
    %cst_72 = arith.constant 3.200000e+01 : f32
    %206 = vector.broadcast %cst_72 : f32 to vector<8x1xf32>
    %207 = arith.divf %205, %206 : vector<8x1xf32>
    %cst_73 = arith.constant 9.99999974E-6 : f32
    %208 = vector.broadcast %cst_73 : f32 to vector<8x1xf32>
    %209 = arith.addf %207, %208 : vector<8x1xf32>
    %210 = math.rsqrt %209 : vector<8x1xf32>
    %211 = vector.broadcast %210 : vector<8x1xf32> to vector<8x32xf32>
    %212 = arith.mulf %202, %211 : vector<8x32xf32>
    %c0_74 = arith.constant 0 : index
    %c0_75 = arith.constant 0 : index
    %213 = vector.load %arg15[%c0_74, %c0_75] : memref<1x32xbf16, #tpu.memory_space<vmem>>, vector<1x32xbf16>
    %214 = arith.extf %213 : vector<1x32xbf16> to vector<1x32xf32>
    %215 = vector.broadcast %214 : vector<1x32xf32> to vector<8x32xf32>
    %216 = arith.mulf %212, %215 : vector<8x32xf32>
    %c0_76 = arith.constant 0 : index
    %c0_77 = arith.constant 0 : index
    %217 = vector.load %arg16[%c0_76, %c0_77] : memref<1x32xbf16, #tpu.memory_space<vmem>>, vector<1x32xbf16>
    %218 = arith.extf %217 : vector<1x32xbf16> to vector<1x32xf32>
    %219 = vector.broadcast %218 : vector<1x32xf32> to vector<8x32xf32>
    %220 = arith.addf %216, %219 : vector<8x32xf32>
    %221 = arith.truncf %220 : vector<8x32xf32> to vector<8x32xbf16>
    %c0_78 = arith.constant 0 : index
    %c0_79 = arith.constant 0 : index
    %c0_80 = arith.constant 0 : index
    %222 = vector.load %arg17[%c0_78, %c0_79, %c0_80] : memref<1x8x32xbf16, #tpu.memory_space<vmem>>, vector<1x8x32xbf16>
    %223 = vector.shape_cast %222 : vector<1x8x32xbf16> to vector<8x32xbf16>
    %224 = vector.shape_cast %221 : vector<8x32xbf16> to vector<1x8x32xbf16>
    tpu.vector_store %arg17[%c0_78, %c0_79, %c0_80], %224 {strides = array<i32>} : memref<1x8x32xbf16, #tpu.memory_space<vmem>>, vector<1x8x32xbf16>,
    return
  }
  func.func @transform_0(%arg0: i32) -> (i32, i32, i32) {
    %c0_i32 = arith.constant 0 : i32
    %c0_i32_0 = arith.constant 0 : i32
    %c0_i32_1 = arith.constant 0 : i32
    return %arg0, %c0_i32, %c0_i32_0 : i32, i32, i32
  }
  func.func @transform_1(%arg0: i32) -> (i32, i32, i32) {
    %c0_i32 = arith.constant 0 : i32
    %c0_i32_0 = arith.constant 0 : i32
    %c0_i32_1 = arith.constant 0 : i32
    return %arg0, %c0_i32, %c0_i32_0 : i32, i32, i32
  }
  func.func @transform_2(%arg0: i32) -> (i32, i32) {
    %c0_i32 = arith.constant 0 : i32
    %c0_i32_0 = arith.constant 0 : i32
    %c0_i32_1 = arith.constant 0 : i32
    return %c0_i32, %c0_i32_0 : i32, i32
  }
  func.func @transform_3(%arg0: i32) -> (i32, i32) {
    %c0_i32 = arith.constant 0 : i32
    %c0_i32_0 = arith.constant 0 : i32
    %c0_i32_1 = arith.constant 0 : i32
    return %c0_i32, %c0_i32_0 : i32, i32
  }
  func.func @transform_4(%arg0: i32) -> (i32, i32) {
    %c0_i32 = arith.constant 0 : i32
    %c0_i32_0 = arith.constant 0 : i32
    %c0_i32_1 = arith.constant 0 : i32
    return %c0_i32, %c0_i32_0 : i32, i32
  }
  func.func @transform_5(%arg0: i32) -> (i32, i32) {
    %c0_i32 = arith.constant 0 : i32
    %c0_i32_0 = arith.constant 0 : i32
    %c0_i32_1 = arith.constant 0 : i32
    return %c0_i32, %c0_i32_0 : i32, i32
  }
  func.func @transform_6(%arg0: i32) -> (i32, i32) {
    %c0_i32 = arith.constant 0 : i32
    %c0_i32_0 = arith.constant 0 : i32
    %c0_i32_1 = arith.constant 0 : i32
    return %c0_i32, %c0_i32_0 : i32, i32
  }
  func.func @transform_7(%arg0: i32) -> (i32, i32) {
    %c0_i32 = arith.constant 0 : i32
    %c0_i32_0 = arith.constant 0 : i32
    %c0_i32_1 = arith.constant 0 : i32
    return %c0_i32, %c0_i32_0 : i32, i32
  }
  func.func @transform_8(%arg0: i32) -> (i32, i32) {
    %c0_i32 = arith.constant 0 : i32
    %c0_i32_0 = arith.constant 0 : i32
    %c0_i32_1 = arith.constant 0 : i32
    return %c0_i32, %c0_i32_0 : i32, i32
  }
  func.func @transform_9(%arg0: i32) -> (i32, i32) {
    %c0_i32 = arith.constant 0 : i32
    %c0_i32_0 = arith.constant 0 : i32
    %c0_i32_1 = arith.constant 0 : i32
    return %c0_i32, %c0_i32_0 : i32, i32
  }
  func.func @transform_10(%arg0: i32) -> (i32, i32) {
    %c0_i32 = arith.constant 0 : i32
    %c0_i32_0 = arith.constant 0 : i32
    %c0_i32_1 = arith.constant 0 : i32
    return %c0_i32, %c0_i32_0 : i32, i32
  }
  func.func @transform_11(%arg0: i32) -> (i32, i32) {
    %c0_i32 = arith.constant 0 : i32
    %c0_i32_0 = arith.constant 0 : i32
    %c0_i32_1 = arith.constant 0 : i32
    return %c0_i32, %c0_i32_0 : i32, i32
  }
  func.func @transform_12(%arg0: i32) -> (i32, i32) {
    %c0_i32 = arith.constant 0 : i32
    %c0_i32_0 = arith.constant 0 : i32
    %c0_i32_1 = arith.constant 0 : i32
    return %c0_i32, %c0_i32_0 : i32, i32
  }
  func.func @transform_13(%arg0: i32) -> (i32, i32) {
    %c0_i32 = arith.constant 0 : i32
    %c0_i32_0 = arith.constant 0 : i32
    %c0_i32_1 = arith.constant 0 : i32
    return %c0_i32, %c0_i32_0 : i32, i32
  }
  func.func @transform_14(%arg0: i32) -> (i32, i32) {
    %c0_i32 = arith.constant 0 : i32
    %c0_i32_0 = arith.constant 0 : i32
    %c0_i32_1 = arith.constant 0 : i32
    return %c0_i32, %c0_i32_0 : i32, i32
  }
  func.func @transform_15(%arg0: i32) -> (i32, i32) {
    %c0_i32 = arith.constant 0 : i32
    %c0_i32_0 = arith.constant 0 : i32
    %c0_i32_1 = arith.constant 0 : i32
    return %c0_i32, %c0_i32_0 : i32, i32
  }
  func.func @transform_16(%arg0: i32) -> (i32, i32, i32) {
    %c0_i32 = arith.constant 0 : i32
    %c0_i32_0 = arith.constant 0 : i32
    %c0_i32_1 = arith.constant 0 : i32
    return %arg0, %c0_i32, %c0_i32_0 : i32, i32, i32
  }
}

module attributes {stable_mosaic.version = 11 : i64} {
  func.func @_entity_decoder_kernel(%arg0: i32, %arg1: memref<1x10x32xbf16, #tpu.memory_space<vmem>>, %arg2: memref<1x8x32xbf16, #tpu.memory_space<vmem>>, %arg3: memref<1x1x8xf32, #tpu.memory_space<vmem>>, %arg4: memref<1x32xbf16, #tpu.memory_space<vmem>>, %arg5: memref<1x32xbf16, #tpu.memory_space<vmem>>, %arg6: memref<32x96xbf16, #tpu.memory_space<vmem>>, %arg7: memref<1x96xbf16, #tpu.memory_space<vmem>>, %arg8: memref<32x32xbf16, #tpu.memory_space<vmem>>, %arg9: memref<1x32xbf16, #tpu.memory_space<vmem>>, %arg10: memref<1x32xbf16, #tpu.memory_space<vmem>>, %arg11: memref<1x32xbf16, #tpu.memory_space<vmem>>, %arg12: memref<32x32xbf16, #tpu.memory_space<vmem>>, %arg13: memref<1x32xbf16, #tpu.memory_space<vmem>>, %arg14: memref<32x64xbf16, #tpu.memory_space<vmem>>, %arg15: memref<1x64xbf16, #tpu.memory_space<vmem>>, %arg16: memref<32x32xbf16, #tpu.memory_space<vmem>>, %arg17: memref<1x32xbf16, #tpu.memory_space<vmem>>, %arg18: memref<1x32xbf16, #tpu.memory_space<vmem>>, %arg19: memref<1x32xbf16, #tpu.memory_space<vmem>>, %arg20: memref<32x64xbf16, #tpu.memory_space<vmem>>, %arg21: memref<1x64xbf16, #tpu.memory_space<vmem>>, %arg22: memref<64x32xbf16, #tpu.memory_space<vmem>>, %arg23: memref<1x32xbf16, #tpu.memory_space<vmem>>, %arg24: memref<1x32xbf16, #tpu.memory_space<vmem>>, %arg25: memref<1x32xbf16, #tpu.memory_space<vmem>>, %arg26: memref<32x36xbf16, #tpu.memory_space<vmem>>, %arg27: memref<1x36xbf16, #tpu.memory_space<vmem>>, %arg28: memref<1x10x36xf32, #tpu.memory_space<vmem>>, %arg29: memref<1x10x32xbf16, #tpu.memory_space<vmem>>, %arg30: memref<1x10x1xi32, #tpu.memory_space<vmem>>) attributes {dimension_semantics = [#tpu.dimension_semantics<parallel>], iteration_bounds = array<i64: 2>, scalar_prefetch = 0 : i64, scratch_operands = 0 : i64, tpu.core_type = #tpu.core_type<tc>, window_params = [{pipeline_mode = #tpu.pipeline_mode<synchronous>, transform_indices = @transform_0, window_bounds = array<i64: 1, 10, 32>}, {transform_indices = @transform_1, window_bounds = array<i64: 1, 8, 32>}, {transform_indices = @transform_2, window_bounds = array<i64: 1, 1, 8>}, {pipeline_mode = #tpu.pipeline_mode<synchronous>, transform_indices = @transform_3, window_bounds = array<i64: 1, 32>}, {pipeline_mode = #tpu.pipeline_mode<synchronous>, transform_indices = @transform_4, window_bounds = array<i64: 1, 32>}, {pipeline_mode = #tpu.pipeline_mode<synchronous>, transform_indices = @transform_5, window_bounds = array<i64: 32, 96>}, {pipeline_mode = #tpu.pipeline_mode<synchronous>, transform_indices = @transform_6, window_bounds = array<i64: 1, 96>}, {pipeline_mode = #tpu.pipeline_mode<synchronous>, transform_indices = @transform_7, window_bounds = array<i64: 32, 32>}, {pipeline_mode = #tpu.pipeline_mode<synchronous>, transform_indices = @transform_8, window_bounds = array<i64: 1, 32>}, {pipeline_mode = #tpu.pipeline_mode<synchronous>, transform_indices = @transform_9, window_bounds = array<i64: 1, 32>}, {pipeline_mode = #tpu.pipeline_mode<synchronous>, transform_indices = @transform_10, window_bounds = array<i64: 1, 32>}, {pipeline_mode = #tpu.pipeline_mode<synchronous>, transform_indices = @transform_11, window_bounds = array<i64: 32, 32>}, {pipeline_mode = #tpu.pipeline_mode<synchronous>, transform_indices = @transform_12, window_bounds = array<i64: 1, 32>}, {pipeline_mode = #tpu.pipeline_mode<synchronous>, transform_indices = @transform_13, window_bounds = array<i64: 32, 64>}, {pipeline_mode = #tpu.pipeline_mode<synchronous>, transform_indices = @transform_14, window_bounds = array<i64: 1, 64>}, {pipeline_mode = #tpu.pipeline_mode<synchronous>, transform_indices = @transform_15, window_bounds = array<i64: 32, 32>}, {pipeline_mode = #tpu.pipeline_mode<synchronous>, transform_indices = @transform_16, window_bounds = array<i64: 1, 32>}, {pipeline_mode = #tpu.pipeline_mode<synchronous>, transform_indices = @transform_17, window_bounds = array<i64: 1, 32>}, {pipeline_mode = #tpu.pipeline_mode<synchronous>, transform_indices = @transform_18, window_bounds = array<i64: 1, 32>}, {pipeline_mode = #tpu.pipeline_mode<synchronous>, transform_indices = @transform_19, window_bounds = array<i64: 32, 64>}, {pipeline_mode = #tpu.pipeline_mode<synchronous>, transform_indices = @transform_20, window_bounds = array<i64: 1, 64>}, {pipeline_mode = #tpu.pipeline_mode<synchronous>, transform_indices = @transform_21, window_bounds = array<i64: 64, 32>}, {pipeline_mode = #tpu.pipeline_mode<synchronous>, transform_indices = @transform_22, window_bounds = array<i64: 1, 32>}, {pipeline_mode = #tpu.pipeline_mode<synchronous>, transform_indices = @transform_23, window_bounds = array<i64: 1, 32>}, {pipeline_mode = #tpu.pipeline_mode<synchronous>, transform_indices = @transform_24, window_bounds = array<i64: 1, 32>}, {pipeline_mode = #tpu.pipeline_mode<synchronous>, transform_indices = @transform_25, window_bounds = array<i64: 32, 36>}, {pipeline_mode = #tpu.pipeline_mode<synchronous>, transform_indices = @transform_26, window_bounds = array<i64: 1, 36>}, {transform_indices = @transform_27, window_bounds = array<i64: 1, 10, 36>}, {transform_indices = @transform_28, window_bounds = array<i64: 1, 10, 32>}, {transform_indices = @transform_29, window_bounds = array<i64: 1, 10, 1>}]} {
    %c0 = arith.constant 0 : index
    %c0_0 = arith.constant 0 : index
    %c0_1 = arith.constant 0 : index
    %0 = vector.load %arg2[%c0, %c0_0, %c0_1] : memref<1x8x32xbf16, #tpu.memory_space<vmem>>, vector<1x8x32xbf16>
    %1 = vector.shape_cast %0 : vector<1x8x32xbf16> to vector<8x32xbf16>
    %2 = arith.extf %1 : vector<8x32xbf16> to vector<8x32xf32>
    %c0_2 = arith.constant 0 : index
    %c0_3 = arith.constant 0 : index
    %c0_4 = arith.constant 0 : index
    %3 = vector.load %arg3[%c0_2, %c0_3, %c0_4] : memref<1x1x8xf32, #tpu.memory_space<vmem>>, vector<1x1x8xf32>
    %4 = vector.shape_cast %3 : vector<1x1x8xf32> to vector<1x8xf32>
    %cst = arith.constant 0.000000e+00 : f32
    %5 = vector.broadcast %cst : f32 to vector<1x8xf32>
    %6 = arith.cmpf ogt, %4, %5 : vector<1x8xf32>
    %cst_5 = arith.constant 0.000000e+00 : f32
    %cst_6 = arith.constant -1.000000e+09 : f32
    %7 = vector.broadcast %cst_5 : f32 to vector<1x8xf32>
    %8 = vector.broadcast %cst_6 : f32 to vector<1x8xf32>
    %9 = arith.select %6, %7, %8 : vector<1x8xi1>, vector<1x8xf32>
    %c0_7 = arith.constant 0 : index
    %c0_8 = arith.constant 0 : index
    %c0_9 = arith.constant 0 : index
    %10 = vector.load %arg1[%c0_7, %c0_8, %c0_9] : memref<1x10x32xbf16, #tpu.memory_space<vmem>>, vector<1x10x32xbf16>
    %11 = vector.shape_cast %10 : vector<1x10x32xbf16> to vector<10x32xbf16>
    %12 = arith.extf %11 : vector<10x32xbf16> to vector<10x32xf32>
    %cst_10 = arith.constant dense<0.000000e+00> : vector<10xf32>
    %13 = vector.multi_reduction <add>, %12, %cst_10 [1] : vector<10x32xf32> to vector<10xf32>
    %14 = vector.shape_cast %13 : vector<10xf32> to vector<10x1xf32>
    %cst_11 = arith.constant 3.200000e+01 : f32
    %15 = vector.broadcast %cst_11 : f32 to vector<10x1xf32>
    %16 = arith.divf %14, %15 : vector<10x1xf32>
    %17 = vector.broadcast %16 : vector<10x1xf32> to vector<10x32xf32>
    %18 = arith.subf %12, %17 : vector<10x32xf32>
    %19 = arith.mulf %18, %18 : vector<10x32xf32>
    %cst_12 = arith.constant dense<0.000000e+00> : vector<10xf32>
    %20 = vector.multi_reduction <add>, %19, %cst_12 [1] : vector<10x32xf32> to vector<10xf32>
    %21 = vector.shape_cast %20 : vector<10xf32> to vector<10x1xf32>
    %cst_13 = arith.constant 3.200000e+01 : f32
    %22 = vector.broadcast %cst_13 : f32 to vector<10x1xf32>
    %23 = arith.divf %21, %22 : vector<10x1xf32>
    %cst_14 = arith.constant 9.99999974E-6 : f32
    %24 = vector.broadcast %cst_14 : f32 to vector<10x1xf32>
    %25 = arith.addf %23, %24 : vector<10x1xf32>
    %26 = math.rsqrt %25 : vector<10x1xf32>
    %27 = vector.broadcast %26 : vector<10x1xf32> to vector<10x32xf32>
    %28 = arith.mulf %18, %27 : vector<10x32xf32>
    %c0_15 = arith.constant 0 : index
    %c0_16 = arith.constant 0 : index
    %29 = vector.load %arg4[%c0_15, %c0_16] : memref<1x32xbf16, #tpu.memory_space<vmem>>, vector<1x32xbf16>
    %30 = arith.extf %29 : vector<1x32xbf16> to vector<1x32xf32>
    %31 = vector.broadcast %30 : vector<1x32xf32> to vector<10x32xf32>
    %32 = arith.mulf %28, %31 : vector<10x32xf32>
    %c0_17 = arith.constant 0 : index
    %c0_18 = arith.constant 0 : index
    %33 = vector.load %arg5[%c0_17, %c0_18] : memref<1x32xbf16, #tpu.memory_space<vmem>>, vector<1x32xbf16>
    %34 = arith.extf %33 : vector<1x32xbf16> to vector<1x32xf32>
    %35 = vector.broadcast %34 : vector<1x32xf32> to vector<10x32xf32>
    %36 = arith.addf %32, %35 : vector<10x32xf32>
    %37 = arith.truncf %36 : vector<10x32xf32> to vector<10x32xbf16>
    %c0_19 = arith.constant 0 : index
    %c0_20 = arith.constant 0 : index
    %38 = vector.load %arg6[%c0_19, %c0_20] : memref<32x96xbf16, #tpu.memory_space<vmem>>, vector<32x96xbf16>
    %cst_21 = arith.constant dense<0.000000e+00> : vector<10x96xf32>
    %39 = tpu.matmul %37, %38, %cst_21 {dimension_numbers = #tpu.dot_dimension_numbers<[1], [0], [0], [1], [0, 0, 1, 1], [], []>} : vector<10x32xbf16>, vector<32x96xbf16>, vector<10x96xf32> -> vector<10x96xf32>
    %c0_22 = arith.constant 0 : index
    %c0_23 = arith.constant 0 : index
    %40 = vector.load %arg7[%c0_22, %c0_23] : memref<1x96xbf16, #tpu.memory_space<vmem>>, vector<1x96xbf16>
    %41 = arith.extf %40 : vector<1x96xbf16> to vector<1x96xf32>
    %42 = vector.broadcast %41 : vector<1x96xf32> to vector<10x96xf32>
    %43 = arith.addf %39, %42 : vector<10x96xf32>
    %44 = vector.extract_strided_slice %43 {offsets = [0, 0], sizes = [10, 32], strides = [1, 1]} : vector<10x96xf32> to vector<10x32xf32>
    %45 = vector.extract_strided_slice %43 {offsets = [0, 32], sizes = [10, 32], strides = [1, 1]} : vector<10x96xf32> to vector<10x32xf32>
    %46 = vector.extract_strided_slice %43 {offsets = [0, 64], sizes = [10, 32], strides = [1, 1]} : vector<10x96xf32> to vector<10x32xf32>
    %47 = tpu.iota {dimensions = array<i32: 0>} : vector<10x10xi32>
    %48 = tpu.iota {dimensions = array<i32: 1>} : vector<10x10xi32>
    %49 = arith.cmpi sge, %47, %48 : vector<10x10xi32>
    %cst_24 = arith.constant 0.000000e+00 : f32
    %cst_25 = arith.constant -1.000000e+09 : f32
    %50 = vector.broadcast %cst_24 : f32 to vector<10x10xf32>
    %51 = vector.broadcast %cst_25 : f32 to vector<10x10xf32>
    %52 = arith.select %49, %50, %51 : vector<10x10xi1>, vector<10x10xf32>
    %53 = vector.extract_strided_slice %44 {offsets = [0, 0], sizes = [10, 8], strides = [1, 1]} : vector<10x32xf32> to vector<10x8xf32>
    %cst_26 = arith.constant 0.353553385 : f32
    %54 = vector.broadcast %cst_26 : f32 to vector<10x8xf32>
    %55 = arith.mulf %53, %54 : vector<10x8xf32>
    %56 = arith.truncf %55 : vector<10x8xf32> to vector<10x8xbf16>
    %57 = vector.extract_strided_slice %45 {offsets = [0, 0], sizes = [10, 8], strides = [1, 1]} : vector<10x32xf32> to vector<10x8xf32>
    %58 = arith.truncf %57 : vector<10x8xf32> to vector<10x8xbf16>
    %59 = vector.extract_strided_slice %46 {offsets = [0, 0], sizes = [10, 8], strides = [1, 1]} : vector<10x32xf32> to vector<10x8xf32>
    %60 = arith.truncf %59 : vector<10x8xf32> to vector<10x8xbf16>
    %cst_27 = arith.constant dense<0.000000e+00> : vector<10x10xf32>
    %61 = tpu.matmul %56, %58, %cst_27 {dimension_numbers = #tpu.dot_dimension_numbers<[1], [1], [0], [0], [0, 0, 1, 0], [], []>} : vector<10x8xbf16>, vector<10x8xbf16>, vector<10x10xf32> -> vector<10x10xf32>
    %62 = arith.addf %61, %52 : vector<10x10xf32>
    %cst_28 = arith.constant dense<0xFF800000> : vector<10xf32>
    %63 = vector.multi_reduction <maximumf>, %62, %cst_28 [1] : vector<10x10xf32> to vector<10xf32>
    %64 = vector.shape_cast %63 : vector<10xf32> to vector<10x1xf32>
    %65 = vector.broadcast %64 : vector<10x1xf32> to vector<10x10xf32>
    %66 = arith.subf %62, %65 : vector<10x10xf32>
    %67 = math.exp %66 : vector<10x10xf32>
    %cst_29 = arith.constant dense<0.000000e+00> : vector<10xf32>
    %68 = vector.multi_reduction <add>, %67, %cst_29 [1] : vector<10x10xf32> to vector<10xf32>
    %69 = vector.shape_cast %68 : vector<10xf32> to vector<10x1xf32>
    %70 = tpu.reciprocal %69 {approx = true} : vector<10x1xf32> -> vector<10x1xf32>
    %71 = vector.broadcast %70 : vector<10x1xf32> to vector<10x10xf32>
    %72 = arith.mulf %67, %71 : vector<10x10xf32>
    %73 = arith.truncf %72 : vector<10x10xf32> to vector<10x10xbf16>
    %cst_30 = arith.constant dense<0.000000e+00> : vector<10x8xf32>
    %74 = tpu.matmul %73, %60, %cst_30 {dimension_numbers = #tpu.dot_dimension_numbers<[1], [0], [0], [1], [0, 0, 1, 1], [], []>} : vector<10x10xbf16>, vector<10x8xbf16>, vector<10x8xf32> -> vector<10x8xf32>
    %75 = vector.extract_strided_slice %44 {offsets = [0, 8], sizes = [10, 8], strides = [1, 1]} : vector<10x32xf32> to vector<10x8xf32>
    %cst_31 = arith.constant 0.353553385 : f32
    %76 = vector.broadcast %cst_31 : f32 to vector<10x8xf32>
    %77 = arith.mulf %75, %76 : vector<10x8xf32>
    %78 = arith.truncf %77 : vector<10x8xf32> to vector<10x8xbf16>
    %79 = vector.extract_strided_slice %45 {offsets = [0, 8], sizes = [10, 8], strides = [1, 1]} : vector<10x32xf32> to vector<10x8xf32>
    %80 = arith.truncf %79 : vector<10x8xf32> to vector<10x8xbf16>
    %81 = vector.extract_strided_slice %46 {offsets = [0, 8], sizes = [10, 8], strides = [1, 1]} : vector<10x32xf32> to vector<10x8xf32>
    %82 = arith.truncf %81 : vector<10x8xf32> to vector<10x8xbf16>
    %cst_32 = arith.constant dense<0.000000e+00> : vector<10x10xf32>
    %83 = tpu.matmul %78, %80, %cst_32 {dimension_numbers = #tpu.dot_dimension_numbers<[1], [1], [0], [0], [0, 0, 1, 0], [], []>} : vector<10x8xbf16>, vector<10x8xbf16>, vector<10x10xf32> -> vector<10x10xf32>
    %84 = arith.addf %83, %52 : vector<10x10xf32>
    %cst_33 = arith.constant dense<0xFF800000> : vector<10xf32>
    %85 = vector.multi_reduction <maximumf>, %84, %cst_33 [1] : vector<10x10xf32> to vector<10xf32>
    %86 = vector.shape_cast %85 : vector<10xf32> to vector<10x1xf32>
    %87 = vector.broadcast %86 : vector<10x1xf32> to vector<10x10xf32>
    %88 = arith.subf %84, %87 : vector<10x10xf32>
    %89 = math.exp %88 : vector<10x10xf32>
    %cst_34 = arith.constant dense<0.000000e+00> : vector<10xf32>
    %90 = vector.multi_reduction <add>, %89, %cst_34 [1] : vector<10x10xf32> to vector<10xf32>
    %91 = vector.shape_cast %90 : vector<10xf32> to vector<10x1xf32>
    %92 = tpu.reciprocal %91 {approx = true} : vector<10x1xf32> -> vector<10x1xf32>
    %93 = vector.broadcast %92 : vector<10x1xf32> to vector<10x10xf32>
    %94 = arith.mulf %89, %93 : vector<10x10xf32>
    %95 = arith.truncf %94 : vector<10x10xf32> to vector<10x10xbf16>
    %cst_35 = arith.constant dense<0.000000e+00> : vector<10x8xf32>
    %96 = tpu.matmul %95, %82, %cst_35 {dimension_numbers = #tpu.dot_dimension_numbers<[1], [0], [0], [1], [0, 0, 1, 1], [], []>} : vector<10x10xbf16>, vector<10x8xbf16>, vector<10x8xf32> -> vector<10x8xf32>
    %97 = vector.extract_strided_slice %44 {offsets = [0, 16], sizes = [10, 8], strides = [1, 1]} : vector<10x32xf32> to vector<10x8xf32>
    %cst_36 = arith.constant 0.353553385 : f32
    %98 = vector.broadcast %cst_36 : f32 to vector<10x8xf32>
    %99 = arith.mulf %97, %98 : vector<10x8xf32>
    %100 = arith.truncf %99 : vector<10x8xf32> to vector<10x8xbf16>
    %101 = vector.extract_strided_slice %45 {offsets = [0, 16], sizes = [10, 8], strides = [1, 1]} : vector<10x32xf32> to vector<10x8xf32>
    %102 = arith.truncf %101 : vector<10x8xf32> to vector<10x8xbf16>
    %103 = vector.extract_strided_slice %46 {offsets = [0, 16], sizes = [10, 8], strides = [1, 1]} : vector<10x32xf32> to vector<10x8xf32>
    %104 = arith.truncf %103 : vector<10x8xf32> to vector<10x8xbf16>
    %cst_37 = arith.constant dense<0.000000e+00> : vector<10x10xf32>
    %105 = tpu.matmul %100, %102, %cst_37 {dimension_numbers = #tpu.dot_dimension_numbers<[1], [1], [0], [0], [0, 0, 1, 0], [], []>} : vector<10x8xbf16>, vector<10x8xbf16>, vector<10x10xf32> -> vector<10x10xf32>
    %106 = arith.addf %105, %52 : vector<10x10xf32>
    %cst_38 = arith.constant dense<0xFF800000> : vector<10xf32>
    %107 = vector.multi_reduction <maximumf>, %106, %cst_38 [1] : vector<10x10xf32> to vector<10xf32>
    %108 = vector.shape_cast %107 : vector<10xf32> to vector<10x1xf32>
    %109 = vector.broadcast %108 : vector<10x1xf32> to vector<10x10xf32>
    %110 = arith.subf %106, %109 : vector<10x10xf32>
    %111 = math.exp %110 : vector<10x10xf32>
    %cst_39 = arith.constant dense<0.000000e+00> : vector<10xf32>
    %112 = vector.multi_reduction <add>, %111, %cst_39 [1] : vector<10x10xf32> to vector<10xf32>
    %113 = vector.shape_cast %112 : vector<10xf32> to vector<10x1xf32>
    %114 = tpu.reciprocal %113 {approx = true} : vector<10x1xf32> -> vector<10x1xf32>
    %115 = vector.broadcast %114 : vector<10x1xf32> to vector<10x10xf32>
    %116 = arith.mulf %111, %115 : vector<10x10xf32>
    %117 = arith.truncf %116 : vector<10x10xf32> to vector<10x10xbf16>
    %cst_40 = arith.constant dense<0.000000e+00> : vector<10x8xf32>
    %118 = tpu.matmul %117, %104, %cst_40 {dimension_numbers = #tpu.dot_dimension_numbers<[1], [0], [0], [1], [0, 0, 1, 1], [], []>} : vector<10x10xbf16>, vector<10x8xbf16>, vector<10x8xf32> -> vector<10x8xf32>
    %119 = vector.extract_strided_slice %44 {offsets = [0, 24], sizes = [10, 8], strides = [1, 1]} : vector<10x32xf32> to vector<10x8xf32>
    %cst_41 = arith.constant 0.353553385 : f32
    %120 = vector.broadcast %cst_41 : f32 to vector<10x8xf32>
    %121 = arith.mulf %119, %120 : vector<10x8xf32>
    %122 = arith.truncf %121 : vector<10x8xf32> to vector<10x8xbf16>
    %123 = vector.extract_strided_slice %45 {offsets = [0, 24], sizes = [10, 8], strides = [1, 1]} : vector<10x32xf32> to vector<10x8xf32>
    %124 = arith.truncf %123 : vector<10x8xf32> to vector<10x8xbf16>
    %125 = vector.extract_strided_slice %46 {offsets = [0, 24], sizes = [10, 8], strides = [1, 1]} : vector<10x32xf32> to vector<10x8xf32>
    %126 = arith.truncf %125 : vector<10x8xf32> to vector<10x8xbf16>
    %cst_42 = arith.constant dense<0.000000e+00> : vector<10x10xf32>
    %127 = tpu.matmul %122, %124, %cst_42 {dimension_numbers = #tpu.dot_dimension_numbers<[1], [1], [0], [0], [0, 0, 1, 0], [], []>} : vector<10x8xbf16>, vector<10x8xbf16>, vector<10x10xf32> -> vector<10x10xf32>
    %128 = arith.addf %127, %52 : vector<10x10xf32>
    %cst_43 = arith.constant dense<0xFF800000> : vector<10xf32>
    %129 = vector.multi_reduction <maximumf>, %128, %cst_43 [1] : vector<10x10xf32> to vector<10xf32>
    %130 = vector.shape_cast %129 : vector<10xf32> to vector<10x1xf32>
    %131 = vector.broadcast %130 : vector<10x1xf32> to vector<10x10xf32>
    %132 = arith.subf %128, %131 : vector<10x10xf32>
    %133 = math.exp %132 : vector<10x10xf32>
    %cst_44 = arith.constant dense<0.000000e+00> : vector<10xf32>
    %134 = vector.multi_reduction <add>, %133, %cst_44 [1] : vector<10x10xf32> to vector<10xf32>
    %135 = vector.shape_cast %134 : vector<10xf32> to vector<10x1xf32>
    %136 = tpu.reciprocal %135 {approx = true} : vector<10x1xf32> -> vector<10x1xf32>
    %137 = vector.broadcast %136 : vector<10x1xf32> to vector<10x10xf32>
    %138 = arith.mulf %133, %137 : vector<10x10xf32>
    %139 = arith.truncf %138 : vector<10x10xf32> to vector<10x10xbf16>
    %cst_45 = arith.constant dense<0.000000e+00> : vector<10x8xf32>
    %140 = tpu.matmul %139, %126, %cst_45 {dimension_numbers = #tpu.dot_dimension_numbers<[1], [0], [0], [1], [0, 0, 1, 1], [], []>} : vector<10x10xbf16>, vector<10x8xbf16>, vector<10x8xf32> -> vector<10x8xf32>
    %141 = tpu.concatenate %74, %96, %118, %140 in 1 : vector<10x8xf32>, vector<10x8xf32>, vector<10x8xf32>, vector<10x8xf32> -> vector<10x32xf32>
    %142 = arith.truncf %141 : vector<10x32xf32> to vector<10x32xbf16>
    %c0_46 = arith.constant 0 : index
    %c0_47 = arith.constant 0 : index
    %143 = vector.load %arg8[%c0_46, %c0_47] : memref<32x32xbf16, #tpu.memory_space<vmem>>, vector<32x32xbf16>
    %cst_48 = arith.constant dense<0.000000e+00> : vector<10x32xf32>
    %144 = tpu.matmul %142, %143, %cst_48 {dimension_numbers = #tpu.dot_dimension_numbers<[1], [0], [0], [1], [0, 0, 1, 1], [], []>} : vector<10x32xbf16>, vector<32x32xbf16>, vector<10x32xf32> -> vector<10x32xf32>
    %c0_49 = arith.constant 0 : index
    %c0_50 = arith.constant 0 : index
    %145 = vector.load %arg9[%c0_49, %c0_50] : memref<1x32xbf16, #tpu.memory_space<vmem>>, vector<1x32xbf16>
    %146 = arith.extf %145 : vector<1x32xbf16> to vector<1x32xf32>
    %147 = vector.broadcast %146 : vector<1x32xf32> to vector<10x32xf32>
    %148 = arith.addf %144, %147 : vector<10x32xf32>
    %149 = arith.addf %36, %148 : vector<10x32xf32>
    %cst_51 = arith.constant dense<0.000000e+00> : vector<10xf32>
    %150 = vector.multi_reduction <add>, %149, %cst_51 [1] : vector<10x32xf32> to vector<10xf32>
    %151 = vector.shape_cast %150 : vector<10xf32> to vector<10x1xf32>
    %cst_52 = arith.constant 3.200000e+01 : f32
    %152 = vector.broadcast %cst_52 : f32 to vector<10x1xf32>
    %153 = arith.divf %151, %152 : vector<10x1xf32>
    %154 = vector.broadcast %153 : vector<10x1xf32> to vector<10x32xf32>
    %155 = arith.subf %149, %154 : vector<10x32xf32>
    %156 = arith.mulf %155, %155 : vector<10x32xf32>
    %cst_53 = arith.constant dense<0.000000e+00> : vector<10xf32>
    %157 = vector.multi_reduction <add>, %156, %cst_53 [1] : vector<10x32xf32> to vector<10xf32>
    %158 = vector.shape_cast %157 : vector<10xf32> to vector<10x1xf32>
    %cst_54 = arith.constant 3.200000e+01 : f32
    %159 = vector.broadcast %cst_54 : f32 to vector<10x1xf32>
    %160 = arith.divf %158, %159 : vector<10x1xf32>
    %cst_55 = arith.constant 9.99999974E-6 : f32
    %161 = vector.broadcast %cst_55 : f32 to vector<10x1xf32>
    %162 = arith.addf %160, %161 : vector<10x1xf32>
    %163 = math.rsqrt %162 : vector<10x1xf32>
    %164 = vector.broadcast %163 : vector<10x1xf32> to vector<10x32xf32>
    %165 = arith.mulf %155, %164 : vector<10x32xf32>
    %c0_56 = arith.constant 0 : index
    %c0_57 = arith.constant 0 : index
    %166 = vector.load %arg10[%c0_56, %c0_57] : memref<1x32xbf16, #tpu.memory_space<vmem>>, vector<1x32xbf16>
    %167 = arith.extf %166 : vector<1x32xbf16> to vector<1x32xf32>
    %168 = vector.broadcast %167 : vector<1x32xf32> to vector<10x32xf32>
    %169 = arith.mulf %165, %168 : vector<10x32xf32>
    %c0_58 = arith.constant 0 : index
    %c0_59 = arith.constant 0 : index
    %170 = vector.load %arg11[%c0_58, %c0_59] : memref<1x32xbf16, #tpu.memory_space<vmem>>, vector<1x32xbf16>
    %171 = arith.extf %170 : vector<1x32xbf16> to vector<1x32xf32>
    %172 = vector.broadcast %171 : vector<1x32xf32> to vector<10x32xf32>
    %173 = arith.addf %169, %172 : vector<10x32xf32>
    %174 = arith.truncf %173 : vector<10x32xf32> to vector<10x32xbf16>
    %c0_60 = arith.constant 0 : index
    %c0_61 = arith.constant 0 : index
    %175 = vector.load %arg12[%c0_60, %c0_61] : memref<32x32xbf16, #tpu.memory_space<vmem>>, vector<32x32xbf16>
    %cst_62 = arith.constant dense<0.000000e+00> : vector<10x32xf32>
    %176 = tpu.matmul %174, %175, %cst_62 {dimension_numbers = #tpu.dot_dimension_numbers<[1], [0], [0], [1], [0, 0, 1, 1], [], []>} : vector<10x32xbf16>, vector<32x32xbf16>, vector<10x32xf32> -> vector<10x32xf32>
    %c0_63 = arith.constant 0 : index
    %c0_64 = arith.constant 0 : index
    %177 = vector.load %arg13[%c0_63, %c0_64] : memref<1x32xbf16, #tpu.memory_space<vmem>>, vector<1x32xbf16>
    %178 = arith.extf %177 : vector<1x32xbf16> to vector<1x32xf32>
    %179 = vector.broadcast %178 : vector<1x32xf32> to vector<10x32xf32>
    %180 = arith.addf %176, %179 : vector<10x32xf32>
    %181 = arith.truncf %2 : vector<8x32xf32> to vector<8x32xbf16>
    %c0_65 = arith.constant 0 : index
    %c0_66 = arith.constant 0 : index
    %182 = vector.load %arg14[%c0_65, %c0_66] : memref<32x64xbf16, #tpu.memory_space<vmem>>, vector<32x64xbf16>
    %cst_67 = arith.constant dense<0.000000e+00> : vector<8x64xf32>
    %183 = tpu.matmul %181, %182, %cst_67 {dimension_numbers = #tpu.dot_dimension_numbers<[1], [0], [0], [1], [0, 0, 1, 1], [], []>} : vector<8x32xbf16>, vector<32x64xbf16>, vector<8x64xf32> -> vector<8x64xf32>
    %c0_68 = arith.constant 0 : index
    %c0_69 = arith.constant 0 : index
    %184 = vector.load %arg15[%c0_68, %c0_69] : memref<1x64xbf16, #tpu.memory_space<vmem>>, vector<1x64xbf16>
    %185 = arith.extf %184 : vector<1x64xbf16> to vector<1x64xf32>
    %186 = vector.broadcast %185 : vector<1x64xf32> to vector<8x64xf32>
    %187 = arith.addf %183, %186 : vector<8x64xf32>
    %188 = vector.extract_strided_slice %187 {offsets = [0, 0], sizes = [8, 32], strides = [1, 1]} : vector<8x64xf32> to vector<8x32xf32>
    %189 = vector.extract_strided_slice %187 {offsets = [0, 32], sizes = [8, 32], strides = [1, 1]} : vector<8x64xf32> to vector<8x32xf32>
    %190 = vector.extract_strided_slice %180 {offsets = [0, 0], sizes = [10, 8], strides = [1, 1]} : vector<10x32xf32> to vector<10x8xf32>
    %cst_70 = arith.constant 0.353553385 : f32
    %191 = vector.broadcast %cst_70 : f32 to vector<10x8xf32>
    %192 = arith.mulf %190, %191 : vector<10x8xf32>
    %193 = arith.truncf %192 : vector<10x8xf32> to vector<10x8xbf16>
    %194 = vector.extract_strided_slice %188 {offsets = [0, 0], sizes = [8, 8], strides = [1, 1]} : vector<8x32xf32> to vector<8x8xf32>
    %195 = arith.truncf %194 : vector<8x8xf32> to vector<8x8xbf16>
    %196 = vector.extract_strided_slice %189 {offsets = [0, 0], sizes = [8, 8], strides = [1, 1]} : vector<8x32xf32> to vector<8x8xf32>
    %197 = arith.truncf %196 : vector<8x8xf32> to vector<8x8xbf16>
    %cst_71 = arith.constant dense<0.000000e+00> : vector<10x8xf32>
    %198 = tpu.matmul %193, %195, %cst_71 {dimension_numbers = #tpu.dot_dimension_numbers<[1], [1], [0], [0], [0, 0, 1, 0], [], []>} : vector<10x8xbf16>, vector<8x8xbf16>, vector<10x8xf32> -> vector<10x8xf32>
    %199 = vector.broadcast %9 : vector<1x8xf32> to vector<10x8xf32>
    %200 = arith.addf %198, %199 : vector<10x8xf32>
    %cst_72 = arith.constant dense<0xFF800000> : vector<10xf32>
    %201 = vector.multi_reduction <maximumf>, %200, %cst_72 [1] : vector<10x8xf32> to vector<10xf32>
    %202 = vector.shape_cast %201 : vector<10xf32> to vector<10x1xf32>
    %203 = vector.broadcast %202 : vector<10x1xf32> to vector<10x8xf32>
    %204 = arith.subf %200, %203 : vector<10x8xf32>
    %205 = math.exp %204 : vector<10x8xf32>
    %cst_73 = arith.constant dense<0.000000e+00> : vector<10xf32>
    %206 = vector.multi_reduction <add>, %205, %cst_73 [1] : vector<10x8xf32> to vector<10xf32>
    %207 = vector.shape_cast %206 : vector<10xf32> to vector<10x1xf32>
    %208 = tpu.reciprocal %207 {approx = true} : vector<10x1xf32> -> vector<10x1xf32>
    %209 = vector.broadcast %208 : vector<10x1xf32> to vector<10x8xf32>
    %210 = arith.mulf %205, %209 : vector<10x8xf32>
    %211 = arith.truncf %210 : vector<10x8xf32> to vector<10x8xbf16>
    %cst_74 = arith.constant dense<0.000000e+00> : vector<10x8xf32>
    %212 = tpu.matmul %211, %197, %cst_74 {dimension_numbers = #tpu.dot_dimension_numbers<[1], [0], [0], [1], [0, 0, 1, 1], [], []>} : vector<10x8xbf16>, vector<8x8xbf16>, vector<10x8xf32> -> vector<10x8xf32>
    %213 = vector.extract_strided_slice %180 {offsets = [0, 8], sizes = [10, 8], strides = [1, 1]} : vector<10x32xf32> to vector<10x8xf32>
    %cst_75 = arith.constant 0.353553385 : f32
    %214 = vector.broadcast %cst_75 : f32 to vector<10x8xf32>
    %215 = arith.mulf %213, %214 : vector<10x8xf32>
    %216 = arith.truncf %215 : vector<10x8xf32> to vector<10x8xbf16>
    %217 = vector.extract_strided_slice %188 {offsets = [0, 8], sizes = [8, 8], strides = [1, 1]} : vector<8x32xf32> to vector<8x8xf32>
    %218 = arith.truncf %217 : vector<8x8xf32> to vector<8x8xbf16>
    %219 = vector.extract_strided_slice %189 {offsets = [0, 8], sizes = [8, 8], strides = [1, 1]} : vector<8x32xf32> to vector<8x8xf32>
    %220 = arith.truncf %219 : vector<8x8xf32> to vector<8x8xbf16>
    %cst_76 = arith.constant dense<0.000000e+00> : vector<10x8xf32>
    %221 = tpu.matmul %216, %218, %cst_76 {dimension_numbers = #tpu.dot_dimension_numbers<[1], [1], [0], [0], [0, 0, 1, 0], [], []>} : vector<10x8xbf16>, vector<8x8xbf16>, vector<10x8xf32> -> vector<10x8xf32>
    %222 = vector.broadcast %9 : vector<1x8xf32> to vector<10x8xf32>
    %223 = arith.addf %221, %222 : vector<10x8xf32>
    %cst_77 = arith.constant dense<0xFF800000> : vector<10xf32>
    %224 = vector.multi_reduction <maximumf>, %223, %cst_77 [1] : vector<10x8xf32> to vector<10xf32>
    %225 = vector.shape_cast %224 : vector<10xf32> to vector<10x1xf32>
    %226 = vector.broadcast %225 : vector<10x1xf32> to vector<10x8xf32>
    %227 = arith.subf %223, %226 : vector<10x8xf32>
    %228 = math.exp %227 : vector<10x8xf32>
    %cst_78 = arith.constant dense<0.000000e+00> : vector<10xf32>
    %229 = vector.multi_reduction <add>, %228, %cst_78 [1] : vector<10x8xf32> to vector<10xf32>
    %230 = vector.shape_cast %229 : vector<10xf32> to vector<10x1xf32>
    %231 = tpu.reciprocal %230 {approx = true} : vector<10x1xf32> -> vector<10x1xf32>
    %232 = vector.broadcast %231 : vector<10x1xf32> to vector<10x8xf32>
    %233 = arith.mulf %228, %232 : vector<10x8xf32>
    %234 = arith.truncf %233 : vector<10x8xf32> to vector<10x8xbf16>
    %cst_79 = arith.constant dense<0.000000e+00> : vector<10x8xf32>
    %235 = tpu.matmul %234, %220, %cst_79 {dimension_numbers = #tpu.dot_dimension_numbers<[1], [0], [0], [1], [0, 0, 1, 1], [], []>} : vector<10x8xbf16>, vector<8x8xbf16>, vector<10x8xf32> -> vector<10x8xf32>
    %236 = vector.extract_strided_slice %180 {offsets = [0, 16], sizes = [10, 8], strides = [1, 1]} : vector<10x32xf32> to vector<10x8xf32>
    %cst_80 = arith.constant 0.353553385 : f32
    %237 = vector.broadcast %cst_80 : f32 to vector<10x8xf32>
    %238 = arith.mulf %236, %237 : vector<10x8xf32>
    %239 = arith.truncf %238 : vector<10x8xf32> to vector<10x8xbf16>
    %240 = vector.extract_strided_slice %188 {offsets = [0, 16], sizes = [8, 8], strides = [1, 1]} : vector<8x32xf32> to vector<8x8xf32>
    %241 = arith.truncf %240 : vector<8x8xf32> to vector<8x8xbf16>
    %242 = vector.extract_strided_slice %189 {offsets = [0, 16], sizes = [8, 8], strides = [1, 1]} : vector<8x32xf32> to vector<8x8xf32>
    %243 = arith.truncf %242 : vector<8x8xf32> to vector<8x8xbf16>
    %cst_81 = arith.constant dense<0.000000e+00> : vector<10x8xf32>
    %244 = tpu.matmul %239, %241, %cst_81 {dimension_numbers = #tpu.dot_dimension_numbers<[1], [1], [0], [0], [0, 0, 1, 0], [], []>} : vector<10x8xbf16>, vector<8x8xbf16>, vector<10x8xf32> -> vector<10x8xf32>
    %245 = vector.broadcast %9 : vector<1x8xf32> to vector<10x8xf32>
    %246 = arith.addf %244, %245 : vector<10x8xf32>
    %cst_82 = arith.constant dense<0xFF800000> : vector<10xf32>
    %247 = vector.multi_reduction <maximumf>, %246, %cst_82 [1] : vector<10x8xf32> to vector<10xf32>
    %248 = vector.shape_cast %247 : vector<10xf32> to vector<10x1xf32>
    %249 = vector.broadcast %248 : vector<10x1xf32> to vector<10x8xf32>
    %250 = arith.subf %246, %249 : vector<10x8xf32>
    %251 = math.exp %250 : vector<10x8xf32>
    %cst_83 = arith.constant dense<0.000000e+00> : vector<10xf32>
    %252 = vector.multi_reduction <add>, %251, %cst_83 [1] : vector<10x8xf32> to vector<10xf32>
    %253 = vector.shape_cast %252 : vector<10xf32> to vector<10x1xf32>
    %254 = tpu.reciprocal %253 {approx = true} : vector<10x1xf32> -> vector<10x1xf32>
    %255 = vector.broadcast %254 : vector<10x1xf32> to vector<10x8xf32>
    %256 = arith.mulf %251, %255 : vector<10x8xf32>
    %257 = arith.truncf %256 : vector<10x8xf32> to vector<10x8xbf16>
    %cst_84 = arith.constant dense<0.000000e+00> : vector<10x8xf32>
    %258 = tpu.matmul %257, %243, %cst_84 {dimension_numbers = #tpu.dot_dimension_numbers<[1], [0], [0], [1], [0, 0, 1, 1], [], []>} : vector<10x8xbf16>, vector<8x8xbf16>, vector<10x8xf32> -> vector<10x8xf32>
    %259 = vector.extract_strided_slice %180 {offsets = [0, 24], sizes = [10, 8], strides = [1, 1]} : vector<10x32xf32> to vector<10x8xf32>
    %cst_85 = arith.constant 0.353553385 : f32
    %260 = vector.broadcast %cst_85 : f32 to vector<10x8xf32>
    %261 = arith.mulf %259, %260 : vector<10x8xf32>
    %262 = arith.truncf %261 : vector<10x8xf32> to vector<10x8xbf16>
    %263 = vector.extract_strided_slice %188 {offsets = [0, 24], sizes = [8, 8], strides = [1, 1]} : vector<8x32xf32> to vector<8x8xf32>
    %264 = arith.truncf %263 : vector<8x8xf32> to vector<8x8xbf16>
    %265 = vector.extract_strided_slice %189 {offsets = [0, 24], sizes = [8, 8], strides = [1, 1]} : vector<8x32xf32> to vector<8x8xf32>
    %266 = arith.truncf %265 : vector<8x8xf32> to vector<8x8xbf16>
    %cst_86 = arith.constant dense<0.000000e+00> : vector<10x8xf32>
    %267 = tpu.matmul %262, %264, %cst_86 {dimension_numbers = #tpu.dot_dimension_numbers<[1], [1], [0], [0], [0, 0, 1, 0], [], []>} : vector<10x8xbf16>, vector<8x8xbf16>, vector<10x8xf32> -> vector<10x8xf32>
    %268 = vector.broadcast %9 : vector<1x8xf32> to vector<10x8xf32>
    %269 = arith.addf %267, %268 : vector<10x8xf32>
    %cst_87 = arith.constant dense<0xFF800000> : vector<10xf32>
    %270 = vector.multi_reduction <maximumf>, %269, %cst_87 [1] : vector<10x8xf32> to vector<10xf32>
    %271 = vector.shape_cast %270 : vector<10xf32> to vector<10x1xf32>
    %272 = vector.broadcast %271 : vector<10x1xf32> to vector<10x8xf32>
    %273 = arith.subf %269, %272 : vector<10x8xf32>
    %274 = math.exp %273 : vector<10x8xf32>
    %cst_88 = arith.constant dense<0.000000e+00> : vector<10xf32>
    %275 = vector.multi_reduction <add>, %274, %cst_88 [1] : vector<10x8xf32> to vector<10xf32>
    %276 = vector.shape_cast %275 : vector<10xf32> to vector<10x1xf32>
    %277 = tpu.reciprocal %276 {approx = true} : vector<10x1xf32> -> vector<10x1xf32>
    %278 = vector.broadcast %277 : vector<10x1xf32> to vector<10x8xf32>
    %279 = arith.mulf %274, %278 : vector<10x8xf32>
    %280 = arith.truncf %279 : vector<10x8xf32> to vector<10x8xbf16>
    %cst_89 = arith.constant dense<0.000000e+00> : vector<10x8xf32>
    %281 = tpu.matmul %280, %266, %cst_89 {dimension_numbers = #tpu.dot_dimension_numbers<[1], [0], [0], [1], [0, 0, 1, 1], [], []>} : vector<10x8xbf16>, vector<8x8xbf16>, vector<10x8xf32> -> vector<10x8xf32>
    %282 = tpu.concatenate %212, %235, %258, %281 in 1 : vector<10x8xf32>, vector<10x8xf32>, vector<10x8xf32>, vector<10x8xf32> -> vector<10x32xf32>
    %283 = arith.truncf %282 : vector<10x32xf32> to vector<10x32xbf16>
    %c0_90 = arith.constant 0 : index
    %c0_91 = arith.constant 0 : index
    %284 = vector.load %arg16[%c0_90, %c0_91] : memref<32x32xbf16, #tpu.memory_space<vmem>>, vector<32x32xbf16>
    %cst_92 = arith.constant dense<0.000000e+00> : vector<10x32xf32>
    %285 = tpu.matmul %283, %284, %cst_92 {dimension_numbers = #tpu.dot_dimension_numbers<[1], [0], [0], [1], [0, 0, 1, 1], [], []>} : vector<10x32xbf16>, vector<32x32xbf16>, vector<10x32xf32> -> vector<10x32xf32>
    %c0_93 = arith.constant 0 : index
    %c0_94 = arith.constant 0 : index
    %286 = vector.load %arg17[%c0_93, %c0_94] : memref<1x32xbf16, #tpu.memory_space<vmem>>, vector<1x32xbf16>
    %287 = arith.extf %286 : vector<1x32xbf16> to vector<1x32xf32>
    %288 = vector.broadcast %287 : vector<1x32xf32> to vector<10x32xf32>
    %289 = arith.addf %285, %288 : vector<10x32xf32>
    %290 = arith.addf %173, %289 : vector<10x32xf32>
    %cst_95 = arith.constant dense<0.000000e+00> : vector<10xf32>
    %291 = vector.multi_reduction <add>, %290, %cst_95 [1] : vector<10x32xf32> to vector<10xf32>
    %292 = vector.shape_cast %291 : vector<10xf32> to vector<10x1xf32>
    %cst_96 = arith.constant 3.200000e+01 : f32
    %293 = vector.broadcast %cst_96 : f32 to vector<10x1xf32>
    %294 = arith.divf %292, %293 : vector<10x1xf32>
    %295 = vector.broadcast %294 : vector<10x1xf32> to vector<10x32xf32>
    %296 = arith.subf %290, %295 : vector<10x32xf32>
    %297 = arith.mulf %296, %296 : vector<10x32xf32>
    %cst_97 = arith.constant dense<0.000000e+00> : vector<10xf32>
    %298 = vector.multi_reduction <add>, %297, %cst_97 [1] : vector<10x32xf32> to vector<10xf32>
    %299 = vector.shape_cast %298 : vector<10xf32> to vector<10x1xf32>
    %cst_98 = arith.constant 3.200000e+01 : f32
    %300 = vector.broadcast %cst_98 : f32 to vector<10x1xf32>
    %301 = arith.divf %299, %300 : vector<10x1xf32>
    %cst_99 = arith.constant 9.99999974E-6 : f32
    %302 = vector.broadcast %cst_99 : f32 to vector<10x1xf32>
    %303 = arith.addf %301, %302 : vector<10x1xf32>
    %304 = math.rsqrt %303 : vector<10x1xf32>
    %305 = vector.broadcast %304 : vector<10x1xf32> to vector<10x32xf32>
    %306 = arith.mulf %296, %305 : vector<10x32xf32>
    %c0_100 = arith.constant 0 : index
    %c0_101 = arith.constant 0 : index
    %307 = vector.load %arg18[%c0_100, %c0_101] : memref<1x32xbf16, #tpu.memory_space<vmem>>, vector<1x32xbf16>
    %308 = arith.extf %307 : vector<1x32xbf16> to vector<1x32xf32>
    %309 = vector.broadcast %308 : vector<1x32xf32> to vector<10x32xf32>
    %310 = arith.mulf %306, %309 : vector<10x32xf32>
    %c0_102 = arith.constant 0 : index
    %c0_103 = arith.constant 0 : index
    %311 = vector.load %arg19[%c0_102, %c0_103] : memref<1x32xbf16, #tpu.memory_space<vmem>>, vector<1x32xbf16>
    %312 = arith.extf %311 : vector<1x32xbf16> to vector<1x32xf32>
    %313 = vector.broadcast %312 : vector<1x32xf32> to vector<10x32xf32>
    %314 = arith.addf %310, %313 : vector<10x32xf32>
    %315 = arith.truncf %314 : vector<10x32xf32> to vector<10x32xbf16>
    %c0_104 = arith.constant 0 : index
    %c0_105 = arith.constant 0 : index
    %316 = vector.load %arg20[%c0_104, %c0_105] : memref<32x64xbf16, #tpu.memory_space<vmem>>, vector<32x64xbf16>
    %cst_106 = arith.constant dense<0.000000e+00> : vector<10x64xf32>
    %317 = tpu.matmul %315, %316, %cst_106 {dimension_numbers = #tpu.dot_dimension_numbers<[1], [0], [0], [1], [0, 0, 1, 1], [], []>} : vector<10x32xbf16>, vector<32x64xbf16>, vector<10x64xf32> -> vector<10x64xf32>
    %c0_107 = arith.constant 0 : index
    %c0_108 = arith.constant 0 : index
    %318 = vector.load %arg21[%c0_107, %c0_108] : memref<1x64xbf16, #tpu.memory_space<vmem>>, vector<1x64xbf16>
    %319 = arith.extf %318 : vector<1x64xbf16> to vector<1x64xf32>
    %320 = vector.broadcast %319 : vector<1x64xf32> to vector<10x64xf32>
    %321 = arith.addf %317, %320 : vector<10x64xf32>
    %322 = arith.mulf %321, %321 : vector<10x64xf32>
    %323 = arith.mulf %321, %322 : vector<10x64xf32>
    %cst_109 = arith.constant 4.471500e-02 : f32
    %324 = vector.broadcast %cst_109 : f32 to vector<10x64xf32>
    %325 = arith.mulf %324, %323 : vector<10x64xf32>
    %326 = arith.addf %321, %325 : vector<10x64xf32>
    %cst_110 = arith.constant 0.797884583 : f32
    %327 = vector.broadcast %cst_110 : f32 to vector<10x64xf32>
    %328 = arith.mulf %327, %326 : vector<10x64xf32>
    %329 = math.tanh %328 : vector<10x64xf32>
    %cst_111 = arith.constant 1.000000e+00 : f32
    %330 = vector.broadcast %cst_111 : f32 to vector<10x64xf32>
    %331 = arith.addf %330, %329 : vector<10x64xf32>
    %cst_112 = arith.constant 5.000000e-01 : f32
    %332 = vector.broadcast %cst_112 : f32 to vector<10x64xf32>
    %333 = arith.mulf %332, %331 : vector<10x64xf32>
    %334 = arith.mulf %321, %333 : vector<10x64xf32>
    %335 = arith.truncf %334 : vector<10x64xf32> to vector<10x64xbf16>
    %c0_113 = arith.constant 0 : index
    %c0_114 = arith.constant 0 : index
    %336 = vector.load %arg22[%c0_113, %c0_114] : memref<64x32xbf16, #tpu.memory_space<vmem>>, vector<64x32xbf16>
    %cst_115 = arith.constant dense<0.000000e+00> : vector<10x32xf32>
    %337 = tpu.matmul %335, %336, %cst_115 {dimension_numbers = #tpu.dot_dimension_numbers<[1], [0], [0], [1], [0, 0, 1, 1], [], []>} : vector<10x64xbf16>, vector<64x32xbf16>, vector<10x32xf32> -> vector<10x32xf32>
    %c0_116 = arith.constant 0 : index
    %c0_117 = arith.constant 0 : index
    %338 = vector.load %arg23[%c0_116, %c0_117] : memref<1x32xbf16, #tpu.memory_space<vmem>>, vector<1x32xbf16>
    %339 = arith.extf %338 : vector<1x32xbf16> to vector<1x32xf32>
    %340 = vector.broadcast %339 : vector<1x32xf32> to vector<10x32xf32>
    %341 = arith.addf %337, %340 : vector<10x32xf32>
    %342 = arith.addf %314, %341 : vector<10x32xf32>
    %cst_118 = arith.constant dense<0.000000e+00> : vector<10xf32>
    %343 = vector.multi_reduction <add>, %342, %cst_118 [1] : vector<10x32xf32> to vector<10xf32>
    %344 = vector.shape_cast %343 : vector<10xf32> to vector<10x1xf32>
    %cst_119 = arith.constant 3.200000e+01 : f32
    %345 = vector.broadcast %cst_119 : f32 to vector<10x1xf32>
    %346 = arith.divf %344, %345 : vector<10x1xf32>
    %347 = vector.broadcast %346 : vector<10x1xf32> to vector<10x32xf32>
    %348 = arith.subf %342, %347 : vector<10x32xf32>
    %349 = arith.mulf %348, %348 : vector<10x32xf32>
    %cst_120 = arith.constant dense<0.000000e+00> : vector<10xf32>
    %350 = vector.multi_reduction <add>, %349, %cst_120 [1] : vector<10x32xf32> to vector<10xf32>
    %351 = vector.shape_cast %350 : vector<10xf32> to vector<10x1xf32>
    %cst_121 = arith.constant 3.200000e+01 : f32
    %352 = vector.broadcast %cst_121 : f32 to vector<10x1xf32>
    %353 = arith.divf %351, %352 : vector<10x1xf32>
    %cst_122 = arith.constant 9.99999974E-6 : f32
    %354 = vector.broadcast %cst_122 : f32 to vector<10x1xf32>
    %355 = arith.addf %353, %354 : vector<10x1xf32>
    %356 = math.rsqrt %355 : vector<10x1xf32>
    %357 = vector.broadcast %356 : vector<10x1xf32> to vector<10x32xf32>
    %358 = arith.mulf %348, %357 : vector<10x32xf32>
    %c0_123 = arith.constant 0 : index
    %c0_124 = arith.constant 0 : index
    %359 = vector.load %arg24[%c0_123, %c0_124] : memref<1x32xbf16, #tpu.memory_space<vmem>>, vector<1x32xbf16>
    %360 = arith.extf %359 : vector<1x32xbf16> to vector<1x32xf32>
    %361 = vector.broadcast %360 : vector<1x32xf32> to vector<10x32xf32>
    %362 = arith.mulf %358, %361 : vector<10x32xf32>
    %c0_125 = arith.constant 0 : index
    %c0_126 = arith.constant 0 : index
    %363 = vector.load %arg25[%c0_125, %c0_126] : memref<1x32xbf16, #tpu.memory_space<vmem>>, vector<1x32xbf16>
    %364 = arith.extf %363 : vector<1x32xbf16> to vector<1x32xf32>
    %365 = vector.broadcast %364 : vector<1x32xf32> to vector<10x32xf32>
    %366 = arith.addf %362, %365 : vector<10x32xf32>
    %367 = arith.truncf %366 : vector<10x32xf32> to vector<10x32xbf16>
    %c0_127 = arith.constant 0 : index
    %c0_128 = arith.constant 0 : index
    %368 = vector.load %arg26[%c0_127, %c0_128] : memref<32x36xbf16, #tpu.memory_space<vmem>>, vector<32x36xbf16>
    %cst_129 = arith.constant dense<0.000000e+00> : vector<10x36xf32>
    %369 = tpu.matmul %367, %368, %cst_129 {dimension_numbers = #tpu.dot_dimension_numbers<[1], [0], [0], [1], [0, 0, 1, 1], [], []>} : vector<10x32xbf16>, vector<32x36xbf16>, vector<10x36xf32> -> vector<10x36xf32>
    %c0_130 = arith.constant 0 : index
    %c0_131 = arith.constant 0 : index
    %370 = vector.load %arg27[%c0_130, %c0_131] : memref<1x36xbf16, #tpu.memory_space<vmem>>, vector<1x36xbf16>
    %371 = arith.extf %370 : vector<1x36xbf16> to vector<1x36xf32>
    %372 = vector.broadcast %371 : vector<1x36xf32> to vector<10x36xf32>
    %373 = arith.addf %369, %372 : vector<10x36xf32>
    %c0_132 = arith.constant 0 : index
    %c0_133 = arith.constant 0 : index
    %c0_134 = arith.constant 0 : index
    %374 = vector.load %arg28[%c0_132, %c0_133, %c0_134] : memref<1x10x36xf32, #tpu.memory_space<vmem>>, vector<1x10x36xf32>
    %375 = vector.shape_cast %374 : vector<1x10x36xf32> to vector<10x36xf32>
    %376 = vector.shape_cast %373 : vector<10x36xf32> to vector<1x10x36xf32>
    tpu.vector_store %arg28[%c0_132, %c0_133, %c0_134], %376 {strides = array<i32>} : memref<1x10x36xf32, #tpu.memory_space<vmem>>, vector<1x10x36xf32>,
    %377 = vector.extract_strided_slice %373 {offsets = [0, 0], sizes = [10, 16], strides = [1, 1]} : vector<10x36xf32> to vector<10x16xf32>
    %378 = vector.extract_strided_slice %373 {offsets = [0, 16], sizes = [10, 16], strides = [1, 1]} : vector<10x36xf32> to vector<10x16xf32>
    %379 = vector.extract_strided_slice %373 {offsets = [0, 32], sizes = [10, 4], strides = [1, 1]} : vector<10x36xf32> to vector<10x4xf32>
    %cst_135 = arith.constant dense<0xFF800000> : vector<10xf32>
    %380 = vector.multi_reduction <maximumf>, %377, %cst_135 [1] : vector<10x16xf32> to vector<10xf32>
    %381 = vector.shape_cast %380 : vector<10xf32> to vector<10x1xf32>
    %382 = tpu.iota {dimensions = array<i32: 1>} : vector<10x16xi32>
    %383 = arith.sitofp %382 : vector<10x16xi32> to vector<10x16xf32>
    %384 = vector.broadcast %381 : vector<10x1xf32> to vector<10x16xf32>
    %385 = arith.cmpf oge, %377, %384 : vector<10x16xf32>
    %cst_136 = arith.constant 1.600000e+01 : f32
    %386 = vector.broadcast %cst_136 : f32 to vector<10x16xf32>
    %387 = arith.select %385, %383, %386 : vector<10x16xi1>, vector<10x16xf32>
    %cst_137 = arith.constant dense<0x7F800000> : vector<10xf32>
    %388 = vector.multi_reduction <minimumf>, %387, %cst_137 [1] : vector<10x16xf32> to vector<10xf32>
    %389 = vector.shape_cast %388 : vector<10xf32> to vector<10x1xf32>
    %390 = arith.fptosi %389 : vector<10x1xf32> to vector<10x1xi32>
    %cst_138 = arith.constant dense<0xFF800000> : vector<10xf32>
    %391 = vector.multi_reduction <maximumf>, %378, %cst_138 [1] : vector<10x16xf32> to vector<10xf32>
    %392 = vector.shape_cast %391 : vector<10xf32> to vector<10x1xf32>
    %393 = tpu.iota {dimensions = array<i32: 1>} : vector<10x16xi32>
    %394 = arith.sitofp %393 : vector<10x16xi32> to vector<10x16xf32>
    %395 = vector.broadcast %392 : vector<10x1xf32> to vector<10x16xf32>
    %396 = arith.cmpf oge, %378, %395 : vector<10x16xf32>
    %cst_139 = arith.constant 1.600000e+01 : f32
    %397 = vector.broadcast %cst_139 : f32 to vector<10x16xf32>
    %398 = arith.select %396, %394, %397 : vector<10x16xi1>, vector<10x16xf32>
    %cst_140 = arith.constant dense<0x7F800000> : vector<10xf32>
    %399 = vector.multi_reduction <minimumf>, %398, %cst_140 [1] : vector<10x16xf32> to vector<10xf32>
    %400 = vector.shape_cast %399 : vector<10xf32> to vector<10x1xf32>
    %401 = arith.fptosi %400 : vector<10x1xf32> to vector<10x1xi32>
    %cst_141 = arith.constant dense<0xFF800000> : vector<10xf32>
    %402 = vector.multi_reduction <maximumf>, %379, %cst_141 [1] : vector<10x4xf32> to vector<10xf32>
    %403 = vector.shape_cast %402 : vector<10xf32> to vector<10x1xf32>
    %404 = tpu.iota {dimensions = array<i32: 1>} : vector<10x4xi32>
    %405 = arith.sitofp %404 : vector<10x4xi32> to vector<10x4xf32>
    %406 = vector.broadcast %403 : vector<10x1xf32> to vector<10x4xf32>
    %407 = arith.cmpf oge, %379, %406 : vector<10x4xf32>
    %cst_142 = arith.constant 4.000000e+00 : f32
    %408 = vector.broadcast %cst_142 : f32 to vector<10x4xf32>
    %409 = arith.select %407, %405, %408 : vector<10x4xi1>, vector<10x4xf32>
    %cst_143 = arith.constant dense<0x7F800000> : vector<10xf32>
    %410 = vector.multi_reduction <minimumf>, %409, %cst_143 [1] : vector<10x4xf32> to vector<10xf32>
    %411 = vector.shape_cast %410 : vector<10xf32> to vector<10x1xf32>
    %412 = arith.fptosi %411 : vector<10x1xf32> to vector<10x1xi32>
    %c3_i32 = arith.constant 3 : i32
    %413 = vector.broadcast %c3_i32 : i32 to vector<10x1xi32>
    %414 = arith.cmpi slt, %412, %413 : vector<10x1xi32>
    %415 = arith.cmpi slt, %390, %401 : vector<10x1xi32>
    %416 = arith.andi %414, %415 : vector<10x1xi1>
    %417 = arith.extui %416 : vector<10x1xi1> to vector<10x1xi32>
    %c0_144 = arith.constant 0 : index
    %c0_145 = arith.constant 0 : index
    %c0_146 = arith.constant 0 : index
    %418 = vector.load %arg30[%c0_144, %c0_145, %c0_146] : memref<1x10x1xi32, #tpu.memory_space<vmem>>, vector<1x10x1xi32>
    %419 = vector.shape_cast %418 : vector<1x10x1xi32> to vector<10x1xi32>
    %420 = vector.shape_cast %417 : vector<10x1xi32> to vector<1x10x1xi32>
    tpu.vector_store %arg30[%c0_144, %c0_145, %c0_146], %420 {strides = array<i32>} : memref<1x10x1xi32, #tpu.memory_space<vmem>>, vector<1x10x1xi32>,
    %421 = tpu.iota {dimensions = array<i32: 1>} : vector<10x8xi32>
    %422 = vector.broadcast %390 : vector<10x1xi32> to vector<10x8xi32>
    %423 = arith.cmpi sge, %421, %422 : vector<10x8xi32>
    %424 = vector.broadcast %401 : vector<10x1xi32> to vector<10x8xi32>
    %425 = arith.cmpi slt, %421, %424 : vector<10x8xi32>
    %426 = arith.andi %423, %425 : vector<10x8xi1>
    %427 = arith.extui %426 : vector<10x8xi1> to vector<10x8xi32>
    %428 = arith.sitofp %427 : vector<10x8xi32> to vector<10x8xf32>
    %cst_147 = arith.constant dense<0.000000e+00> : vector<10xf32>
    %429 = vector.multi_reduction <add>, %428, %cst_147 [1] : vector<10x8xf32> to vector<10xf32>
    %430 = vector.shape_cast %429 : vector<10xf32> to vector<10x1xf32>
    %431 = arith.truncf %428 : vector<10x8xf32> to vector<10x8xbf16>
    %432 = arith.truncf %2 : vector<8x32xf32> to vector<8x32xbf16>
    %cst_148 = arith.constant dense<0.000000e+00> : vector<10x32xf32>
    %433 = tpu.matmul %431, %432, %cst_148 {dimension_numbers = #tpu.dot_dimension_numbers<[1], [0], [0], [1], [0, 0, 1, 1], [], []>} : vector<10x8xbf16>, vector<8x32xbf16>, vector<10x32xf32> -> vector<10x32xf32>
    %cst_149 = arith.constant 1.000000e+00 : f32
    %434 = vector.broadcast %cst_149 : f32 to vector<10x1xf32>
    %435 = arith.maximumf %430, %434 : vector<10x1xf32>
    %436 = vector.broadcast %435 : vector<10x1xf32> to vector<10x32xf32>
    %437 = arith.divf %433, %436 : vector<10x32xf32>
    %438 = arith.truncf %437 : vector<10x32xf32> to vector<10x32xbf16>
    %c0_150 = arith.constant 0 : index
    %c0_151 = arith.constant 0 : index
    %c0_152 = arith.constant 0 : index
    %439 = vector.load %arg29[%c0_150, %c0_151, %c0_152] : memref<1x10x32xbf16, #tpu.memory_space<vmem>>, vector<1x10x32xbf16>
    %440 = vector.shape_cast %439 : vector<1x10x32xbf16> to vector<10x32xbf16>
    %441 = vector.shape_cast %438 : vector<10x32xbf16> to vector<1x10x32xbf16>
    tpu.vector_store %arg29[%c0_150, %c0_151, %c0_152], %441 {strides = array<i32>} : memref<1x10x32xbf16, #tpu.memory_space<vmem>>, vector<1x10x32xbf16>,
    return
  }
  func.func @transform_0(%arg0: i32) -> (i32, i32, i32) {
    %c0_i32 = arith.constant 0 : i32
    %c0_i32_0 = arith.constant 0 : i32
    %c0_i32_1 = arith.constant 0 : i32
    %c0_i32_2 = arith.constant 0 : i32
    return %c0_i32, %c0_i32_0, %c0_i32_1 : i32, i32, i32
  }
  func.func @transform_1(%arg0: i32) -> (i32, i32, i32) {
    %c0_i32 = arith.constant 0 : i32
    %c0_i32_0 = arith.constant 0 : i32
    %c0_i32_1 = arith.constant 0 : i32
    return %arg0, %c0_i32, %c0_i32_0 : i32, i32, i32
  }
  func.func @transform_2(%arg0: i32) -> (i32, i32, i32) {
    %c0_i32 = arith.constant 0 : i32
    %c0_i32_0 = arith.constant 0 : i32
    %c0_i32_1 = arith.constant 0 : i32
    return %arg0, %c0_i32, %c0_i32_0 : i32, i32, i32
  }
  func.func @transform_3(%arg0: i32) -> (i32, i32) {
    %c0_i32 = arith.constant 0 : i32
    %c0_i32_0 = arith.constant 0 : i32
    %c0_i32_1 = arith.constant 0 : i32
    return %c0_i32, %c0_i32_0 : i32, i32
  }
  func.func @transform_4(%arg0: i32) -> (i32, i32) {
    %c0_i32 = arith.constant 0 : i32
    %c0_i32_0 = arith.constant 0 : i32
    %c0_i32_1 = arith.constant 0 : i32
    return %c0_i32, %c0_i32_0 : i32, i32
  }
  func.func @transform_5(%arg0: i32) -> (i32, i32) {
    %c0_i32 = arith.constant 0 : i32
    %c0_i32_0 = arith.constant 0 : i32
    %c0_i32_1 = arith.constant 0 : i32
    return %c0_i32, %c0_i32_0 : i32, i32
  }
  func.func @transform_6(%arg0: i32) -> (i32, i32) {
    %c0_i32 = arith.constant 0 : i32
    %c0_i32_0 = arith.constant 0 : i32
    %c0_i32_1 = arith.constant 0 : i32
    return %c0_i32, %c0_i32_0 : i32, i32
  }
  func.func @transform_7(%arg0: i32) -> (i32, i32) {
    %c0_i32 = arith.constant 0 : i32
    %c0_i32_0 = arith.constant 0 : i32
    %c0_i32_1 = arith.constant 0 : i32
    return %c0_i32, %c0_i32_0 : i32, i32
  }
  func.func @transform_8(%arg0: i32) -> (i32, i32) {
    %c0_i32 = arith.constant 0 : i32
    %c0_i32_0 = arith.constant 0 : i32
    %c0_i32_1 = arith.constant 0 : i32
    return %c0_i32, %c0_i32_0 : i32, i32
  }
  func.func @transform_9(%arg0: i32) -> (i32, i32) {
    %c0_i32 = arith.constant 0 : i32
    %c0_i32_0 = arith.constant 0 : i32
    %c0_i32_1 = arith.constant 0 : i32
    return %c0_i32, %c0_i32_0 : i32, i32
  }
  func.func @transform_10(%arg0: i32) -> (i32, i32) {
    %c0_i32 = arith.constant 0 : i32
    %c0_i32_0 = arith.constant 0 : i32
    %c0_i32_1 = arith.constant 0 : i32
    return %c0_i32, %c0_i32_0 : i32, i32
  }
  func.func @transform_11(%arg0: i32) -> (i32, i32) {
    %c0_i32 = arith.constant 0 : i32
    %c0_i32_0 = arith.constant 0 : i32
    %c0_i32_1 = arith.constant 0 : i32
    return %c0_i32, %c0_i32_0 : i32, i32
  }
  func.func @transform_12(%arg0: i32) -> (i32, i32) {
    %c0_i32 = arith.constant 0 : i32
    %c0_i32_0 = arith.constant 0 : i32
    %c0_i32_1 = arith.constant 0 : i32
    return %c0_i32, %c0_i32_0 : i32, i32
  }
  func.func @transform_13(%arg0: i32) -> (i32, i32) {
    %c0_i32 = arith.constant 0 : i32
    %c0_i32_0 = arith.constant 0 : i32
    %c0_i32_1 = arith.constant 0 : i32
    return %c0_i32, %c0_i32_0 : i32, i32
  }
  func.func @transform_14(%arg0: i32) -> (i32, i32) {
    %c0_i32 = arith.constant 0 : i32
    %c0_i32_0 = arith.constant 0 : i32
    %c0_i32_1 = arith.constant 0 : i32
    return %c0_i32, %c0_i32_0 : i32, i32
  }
  func.func @transform_15(%arg0: i32) -> (i32, i32) {
    %c0_i32 = arith.constant 0 : i32
    %c0_i32_0 = arith.constant 0 : i32
    %c0_i32_1 = arith.constant 0 : i32
    return %c0_i32, %c0_i32_0 : i32, i32
  }
  func.func @transform_16(%arg0: i32) -> (i32, i32) {
    %c0_i32 = arith.constant 0 : i32
    %c0_i32_0 = arith.constant 0 : i32
    %c0_i32_1 = arith.constant 0 : i32
    return %c0_i32, %c0_i32_0 : i32, i32
  }
  func.func @transform_17(%arg0: i32) -> (i32, i32) {
    %c0_i32 = arith.constant 0 : i32
    %c0_i32_0 = arith.constant 0 : i32
    %c0_i32_1 = arith.constant 0 : i32
    return %c0_i32, %c0_i32_0 : i32, i32
  }
  func.func @transform_18(%arg0: i32) -> (i32, i32) {
    %c0_i32 = arith.constant 0 : i32
    %c0_i32_0 = arith.constant 0 : i32
    %c0_i32_1 = arith.constant 0 : i32
    return %c0_i32, %c0_i32_0 : i32, i32
  }
  func.func @transform_19(%arg0: i32) -> (i32, i32) {
    %c0_i32 = arith.constant 0 : i32
    %c0_i32_0 = arith.constant 0 : i32
    %c0_i32_1 = arith.constant 0 : i32
    return %c0_i32, %c0_i32_0 : i32, i32
  }
  func.func @transform_20(%arg0: i32) -> (i32, i32) {
    %c0_i32 = arith.constant 0 : i32
    %c0_i32_0 = arith.constant 0 : i32
    %c0_i32_1 = arith.constant 0 : i32
    return %c0_i32, %c0_i32_0 : i32, i32
  }
  func.func @transform_21(%arg0: i32) -> (i32, i32) {
    %c0_i32 = arith.constant 0 : i32
    %c0_i32_0 = arith.constant 0 : i32
    %c0_i32_1 = arith.constant 0 : i32
    return %c0_i32, %c0_i32_0 : i32, i32
  }
  func.func @transform_22(%arg0: i32) -> (i32, i32) {
    %c0_i32 = arith.constant 0 : i32
    %c0_i32_0 = arith.constant 0 : i32
    %c0_i32_1 = arith.constant 0 : i32
    return %c0_i32, %c0_i32_0 : i32, i32
  }
  func.func @transform_23(%arg0: i32) -> (i32, i32) {
    %c0_i32 = arith.constant 0 : i32
    %c0_i32_0 = arith.constant 0 : i32
    %c0_i32_1 = arith.constant 0 : i32
    return %c0_i32, %c0_i32_0 : i32, i32
  }
  func.func @transform_24(%arg0: i32) -> (i32, i32) {
    %c0_i32 = arith.constant 0 : i32
    %c0_i32_0 = arith.constant 0 : i32
    %c0_i32_1 = arith.constant 0 : i32
    return %c0_i32, %c0_i32_0 : i32, i32
  }
  func.func @transform_25(%arg0: i32) -> (i32, i32) {
    %c0_i32 = arith.constant 0 : i32
    %c0_i32_0 = arith.constant 0 : i32
    %c0_i32_1 = arith.constant 0 : i32
    return %c0_i32, %c0_i32_0 : i32, i32
  }
  func.func @transform_26(%arg0: i32) -> (i32, i32) {
    %c0_i32 = arith.constant 0 : i32
    %c0_i32_0 = arith.constant 0 : i32
    %c0_i32_1 = arith.constant 0 : i32
    return %c0_i32, %c0_i32_0 : i32, i32
  }
  func.func @transform_27(%arg0: i32) -> (i32, i32, i32) {
    %c0_i32 = arith.constant 0 : i32
    %c0_i32_0 = arith.constant 0 : i32
    %c0_i32_1 = arith.constant 0 : i32
    return %arg0, %c0_i32, %c0_i32_0 : i32, i32, i32
  }
  func.func @transform_28(%arg0: i32) -> (i32, i32, i32) {
    %c0_i32 = arith.constant 0 : i32
    %c0_i32_0 = arith.constant 0 : i32
    %c0_i32_1 = arith.constant 0 : i32
    return %arg0, %c0_i32, %c0_i32_0 : i32, i32, i32
  }
  func.func @transform_29(%arg0: i32) -> (i32, i32, i32) {
    %c0_i32 = arith.constant 0 : i32
    %c0_i32_0 = arith.constant 0 : i32
    %c0_i32_1 = arith.constant 0 : i32
    return %arg0, %c0_i32, %c0_i32_0 : i32, i32, i32
  }
}

module attributes {stable_mosaic.version = 11 : i64} {
  func.func @_relation_decoder_kernel(%arg0: i32, %arg1: memref<1x10x32xbf16, #tpu.memory_space<vmem>>, %arg2: memref<1x10x32xbf16, #tpu.memory_space<vmem>>, %arg3: memref<1x1x10xf32, #tpu.memory_space<vmem>>, %arg4: memref<1x32xbf16, #tpu.memory_space<vmem>>, %arg5: memref<1x32xbf16, #tpu.memory_space<vmem>>, %arg6: memref<32x96xbf16, #tpu.memory_space<vmem>>, %arg7: memref<1x96xbf16, #tpu.memory_space<vmem>>, %arg8: memref<32x32xbf16, #tpu.memory_space<vmem>>, %arg9: memref<1x32xbf16, #tpu.memory_space<vmem>>, %arg10: memref<1x32xbf16, #tpu.memory_space<vmem>>, %arg11: memref<1x32xbf16, #tpu.memory_space<vmem>>, %arg12: memref<32x32xbf16, #tpu.memory_space<vmem>>, %arg13: memref<1x32xbf16, #tpu.memory_space<vmem>>, %arg14: memref<32x64xbf16, #tpu.memory_space<vmem>>, %arg15: memref<1x64xbf16, #tpu.memory_space<vmem>>, %arg16: memref<32x32xbf16, #tpu.memory_space<vmem>>, %arg17: memref<1x32xbf16, #tpu.memory_space<vmem>>, %arg18: memref<1x32xbf16, #tpu.memory_space<vmem>>, %arg19: memref<1x32xbf16, #tpu.memory_space<vmem>>, %arg20: memref<32x64xbf16, #tpu.memory_space<vmem>>, %arg21: memref<1x64xbf16, #tpu.memory_space<vmem>>, %arg22: memref<64x32xbf16, #tpu.memory_space<vmem>>, %arg23: memref<1x32xbf16, #tpu.memory_space<vmem>>, %arg24: memref<1x32xbf16, #tpu.memory_space<vmem>>, %arg25: memref<1x32xbf16, #tpu.memory_space<vmem>>, %arg26: memref<32x23xbf16, #tpu.memory_space<vmem>>, %arg27: memref<1x23xbf16, #tpu.memory_space<vmem>>, %arg28: memref<1x10x23xf32, #tpu.memory_space<vmem>>) attributes {dimension_semantics = [#tpu.dimension_semantics<parallel>], iteration_bounds = array<i64: 2>, scalar_prefetch = 0 : i64, scratch_operands = 0 : i64, tpu.core_type = #tpu.core_type<tc>, window_params = [{pipeline_mode = #tpu.pipeline_mode<synchronous>, transform_indices = @transform_0, window_bounds = array<i64: 1, 10, 32>}, {transform_indices = @transform_1, window_bounds = array<i64: 1, 10, 32>}, {transform_indices = @transform_2, window_bounds = array<i64: 1, 1, 10>}, {pipeline_mode = #tpu.pipeline_mode<synchronous>, transform_indices = @transform_3, window_bounds = array<i64: 1, 32>}, {pipeline_mode = #tpu.pipeline_mode<synchronous>, transform_indices = @transform_4, window_bounds = array<i64: 1, 32>}, {pipeline_mode = #tpu.pipeline_mode<synchronous>, transform_indices = @transform_5, window_bounds = array<i64: 32, 96>}, {pipeline_mode = #tpu.pipeline_mode<synchronous>, transform_indices = @transform_6, window_bounds = array<i64: 1, 96>}, {pipeline_mode = #tpu.pipeline_mode<synchronous>, transform_indices = @transform_7, window_bounds = array<i64: 32, 32>}, {pipeline_mode = #tpu.pipeline_mode<synchronous>, transform_indices = @transform_8, window_bounds = array<i64: 1, 32>}, {pipeline_mode = #tpu.pipeline_mode<synchronous>, transform_indices = @transform_9, window_bounds = array<i64: 1, 32>}, {pipeline_mode = #tpu.pipeline_mode<synchronous>, transform_indices = @transform_10, window_bounds = array<i64: 1, 32>}, {pipeline_mode = #tpu.pipeline_mode<synchronous>, transform_indices = @transform_11, window_bounds = array<i64: 32, 32>}, {pipeline_mode = #tpu.pipeline_mode<synchronous>, transform_indices = @transform_12, window_bounds = array<i64: 1, 32>}, {pipeline_mode = #tpu.pipeline_mode<synchronous>, transform_indices = @transform_13, window_bounds = array<i64: 32, 64>}, {pipeline_mode = #tpu.pipeline_mode<synchronous>, transform_indices = @transform_14, window_bounds = array<i64: 1, 64>}, {pipeline_mode = #tpu.pipeline_mode<synchronous>, transform_indices = @transform_15, window_bounds = array<i64: 32, 32>}, {pipeline_mode = #tpu.pipeline_mode<synchronous>, transform_indices = @transform_16, window_bounds = array<i64: 1, 32>}, {pipeline_mode = #tpu.pipeline_mode<synchronous>, transform_indices = @transform_17, window_bounds = array<i64: 1, 32>}, {pipeline_mode = #tpu.pipeline_mode<synchronous>, transform_indices = @transform_18, window_bounds = array<i64: 1, 32>}, {pipeline_mode = #tpu.pipeline_mode<synchronous>, transform_indices = @transform_19, window_bounds = array<i64: 32, 64>}, {pipeline_mode = #tpu.pipeline_mode<synchronous>, transform_indices = @transform_20, window_bounds = array<i64: 1, 64>}, {pipeline_mode = #tpu.pipeline_mode<synchronous>, transform_indices = @transform_21, window_bounds = array<i64: 64, 32>}, {pipeline_mode = #tpu.pipeline_mode<synchronous>, transform_indices = @transform_22, window_bounds = array<i64: 1, 32>}, {pipeline_mode = #tpu.pipeline_mode<synchronous>, transform_indices = @transform_23, window_bounds = array<i64: 1, 32>}, {pipeline_mode = #tpu.pipeline_mode<synchronous>, transform_indices = @transform_24, window_bounds = array<i64: 1, 32>}, {pipeline_mode = #tpu.pipeline_mode<synchronous>, transform_indices = @transform_25, window_bounds = array<i64: 32, 23>}, {pipeline_mode = #tpu.pipeline_mode<synchronous>, transform_indices = @transform_26, window_bounds = array<i64: 1, 23>}, {transform_indices = @transform_27, window_bounds = array<i64: 1, 10, 23>}]} {
    %c0 = arith.constant 0 : index
    %c0_0 = arith.constant 0 : index
    %c0_1 = arith.constant 0 : index
    %0 = vector.load %arg2[%c0, %c0_0, %c0_1] : memref<1x10x32xbf16, #tpu.memory_space<vmem>>, vector<1x10x32xbf16>
    %1 = vector.shape_cast %0 : vector<1x10x32xbf16> to vector<10x32xbf16>
    %2 = arith.extf %1 : vector<10x32xbf16> to vector<10x32xf32>
    %c0_2 = arith.constant 0 : index
    %c0_3 = arith.constant 0 : index
    %c0_4 = arith.constant 0 : index
    %3 = vector.load %arg3[%c0_2, %c0_3, %c0_4] : memref<1x1x10xf32, #tpu.memory_space<vmem>>, vector<1x1x10xf32>
    %4 = vector.shape_cast %3 : vector<1x1x10xf32> to vector<1x10xf32>
    %cst = arith.constant 0.000000e+00 : f32
    %5 = vector.broadcast %cst : f32 to vector<1x10xf32>
    %6 = arith.cmpf ogt, %4, %5 : vector<1x10xf32>
    %cst_5 = arith.constant 0.000000e+00 : f32
    %cst_6 = arith.constant -1.000000e+09 : f32
    %7 = vector.broadcast %cst_5 : f32 to vector<1x10xf32>
    %8 = vector.broadcast %cst_6 : f32 to vector<1x10xf32>
    %9 = arith.select %6, %7, %8 : vector<1x10xi1>, vector<1x10xf32>
    %c0_7 = arith.constant 0 : index
    %c0_8 = arith.constant 0 : index
    %c0_9 = arith.constant 0 : index
    %10 = vector.load %arg1[%c0_7, %c0_8, %c0_9] : memref<1x10x32xbf16, #tpu.memory_space<vmem>>, vector<1x10x32xbf16>
    %11 = vector.shape_cast %10 : vector<1x10x32xbf16> to vector<10x32xbf16>
    %12 = arith.extf %11 : vector<10x32xbf16> to vector<10x32xf32>
    %cst_10 = arith.constant dense<0.000000e+00> : vector<10xf32>
    %13 = vector.multi_reduction <add>, %12, %cst_10 [1] : vector<10x32xf32> to vector<10xf32>
    %14 = vector.shape_cast %13 : vector<10xf32> to vector<10x1xf32>
    %cst_11 = arith.constant 3.200000e+01 : f32
    %15 = vector.broadcast %cst_11 : f32 to vector<10x1xf32>
    %16 = arith.divf %14, %15 : vector<10x1xf32>
    %17 = vector.broadcast %16 : vector<10x1xf32> to vector<10x32xf32>
    %18 = arith.subf %12, %17 : vector<10x32xf32>
    %19 = arith.mulf %18, %18 : vector<10x32xf32>
    %cst_12 = arith.constant dense<0.000000e+00> : vector<10xf32>
    %20 = vector.multi_reduction <add>, %19, %cst_12 [1] : vector<10x32xf32> to vector<10xf32>
    %21 = vector.shape_cast %20 : vector<10xf32> to vector<10x1xf32>
    %cst_13 = arith.constant 3.200000e+01 : f32
    %22 = vector.broadcast %cst_13 : f32 to vector<10x1xf32>
    %23 = arith.divf %21, %22 : vector<10x1xf32>
    %cst_14 = arith.constant 9.99999974E-6 : f32
    %24 = vector.broadcast %cst_14 : f32 to vector<10x1xf32>
    %25 = arith.addf %23, %24 : vector<10x1xf32>
    %26 = math.rsqrt %25 : vector<10x1xf32>
    %27 = vector.broadcast %26 : vector<10x1xf32> to vector<10x32xf32>
    %28 = arith.mulf %18, %27 : vector<10x32xf32>
    %c0_15 = arith.constant 0 : index
    %c0_16 = arith.constant 0 : index
    %29 = vector.load %arg4[%c0_15, %c0_16] : memref<1x32xbf16, #tpu.memory_space<vmem>>, vector<1x32xbf16>
    %30 = arith.extf %29 : vector<1x32xbf16> to vector<1x32xf32>
    %31 = vector.broadcast %30 : vector<1x32xf32> to vector<10x32xf32>
    %32 = arith.mulf %28, %31 : vector<10x32xf32>
    %c0_17 = arith.constant 0 : index
    %c0_18 = arith.constant 0 : index
    %33 = vector.load %arg5[%c0_17, %c0_18] : memref<1x32xbf16, #tpu.memory_space<vmem>>, vector<1x32xbf16>
    %34 = arith.extf %33 : vector<1x32xbf16> to vector<1x32xf32>
    %35 = vector.broadcast %34 : vector<1x32xf32> to vector<10x32xf32>
    %36 = arith.addf %32, %35 : vector<10x32xf32>
    %37 = arith.truncf %36 : vector<10x32xf32> to vector<10x32xbf16>
    %c0_19 = arith.constant 0 : index
    %c0_20 = arith.constant 0 : index
    %38 = vector.load %arg6[%c0_19, %c0_20] : memref<32x96xbf16, #tpu.memory_space<vmem>>, vector<32x96xbf16>
    %cst_21 = arith.constant dense<0.000000e+00> : vector<10x96xf32>
    %39 = tpu.matmul %37, %38, %cst_21 {dimension_numbers = #tpu.dot_dimension_numbers<[1], [0], [0], [1], [0, 0, 1, 1], [], []>} : vector<10x32xbf16>, vector<32x96xbf16>, vector<10x96xf32> -> vector<10x96xf32>
    %c0_22 = arith.constant 0 : index
    %c0_23 = arith.constant 0 : index
    %40 = vector.load %arg7[%c0_22, %c0_23] : memref<1x96xbf16, #tpu.memory_space<vmem>>, vector<1x96xbf16>
    %41 = arith.extf %40 : vector<1x96xbf16> to vector<1x96xf32>
    %42 = vector.broadcast %41 : vector<1x96xf32> to vector<10x96xf32>
    %43 = arith.addf %39, %42 : vector<10x96xf32>
    %44 = vector.extract_strided_slice %43 {offsets = [0, 0], sizes = [10, 32], strides = [1, 1]} : vector<10x96xf32> to vector<10x32xf32>
    %45 = vector.extract_strided_slice %43 {offsets = [0, 32], sizes = [10, 32], strides = [1, 1]} : vector<10x96xf32> to vector<10x32xf32>
    %46 = vector.extract_strided_slice %43 {offsets = [0, 64], sizes = [10, 32], strides = [1, 1]} : vector<10x96xf32> to vector<10x32xf32>
    %47 = tpu.iota {dimensions = array<i32: 0>} : vector<10x10xi32>
    %48 = tpu.iota {dimensions = array<i32: 1>} : vector<10x10xi32>
    %49 = arith.cmpi sge, %47, %48 : vector<10x10xi32>
    %cst_24 = arith.constant 0.000000e+00 : f32
    %cst_25 = arith.constant -1.000000e+09 : f32
    %50 = vector.broadcast %cst_24 : f32 to vector<10x10xf32>
    %51 = vector.broadcast %cst_25 : f32 to vector<10x10xf32>
    %52 = arith.select %49, %50, %51 : vector<10x10xi1>, vector<10x10xf32>
    %53 = vector.extract_strided_slice %44 {offsets = [0, 0], sizes = [10, 8], strides = [1, 1]} : vector<10x32xf32> to vector<10x8xf32>
    %cst_26 = arith.constant 0.353553385 : f32
    %54 = vector.broadcast %cst_26 : f32 to vector<10x8xf32>
    %55 = arith.mulf %53, %54 : vector<10x8xf32>
    %56 = arith.truncf %55 : vector<10x8xf32> to vector<10x8xbf16>
    %57 = vector.extract_strided_slice %45 {offsets = [0, 0], sizes = [10, 8], strides = [1, 1]} : vector<10x32xf32> to vector<10x8xf32>
    %58 = arith.truncf %57 : vector<10x8xf32> to vector<10x8xbf16>
    %59 = vector.extract_strided_slice %46 {offsets = [0, 0], sizes = [10, 8], strides = [1, 1]} : vector<10x32xf32> to vector<10x8xf32>
    %60 = arith.truncf %59 : vector<10x8xf32> to vector<10x8xbf16>
    %cst_27 = arith.constant dense<0.000000e+00> : vector<10x10xf32>
    %61 = tpu.matmul %56, %58, %cst_27 {dimension_numbers = #tpu.dot_dimension_numbers<[1], [1], [0], [0], [0, 0, 1, 0], [], []>} : vector<10x8xbf16>, vector<10x8xbf16>, vector<10x10xf32> -> vector<10x10xf32>
    %62 = arith.addf %61, %52 : vector<10x10xf32>
    %cst_28 = arith.constant dense<0xFF800000> : vector<10xf32>
    %63 = vector.multi_reduction <maximumf>, %62, %cst_28 [1] : vector<10x10xf32> to vector<10xf32>
    %64 = vector.shape_cast %63 : vector<10xf32> to vector<10x1xf32>
    %65 = vector.broadcast %64 : vector<10x1xf32> to vector<10x10xf32>
    %66 = arith.subf %62, %65 : vector<10x10xf32>
    %67 = math.exp %66 : vector<10x10xf32>
    %cst_29 = arith.constant dense<0.000000e+00> : vector<10xf32>
    %68 = vector.multi_reduction <add>, %67, %cst_29 [1] : vector<10x10xf32> to vector<10xf32>
    %69 = vector.shape_cast %68 : vector<10xf32> to vector<10x1xf32>
    %70 = tpu.reciprocal %69 {approx = true} : vector<10x1xf32> -> vector<10x1xf32>
    %71 = vector.broadcast %70 : vector<10x1xf32> to vector<10x10xf32>
    %72 = arith.mulf %67, %71 : vector<10x10xf32>
    %73 = arith.truncf %72 : vector<10x10xf32> to vector<10x10xbf16>
    %cst_30 = arith.constant dense<0.000000e+00> : vector<10x8xf32>
    %74 = tpu.matmul %73, %60, %cst_30 {dimension_numbers = #tpu.dot_dimension_numbers<[1], [0], [0], [1], [0, 0, 1, 1], [], []>} : vector<10x10xbf16>, vector<10x8xbf16>, vector<10x8xf32> -> vector<10x8xf32>
    %75 = vector.extract_strided_slice %44 {offsets = [0, 8], sizes = [10, 8], strides = [1, 1]} : vector<10x32xf32> to vector<10x8xf32>
    %cst_31 = arith.constant 0.353553385 : f32
    %76 = vector.broadcast %cst_31 : f32 to vector<10x8xf32>
    %77 = arith.mulf %75, %76 : vector<10x8xf32>
    %78 = arith.truncf %77 : vector<10x8xf32> to vector<10x8xbf16>
    %79 = vector.extract_strided_slice %45 {offsets = [0, 8], sizes = [10, 8], strides = [1, 1]} : vector<10x32xf32> to vector<10x8xf32>
    %80 = arith.truncf %79 : vector<10x8xf32> to vector<10x8xbf16>
    %81 = vector.extract_strided_slice %46 {offsets = [0, 8], sizes = [10, 8], strides = [1, 1]} : vector<10x32xf32> to vector<10x8xf32>
    %82 = arith.truncf %81 : vector<10x8xf32> to vector<10x8xbf16>
    %cst_32 = arith.constant dense<0.000000e+00> : vector<10x10xf32>
    %83 = tpu.matmul %78, %80, %cst_32 {dimension_numbers = #tpu.dot_dimension_numbers<[1], [1], [0], [0], [0, 0, 1, 0], [], []>} : vector<10x8xbf16>, vector<10x8xbf16>, vector<10x10xf32> -> vector<10x10xf32>
    %84 = arith.addf %83, %52 : vector<10x10xf32>
    %cst_33 = arith.constant dense<0xFF800000> : vector<10xf32>
    %85 = vector.multi_reduction <maximumf>, %84, %cst_33 [1] : vector<10x10xf32> to vector<10xf32>
    %86 = vector.shape_cast %85 : vector<10xf32> to vector<10x1xf32>
    %87 = vector.broadcast %86 : vector<10x1xf32> to vector<10x10xf32>
    %88 = arith.subf %84, %87 : vector<10x10xf32>
    %89 = math.exp %88 : vector<10x10xf32>
    %cst_34 = arith.constant dense<0.000000e+00> : vector<10xf32>
    %90 = vector.multi_reduction <add>, %89, %cst_34 [1] : vector<10x10xf32> to vector<10xf32>
    %91 = vector.shape_cast %90 : vector<10xf32> to vector<10x1xf32>
    %92 = tpu.reciprocal %91 {approx = true} : vector<10x1xf32> -> vector<10x1xf32>
    %93 = vector.broadcast %92 : vector<10x1xf32> to vector<10x10xf32>
    %94 = arith.mulf %89, %93 : vector<10x10xf32>
    %95 = arith.truncf %94 : vector<10x10xf32> to vector<10x10xbf16>
    %cst_35 = arith.constant dense<0.000000e+00> : vector<10x8xf32>
    %96 = tpu.matmul %95, %82, %cst_35 {dimension_numbers = #tpu.dot_dimension_numbers<[1], [0], [0], [1], [0, 0, 1, 1], [], []>} : vector<10x10xbf16>, vector<10x8xbf16>, vector<10x8xf32> -> vector<10x8xf32>
    %97 = vector.extract_strided_slice %44 {offsets = [0, 16], sizes = [10, 8], strides = [1, 1]} : vector<10x32xf32> to vector<10x8xf32>
    %cst_36 = arith.constant 0.353553385 : f32
    %98 = vector.broadcast %cst_36 : f32 to vector<10x8xf32>
    %99 = arith.mulf %97, %98 : vector<10x8xf32>
    %100 = arith.truncf %99 : vector<10x8xf32> to vector<10x8xbf16>
    %101 = vector.extract_strided_slice %45 {offsets = [0, 16], sizes = [10, 8], strides = [1, 1]} : vector<10x32xf32> to vector<10x8xf32>
    %102 = arith.truncf %101 : vector<10x8xf32> to vector<10x8xbf16>
    %103 = vector.extract_strided_slice %46 {offsets = [0, 16], sizes = [10, 8], strides = [1, 1]} : vector<10x32xf32> to vector<10x8xf32>
    %104 = arith.truncf %103 : vector<10x8xf32> to vector<10x8xbf16>
    %cst_37 = arith.constant dense<0.000000e+00> : vector<10x10xf32>
    %105 = tpu.matmul %100, %102, %cst_37 {dimension_numbers = #tpu.dot_dimension_numbers<[1], [1], [0], [0], [0, 0, 1, 0], [], []>} : vector<10x8xbf16>, vector<10x8xbf16>, vector<10x10xf32> -> vector<10x10xf32>
    %106 = arith.addf %105, %52 : vector<10x10xf32>
    %cst_38 = arith.constant dense<0xFF800000> : vector<10xf32>
    %107 = vector.multi_reduction <maximumf>, %106, %cst_38 [1] : vector<10x10xf32> to vector<10xf32>
    %108 = vector.shape_cast %107 : vector<10xf32> to vector<10x1xf32>
    %109 = vector.broadcast %108 : vector<10x1xf32> to vector<10x10xf32>
    %110 = arith.subf %106, %109 : vector<10x10xf32>
    %111 = math.exp %110 : vector<10x10xf32>
    %cst_39 = arith.constant dense<0.000000e+00> : vector<10xf32>
    %112 = vector.multi_reduction <add>, %111, %cst_39 [1] : vector<10x10xf32> to vector<10xf32>
    %113 = vector.shape_cast %112 : vector<10xf32> to vector<10x1xf32>
    %114 = tpu.reciprocal %113 {approx = true} : vector<10x1xf32> -> vector<10x1xf32>
    %115 = vector.broadcast %114 : vector<10x1xf32> to vector<10x10xf32>
    %116 = arith.mulf %111, %115 : vector<10x10xf32>
    %117 = arith.truncf %116 : vector<10x10xf32> to vector<10x10xbf16>
    %cst_40 = arith.constant dense<0.000000e+00> : vector<10x8xf32>
    %118 = tpu.matmul %117, %104, %cst_40 {dimension_numbers = #tpu.dot_dimension_numbers<[1], [0], [0], [1], [0, 0, 1, 1], [], []>} : vector<10x10xbf16>, vector<10x8xbf16>, vector<10x8xf32> -> vector<10x8xf32>
    %119 = vector.extract_strided_slice %44 {offsets = [0, 24], sizes = [10, 8], strides = [1, 1]} : vector<10x32xf32> to vector<10x8xf32>
    %cst_41 = arith.constant 0.353553385 : f32
    %120 = vector.broadcast %cst_41 : f32 to vector<10x8xf32>
    %121 = arith.mulf %119, %120 : vector<10x8xf32>
    %122 = arith.truncf %121 : vector<10x8xf32> to vector<10x8xbf16>
    %123 = vector.extract_strided_slice %45 {offsets = [0, 24], sizes = [10, 8], strides = [1, 1]} : vector<10x32xf32> to vector<10x8xf32>
    %124 = arith.truncf %123 : vector<10x8xf32> to vector<10x8xbf16>
    %125 = vector.extract_strided_slice %46 {offsets = [0, 24], sizes = [10, 8], strides = [1, 1]} : vector<10x32xf32> to vector<10x8xf32>
    %126 = arith.truncf %125 : vector<10x8xf32> to vector<10x8xbf16>
    %cst_42 = arith.constant dense<0.000000e+00> : vector<10x10xf32>
    %127 = tpu.matmul %122, %124, %cst_42 {dimension_numbers = #tpu.dot_dimension_numbers<[1], [1], [0], [0], [0, 0, 1, 0], [], []>} : vector<10x8xbf16>, vector<10x8xbf16>, vector<10x10xf32> -> vector<10x10xf32>
    %128 = arith.addf %127, %52 : vector<10x10xf32>
    %cst_43 = arith.constant dense<0xFF800000> : vector<10xf32>
    %129 = vector.multi_reduction <maximumf>, %128, %cst_43 [1] : vector<10x10xf32> to vector<10xf32>
    %130 = vector.shape_cast %129 : vector<10xf32> to vector<10x1xf32>
    %131 = vector.broadcast %130 : vector<10x1xf32> to vector<10x10xf32>
    %132 = arith.subf %128, %131 : vector<10x10xf32>
    %133 = math.exp %132 : vector<10x10xf32>
    %cst_44 = arith.constant dense<0.000000e+00> : vector<10xf32>
    %134 = vector.multi_reduction <add>, %133, %cst_44 [1] : vector<10x10xf32> to vector<10xf32>
    %135 = vector.shape_cast %134 : vector<10xf32> to vector<10x1xf32>
    %136 = tpu.reciprocal %135 {approx = true} : vector<10x1xf32> -> vector<10x1xf32>
    %137 = vector.broadcast %136 : vector<10x1xf32> to vector<10x10xf32>
    %138 = arith.mulf %133, %137 : vector<10x10xf32>
    %139 = arith.truncf %138 : vector<10x10xf32> to vector<10x10xbf16>
    %cst_45 = arith.constant dense<0.000000e+00> : vector<10x8xf32>
    %140 = tpu.matmul %139, %126, %cst_45 {dimension_numbers = #tpu.dot_dimension_numbers<[1], [0], [0], [1], [0, 0, 1, 1], [], []>} : vector<10x10xbf16>, vector<10x8xbf16>, vector<10x8xf32> -> vector<10x8xf32>
    %141 = tpu.concatenate %74, %96, %118, %140 in 1 : vector<10x8xf32>, vector<10x8xf32>, vector<10x8xf32>, vector<10x8xf32> -> vector<10x32xf32>
    %142 = arith.truncf %141 : vector<10x32xf32> to vector<10x32xbf16>
    %c0_46 = arith.constant 0 : index
    %c0_47 = arith.constant 0 : index
    %143 = vector.load %arg8[%c0_46, %c0_47] : memref<32x32xbf16, #tpu.memory_space<vmem>>, vector<32x32xbf16>
    %cst_48 = arith.constant dense<0.000000e+00> : vector<10x32xf32>
    %144 = tpu.matmul %142, %143, %cst_48 {dimension_numbers = #tpu.dot_dimension_numbers<[1], [0], [0], [1], [0, 0, 1, 1], [], []>} : vector<10x32xbf16>, vector<32x32xbf16>, vector<10x32xf32> -> vector<10x32xf32>
    %c0_49 = arith.constant 0 : index
    %c0_50 = arith.constant 0 : index
    %145 = vector.load %arg9[%c0_49, %c0_50] : memref<1x32xbf16, #tpu.memory_space<vmem>>, vector<1x32xbf16>
    %146 = arith.extf %145 : vector<1x32xbf16> to vector<1x32xf32>
    %147 = vector.broadcast %146 : vector<1x32xf32> to vector<10x32xf32>
    %148 = arith.addf %144, %147 : vector<10x32xf32>
    %149 = arith.addf %36, %148 : vector<10x32xf32>
    %cst_51 = arith.constant dense<0.000000e+00> : vector<10xf32>
    %150 = vector.multi_reduction <add>, %149, %cst_51 [1] : vector<10x32xf32> to vector<10xf32>
    %151 = vector.shape_cast %150 : vector<10xf32> to vector<10x1xf32>
    %cst_52 = arith.constant 3.200000e+01 : f32
    %152 = vector.broadcast %cst_52 : f32 to vector<10x1xf32>
    %153 = arith.divf %151, %152 : vector<10x1xf32>
    %154 = vector.broadcast %153 : vector<10x1xf32> to vector<10x32xf32>
    %155 = arith.subf %149, %154 : vector<10x32xf32>
    %156 = arith.mulf %155, %155 : vector<10x32xf32>
    %cst_53 = arith.constant dense<0.000000e+00> : vector<10xf32>
    %157 = vector.multi_reduction <add>, %156, %cst_53 [1] : vector<10x32xf32> to vector<10xf32>
    %158 = vector.shape_cast %157 : vector<10xf32> to vector<10x1xf32>
    %cst_54 = arith.constant 3.200000e+01 : f32
    %159 = vector.broadcast %cst_54 : f32 to vector<10x1xf32>
    %160 = arith.divf %158, %159 : vector<10x1xf32>
    %cst_55 = arith.constant 9.99999974E-6 : f32
    %161 = vector.broadcast %cst_55 : f32 to vector<10x1xf32>
    %162 = arith.addf %160, %161 : vector<10x1xf32>
    %163 = math.rsqrt %162 : vector<10x1xf32>
    %164 = vector.broadcast %163 : vector<10x1xf32> to vector<10x32xf32>
    %165 = arith.mulf %155, %164 : vector<10x32xf32>
    %c0_56 = arith.constant 0 : index
    %c0_57 = arith.constant 0 : index
    %166 = vector.load %arg10[%c0_56, %c0_57] : memref<1x32xbf16, #tpu.memory_space<vmem>>, vector<1x32xbf16>
    %167 = arith.extf %166 : vector<1x32xbf16> to vector<1x32xf32>
    %168 = vector.broadcast %167 : vector<1x32xf32> to vector<10x32xf32>
    %169 = arith.mulf %165, %168 : vector<10x32xf32>
    %c0_58 = arith.constant 0 : index
    %c0_59 = arith.constant 0 : index
    %170 = vector.load %arg11[%c0_58, %c0_59] : memref<1x32xbf16, #tpu.memory_space<vmem>>, vector<1x32xbf16>
    %171 = arith.extf %170 : vector<1x32xbf16> to vector<1x32xf32>
    %172 = vector.broadcast %171 : vector<1x32xf32> to vector<10x32xf32>
    %173 = arith.addf %169, %172 : vector<10x32xf32>
    %174 = arith.truncf %173 : vector<10x32xf32> to vector<10x32xbf16>
    %c0_60 = arith.constant 0 : index
    %c0_61 = arith.constant 0 : index
    %175 = vector.load %arg12[%c0_60, %c0_61] : memref<32x32xbf16, #tpu.memory_space<vmem>>, vector<32x32xbf16>
    %cst_62 = arith.constant dense<0.000000e+00> : vector<10x32xf32>
    %176 = tpu.matmul %174, %175, %cst_62 {dimension_numbers = #tpu.dot_dimension_numbers<[1], [0], [0], [1], [0, 0, 1, 1], [], []>} : vector<10x32xbf16>, vector<32x32xbf16>, vector<10x32xf32> -> vector<10x32xf32>
    %c0_63 = arith.constant 0 : index
    %c0_64 = arith.constant 0 : index
    %177 = vector.load %arg13[%c0_63, %c0_64] : memref<1x32xbf16, #tpu.memory_space<vmem>>, vector<1x32xbf16>
    %178 = arith.extf %177 : vector<1x32xbf16> to vector<1x32xf32>
    %179 = vector.broadcast %178 : vector<1x32xf32> to vector<10x32xf32>
    %180 = arith.addf %176, %179 : vector<10x32xf32>
    %181 = arith.truncf %2 : vector<10x32xf32> to vector<10x32xbf16>
    %c0_65 = arith.constant 0 : index
    %c0_66 = arith.constant 0 : index
    %182 = vector.load %arg14[%c0_65, %c0_66] : memref<32x64xbf16, #tpu.memory_space<vmem>>, vector<32x64xbf16>
    %cst_67 = arith.constant dense<0.000000e+00> : vector<10x64xf32>
    %183 = tpu.matmul %181, %182, %cst_67 {dimension_numbers = #tpu.dot_dimension_numbers<[1], [0], [0], [1], [0, 0, 1, 1], [], []>} : vector<10x32xbf16>, vector<32x64xbf16>, vector<10x64xf32> -> vector<10x64xf32>
    %c0_68 = arith.constant 0 : index
    %c0_69 = arith.constant 0 : index
    %184 = vector.load %arg15[%c0_68, %c0_69] : memref<1x64xbf16, #tpu.memory_space<vmem>>, vector<1x64xbf16>
    %185 = arith.extf %184 : vector<1x64xbf16> to vector<1x64xf32>
    %186 = vector.broadcast %185 : vector<1x64xf32> to vector<10x64xf32>
    %187 = arith.addf %183, %186 : vector<10x64xf32>
    %188 = vector.extract_strided_slice %187 {offsets = [0, 0], sizes = [10, 32], strides = [1, 1]} : vector<10x64xf32> to vector<10x32xf32>
    %189 = vector.extract_strided_slice %187 {offsets = [0, 32], sizes = [10, 32], strides = [1, 1]} : vector<10x64xf32> to vector<10x32xf32>
    %190 = vector.extract_strided_slice %180 {offsets = [0, 0], sizes = [10, 8], strides = [1, 1]} : vector<10x32xf32> to vector<10x8xf32>
    %cst_70 = arith.constant 0.353553385 : f32
    %191 = vector.broadcast %cst_70 : f32 to vector<10x8xf32>
    %192 = arith.mulf %190, %191 : vector<10x8xf32>
    %193 = arith.truncf %192 : vector<10x8xf32> to vector<10x8xbf16>
    %194 = vector.extract_strided_slice %188 {offsets = [0, 0], sizes = [10, 8], strides = [1, 1]} : vector<10x32xf32> to vector<10x8xf32>
    %195 = arith.truncf %194 : vector<10x8xf32> to vector<10x8xbf16>
    %196 = vector.extract_strided_slice %189 {offsets = [0, 0], sizes = [10, 8], strides = [1, 1]} : vector<10x32xf32> to vector<10x8xf32>
    %197 = arith.truncf %196 : vector<10x8xf32> to vector<10x8xbf16>
    %cst_71 = arith.constant dense<0.000000e+00> : vector<10x10xf32>
    %198 = tpu.matmul %193, %195, %cst_71 {dimension_numbers = #tpu.dot_dimension_numbers<[1], [1], [0], [0], [0, 0, 1, 0], [], []>} : vector<10x8xbf16>, vector<10x8xbf16>, vector<10x10xf32> -> vector<10x10xf32>
    %199 = vector.broadcast %9 : vector<1x10xf32> to vector<10x10xf32>
    %200 = arith.addf %198, %199 : vector<10x10xf32>
    %cst_72 = arith.constant dense<0xFF800000> : vector<10xf32>
    %201 = vector.multi_reduction <maximumf>, %200, %cst_72 [1] : vector<10x10xf32> to vector<10xf32>
    %202 = vector.shape_cast %201 : vector<10xf32> to vector<10x1xf32>
    %203 = vector.broadcast %202 : vector<10x1xf32> to vector<10x10xf32>
    %204 = arith.subf %200, %203 : vector<10x10xf32>
    %205 = math.exp %204 : vector<10x10xf32>
    %cst_73 = arith.constant dense<0.000000e+00> : vector<10xf32>
    %206 = vector.multi_reduction <add>, %205, %cst_73 [1] : vector<10x10xf32> to vector<10xf32>
    %207 = vector.shape_cast %206 : vector<10xf32> to vector<10x1xf32>
    %208 = tpu.reciprocal %207 {approx = true} : vector<10x1xf32> -> vector<10x1xf32>
    %209 = vector.broadcast %208 : vector<10x1xf32> to vector<10x10xf32>
    %210 = arith.mulf %205, %209 : vector<10x10xf32>
    %211 = arith.truncf %210 : vector<10x10xf32> to vector<10x10xbf16>
    %cst_74 = arith.constant dense<0.000000e+00> : vector<10x8xf32>
    %212 = tpu.matmul %211, %197, %cst_74 {dimension_numbers = #tpu.dot_dimension_numbers<[1], [0], [0], [1], [0, 0, 1, 1], [], []>} : vector<10x10xbf16>, vector<10x8xbf16>, vector<10x8xf32> -> vector<10x8xf32>
    %213 = vector.extract_strided_slice %180 {offsets = [0, 8], sizes = [10, 8], strides = [1, 1]} : vector<10x32xf32> to vector<10x8xf32>
    %cst_75 = arith.constant 0.353553385 : f32
    %214 = vector.broadcast %cst_75 : f32 to vector<10x8xf32>
    %215 = arith.mulf %213, %214 : vector<10x8xf32>
    %216 = arith.truncf %215 : vector<10x8xf32> to vector<10x8xbf16>
    %217 = vector.extract_strided_slice %188 {offsets = [0, 8], sizes = [10, 8], strides = [1, 1]} : vector<10x32xf32> to vector<10x8xf32>
    %218 = arith.truncf %217 : vector<10x8xf32> to vector<10x8xbf16>
    %219 = vector.extract_strided_slice %189 {offsets = [0, 8], sizes = [10, 8], strides = [1, 1]} : vector<10x32xf32> to vector<10x8xf32>
    %220 = arith.truncf %219 : vector<10x8xf32> to vector<10x8xbf16>
    %cst_76 = arith.constant dense<0.000000e+00> : vector<10x10xf32>
    %221 = tpu.matmul %216, %218, %cst_76 {dimension_numbers = #tpu.dot_dimension_numbers<[1], [1], [0], [0], [0, 0, 1, 0], [], []>} : vector<10x8xbf16>, vector<10x8xbf16>, vector<10x10xf32> -> vector<10x10xf32>
    %222 = vector.broadcast %9 : vector<1x10xf32> to vector<10x10xf32>
    %223 = arith.addf %221, %222 : vector<10x10xf32>
    %cst_77 = arith.constant dense<0xFF800000> : vector<10xf32>
    %224 = vector.multi_reduction <maximumf>, %223, %cst_77 [1] : vector<10x10xf32> to vector<10xf32>
    %225 = vector.shape_cast %224 : vector<10xf32> to vector<10x1xf32>
    %226 = vector.broadcast %225 : vector<10x1xf32> to vector<10x10xf32>
    %227 = arith.subf %223, %226 : vector<10x10xf32>
    %228 = math.exp %227 : vector<10x10xf32>
    %cst_78 = arith.constant dense<0.000000e+00> : vector<10xf32>
    %229 = vector.multi_reduction <add>, %228, %cst_78 [1] : vector<10x10xf32> to vector<10xf32>
    %230 = vector.shape_cast %229 : vector<10xf32> to vector<10x1xf32>
    %231 = tpu.reciprocal %230 {approx = true} : vector<10x1xf32> -> vector<10x1xf32>
    %232 = vector.broadcast %231 : vector<10x1xf32> to vector<10x10xf32>
    %233 = arith.mulf %228, %232 : vector<10x10xf32>
    %234 = arith.truncf %233 : vector<10x10xf32> to vector<10x10xbf16>
    %cst_79 = arith.constant dense<0.000000e+00> : vector<10x8xf32>
    %235 = tpu.matmul %234, %220, %cst_79 {dimension_numbers = #tpu.dot_dimension_numbers<[1], [0], [0], [1], [0, 0, 1, 1], [], []>} : vector<10x10xbf16>, vector<10x8xbf16>, vector<10x8xf32> -> vector<10x8xf32>
    %236 = vector.extract_strided_slice %180 {offsets = [0, 16], sizes = [10, 8], strides = [1, 1]} : vector<10x32xf32> to vector<10x8xf32>
    %cst_80 = arith.constant 0.353553385 : f32
    %237 = vector.broadcast %cst_80 : f32 to vector<10x8xf32>
    %238 = arith.mulf %236, %237 : vector<10x8xf32>
    %239 = arith.truncf %238 : vector<10x8xf32> to vector<10x8xbf16>
    %240 = vector.extract_strided_slice %188 {offsets = [0, 16], sizes = [10, 8], strides = [1, 1]} : vector<10x32xf32> to vector<10x8xf32>
    %241 = arith.truncf %240 : vector<10x8xf32> to vector<10x8xbf16>
    %242 = vector.extract_strided_slice %189 {offsets = [0, 16], sizes = [10, 8], strides = [1, 1]} : vector<10x32xf32> to vector<10x8xf32>
    %243 = arith.truncf %242 : vector<10x8xf32> to vector<10x8xbf16>
    %cst_81 = arith.constant dense<0.000000e+00> : vector<10x10xf32>
    %244 = tpu.matmul %239, %241, %cst_81 {dimension_numbers = #tpu.dot_dimension_numbers<[1], [1], [0], [0], [0, 0, 1, 0], [], []>} : vector<10x8xbf16>, vector<10x8xbf16>, vector<10x10xf32> -> vector<10x10xf32>
    %245 = vector.broadcast %9 : vector<1x10xf32> to vector<10x10xf32>
    %246 = arith.addf %244, %245 : vector<10x10xf32>
    %cst_82 = arith.constant dense<0xFF800000> : vector<10xf32>
    %247 = vector.multi_reduction <maximumf>, %246, %cst_82 [1] : vector<10x10xf32> to vector<10xf32>
    %248 = vector.shape_cast %247 : vector<10xf32> to vector<10x1xf32>
    %249 = vector.broadcast %248 : vector<10x1xf32> to vector<10x10xf32>
    %250 = arith.subf %246, %249 : vector<10x10xf32>
    %251 = math.exp %250 : vector<10x10xf32>
    %cst_83 = arith.constant dense<0.000000e+00> : vector<10xf32>
    %252 = vector.multi_reduction <add>, %251, %cst_83 [1] : vector<10x10xf32> to vector<10xf32>
    %253 = vector.shape_cast %252 : vector<10xf32> to vector<10x1xf32>
    %254 = tpu.reciprocal %253 {approx = true} : vector<10x1xf32> -> vector<10x1xf32>
    %255 = vector.broadcast %254 : vector<10x1xf32> to vector<10x10xf32>
    %256 = arith.mulf %251, %255 : vector<10x10xf32>
    %257 = arith.truncf %256 : vector<10x10xf32> to vector<10x10xbf16>
    %cst_84 = arith.constant dense<0.000000e+00> : vector<10x8xf32>
    %258 = tpu.matmul %257, %243, %cst_84 {dimension_numbers = #tpu.dot_dimension_numbers<[1], [0], [0], [1], [0, 0, 1, 1], [], []>} : vector<10x10xbf16>, vector<10x8xbf16>, vector<10x8xf32> -> vector<10x8xf32>
    %259 = vector.extract_strided_slice %180 {offsets = [0, 24], sizes = [10, 8], strides = [1, 1]} : vector<10x32xf32> to vector<10x8xf32>
    %cst_85 = arith.constant 0.353553385 : f32
    %260 = vector.broadcast %cst_85 : f32 to vector<10x8xf32>
    %261 = arith.mulf %259, %260 : vector<10x8xf32>
    %262 = arith.truncf %261 : vector<10x8xf32> to vector<10x8xbf16>
    %263 = vector.extract_strided_slice %188 {offsets = [0, 24], sizes = [10, 8], strides = [1, 1]} : vector<10x32xf32> to vector<10x8xf32>
    %264 = arith.truncf %263 : vector<10x8xf32> to vector<10x8xbf16>
    %265 = vector.extract_strided_slice %189 {offsets = [0, 24], sizes = [10, 8], strides = [1, 1]} : vector<10x32xf32> to vector<10x8xf32>
    %266 = arith.truncf %265 : vector<10x8xf32> to vector<10x8xbf16>
    %cst_86 = arith.constant dense<0.000000e+00> : vector<10x10xf32>
    %267 = tpu.matmul %262, %264, %cst_86 {dimension_numbers = #tpu.dot_dimension_numbers<[1], [1], [0], [0], [0, 0, 1, 0], [], []>} : vector<10x8xbf16>, vector<10x8xbf16>, vector<10x10xf32> -> vector<10x10xf32>
    %268 = vector.broadcast %9 : vector<1x10xf32> to vector<10x10xf32>
    %269 = arith.addf %267, %268 : vector<10x10xf32>
    %cst_87 = arith.constant dense<0xFF800000> : vector<10xf32>
    %270 = vector.multi_reduction <maximumf>, %269, %cst_87 [1] : vector<10x10xf32> to vector<10xf32>
    %271 = vector.shape_cast %270 : vector<10xf32> to vector<10x1xf32>
    %272 = vector.broadcast %271 : vector<10x1xf32> to vector<10x10xf32>
    %273 = arith.subf %269, %272 : vector<10x10xf32>
    %274 = math.exp %273 : vector<10x10xf32>
    %cst_88 = arith.constant dense<0.000000e+00> : vector<10xf32>
    %275 = vector.multi_reduction <add>, %274, %cst_88 [1] : vector<10x10xf32> to vector<10xf32>
    %276 = vector.shape_cast %275 : vector<10xf32> to vector<10x1xf32>
    %277 = tpu.reciprocal %276 {approx = true} : vector<10x1xf32> -> vector<10x1xf32>
    %278 = vector.broadcast %277 : vector<10x1xf32> to vector<10x10xf32>
    %279 = arith.mulf %274, %278 : vector<10x10xf32>
    %280 = arith.truncf %279 : vector<10x10xf32> to vector<10x10xbf16>
    %cst_89 = arith.constant dense<0.000000e+00> : vector<10x8xf32>
    %281 = tpu.matmul %280, %266, %cst_89 {dimension_numbers = #tpu.dot_dimension_numbers<[1], [0], [0], [1], [0, 0, 1, 1], [], []>} : vector<10x10xbf16>, vector<10x8xbf16>, vector<10x8xf32> -> vector<10x8xf32>
    %282 = tpu.concatenate %212, %235, %258, %281 in 1 : vector<10x8xf32>, vector<10x8xf32>, vector<10x8xf32>, vector<10x8xf32> -> vector<10x32xf32>
    %283 = arith.truncf %282 : vector<10x32xf32> to vector<10x32xbf16>
    %c0_90 = arith.constant 0 : index
    %c0_91 = arith.constant 0 : index
    %284 = vector.load %arg16[%c0_90, %c0_91] : memref<32x32xbf16, #tpu.memory_space<vmem>>, vector<32x32xbf16>
    %cst_92 = arith.constant dense<0.000000e+00> : vector<10x32xf32>
    %285 = tpu.matmul %283, %284, %cst_92 {dimension_numbers = #tpu.dot_dimension_numbers<[1], [0], [0], [1], [0, 0, 1, 1], [], []>} : vector<10x32xbf16>, vector<32x32xbf16>, vector<10x32xf32> -> vector<10x32xf32>
    %c0_93 = arith.constant 0 : index
    %c0_94 = arith.constant 0 : index
    %286 = vector.load %arg17[%c0_93, %c0_94] : memref<1x32xbf16, #tpu.memory_space<vmem>>, vector<1x32xbf16>
    %287 = arith.extf %286 : vector<1x32xbf16> to vector<1x32xf32>
    %288 = vector.broadcast %287 : vector<1x32xf32> to vector<10x32xf32>
    %289 = arith.addf %285, %288 : vector<10x32xf32>
    %290 = arith.addf %173, %289 : vector<10x32xf32>
    %cst_95 = arith.constant dense<0.000000e+00> : vector<10xf32>
    %291 = vector.multi_reduction <add>, %290, %cst_95 [1] : vector<10x32xf32> to vector<10xf32>
    %292 = vector.shape_cast %291 : vector<10xf32> to vector<10x1xf32>
    %cst_96 = arith.constant 3.200000e+01 : f32
    %293 = vector.broadcast %cst_96 : f32 to vector<10x1xf32>
    %294 = arith.divf %292, %293 : vector<10x1xf32>
    %295 = vector.broadcast %294 : vector<10x1xf32> to vector<10x32xf32>
    %296 = arith.subf %290, %295 : vector<10x32xf32>
    %297 = arith.mulf %296, %296 : vector<10x32xf32>
    %cst_97 = arith.constant dense<0.000000e+00> : vector<10xf32>
    %298 = vector.multi_reduction <add>, %297, %cst_97 [1] : vector<10x32xf32> to vector<10xf32>
    %299 = vector.shape_cast %298 : vector<10xf32> to vector<10x1xf32>
    %cst_98 = arith.constant 3.200000e+01 : f32
    %300 = vector.broadcast %cst_98 : f32 to vector<10x1xf32>
    %301 = arith.divf %299, %300 : vector<10x1xf32>
    %cst_99 = arith.constant 9.99999974E-6 : f32
    %302 = vector.broadcast %cst_99 : f32 to vector<10x1xf32>
    %303 = arith.addf %301, %302 : vector<10x1xf32>
    %304 = math.rsqrt %303 : vector<10x1xf32>
    %305 = vector.broadcast %304 : vector<10x1xf32> to vector<10x32xf32>
    %306 = arith.mulf %296, %305 : vector<10x32xf32>
    %c0_100 = arith.constant 0 : index
    %c0_101 = arith.constant 0 : index
    %307 = vector.load %arg18[%c0_100, %c0_101] : memref<1x32xbf16, #tpu.memory_space<vmem>>, vector<1x32xbf16>
    %308 = arith.extf %307 : vector<1x32xbf16> to vector<1x32xf32>
    %309 = vector.broadcast %308 : vector<1x32xf32> to vector<10x32xf32>
    %310 = arith.mulf %306, %309 : vector<10x32xf32>
    %c0_102 = arith.constant 0 : index
    %c0_103 = arith.constant 0 : index
    %311 = vector.load %arg19[%c0_102, %c0_103] : memref<1x32xbf16, #tpu.memory_space<vmem>>, vector<1x32xbf16>
    %312 = arith.extf %311 : vector<1x32xbf16> to vector<1x32xf32>
    %313 = vector.broadcast %312 : vector<1x32xf32> to vector<10x32xf32>
    %314 = arith.addf %310, %313 : vector<10x32xf32>
    %315 = arith.truncf %314 : vector<10x32xf32> to vector<10x32xbf16>
    %c0_104 = arith.constant 0 : index
    %c0_105 = arith.constant 0 : index
    %316 = vector.load %arg20[%c0_104, %c0_105] : memref<32x64xbf16, #tpu.memory_space<vmem>>, vector<32x64xbf16>
    %cst_106 = arith.constant dense<0.000000e+00> : vector<10x64xf32>
    %317 = tpu.matmul %315, %316, %cst_106 {dimension_numbers = #tpu.dot_dimension_numbers<[1], [0], [0], [1], [0, 0, 1, 1], [], []>} : vector<10x32xbf16>, vector<32x64xbf16>, vector<10x64xf32> -> vector<10x64xf32>
    %c0_107 = arith.constant 0 : index
    %c0_108 = arith.constant 0 : index
    %318 = vector.load %arg21[%c0_107, %c0_108] : memref<1x64xbf16, #tpu.memory_space<vmem>>, vector<1x64xbf16>
    %319 = arith.extf %318 : vector<1x64xbf16> to vector<1x64xf32>
    %320 = vector.broadcast %319 : vector<1x64xf32> to vector<10x64xf32>
    %321 = arith.addf %317, %320 : vector<10x64xf32>
    %322 = arith.mulf %321, %321 : vector<10x64xf32>
    %323 = arith.mulf %321, %322 : vector<10x64xf32>
    %cst_109 = arith.constant 4.471500e-02 : f32
    %324 = vector.broadcast %cst_109 : f32 to vector<10x64xf32>
    %325 = arith.mulf %324, %323 : vector<10x64xf32>
    %326 = arith.addf %321, %325 : vector<10x64xf32>
    %cst_110 = arith.constant 0.797884583 : f32
    %327 = vector.broadcast %cst_110 : f32 to vector<10x64xf32>
    %328 = arith.mulf %327, %326 : vector<10x64xf32>
    %329 = math.tanh %328 : vector<10x64xf32>
    %cst_111 = arith.constant 1.000000e+00 : f32
    %330 = vector.broadcast %cst_111 : f32 to vector<10x64xf32>
    %331 = arith.addf %330, %329 : vector<10x64xf32>
    %cst_112 = arith.constant 5.000000e-01 : f32
    %332 = vector.broadcast %cst_112 : f32 to vector<10x64xf32>
    %333 = arith.mulf %332, %331 : vector<10x64xf32>
    %334 = arith.mulf %321, %333 : vector<10x64xf32>
    %335 = arith.truncf %334 : vector<10x64xf32> to vector<10x64xbf16>
    %c0_113 = arith.constant 0 : index
    %c0_114 = arith.constant 0 : index
    %336 = vector.load %arg22[%c0_113, %c0_114] : memref<64x32xbf16, #tpu.memory_space<vmem>>, vector<64x32xbf16>
    %cst_115 = arith.constant dense<0.000000e+00> : vector<10x32xf32>
    %337 = tpu.matmul %335, %336, %cst_115 {dimension_numbers = #tpu.dot_dimension_numbers<[1], [0], [0], [1], [0, 0, 1, 1], [], []>} : vector<10x64xbf16>, vector<64x32xbf16>, vector<10x32xf32> -> vector<10x32xf32>
    %c0_116 = arith.constant 0 : index
    %c0_117 = arith.constant 0 : index
    %338 = vector.load %arg23[%c0_116, %c0_117] : memref<1x32xbf16, #tpu.memory_space<vmem>>, vector<1x32xbf16>
    %339 = arith.extf %338 : vector<1x32xbf16> to vector<1x32xf32>
    %340 = vector.broadcast %339 : vector<1x32xf32> to vector<10x32xf32>
    %341 = arith.addf %337, %340 : vector<10x32xf32>
    %342 = arith.addf %314, %341 : vector<10x32xf32>
    %cst_118 = arith.constant dense<0.000000e+00> : vector<10xf32>
    %343 = vector.multi_reduction <add>, %342, %cst_118 [1] : vector<10x32xf32> to vector<10xf32>
    %344 = vector.shape_cast %343 : vector<10xf32> to vector<10x1xf32>
    %cst_119 = arith.constant 3.200000e+01 : f32
    %345 = vector.broadcast %cst_119 : f32 to vector<10x1xf32>
    %346 = arith.divf %344, %345 : vector<10x1xf32>
    %347 = vector.broadcast %346 : vector<10x1xf32> to vector<10x32xf32>
    %348 = arith.subf %342, %347 : vector<10x32xf32>
    %349 = arith.mulf %348, %348 : vector<10x32xf32>
    %cst_120 = arith.constant dense<0.000000e+00> : vector<10xf32>
    %350 = vector.multi_reduction <add>, %349, %cst_120 [1] : vector<10x32xf32> to vector<10xf32>
    %351 = vector.shape_cast %350 : vector<10xf32> to vector<10x1xf32>
    %cst_121 = arith.constant 3.200000e+01 : f32
    %352 = vector.broadcast %cst_121 : f32 to vector<10x1xf32>
    %353 = arith.divf %351, %352 : vector<10x1xf32>
    %cst_122 = arith.constant 9.99999974E-6 : f32
    %354 = vector.broadcast %cst_122 : f32 to vector<10x1xf32>
    %355 = arith.addf %353, %354 : vector<10x1xf32>
    %356 = math.rsqrt %355 : vector<10x1xf32>
    %357 = vector.broadcast %356 : vector<10x1xf32> to vector<10x32xf32>
    %358 = arith.mulf %348, %357 : vector<10x32xf32>
    %c0_123 = arith.constant 0 : index
    %c0_124 = arith.constant 0 : index
    %359 = vector.load %arg24[%c0_123, %c0_124] : memref<1x32xbf16, #tpu.memory_space<vmem>>, vector<1x32xbf16>
    %360 = arith.extf %359 : vector<1x32xbf16> to vector<1x32xf32>
    %361 = vector.broadcast %360 : vector<1x32xf32> to vector<10x32xf32>
    %362 = arith.mulf %358, %361 : vector<10x32xf32>
    %c0_125 = arith.constant 0 : index
    %c0_126 = arith.constant 0 : index
    %363 = vector.load %arg25[%c0_125, %c0_126] : memref<1x32xbf16, #tpu.memory_space<vmem>>, vector<1x32xbf16>
    %364 = arith.extf %363 : vector<1x32xbf16> to vector<1x32xf32>
    %365 = vector.broadcast %364 : vector<1x32xf32> to vector<10x32xf32>
    %366 = arith.addf %362, %365 : vector<10x32xf32>
    %367 = arith.truncf %366 : vector<10x32xf32> to vector<10x32xbf16>
    %c0_127 = arith.constant 0 : index
    %c0_128 = arith.constant 0 : index
    %368 = vector.load %arg26[%c0_127, %c0_128] : memref<32x23xbf16, #tpu.memory_space<vmem>>, vector<32x23xbf16>
    %cst_129 = arith.constant dense<0.000000e+00> : vector<10x23xf32>
    %369 = tpu.matmul %367, %368, %cst_129 {dimension_numbers = #tpu.dot_dimension_numbers<[1], [0], [0], [1], [0, 0, 1, 1], [], []>} : vector<10x32xbf16>, vector<32x23xbf16>, vector<10x23xf32> -> vector<10x23xf32>
    %c0_130 = arith.constant 0 : index
    %c0_131 = arith.constant 0 : index
    %370 = vector.load %arg27[%c0_130, %c0_131] : memref<1x23xbf16, #tpu.memory_space<vmem>>, vector<1x23xbf16>
    %371 = arith.extf %370 : vector<1x23xbf16> to vector<1x23xf32>
    %372 = vector.broadcast %371 : vector<1x23xf32> to vector<10x23xf32>
    %373 = arith.addf %369, %372 : vector<10x23xf32>
    %c0_132 = arith.constant 0 : index
    %c0_133 = arith.constant 0 : index
    %c0_134 = arith.constant 0 : index
    %374 = vector.load %arg28[%c0_132, %c0_133, %c0_134] : memref<1x10x23xf32, #tpu.memory_space<vmem>>, vector<1x10x23xf32>
    %375 = vector.shape_cast %374 : vector<1x10x23xf32> to vector<10x23xf32>
    %376 = vector.shape_cast %373 : vector<10x23xf32> to vector<1x10x23xf32>
    tpu.vector_store %arg28[%c0_132, %c0_133, %c0_134], %376 {strides = array<i32>} : memref<1x10x23xf32, #tpu.memory_space<vmem>>, vector<1x10x23xf32>,
    return
  }
  func.func @transform_0(%arg0: i32) -> (i32, i32, i32) {
    %c0_i32 = arith.constant 0 : i32
    %c0_i32_0 = arith.constant 0 : i32
    %c0_i32_1 = arith.constant 0 : i32
    %c0_i32_2 = arith.constant 0 : i32
    return %c0_i32, %c0_i32_0, %c0_i32_1 : i32, i32, i32
  }
  func.func @transform_1(%arg0: i32) -> (i32, i32, i32) {
    %c0_i32 = arith.constant 0 : i32
    %c0_i32_0 = arith.constant 0 : i32
    %c0_i32_1 = arith.constant 0 : i32
    return %arg0, %c0_i32, %c0_i32_0 : i32, i32, i32
  }
  func.func @transform_2(%arg0: i32) -> (i32, i32, i32) {
    %c0_i32 = arith.constant 0 : i32
    %c0_i32_0 = arith.constant 0 : i32
    %c0_i32_1 = arith.constant 0 : i32
    return %arg0, %c0_i32, %c0_i32_0 : i32, i32, i32
  }
  func.func @transform_3(%arg0: i32) -> (i32, i32) {
    %c0_i32 = arith.constant 0 : i32
    %c0_i32_0 = arith.constant 0 : i32
    %c0_i32_1 = arith.constant 0 : i32
    return %c0_i32, %c0_i32_0 : i32, i32
  }
  func.func @transform_4(%arg0: i32) -> (i32, i32) {
    %c0_i32 = arith.constant 0 : i32
    %c0_i32_0 = arith.constant 0 : i32
    %c0_i32_1 = arith.constant 0 : i32
    return %c0_i32, %c0_i32_0 : i32, i32
  }
  func.func @transform_5(%arg0: i32) -> (i32, i32) {
    %c0_i32 = arith.constant 0 : i32
    %c0_i32_0 = arith.constant 0 : i32
    %c0_i32_1 = arith.constant 0 : i32
    return %c0_i32, %c0_i32_0 : i32, i32
  }
  func.func @transform_6(%arg0: i32) -> (i32, i32) {
    %c0_i32 = arith.constant 0 : i32
    %c0_i32_0 = arith.constant 0 : i32
    %c0_i32_1 = arith.constant 0 : i32
    return %c0_i32, %c0_i32_0 : i32, i32
  }
  func.func @transform_7(%arg0: i32) -> (i32, i32) {
    %c0_i32 = arith.constant 0 : i32
    %c0_i32_0 = arith.constant 0 : i32
    %c0_i32_1 = arith.constant 0 : i32
    return %c0_i32, %c0_i32_0 : i32, i32
  }
  func.func @transform_8(%arg0: i32) -> (i32, i32) {
    %c0_i32 = arith.constant 0 : i32
    %c0_i32_0 = arith.constant 0 : i32
    %c0_i32_1 = arith.constant 0 : i32
    return %c0_i32, %c0_i32_0 : i32, i32
  }
  func.func @transform_9(%arg0: i32) -> (i32, i32) {
    %c0_i32 = arith.constant 0 : i32
    %c0_i32_0 = arith.constant 0 : i32
    %c0_i32_1 = arith.constant 0 : i32
    return %c0_i32, %c0_i32_0 : i32, i32
  }
  func.func @transform_10(%arg0: i32) -> (i32, i32) {
    %c0_i32 = arith.constant 0 : i32
    %c0_i32_0 = arith.constant 0 : i32
    %c0_i32_1 = arith.constant 0 : i32
    return %c0_i32, %c0_i32_0 : i32, i32
  }
  func.func @transform_11(%arg0: i32) -> (i32, i32) {
    %c0_i32 = arith.constant 0 : i32
    %c0_i32_0 = arith.constant 0 : i32
    %c0_i32_1 = arith.constant 0 : i32
    return %c0_i32, %c0_i32_0 : i32, i32
  }
  func.func @transform_12(%arg0: i32) -> (i32, i32) {
    %c0_i32 = arith.constant 0 : i32
    %c0_i32_0 = arith.constant 0 : i32
    %c0_i32_1 = arith.constant 0 : i32
    return %c0_i32, %c0_i32_0 : i32, i32
  }
  func.func @transform_13(%arg0: i32) -> (i32, i32) {
    %c0_i32 = arith.constant 0 : i32
    %c0_i32_0 = arith.constant 0 : i32
    %c0_i32_1 = arith.constant 0 : i32
    return %c0_i32, %c0_i32_0 : i32, i32
  }
  func.func @transform_14(%arg0: i32) -> (i32, i32) {
    %c0_i32 = arith.constant 0 : i32
    %c0_i32_0 = arith.constant 0 : i32
    %c0_i32_1 = arith.constant 0 : i32
    return %c0_i32, %c0_i32_0 : i32, i32
  }
  func.func @transform_15(%arg0: i32) -> (i32, i32) {
    %c0_i32 = arith.constant 0 : i32
    %c0_i32_0 = arith.constant 0 : i32
    %c0_i32_1 = arith.constant 0 : i32
    return %c0_i32, %c0_i32_0 : i32, i32
  }
  func.func @transform_16(%arg0: i32) -> (i32, i32) {
    %c0_i32 = arith.constant 0 : i32
    %c0_i32_0 = arith.constant 0 : i32
    %c0_i32_1 = arith.constant 0 : i32
    return %c0_i32, %c0_i32_0 : i32, i32
  }
  func.func @transform_17(%arg0: i32) -> (i32, i32) {
    %c0_i32 = arith.constant 0 : i32
    %c0_i32_0 = arith.constant 0 : i32
    %c0_i32_1 = arith.constant 0 : i32
    return %c0_i32, %c0_i32_0 : i32, i32
  }
  func.func @transform_18(%arg0: i32) -> (i32, i32) {
    %c0_i32 = arith.constant 0 : i32
    %c0_i32_0 = arith.constant 0 : i32
    %c0_i32_1 = arith.constant 0 : i32
    return %c0_i32, %c0_i32_0 : i32, i32
  }
  func.func @transform_19(%arg0: i32) -> (i32, i32) {
    %c0_i32 = arith.constant 0 : i32
    %c0_i32_0 = arith.constant 0 : i32
    %c0_i32_1 = arith.constant 0 : i32
    return %c0_i32, %c0_i32_0 : i32, i32
  }
  func.func @transform_20(%arg0: i32) -> (i32, i32) {
    %c0_i32 = arith.constant 0 : i32
    %c0_i32_0 = arith.constant 0 : i32
    %c0_i32_1 = arith.constant 0 : i32
    return %c0_i32, %c0_i32_0 : i32, i32
  }
  func.func @transform_21(%arg0: i32) -> (i32, i32) {
    %c0_i32 = arith.constant 0 : i32
    %c0_i32_0 = arith.constant 0 : i32
    %c0_i32_1 = arith.constant 0 : i32
    return %c0_i32, %c0_i32_0 : i32, i32
  }
  func.func @transform_22(%arg0: i32) -> (i32, i32) {
    %c0_i32 = arith.constant 0 : i32
    %c0_i32_0 = arith.constant 0 : i32
    %c0_i32_1 = arith.constant 0 : i32
    return %c0_i32, %c0_i32_0 : i32, i32
  }
  func.func @transform_23(%arg0: i32) -> (i32, i32) {
    %c0_i32 = arith.constant 0 : i32
    %c0_i32_0 = arith.constant 0 : i32
    %c0_i32_1 = arith.constant 0 : i32
    return %c0_i32, %c0_i32_0 : i32, i32
  }
  func.func @transform_24(%arg0: i32) -> (i32, i32) {
    %c0_i32 = arith.constant 0 : i32
    %c0_i32_0 = arith.constant 0 : i32
    %c0_i32_1 = arith.constant 0 : i32
    return %c0_i32, %c0_i32_0 : i32, i32
  }
  func.func @transform_25(%arg0: i32) -> (i32, i32) {
    %c0_i32 = arith.constant 0 : i32
    %c0_i32_0 = arith.constant 0 : i32
    %c0_i32_1 = arith.constant 0 : i32
    return %c0_i32, %c0_i32_0 : i32, i32
  }
  func.func @transform_26(%arg0: i32) -> (i32, i32) {
    %c0_i32 = arith.constant 0 : i32
    %c0_i32_0 = arith.constant 0 : i32
    %c0_i32_1 = arith.constant 0 : i32
    return %c0_i32, %c0_i32_0 : i32, i32
  }
  func.func @transform_27(%arg0: i32) -> (i32, i32, i32) {
    %c0_i32 = arith.constant 0 : i32
    %c0_i32_0 = arith.constant 0 : i32
    %c0_i32_1 = arith.constant 0 : i32
    return %arg0, %c0_i32, %c0_i32_0 : i32, i32, i32
  }
}

</mosaic_0001>

<llo_original>
// kernel: nere_forward.3
$region0: #{nere_forward.3}
  #allocation0 [shape = 'u32[]', space=smem, size = 0x4, offset = 0x4, fixed_abs, tag = 'smem constant byte address 0x4 - core index']
  #allocation1 [shape = 'u32[144,128]{1,0:T(1,128)}', space=vmem, size = 0x12000, scoped, tag = 'internal scratch']
  %s0 = inlined_call_operand.vmem [shape: bf16[2,8,32], index: 0, kind: input, shape index: {}]
  %s1 = inlined_call_operand.vmem [shape: f32[2,1,8], index: 1, kind: input, shape index: {}]
  %s2 = inlined_call_operand.vmem [shape: bf16[1,32], index: 2, kind: input, shape index: {}]
  %s3 = inlined_call_operand.vmem [shape: bf16[1,32], index: 3, kind: input, shape index: {}]
  %s4 = inlined_call_operand.vmem [shape: bf16[32,96], index: 4, kind: input, shape index: {}]
  %s5 = inlined_call_operand.vmem [shape: bf16[1,96], index: 5, kind: input, shape index: {}]
  %s6 = inlined_call_operand.vmem [shape: bf16[32,32], index: 6, kind: input, shape index: {}]
  %s7 = inlined_call_operand.vmem [shape: bf16[1,32], index: 7, kind: input, shape index: {}]
  %s8 = inlined_call_operand.vmem [shape: bf16[1,32], index: 8, kind: input, shape index: {}]
  %s9 = inlined_call_operand.vmem [shape: bf16[1,32], index: 9, kind: input, shape index: {}]
  %s10 = inlined_call_operand.vmem [shape: bf16[32,64], index: 10, kind: input, shape index: {}]
  %s11 = inlined_call_operand.vmem [shape: bf16[1,64], index: 11, kind: input, shape index: {}]
  %s12 = inlined_call_operand.vmem [shape: bf16[64,32], index: 12, kind: input, shape index: {}]
  %s13 = inlined_call_operand.vmem [shape: bf16[1,32], index: 13, kind: input, shape index: {}]
  %s14 = inlined_call_operand.vmem [shape: bf16[1,32], index: 14, kind: input, shape index: {}]
  %s15 = inlined_call_operand.vmem [shape: bf16[1,32], index: 15, kind: input, shape index: {}]
  %s16 = inlined_call_operand.vmem [shape: bf16[2,8,32], index: 16, kind: output, shape index: {}]
  %s17 = sld [smem:[#allocation0]]
  $region97: #{nere_forward.3} parent=0
    _
  %s19 = ssub.s32 1, %s17
  %s20 = scalar_select 0, %s19, %s17
  loop: start=0, step=1, limit=4
  $region2: #{nere_forward.3} parent=0 // loop_pre_header
    _
  $region3: #{nere_forward.3} parent=0 // loop_header
    %s22 = sphi 0, %s26
    %p23 = scmp.ge.s32.totalorder %s22, 4
    %s32 = sphi 0, %s34
    %s35 = sphi 0, %s32
    %s36 = sphi 0, %s35
    %s52 = sphi 0, %s36
    %s58 = sphi 0, %s60
    %s61 = sphi 0, %s58
    %s62 = sphi 0, %s61
    %s78 = sphi 0, %s62
    %s82 = sphi 0, %s82
    %s84 = sphi 0, %s82
    %s85 = sphi 0, %s84
    %s99 = sphi 0, %s85
    %s103 = sphi 0, %s103
    %s105 = sphi 0, %s103
    %s106 = sphi 0, %s105
    %s120 = sphi 0, %s106
    %s124 = sphi 0, %s124
    %s126 = sphi 0, %s124
    %s127 = sphi 0, %s126
    %s141 = sphi 0, %s127
    %s145 = sphi 0, %s145
    %s147 = sphi 0, %s145
    %s148 = sphi 0, %s147
    %s162 = sphi 0, %s148
    %s166 = sphi 0, %s166
    %s168 = sphi 0, %s166
    %s169 = sphi 0, %s168
    %s183 = sphi 0, %s169
    %s187 = sphi 0, %s187
    %s189 = sphi 0, %s187
    %s190 = sphi 0, %s189
    %s204 = sphi 0, %s190
    %s208 = sphi 0, %s208
    %s210 = sphi 0, %s208
    %s211 = sphi 0, %s210
    %s225 = sphi 0, %s211
    %s229 = sphi 0, %s229
    %s231 = sphi 0, %s229
    %s232 = sphi 0, %s231
    %s246 = sphi 0, %s232
    %s250 = sphi 0, %s250
    %s252 = sphi 0, %s250
    %s253 = sphi 0, %s252
    %s267 = sphi 0, %s253
    %s271 = sphi 0, %s271
    %s273 = sphi 0, %s271
    %s274 = sphi 0, %s273
    %s288 = sphi 0, %s274
    %s292 = sphi 0, %s292
    %s294 = sphi 0, %s292
    %s295 = sphi 0, %s294
    %s309 = sphi 0, %s295
    %s313 = sphi 0, %s313
    %s315 = sphi 0, %s313
    %s316 = sphi 0, %s315
    %s330 = sphi 0, %s316
    %s334 = sphi 0, %s334
    %s336 = sphi 0, %s334
    %s337 = sphi 0, %s336
    %s351 = sphi 0, %s337
    %s355 = sphi 0, %s355
    %s357 = sphi 0, %s355
    %s358 = sphi 0, %s357
    %s372 = sphi 0, %s358
    %s378 = sphi 0, %s380
    %s381 = sphi 0, %s378
    %s382 = sphi 0, %s381
    %s398 = sphi 0, %s382
  $region4: #{nere_forward.3} parent=0 // loop_header_branch
    %25 = sbr.rel (%p23) target = $region8
  $region5: #{nere_forward.3} parent=0 // loop_body
    %s27 = ssub.s32 %s22, 1
    %s28 = ssub.s32 %s22, 2
    %s29 = sadd.s32 %s22, 1
    %s30 = ssub.s32 %s22, %s29
    %p31 = scmp.eq.s32.totalorder %s30, 0
    %s33 = sadd.s32 %s32, 1
    %s34 = scalar_select %p31, %s32, %s33
    %p37 = pneg %p31
    %p38 = scmp.eq.s32.totalorder %s22, 1
    %p39 = por %p37, %p38
    %p40 = scmp.ne.s32.totalorder %s32, %s35
    %p41 = scmp.eq.s32.totalorder %s22, 0
    %p42 = por %p40, %p41
    %p43 = scmp.ne.s32.totalorder %s32, %s35
    %p44 = scmp.eq.s32.totalorder %s27, 1
    %p45 = por %p43, %p44
    %p46 = scmp.ne.s32.totalorder %s35, %s36
    %p47 = scmp.eq.s32.totalorder %s27, 0
    %p48 = por %p46, %p47
    %p49 = scmp.ne.s32.totalorder %s35, %s36
    %p50 = scmp.eq.s32.totalorder %s28, 1
    %p51 = por %p49, %p50
    %p53 = scmp.ne.s32.totalorder %s36, %s52
    %p54 = scmp.eq.s32.totalorder %s28, 0
    %p55 = por %p53, %p54
    %s56 = ssub.s32 %s22, %s29
    %p57 = scmp.eq.s32.totalorder %s56, 0
    %s59 = sadd.s32 %s58, 1
    %s60 = scalar_select %p57, %s58, %s59
    %p63 = pneg %p57
    %p64 = scmp.eq.s32.totalorder %s22, 1
    %p65 = por %p63, %p64
    %p66 = scmp.ne.s32.totalorder %s58, %s61
    %p67 = scmp.eq.s32.totalorder %s22, 0
    %p68 = por %p66, %p67
    %p69 = scmp.ne.s32.totalorder %s58, %s61
    %p70 = scmp.eq.s32.totalorder %s27, 1
    %p71 = por %p69, %p70
    %p72 = scmp.ne.s32.totalorder %s61, %s62
    %p73 = scmp.eq.s32.totalorder %s27, 0
    %p74 = por %p72, %p73
    %p75 = scmp.ne.s32.totalorder %s61, %s62
    %p76 = scmp.eq.s32.totalorder %s28, 1
    %p77 = por %p75, %p76
    %p79 = scmp.ne.s32.totalorder %s62, %s78
    %p80 = scmp.eq.s32.totalorder %s28, 0
    %p81 = por %p79, %p80
    %s83 = sadd.s32 %s82, 1
    %p86 = scmp.eq.s32.totalorder %s22, 1
    %p87 = scmp.ne.s32.totalorder %s82, %s84
    %p88 = scmp.eq.s32.totalorder %s22, 0
    %p89 = por %p87, %p88
    %p90 = scmp.ne.s32.totalorder %s82, %s84
    %p91 = scmp.eq.s32.totalorder %s27, 1
    %p92 = por %p90, %p91
    %p93 = scmp.ne.s32.totalorder %s84, %s85
    %p94 = scmp.eq.s32.totalorder %s27, 0
    %p95 = por %p93, %p94
    %p96 = scmp.ne.s32.totalorder %s84, %s85
    %p97 = scmp.eq.s32.totalorder %s28, 1
    %p98 = por %p96, %p97
    %p100 = scmp.ne.s32.totalorder %s85, %s99
    %p101 = scmp.eq.s32.totalorder %s28, 0
    %p102 = por %p100, %p101
    %s104 = sadd.s32 %s103, 1
    %p107 = scmp.eq.s32.totalorder %s22, 1
    %p108 = scmp.ne.s32.totalorder %s103, %s105
    %p109 = scmp.eq.s32.totalorder %s22, 0
    %p110 = por %p108, %p109
    %p111 = scmp.ne.s32.totalorder %s103, %s105
    %p112 = scmp.eq.s32.totalorder %s27, 1
    %p113 = por %p111, %p112
    %p114 = scmp.ne.s32.totalorder %s105, %s106
    %p115 = scmp.eq.s32.totalorder %s27, 0
    %p116 = por %p114, %p115
    %p117 = scmp.ne.s32.totalorder %s105, %s106
    %p118 = scmp.eq.s32.totalorder %s28, 1
    %p119 = por %p117, %p118
    %p121 = scmp.ne.s32.totalorder %s106, %s120
    %p122 = scmp.eq.s32.totalorder %s28, 0
    %p123 = por %p121, %p122
    %s125 = sadd.s32 %s124, 1
    %p128 = scmp.eq.s32.totalorder %s22, 1
    %p129 = scmp.ne.s32.totalorder %s124, %s126
    %p130 = scmp.eq.s32.totalorder %s22, 0
    %p131 = por %p129, %p130
    %p132 = scmp.ne.s32.totalorder %s124, %s126
    %p133 = scmp.eq.s32.totalorder %s27, 1
    %p134 = por %p132, %p133
    %p135 = scmp.ne.s32.totalorder %s126, %s127
    %p136 = scmp.eq.s32.totalorder %s27, 0
    %p137 = por %p135, %p136
    %p138 = scmp.ne.s32.totalorder %s126, %s127
    %p139 = scmp.eq.s32.totalorder %s28, 1
    %p140 = por %p138, %p139
    %p142 = scmp.ne.s32.totalorder %s127, %s141
    %p143 = scmp.eq.s32.totalorder %s28, 0
    %p144 = por %p142, %p143
    %s146 = sadd.s32 %s145, 1
    %p149 = scmp.eq.s32.totalorder %s22, 1
    %p150 = scmp.ne.s32.totalorder %s145, %s147
    %p151 = scmp.eq.s32.totalorder %s22, 0
    %p152 = por %p150, %p151
    %p153 = scmp.ne.s32.totalorder %s145, %s147
    %p154 = scmp.eq.s32.totalorder %s27, 1
    %p155 = por %p153, %p154
    %p156 = scmp.ne.s32.totalorder %s147, %s148
    %p157 = scmp.eq.s32.totalorder %s27, 0
    %p158 = por %p156, %p157
    %p159 = scmp.ne.s32.totalorder %s147, %s148
    %p160 = scmp.eq.s32.totalorder %s28, 1
    %p161 = por %p159, %p160
    %p163 = scmp.ne.s32.totalorder %s148, %s162
    %p164 = scmp.eq.s32.totalorder %s28, 0
    %p165 = por %p163, %p164
    %s167 = sadd.s32 %s166, 1
    %p170 = scmp.eq.s32.totalorder %s22, 1
    %p171 = scmp.ne.s32.totalorder %s166, %s168
    %p172 = scmp.eq.s32.totalorder %s22, 0
    %p173 = por %p171, %p172
    %p174 = scmp.ne.s32.totalorder %s166, %s168
    %p175 = scmp.eq.s32.totalorder %s27, 1
    %p176 = por %p174, %p175
    %p177 = scmp.ne.s32.totalorder %s168, %s169
    %p178 = scmp.eq.s32.totalorder %s27, 0
    %p179 = por %p177, %p178
    %p180 = scmp.ne.s32.totalorder %s168, %s169
    %p181 = scmp.eq.s32.totalorder %s28, 1
    %p182 = por %p180, %p181
    %p184 = scmp.ne.s32.totalorder %s169, %s183
    %p185 = scmp.eq.s32.totalorder %s28, 0
    %p186 = por %p184, %p185
    %s188 = sadd.s32 %s187, 1
    %p191 = scmp.eq.s32.totalorder %s22, 1
    %p192 = scmp.ne.s32.totalorder %s187, %s189
    %p193 = scmp.eq.s32.totalorder %s22, 0
    %p194 = por %p192, %p193
    %p195 = scmp.ne.s32.totalorder %s187, %s189
    %p196 = scmp.eq.s32.totalorder %s27, 1
    %p197 = por %p195, %p196
    %p198 = scmp.ne.s32.totalorder %s189, %s190
    %p199 = scmp.eq.s32.totalorder %s27, 0
    %p200 = por %p198, %p199
    %p201 = scmp.ne.s32.totalorder %s189, %s190
    %p202 = scmp.eq.s32.totalorder %s28, 1
    %p203 = por %p201, %p202
    %p205 = scmp.ne.s32.totalorder %s190, %s204
    %p206 = scmp.eq.s32.totalorder %s28, 0
    %p207 = por %p205, %p206
    %s209 = sadd.s32 %s208, 1
    %p212 = scmp.eq.s32.totalorder %s22, 1
    %p213 = scmp.ne.s32.totalorder %s208, %s210
    %p214 = scmp.eq.s32.totalorder %s22, 0
    %p215 = por %p213, %p214
    %p216 = scmp.ne.s32.totalorder %s208, %s210
    %p217 = scmp.eq.s32.totalorder %s27, 1
    %p218 = por %p216, %p217
    %p219 = scmp.ne.s32.totalorder %s210, %s211
    %p220 = scmp.eq.s32.totalorder %s27, 0
    %p221 = por %p219, %p220
    %p222 = scmp.ne.s32.totalorder %s210, %s211
    %p223 = scmp.eq.s32.totalorder %s28, 1
    %p224 = por %p222, %p223
    %p226 = scmp.ne.s32.totalorder %s211, %s225
    %p227 = scmp.eq.s32.totalorder %s28, 0
    %p228 = por %p226, %p227
    %s230 = sadd.s32 %s229, 1
    %p233 = scmp.eq.s32.totalorder %s22, 1
    %p234 = scmp.ne.s32.totalorder %s229, %s231
    %p235 = scmp.eq.s32.totalorder %s22, 0
    %p236 = por %p234, %p235
    %p237 = scmp.ne.s32.totalorder %s229, %s231
    %p238 = scmp.eq.s32.totalorder %s27, 1
    %p239 = por %p237, %p238
    %p240 = scmp.ne.s32.totalorder %s231, %s232
    %p241 = scmp.eq.s32.totalorder %s27, 0
    %p242 = por %p240, %p241
    %p243 = scmp.ne.s32.totalorder %s231, %s232
    %p244 = scmp.eq.s32.totalorder %s28, 1
    %p245 = por %p243, %p244
    %p247 = scmp.ne.s32.totalorder %s232, %s246
    %p248 = scmp.eq.s32.totalorder %s28, 0
    %p249 = por %p247, %p248
    %s251 = sadd.s32 %s250, 1
    %p254 = scmp.eq.s32.totalorder %s22, 1
    %p255 = scmp.ne.s32.totalorder %s250, %s252
    %p256 = scmp.eq.s32.totalorder %s22, 0
    %p257 = por %p255, %p256
    %p258 = scmp.ne.s32.totalorder %s250, %s252
    %p259 = scmp.eq.s32.totalorder %s27, 1
    %p260 = por %p258, %p259
    %p261 = scmp.ne.s32.totalorder %s252, %s253
    %p262 = scmp.eq.s32.totalorder %s27, 0
    %p263 = por %p261, %p262
    %p264 = scmp.ne.s32.totalorder %s252, %s253
    %p265 = scmp.eq.s32.totalorder %s28, 1
    %p266 = por %p264, %p265
    %p268 = scmp.ne.s32.totalorder %s253, %s267
    %p269 = scmp.eq.s32.totalorder %s28, 0
    %p270 = por %p268, %p269
    %s272 = sadd.s32 %s271, 1
    %p275 = scmp.eq.s32.totalorder %s22, 1
    %p276 = scmp.ne.s32.totalorder %s271, %s273
    %p277 = scmp.eq.s32.totalorder %s22, 0
    %p278 = por %p276, %p277
    %p279 = scmp.ne.s32.totalorder %s271, %s273
    %p280 = scmp.eq.s32.totalorder %s27, 1
    %p281 = por %p279, %p280
    %p282 = scmp.ne.s32.totalorder %s273, %s274
    %p283 = scmp.eq.s32.totalorder %s27, 0
    %p284 = por %p282, %p283
    %p285 = scmp.ne.s32.totalorder %s273, %s274
    %p286 = scmp.eq.s32.totalorder %s28, 1
    %p287 = por %p285, %p286
    %p289 = scmp.ne.s32.totalorder %s274, %s288
    %p290 = scmp.eq.s32.totalorder %s28, 0
    %p291 = por %p289, %p290
    %s293 = sadd.s32 %s292, 1
    %p296 = scmp.eq.s32.totalorder %s22, 1
    %p297 = scmp.ne.s32.totalorder %s292, %s294
    %p298 = scmp.eq.s32.totalorder %s22, 0
    %p299 = por %p297, %p298
    %p300 = scmp.ne.s32.totalorder %s292, %s294
    %p301 = scmp.eq.s32.totalorder %s27, 1
    %p302 = por %p300, %p301
    %p303 = scmp.ne.s32.totalorder %s294, %s295
    %p304 = scmp.eq.s32.totalorder %s27, 0
    %p305 = por %p303, %p304
    %p306 = scmp.ne.s32.totalorder %s294, %s295
    %p307 = scmp.eq.s32.totalorder %s28, 1
    %p308 = por %p306, %p307
    %p310 = scmp.ne.s32.totalorder %s295, %s309
    %p311 = scmp.eq.s32.totalorder %s28, 0
    %p312 = por %p310, %p311
    %s314 = sadd.s32 %s313, 1
    %p317 = scmp.eq.s32.totalorder %s22, 1
    %p318 = scmp.ne.s32.totalorder %s313, %s315
    %p319 = scmp.eq.s32.totalorder %s22, 0
    %p320 = por %p318, %p319
    %p321 = scmp.ne.s32.totalorder %s313, %s315
    %p322 = scmp.eq.s32.totalorder %s27, 1
    %p323 = por %p321, %p322
    %p324 = scmp.ne.s32.totalorder %s315, %s316
    %p325 = scmp.eq.s32.totalorder %s27, 0
    %p326 = por %p324, %p325
    %p327 = scmp.ne.s32.totalorder %s315, %s316
    %p328 = scmp.eq.s32.totalorder %s28, 1
    %p329 = por %p327, %p328
    %p331 = scmp.ne.s32.totalorder %s316, %s330
    %p332 = scmp.eq.s32.totalorder %s28, 0
    %p333 = por %p331, %p332
    %s335 = sadd.s32 %s334, 1
    %p338 = scmp.eq.s32.totalorder %s22, 1
    %p339 = scmp.ne.s32.totalorder %s334, %s336
    %p340 = scmp.eq.s32.totalorder %s22, 0
    %p341 = por %p339, %p340
    %p342 = scmp.ne.s32.totalorder %s334, %s336
    %p343 = scmp.eq.s32.totalorder %s27, 1
    %p344 = por %p342, %p343
    %p345 = scmp.ne.s32.totalorder %s336, %s337
    %p346 = scmp.eq.s32.totalorder %s27, 0
    %p347 = por %p345, %p346
    %p348 = scmp.ne.s32.totalorder %s336, %s337
    %p349 = scmp.eq.s32.totalorder %s28, 1
    %p350 = por %p348, %p349
    %p352 = scmp.ne.s32.totalorder %s337, %s351
    %p353 = scmp.eq.s32.totalorder %s28, 0
    %p354 = por %p352, %p353
    %s356 = sadd.s32 %s355, 1
    %p359 = scmp.eq.s32.totalorder %s22, 1
    %p360 = scmp.ne.s32.totalorder %s355, %s357
    %p361 = scmp.eq.s32.totalorder %s22, 0
    %p362 = por %p360, %p361
    %p363 = scmp.ne.s32.totalorder %s355, %s357
    %p364 = scmp.eq.s32.totalorder %s27, 1
    %p365 = por %p363, %p364
    %p366 = scmp.ne.s32.totalorder %s357, %s358
    %p367 = scmp.eq.s32.totalorder %s27, 0
    %p368 = por %p366, %p367
    %p369 = scmp.ne.s32.totalorder %s357, %s358
    %p370 = scmp.eq.s32.totalorder %s28, 1
    %p371 = por %p369, %p370
    %p373 = scmp.ne.s32.totalorder %s358, %s372
    %p374 = scmp.eq.s32.totalorder %s28, 0
    %p375 = por %p373, %p374
    %s376 = ssub.s32 %s22, %s29
    %p377 = scmp.eq.s32.totalorder %s376, 0
    %s379 = sadd.s32 %s378, 1
    %s380 = scalar_select %p377, %s378, %s379
    %p383 = pneg %p377
    %p384 = scmp.eq.s32.totalorder %s22, 1
    %p385 = por %p383, %p384
    %p386 = scmp.ne.s32.totalorder %s378, %s381
    %p387 = scmp.eq.s32.totalorder %s22, 0
    %p388 = por %p386, %p387
    %p389 = scmp.ne.s32.totalorder %s378, %s381
    %p390 = scmp.eq.s32.totalorder %s27, 1
    %p391 = por %p389, %p390
    %p392 = scmp.ne.s32.totalorder %s381, %s382
    %p393 = scmp.eq.s32.totalorder %s27, 0
    %p394 = por %p392, %p393
    %p395 = scmp.ne.s32.totalorder %s381, %s382
    %p396 = scmp.eq.s32.totalorder %s28, 1
    %p397 = por %p395, %p396
    %p399 = scmp.ne.s32.totalorder %s382, %s398
    %p400 = scmp.eq.s32.totalorder %s28, 0
    %p401 = por %p399, %p400
    %p402 = scmp.le.s32.totalorder 1, %s22
    %p403 = scmp.lt.s32.totalorder %s22, 3
    %p404 = pnand %p402, %p403
    %p405 = pneg %p404
    // Predicated region
    $region9: #{nere_forward.3} parent=5 // pred_check
      _
    $region10: #{nere_forward.3} parent=5 // pred_check_branch
      %407 = sbr.rel (%p404) target = $region12
    $region11: #{nere_forward.3} parent=5 // pred_region
      %s408 = ssub.s32 %s22, 1
      // Predicated region
      $region13: #{nere_forward.3} parent=11 // pred_check
        %p409 = pneg %p95
      $region14: #{nere_forward.3} parent=11 // pred_check_branch
        %411 = sbr.rel (%p409) target = $region16
      $region15: #{nere_forward.3} parent=11 // pred_region
        _
      $region16: #{nere_forward.3} parent=11 // pred_fallthru
        _
      // Predicated region
      $region17: #{nere_forward.3} parent=11 // pred_check
        %p412 = pneg %p116
      $region18: #{nere_forward.3} parent=11 // pred_check_branch
        %414 = sbr.rel (%p412) target = $region20
      $region19: #{nere_forward.3} parent=11 // pred_region
        _
      $region20: #{nere_forward.3} parent=11 // pred_fallthru
        _
      // Predicated region
      $region21: #{nere_forward.3} parent=11 // pred_check
        %p415 = pneg %p137
      $region22: #{nere_forward.3} parent=11 // pred_check_branch
        %417 = sbr.rel (%p415) target = $region24
      $region23: #{nere_forward.3} parent=11 // pred_region
        _
      $region24: #{nere_forward.3} parent=11 // pred_fallthru
        _
      // Predicated region
      $region25: #{nere_forward.3} parent=11 // pred_check
        %p418 = pneg %p158
      $region26: #{nere_forward.3} parent=11 // pred_check_branch
        %420 = sbr.rel (%p418) target = $region28
      $region27: #{nere_forward.3} parent=11 // pred_region
        _
      $region28: #{nere_forward.3} parent=11 // pred_fallthru
        _
      // Predicated region
      $region29: #{nere_forward.3} parent=11 // pred_check
        %p421 = pneg %p179
      $region30: #{nere_forward.3} parent=11 // pred_check_branch
        %423 = sbr.rel (%p421) target = $region32
      $region31: #{nere_forward.3} parent=11 // pred_region
        _
      $region32: #{nere_forward.3} parent=11 // pred_fallthru
        _
      // Predicated region
      $region33: #{nere_forward.3} parent=11 // pred_check
        %p424 = pneg %p200
      $region34: #{nere_forward.3} parent=11 // pred_check_branch
        %426 = sbr.rel (%p424) target = $region36
      $region35: #{nere_forward.3} parent=11 // pred_region
        _
      $region36: #{nere_forward.3} parent=11 // pred_fallthru
        _
      // Predicated region
      $region37: #{nere_forward.3} parent=11 // pred_check
        %p427 = pneg %p221
      $region38: #{nere_forward.3} parent=11 // pred_check_branch
        %429 = sbr.rel (%p427) target = $region40
      $region39: #{nere_forward.3} parent=11 // pred_region
        _
      $region40: #{nere_forward.3} parent=11 // pred_fallthru
        _
      // Predicated region
      $region41: #{nere_forward.3} parent=11 // pred_check
        %p430 = pneg %p242
      $region42: #{nere_forward.3} parent=11 // pred_check_branch
        %432 = sbr.rel (%p430) target = $region44
      $region43: #{nere_forward.3} parent=11 // pred_region
        _
      $region44: #{nere_forward.3} parent=11 // pred_fallthru
        _
      // Predicated region
      $region45: #{nere_forward.3} parent=11 // pred_check
        %p433 = pneg %p263
      $region46: #{nere_forward.3} parent=11 // pred_check_branch
        %435 = sbr.rel (%p433) target = $region48
      $region47: #{nere_forward.3} parent=11 // pred_region
        _
      $region48: #{nere_forward.3} parent=11 // pred_fallthru
        _
      // Predicated region
      $region49: #{nere_forward.3} parent=11 // pred_check
        %p436 = pneg %p284
      $region50: #{nere_forward.3} parent=11 // pred_check_branch
        %438 = sbr.rel (%p436) target = $region52
      $region51: #{nere_forward.3} parent=11 // pred_region
        _
      $region52: #{nere_forward.3} parent=11 // pred_fallthru
        _
      // Predicated region
      $region53: #{nere_forward.3} parent=11 // pred_check
        %p439 = pneg %p305
      $region54: #{nere_forward.3} parent=11 // pred_check_branch
        %441 = sbr.rel (%p439) target = $region56
      $region55: #{nere_forward.3} parent=11 // pred_region
        _
      $region56: #{nere_forward.3} parent=11 // pred_fallthru
        _
      // Predicated region
      $region57: #{nere_forward.3} parent=11 // pred_check
        %p442 = pneg %p326
      $region58: #{nere_forward.3} parent=11 // pred_check_branch
        %444 = sbr.rel (%p442) target = $region60
      $region59: #{nere_forward.3} parent=11 // pred_region
        _
      $region60: #{nere_forward.3} parent=11 // pred_fallthru
        _
      // Predicated region
      $region61: #{nere_forward.3} parent=11 // pred_check
        %p445 = pneg %p347
      $region62: #{nere_forward.3} parent=11 // pred_check_branch
        %447 = sbr.rel (%p445) target = $region64
      $region63: #{nere_forward.3} parent=11 // pred_region
        _
      $region64: #{nere_forward.3} parent=11 // pred_fallthru
        _
      // Predicated region
      $region65: #{nere_forward.3} parent=11 // pred_check
        %p448 = pneg %p368
      $region66: #{nere_forward.3} parent=11 // pred_check_branch
        %450 = sbr.rel (%p448) target = $region68
      $region67: #{nere_forward.3} parent=11 // pred_region
        _
      $region68: #{nere_forward.3} parent=11 // pred_fallthru
        _
    $region12: #{nere_forward.3} parent=5 // pred_fallthru
      _
    %p451 = scmp.lt.s32.totalorder %s22, 2
    // Predicated region
    $region69: #{nere_forward.3} parent=5 // pred_check
      %p452 = pneg %p451
    $region70: #{nere_forward.3} parent=5 // pred_check_branch
      %454 = sbr.rel (%p452) target = $region72
    $region71: #{nere_forward.3} parent=5 // pred_region
      // Predicated region
      $region73: #{nere_forward.3} parent=71 // pred_check
        %p455 = pneg %p42
      $region74: #{nere_forward.3} parent=71 // pred_check_branch
        %457 = sbr.rel (%p455) target = $region76
      $region75: #{nere_forward.3} parent=71 // pred_region
        %p458 = scmp.lt.s32.totalorder %s22, 1
        %s459 = scalar_select %p458, %s22, 1
        %s460 = smul.addr %s459, 4
        %s461 = scalar_lea.vmem %s0, %s460
      $region76: #{nere_forward.3} parent=71 // pred_fallthru
        _
      // Predicated region
      $region77: #{nere_forward.3} parent=71 // pred_check
        %p462 = pneg %p68
      $region78: #{nere_forward.3} parent=71 // pred_check_branch
        %464 = sbr.rel (%p462) target = $region80
      $region79: #{nere_forward.3} parent=71 // pred_region
        %p465 = scmp.lt.s32.totalorder %s22, 1
        %s466 = scalar_select %p465, %s22, 1
        %s467 = scalar_lea.vmem %s1, %s466
      $region80: #{nere_forward.3} parent=71 // pred_fallthru
        _
    $region72: #{nere_forward.3} parent=5 // pred_fallthru
      _
    %p468 = scmp.le.s32.totalorder 1, %s22
    %p469 = scmp.lt.s32.totalorder %s22, 3
    %p470 = pnand %p468, %p469
    %p471 = pneg %p470
    // Predicated region
    $region81: #{nere_forward.3} parent=5 // pred_check
      _
    $region82: #{nere_forward.3} parent=5 // pred_check_branch
      %473 = sbr.rel (%p470) target = $region84
    $region83: #{nere_forward.3} parent=5 // pred_region
      %s474 = ssub.s32 %s22, 1
      %p475 = scmp.lt.s32.totalorder %s27, 1
      %s476 = scalar_select %p475, %s27, 1
      %s477 = smul.addr %s476, 4
      %s478 = scalar_lea.vmem %s0, %s477
      %p479 = pneg %p48
      %p480 = pneg %p45
      %p481 = scmp.lt.s32.totalorder %s27, 1
      %s482 = scalar_select %p481, %s27, 1
      %s483 = scalar_lea.vmem %s1, %s482
      %p484 = pneg %p74
      %p485 = pneg %p71
      %p486 = pneg %p95
      %p487 = pneg %p92
      %p488 = pneg %p116
      %p489 = pneg %p113
      %p490 = pneg %p137
      %p491 = pneg %p134
      %p492 = pneg %p158
      %p493 = pneg %p155
      %p494 = pneg %p179
      %p495 = pneg %p176
      %p496 = pneg %p200
      %p497 = pneg %p197
      %p498 = pneg %p221
      %p499 = pneg %p218
      %p500 = pneg %p242
      %p501 = pneg %p239
      %p502 = pneg %p263
      %p503 = pneg %p260
      %p504 = pneg %p284
      %p505 = pneg %p281
      %p506 = pneg %p305
      %p507 = pneg %p302
      %p508 = pneg %p326
      %p509 = pneg %p323
      %p510 = pneg %p347
      %p511 = pneg %p344
      %p512 = pneg %p368
      %p513 = pneg %p365
      %p514 = pneg %p394
      %p515 = pneg %p391
      %p516 = scmp.lt.s32.totalorder %s27, 1
      %s517 = scalar_select %p516, %s27, 1
      %s518 = smul.addr %s517, 4
      %s519 = scalar_lea.vmem %s16, %s518
      %p520 = scmp.lt.s32.totalorder %s27, 1
      %s521 = scalar_select %p520, %s27, 1
      %s522 = smul.addr %s521, 4
      %s523 = scalar_lea.vmem %s0, %s522
      %p524 = scmp.lt.s32.totalorder %s27, 1
      %s525 = scalar_select %p524, %s27, 1
      %s526 = scalar_lea.vmem %s1, %s525
      %p527 = scmp.lt.s32.totalorder %s27, 1
      %s528 = scalar_select %p527, %s27, 1
      %s529 = smul.addr %s528, 4
      %s530 = scalar_lea.vmem %s16, %s529
      %v532 = vld [vmem:[%s523] sm:$0xf]
      %v533 = vunpack.c.l.bf16 %v532
      %v534 = vld [vmem:[%s526] sm:$0x1]
      %vm535 = vcmp.gt.f32.partialorder %v534, 0.0
      %v536 = vsel %vm535, 0.0, -1e+09
      %vm537 = vcmask 261120
      %v538 = vsel %vm537, %v533, 0.0
      %539 = vadd.xlane.f32.xlu0 %v538
      %v540 = vpop.xlane.xlu0 %539
      %v541 = vrcp.pop 32.0
      %v542 = vmul.f32 %v540, %v541
      %v543 = vsub.f32 %v533, %v542
      %v544 = vmul.f32 %v543, %v543
      %v545 = vsel %vm537, %v544, 0.0
      %546 = vadd.xlane.f32.xlu0 %v545
      %v547 = vpop.xlane.xlu0 %546
      %v548 = vmul.f32 %v547, %v541
      %v549 = vadd.f32 %v548, 1e-05
      %v550 = vrsqrt.pop %v549
      %v551 = vmul.f32 %v543, %v550
      %v552 = vld [vmem:[%s2] sm:$0x1]
      %v553 = vunpack.c.l.bf16 %v552
      %v554 = vlaneseq
      %v555 = vshrl.u32 %v554, 7
      %v556 = vsub.s32 0, %v555
      %v557 = vrot.slane %v553, %v556
      %v558 = vmul.f32 %v551, %v557
      %v559 = vld [vmem:[%s3] sm:$0x1]
      %v560 = vunpack.c.l.bf16 %v559
      %v561 = vlaneseq
      %v562 = vshrl.u32 %v561, 7
      %v563 = vsub.s32 0, %v562
      %v564 = vrot.slane %v560, %v563
      %v565 = vadd.f32 %v558, %v564
      %v566 = vpack.c.bf16 %v565, %v565
      %v567 = vld [vmem:[%s4] sm:$0xf]
      %v568 = vld [vmem:[%s4 + $0x4] sm:$0xf]
      %v569 = vld [vmem:[%s4 + $0x8] sm:$0xf]
      %v570 = vld [vmem:[%s4 + $0xc] sm:$0xf]
      %v571 = vld [vmem:[%s5] sm:$0x1]
      %v572 = vunpack.c.l.bf16 %v571
      %v573 = vlaneseq
      %v574 = vshrl.u32 %v573, 7
      %v575 = vsub.s32 0, %v574
      %v576 = vrot.slane %v572, %v575
      %v581 = vunpack.c.l.b16 %v567
      %v582 = vunpack.c.l.b16 %v568
      %v583 = vunpack.c.l.b16 %v569
      %v584 = vunpack.c.l.b16 %v570
      %v585 = vpack.c.b16 %v582, %v581
      %v586 = vpack.c.b16 %v584, %v583
      %v590 = vsel %vm537, %v566, 0
      %592 = vmatprep.subr.bf16.mxu0 0
      %593 = vmatpush1.bf16.msra.mxu0 %v585
      %594 = vmatprep.subr.bf16.mxu0 0
      %595 = vmatpush1.bf16.msra.mxu0 %v586
      %596 = vmatprep.subr.bf16.mxu0 0
      %597 = vmatpush1.bf16.msra.mxu0 0
      %598 = vmatprep.subr.bf16.mxu0 0
      %599 = vmatpush1.bf16.msra.mxu0 0
      %600 = vmatprep.subr.bf16.mxu0 0
      %601 = vmatpush1.bf16.msra.mxu0 0
      %602 = vmatprep.subr.bf16.mxu0 0
      %603 = vmatpush1.bf16.msra.mxu0 0
      %604 = vmatprep.subr.bf16.mxu0 0
      %605 = vmatpush1.bf16.msra.mxu0 0
      %606 = vmatprep.subr.bf16.mxu0 0
      %607 = vmatpush1.bf16.msra.mxu0 0
      %608 = vmatprep.subr.bf16.mxu0 0
      %609 = vmatpush1.bf16.msra.mxu0 0
      %610 = vmatprep.subr.bf16.mxu0 0
      %611 = vmatpush1.bf16.msra.mxu0 0
      %612 = vmatprep.subr.bf16.mxu0 0
      %613 = vmatpush1.bf16.msra.mxu0 0
      %614 = vmatprep.subr.bf16.mxu0 0
      %615 = vmatpush1.bf16.msra.mxu0 0
      %616 = vmatprep.subr.bf16.mxu0 0
      %617 = vmatpush1.bf16.msra.mxu0 0
      %618 = vmatprep.subr.bf16.mxu0 0
      %619 = vmatpush1.bf16.msra.mxu0 0
      %620 = vmatprep.subr.bf16.mxu0 0
      %621 = vmatpush1.bf16.msra.mxu0 0
      %622 = vmatprep.subr.bf16.mxu0 0
      %623 = vmatpush1.bf16.msra.mxu0 0
      %624 = vmatprep.mubr.bf16.mxu0 0
      %625 = vmatmul.mubr.bf16.gmra.mrb[0].mxu0 %v590
      %v626 = vpop.f32.mrb[0].mxu0
      %v627 = vadd.f32 %v576, %v626
      %v628 = vpop.f32.mrb[0].mxu0
      %v629 = vpop.f32.mrb[0].mxu0
      %v630 = vpop.f32.mrb[0].mxu0
      %631 = vdwg.mxu0
      %v632 = vmul.f32 %v627, 0.35355338
      %v633 = vpack.c.bf16 %v632, %v632
      %v634 = vpack.c.bf16 %v627, %v627
      %v636 = vlaneseq
      %v637 = vshrl.u32 %v636, 7
      %v638 = vsub.s32 0, %v637
      %v639 = vrot.slane %v536, %v638
      %642 = vrot.lane.b32.xlu0 %v634, 96
      %v643 = vpop.permute.xlu0 %642
      %vm644 = vcmask 64512
      %v646 = vsel %vm644, %v633, 0
      %v649 = vsel %vm644, %v643, 0
      %651 = vmatprep.subr.bf16.mxu0 0
      %652 = vmatpush1.bf16.xpose.msra.mxu0 %v649
      %653 = vmatprep.subr.bf16.mxu0 0
      %654 = vmatpush1.bf16.xpose.msra.mxu0 0
      %655 = vmatprep.subr.bf16.mxu0 0
      %656 = vmatpush1.bf16.xpose.msra.mxu0 0
      %657 = vmatprep.subr.bf16.mxu0 0
      %658 = vmatpush1.bf16.xpose.msra.mxu0 0
      %659 = vmatprep.subr.bf16.mxu0 0
      %660 = vmatpush1.bf16.xpose.msra.mxu0 0
      %661 = vmatprep.subr.bf16.mxu0 0
      %662 = vmatpush1.bf16.xpose.msra.mxu0 0
      %663 = vmatprep.subr.bf16.mxu0 0
      %664 = vmatpush1.bf16.xpose.msra.mxu0 0
      %665 = vmatprep.subr.bf16.mxu0 0
      %666 = vmatpush1.bf16.xpose.msra.mxu0 0
      %667 = vmatprep.subr.bf16.mxu0 0
      %668 = vmatpush1.bf16.xpose.msra.mxu0 0
      %669 = vmatprep.subr.bf16.mxu0 0
      %670 = vmatpush1.bf16.xpose.msra.mxu0 0
      %671 = vmatprep.subr.bf16.mxu0 0
      %672 = vmatpush1.bf16.xpose.msra.mxu0 0
      %673 = vmatprep.subr.bf16.mxu0 0
      %674 = vmatpush1.bf16.xpose.msra.mxu0 0
      %675 = vmatprep.subr.bf16.mxu0 0
      %676 = vmatpush1.bf16.xpose.msra.mxu0 0
      %677 = vmatprep.subr.bf16.mxu0 0
      %678 = vmatpush1.bf16.xpose.msra.mxu0 0
      %679 = vmatprep.subr.bf16.mxu0 0
      %680 = vmatpush1.bf16.xpose.msra.mxu0 0
      %681 = vmatprep.subr.bf16.mxu0 0
      %682 = vmatpush1.bf16.xpose.msra.mxu0 0
      %683 = vmatprep.mubr.bf16.mxu0 0
      %684 = vmatmul.mubr.bf16.gmra.mrb[0].mxu0 %v646
      %v685 = vpop.f32.mrb[0].mxu0
      %v686 = vadd.f32 %v639, %v685
      %v687 = vpop.f32.mrb[0].mxu0
      %v688 = vpop.f32.mrb[0].mxu0
      %v689 = vpop.f32.mrb[0].mxu0
      %690 = vdwg.mxu0
      %v691 = vsel %vm644, %v686, -inf
      %692 = vmax.xlane.f32.xlu0 %v691
      %v693 = vpop.xlane.xlu0 %692
      %v694 = vsub.f32 %v686, %v693
      %v695 = vmul.f32 %v694, 1.442695
      %v696 = vpow.pop %v695
      %v697 = vsel %vm644, %v696, 0.0
      %698 = vadd.xlane.f32.xlu0 %v697
      %v699 = vpop.xlane.xlu0 %698
      %v700 = vrcp.pop %v699
      %v701 = vmul.f32 %v696, %v700
      %v702 = vpack.c.bf16 %v701, %v701
      %703 = vrot.lane.b32.xlu0 %v634, 64
      %v704 = vpop.permute.xlu0 %703
      %v706 = vsel %vm644, %v702, 0
      %vm708 = vcmask 1043456
      %v710 = vsel %vm708, %v704, 0
      %712 = vmatprep.subr.bf16.mxu0 0
      %713 = vmatpush1.bf16.msra.mxu0 %v710
      %714 = vmatprep.subr.bf16.mxu0 0
      %715 = vmatpush1.bf16.msra.mxu0 0
      %716 = vmatprep.subr.bf16.mxu0 0
      %717 = vmatpush1.bf16.msra.mxu0 0
      %718 = vmatprep.subr.bf16.mxu0 0
      %719 = vmatpush1.bf16.msra.mxu0 0
      %720 = vmatprep.subr.bf16.mxu0 0
      %721 = vmatpush1.bf16.msra.mxu0 0
      %722 = vmatprep.subr.bf16.mxu0 0
      %723 = vmatpush1.bf16.msra.mxu0 0
      %724 = vmatprep.subr.bf16.mxu0 0
      %725 = vmatpush1.bf16.msra.mxu0 0
      %726 = vmatprep.subr.bf16.mxu0 0
      %727 = vmatpush1.bf16.msra.mxu0 0
      %728 = vmatprep.subr.bf16.mxu0 0
      %729 = vmatpush1.bf16.msra.mxu0 0
      %730 = vmatprep.subr.bf16.mxu0 0
      %731 = vmatpush1.bf16.msra.mxu0 0
      %732 = vmatprep.subr.bf16.mxu0 0
      %733 = vmatpush1.bf16.msra.mxu0 0
      %734 = vmatprep.subr.bf16.mxu0 0
      %735 = vmatpush1.bf16.msra.mxu0 0
      %736 = vmatprep.subr.bf16.mxu0 0
      %737 = vmatpush1.bf16.msra.mxu0 0
      %738 = vmatprep.subr.bf16.mxu0 0
      %739 = vmatpush1.bf16.msra.mxu0 0
      %740 = vmatprep.subr.bf16.mxu0 0
      %741 = vmatpush1.bf16.msra.mxu0 0
      %742 = vmatprep.subr.bf16.mxu0 0
      %743 = vmatpush1.bf16.msra.mxu0 0
      %744 = vmatprep.mubr.bf16.mxu0 0
      %745 = vmatmul.mubr.bf16.gmra.mrb[0].mxu0 %v706
      %v746 = vpop.f32.mrb[0].mxu0
      %v747 = vadd.f32 0.0, %v746
      %v748 = vpop.f32.mrb[0].mxu0
      %v749 = vpop.f32.mrb[0].mxu0
      %v750 = vpop.f32.mrb[0].mxu0
      %751 = vdwg.mxu0
      %753 = vrot.lane.b32.xlu0 %v633, 120
      %v754 = vpop.permute.xlu0 %753
      %755 = vrot.lane.b32.xlu0 %v634, 88
      %v756 = vpop.permute.xlu0 %755
      %v758 = vsel %vm644, %v754, 0
      %v761 = vsel %vm644, %v756, 0
      %763 = vmatprep.subr.bf16.mxu0 0
      %764 = vmatpush1.bf16.xpose.msra.mxu0 %v761
      %765 = vmatprep.subr.bf16.mxu0 0
      %766 = vmatpush1.bf16.xpose.msra.mxu0 0
      %767 = vmatprep.subr.bf16.mxu0 0
      %768 = vmatpush1.bf16.xpose.msra.mxu0 0
      %769 = vmatprep.subr.bf16.mxu0 0
      %770 = vmatpush1.bf16.xpose.msra.mxu0 0
      %771 = vmatprep.subr.bf16.mxu0 0
      %772 = vmatpush1.bf16.xpose.msra.mxu0 0
      %773 = vmatprep.subr.bf16.mxu0 0
      %774 = vmatpush1.bf16.xpose.msra.mxu0 0
      %775 = vmatprep.subr.bf16.mxu0 0
      %776 = vmatpush1.bf16.xpose.msra.mxu0 0
      %777 = vmatprep.subr.bf16.mxu0 0
      %778 = vmatpush1.bf16.xpose.msra.mxu0 0
      %779 = vmatprep.subr.bf16.mxu0 0
      %780 = vmatpush1.bf16.xpose.msra.mxu0 0
      %781 = vmatprep.subr.bf16.mxu0 0
      %782 = vmatpush1.bf16.xpose.msra.mxu0 0
      %783 = vmatprep.subr.bf16.mxu0 0
      %784 = vmatpush1.bf16.xpose.msra.mxu0 0
      %785 = vmatprep.subr.bf16.mxu0 0
      %786 = vmatpush1.bf16.xpose.msra.mxu0 0
      %787 = vmatprep.subr.bf16.mxu0 0
      %788 = vmatpush1.bf16.xpose.msra.mxu0 0
      %789 = vmatprep.subr.bf16.mxu0 0
      %790 = vmatpush1.bf16.xpose.msra.mxu0 0
      %791 = vmatprep.subr.bf16.mxu0 0
      %792 = vmatpush1.bf16.xpose.msra.mxu0 0
      %793 = vmatprep.subr.bf16.mxu0 0
      %794 = vmatpush1.bf16.xpose.msra.mxu0 0
      %795 = vmatprep.mubr.bf16.mxu0 0
      %796 = vmatmul.mubr.bf16.gmra.mrb[0].mxu0 %v758
      %v797 = vpop.f32.mrb[0].mxu0
      %v798 = vadd.f32 %v639, %v797
      %v799 = vpop.f32.mrb[0].mxu0
      %v800 = vpop.f32.mrb[0].mxu0
      %v801 = vpop.f32.mrb[0].mxu0
      %802 = vdwg.mxu0
      %v803 = vsel %vm644, %v798, -inf
      %804 = vmax.xlane.f32.xlu0 %v803
      %v805 = vpop.xlane.xlu0 %804
      %v806 = vsub.f32 %v798, %v805
      %v807 = vmul.f32 %v806, 1.442695
      %v808 = vpow.pop %v807
      %v809 = vsel %vm644, %v808, 0.0
      %810 = vadd.xlane.f32.xlu0 %v809
      %v811 = vpop.xlane.xlu0 %810
      %v812 = vrcp.pop %v811
      %v813 = vmul.f32 %v808, %v812
      %v814 = vpack.c.bf16 %v813, %v813
      %815 = vrot.lane.b32.xlu0 %v634, 56
      %v816 = vpop.permute.xlu0 %815
      %v818 = vsel %vm644, %v814, 0
      %v821 = vsel %vm708, %v816, 0
      %823 = vmatprep.subr.bf16.mxu0 0
      %824 = vmatpush1.bf16.msra.mxu0 %v821
      %825 = vmatprep.subr.bf16.mxu0 0
      %826 = vmatpush1.bf16.msra.mxu0 0
      %827 = vmatprep.subr.bf16.mxu0 0
      %828 = vmatpush1.bf16.msra.mxu0 0
      %829 = vmatprep.subr.bf16.mxu0 0
      %830 = vmatpush1.bf16.msra.mxu0 0
      %831 = vmatprep.subr.bf16.mxu0 0
      %832 = vmatpush1.bf16.msra.mxu0 0
      %833 = vmatprep.subr.bf16.mxu0 0
      %834 = vmatpush1.bf16.msra.mxu0 0
      %835 = vmatprep.subr.bf16.mxu0 0
      %836 = vmatpush1.bf16.msra.mxu0 0
      %837 = vmatprep.subr.bf16.mxu0 0
      %838 = vmatpush1.bf16.msra.mxu0 0
      %839 = vmatprep.subr.bf16.mxu0 0
      %840 = vmatpush1.bf16.msra.mxu0 0
      %841 = vmatprep.subr.bf16.mxu0 0
      %842 = vmatpush1.bf16.msra.mxu0 0
      %843 = vmatprep.subr.bf16.mxu0 0
      %844 = vmatpush1.bf16.msra.mxu0 0
      %845 = vmatprep.subr.bf16.mxu0 0
      %846 = vmatpush1.bf16.msra.mxu0 0
      %847 = vmatprep.subr.bf16.mxu0 0
      %848 = vmatpush1.bf16.msra.mxu0 0
      %849 = vmatprep.subr.bf16.mxu0 0
      %850 = vmatpush1.bf16.msra.mxu0 0
      %851 = vmatprep.subr.bf16.mxu0 0
      %852 = vmatpush1.bf16.msra.mxu0 0
      %853 = vmatprep.subr.bf16.mxu0 0
      %854 = vmatpush1.bf16.msra.mxu0 0
      %855 = vmatprep.mubr.bf16.mxu0 0
      %856 = vmatmul.mubr.bf16.gmra.mrb[0].mxu0 %v818
      %v857 = vpop.f32.mrb[0].mxu0
      %v858 = vadd.f32 0.0, %v857
      %v859 = vpop.f32.mrb[0].mxu0
      %v860 = vpop.f32.mrb[0].mxu0
      %v861 = vpop.f32.mrb[0].mxu0
      %862 = vdwg.mxu0
      %863 = vrot.lane.b32.xlu0 %v633, 112
      %v864 = vpop.permute.xlu0 %863
      %865 = vrot.lane.b32.xlu0 %v634, 80
      %v866 = vpop.permute.xlu0 %865
      %v868 = vsel %vm644, %v864, 0
      %v871 = vsel %vm644, %v866, 0
      %873 = vmatprep.subr.bf16.mxu0 0
      %874 = vmatpush1.bf16.xpose.msra.mxu0 %v871
      %875 = vmatprep.subr.bf16.mxu0 0
      %876 = vmatpush1.bf16.xpose.msra.mxu0 0
      %877 = vmatprep.subr.bf16.mxu0 0
      %878 = vmatpush1.bf16.xpose.msra.mxu0 0
      %879 = vmatprep.subr.bf16.mxu0 0
      %880 = vmatpush1.bf16.xpose.msra.mxu0 0
      %881 = vmatprep.subr.bf16.mxu0 0
      %882 = vmatpush1.bf16.xpose.msra.mxu0 0
      %883 = vmatprep.subr.bf16.mxu0 0
      %884 = vmatpush1.bf16.xpose.msra.mxu0 0
      %885 = vmatprep.subr.bf16.mxu0 0
      %886 = vmatpush1.bf16.xpose.msra.mxu0 0
      %887 = vmatprep.subr.bf16.mxu0 0
      %888 = vmatpush1.bf16.xpose.msra.mxu0 0
      %889 = vmatprep.subr.bf16.mxu0 0
      %890 = vmatpush1.bf16.xpose.msra.mxu0 0
      %891 = vmatprep.subr.bf16.mxu0 0
      %892 = vmatpush1.bf16.xpose.msra.mxu0 0
      %893 = vmatprep.subr.bf16.mxu0 0
      %894 = vmatpush1.bf16.xpose.msra.mxu0 0
      %895 = vmatprep.subr.bf16.mxu0 0
      %896 = vmatpush1.bf16.xpose.msra.mxu0 0
      %897 = vmatprep.subr.bf16.mxu0 0
      %898 = vmatpush1.bf16.xpose.msra.mxu0 0
      %899 = vmatprep.subr.bf16.mxu0 0
      %900 = vmatpush1.bf16.xpose.msra.mxu0 0
      %901 = vmatprep.subr.bf16.mxu0 0
      %902 = vmatpush1.bf16.xpose.msra.mxu0 0
      %903 = vmatprep.subr.bf16.mxu0 0
      %904 = vmatpush1.bf16.xpose.msra.mxu0 0
      %905 = vmatprep.mubr.bf16.mxu0 0
      %906 = vmatmul.mubr.bf16.gmra.mrb[0].mxu0 %v868
      %v907 = vpop.f32.mrb[0].mxu0
      %v908 = vadd.f32 %v639, %v907
      %v909 = vpop.f32.mrb[0].mxu0
      %v910 = vpop.f32.mrb[0].mxu0
      %v911 = vpop.f32.mrb[0].mxu0
      %912 = vdwg.mxu0
      %v913 = vsel %vm644, %v908, -inf
      %914 = vmax.xlane.f32.xlu0 %v913
      %v915 = vpop.xlane.xlu0 %914
      %v916 = vsub.f32 %v908, %v915
      %v917 = vmul.f32 %v916, 1.442695
      %v918 = vpow.pop %v917
      %v919 = vsel %vm644, %v918, 0.0
      %920 = vadd.xlane.f32.xlu0 %v919
      %v921 = vpop.xlane.xlu0 %920
      %v922 = vrcp.pop %v921
      %v923 = vmul.f32 %v918, %v922
      %v924 = vpack.c.bf16 %v923, %v923
      %925 = vrot.lane.b32.xlu0 %v634, 48
      %v926 = vpop.permute.xlu0 %925
      %v928 = vsel %vm644, %v924, 0
      %v931 = vsel %vm708, %v926, 0
      %933 = vmatprep.subr.bf16.mxu0 0
      %934 = vmatpush1.bf16.msra.mxu0 %v931
      %935 = vmatprep.subr.bf16.mxu0 0
      %936 = vmatpush1.bf16.msra.mxu0 0
      %937 = vmatprep.subr.bf16.mxu0 0
      %938 = vmatpush1.bf16.msra.mxu0 0
      %939 = vmatprep.subr.bf16.mxu0 0
      %940 = vmatpush1.bf16.msra.mxu0 0
      %941 = vmatprep.subr.bf16.mxu0 0
      %942 = vmatpush1.bf16.msra.mxu0 0
      %943 = vmatprep.subr.bf16.mxu0 0
      %944 = vmatpush1.bf16.msra.mxu0 0
      %945 = vmatprep.subr.bf16.mxu0 0
      %946 = vmatpush1.bf16.msra.mxu0 0
      %947 = vmatprep.subr.bf16.mxu0 0
      %948 = vmatpush1.bf16.msra.mxu0 0
      %949 = vmatprep.subr.bf16.mxu0 0
      %950 = vmatpush1.bf16.msra.mxu0 0
      %951 = vmatprep.subr.bf16.mxu0 0
      %952 = vmatpush1.bf16.msra.mxu0 0
      %953 = vmatprep.subr.bf16.mxu0 0
      %954 = vmatpush1.bf16.msra.mxu0 0
      %955 = vmatprep.subr.bf16.mxu0 0
      %956 = vmatpush1.bf16.msra.mxu0 0
      %957 = vmatprep.subr.bf16.mxu0 0
      %958 = vmatpush1.bf16.msra.mxu0 0
      %959 = vmatprep.subr.bf16.mxu0 0
      %960 = vmatpush1.bf16.msra.mxu0 0
      %961 = vmatprep.subr.bf16.mxu0 0
      %962 = vmatpush1.bf16.msra.mxu0 0
      %963 = vmatprep.subr.bf16.mxu0 0
      %964 = vmatpush1.bf16.msra.mxu0 0
      %965 = vmatprep.mubr.bf16.mxu0 0
      %966 = vmatmul.mubr.bf16.gmra.mrb[0].mxu0 %v928
      %v967 = vpop.f32.mrb[0].mxu0
      %v968 = vadd.f32 0.0, %v967
      %v969 = vpop.f32.mrb[0].mxu0
      %v970 = vpop.f32.mrb[0].mxu0
      %v971 = vpop.f32.mrb[0].mxu0
      %972 = vdwg.mxu0
      %973 = vrot.lane.b32.xlu0 %v633, 104
      %v974 = vpop.permute.xlu0 %973
      %975 = vrot.lane.b32.xlu0 %v634, 72
      %v976 = vpop.permute.xlu0 %975
      %v978 = vsel %vm644, %v974, 0
      %v981 = vsel %vm644, %v976, 0
      %983 = vmatprep.subr.bf16.mxu0 0
      %984 = vmatpush1.bf16.xpose.msra.mxu0 %v981
      %985 = vmatprep.subr.bf16.mxu0 0
      %986 = vmatpush1.bf16.xpose.msra.mxu0 0
      %987 = vmatprep.subr.bf16.mxu0 0
      %988 = vmatpush1.bf16.xpose.msra.mxu0 0
      %989 = vmatprep.subr.bf16.mxu0 0
      %990 = vmatpush1.bf16.xpose.msra.mxu0 0
      %991 = vmatprep.subr.bf16.mxu0 0
      %992 = vmatpush1.bf16.xpose.msra.mxu0 0
      %993 = vmatprep.subr.bf16.mxu0 0
      %994 = vmatpush1.bf16.xpose.msra.mxu0 0
      %995 = vmatprep.subr.bf16.mxu0 0
      %996 = vmatpush1.bf16.xpose.msra.mxu0 0
      %997 = vmatprep.subr.bf16.mxu0 0
      %998 = vmatpush1.bf16.xpose.msra.mxu0 0
      %999 = vmatprep.subr.bf16.mxu0 0
      %1000 = vmatpush1.bf16.xpose.msra.mxu0 0
      %1001 = vmatprep.subr.bf16.mxu0 0
      %1002 = vmatpush1.bf16.xpose.msra.mxu0 0
      %1003 = vmatprep.subr.bf16.mxu0 0
      %1004 = vmatpush1.bf16.xpose.msra.mxu0 0
      %1005 = vmatprep.subr.bf16.mxu0 0
      %1006 = vmatpush1.bf16.xpose.msra.mxu0 0
      %1007 = vmatprep.subr.bf16.mxu0 0
      %1008 = vmatpush1.bf16.xpose.msra.mxu0 0
      %1009 = vmatprep.subr.bf16.mxu0 0
      %1010 = vmatpush1.bf16.xpose.msra.mxu0 0
      %1011 = vmatprep.subr.bf16.mxu0 0
      %1012 = vmatpush1.bf16.xpose.msra.mxu0 0
      %1013 = vmatprep.subr.bf16.mxu0 0
      %1014 = vmatpush1.bf16.xpose.msra.mxu0 0
      %1015 = vmatprep.mubr.bf16.mxu0 0
      %1016 = vmatmul.mubr.bf16.gmra.mrb[0].mxu0 %v978
      %v1017 = vpop.f32.mrb[0].mxu0
      %v1018 = vadd.f32 %v639, %v1017
      %v1019 = vpop.f32.mrb[0].mxu0
      %v1020 = vpop.f32.mrb[0].mxu0
      %v1021 = vpop.f32.mrb[0].mxu0
      %1022 = vdwg.mxu0
      %v1023 = vsel %vm644, %v1018, -inf
      %1024 = vmax.xlane.f32.xlu0 %v1023
      %v1025 = vpop.xlane.xlu0 %1024
      %v1026 = vsub.f32 %v1018, %v1025
      %v1027 = vmul.f32 %v1026, 1.442695
      %v1028 = vpow.pop %v1027
      %v1029 = vsel %vm644, %v1028, 0.0
      %1030 = vadd.xlane.f32.xlu0 %v1029
      %v1031 = vpop.xlane.xlu0 %1030
      %v1032 = vrcp.pop %v1031
      %v1033 = vmul.f32 %v1028, %v1032
      %v1034 = vpack.c.bf16 %v1033, %v1033
      %1035 = vrot.lane.b32.xlu0 %v634, 40
      %v1036 = vpop.permute.xlu0 %1035
      %v1038 = vsel %vm644, %v1034, 0
      %v1041 = vsel %vm708, %v1036, 0
      %1043 = vmatprep.subr.bf16.mxu0 0
      %1044 = vmatpush1.bf16.msra.mxu0 %v1041
      %1045 = vmatprep.subr.bf16.mxu0 0
      %1046 = vmatpush1.bf16.msra.mxu0 0
      %1047 = vmatprep.subr.bf16.mxu0 0
      %1048 = vmatpush1.bf16.msra.mxu0 0
      %1049 = vmatprep.subr.bf16.mxu0 0
      %1050 = vmatpush1.bf16.msra.mxu0 0
      %1051 = vmatprep.subr.bf16.mxu0 0
      %1052 = vmatpush1.bf16.msra.mxu0 0
      %1053 = vmatprep.subr.bf16.mxu0 0
      %1054 = vmatpush1.bf16.msra.mxu0 0
      %1055 = vmatprep.subr.bf16.mxu0 0
      %1056 = vmatpush1.bf16.msra.mxu0 0
      %1057 = vmatprep.subr.bf16.mxu0 0
      %1058 = vmatpush1.bf16.msra.mxu0 0
      %1059 = vmatprep.subr.bf16.mxu0 0
      %1060 = vmatpush1.bf16.msra.mxu0 0
      %1061 = vmatprep.subr.bf16.mxu0 0
      %1062 = vmatpush1.bf16.msra.mxu0 0
      %1063 = vmatprep.subr.bf16.mxu0 0
      %1064 = vmatpush1.bf16.msra.mxu0 0
      %1065 = vmatprep.subr.bf16.mxu0 0
      %1066 = vmatpush1.bf16.msra.mxu0 0
      %1067 = vmatprep.subr.bf16.mxu0 0
      %1068 = vmatpush1.bf16.msra.mxu0 0
      %1069 = vmatprep.subr.bf16.mxu0 0
      %1070 = vmatpush1.bf16.msra.mxu0 0
      %1071 = vmatprep.subr.bf16.mxu0 0
      %1072 = vmatpush1.bf16.msra.mxu0 0
      %1073 = vmatprep.subr.bf16.mxu0 0
      %1074 = vmatpush1.bf16.msra.mxu0 0
      %1075 = vmatprep.mubr.bf16.mxu0 0
      %1076 = vmatmul.mubr.bf16.gmra.mrb[0].mxu0 %v1038
      %v1077 = vpop.f32.mrb[0].mxu0
      %v1078 = vadd.f32 0.0, %v1077
      %v1079 = vpop.f32.mrb[0].mxu0
      %v1080 = vpop.f32.mrb[0].mxu0
      %v1081 = vpop.f32.mrb[0].mxu0
      %1082 = vdwg.mxu0
      %1084 = vrot.lane.b32.xlu0 %v858, 8
      %v1085 = vpop.permute.xlu0 %1084
      %1088 = vrot.lane.b32.xlu0 %v968, 16
      %v1089 = vpop.permute.xlu0 %1088
      %1092 = vrot.lane.b32.xlu0 %v1078, 24
      %v1093 = vpop.permute.xlu0 %1092
      %v1095 = vsel %vm644, %v747, %v1085
      %vm1096 = vcmask 130048
      %v1097 = vsel %vm1096, %v1095, %v1089
      %vm1098 = vcmask 195584
      %v1099 = vsel %vm1098, %v1097, %v1093
      %v1100 = vpack.c.bf16 %v1099, %v1099
      %v1101 = vld [vmem:[%s6] sm:$0xf]
      %v1102 = vld [vmem:[%s6 + $0x4] sm:$0xf]
      %v1103 = vld [vmem:[%s6 + $0x8] sm:$0xf]
      %v1104 = vld [vmem:[%s6 + $0xc] sm:$0xf]
      %v1105 = vld [vmem:[%s7] sm:$0x1]
      %v1106 = vunpack.c.l.bf16 %v1105
      %v1107 = vlaneseq
      %v1108 = vshrl.u32 %v1107, 7
      %v1109 = vsub.s32 0, %v1108
      %v1110 = vrot.slane %v1106, %v1109
      %v1115 = vunpack.c.l.b16 %v1101
      %v1116 = vunpack.c.l.b16 %v1102
      %v1117 = vunpack.c.l.b16 %v1103
      %v1118 = vunpack.c.l.b16 %v1104
      %v1119 = vpack.c.b16 %v1116, %v1115
      %v1120 = vpack.c.b16 %v1118, %v1117
      %v1124 = vsel %vm537, %v1100, 0
      %1126 = vmatprep.subr.bf16.mxu0 0
      %1127 = vmatpush1.bf16.msra.mxu0 %v1119
      %1128 = vmatprep.subr.bf16.mxu0 0
      %1129 = vmatpush1.bf16.msra.mxu0 %v1120
      %1130 = vmatprep.subr.bf16.mxu0 0
      %1131 = vmatpush1.bf16.msra.mxu0 0
      %1132 = vmatprep.subr.bf16.mxu0 0
      %1133 = vmatpush1.bf16.msra.mxu0 0
      %1134 = vmatprep.subr.bf16.mxu0 0
      %1135 = vmatpush1.bf16.msra.mxu0 0
      %1136 = vmatprep.subr.bf16.mxu0 0
      %1137 = vmatpush1.bf16.msra.mxu0 0
      %1138 = vmatprep.subr.bf16.mxu0 0
      %1139 = vmatpush1.bf16.msra.mxu0 0
      %1140 = vmatprep.subr.bf16.mxu0 0
      %1141 = vmatpush1.bf16.msra.mxu0 0
      %1142 = vmatprep.subr.bf16.mxu0 0
      %1143 = vmatpush1.bf16.msra.mxu0 0
      %1144 = vmatprep.subr.bf16.mxu0 0
      %1145 = vmatpush1.bf16.msra.mxu0 0
      %1146 = vmatprep.subr.bf16.mxu0 0
      %1147 = vmatpush1.bf16.msra.mxu0 0
      %1148 = vmatprep.subr.bf16.mxu0 0
      %1149 = vmatpush1.bf16.msra.mxu0 0
      %1150 = vmatprep.subr.bf16.mxu0 0
      %1151 = vmatpush1.bf16.msra.mxu0 0
      %1152 = vmatprep.subr.bf16.mxu0 0
      %1153 = vmatpush1.bf16.msra.mxu0 0
      %1154 = vmatprep.subr.bf16.mxu0 0
      %1155 = vmatpush1.bf16.msra.mxu0 0
      %1156 = vmatprep.subr.bf16.mxu0 0
      %1157 = vmatpush1.bf16.msra.mxu0 0
      %1158 = vmatprep.mubr.bf16.mxu0 0
      %1159 = vmatmul.mubr.bf16.gmra.mrb[0].mxu0 %v1124
      %v1160 = vpop.f32.mrb[0].mxu0
      %v1161 = vadd.f32 %v1110, %v1160
      %v1162 = vpop.f32.mrb[0].mxu0
      %v1163 = vpop.f32.mrb[0].mxu0
      %v1164 = vpop.f32.mrb[0].mxu0
      %1165 = vdwg.mxu0
      %v1166 = vadd.f32 %v565, %v1161
      %v1167 = vsel %vm537, %v1166, 0.0
      %1168 = vadd.xlane.f32.xlu0 %v1167
      %v1169 = vpop.xlane.xlu0 %1168
      %v1170 = vmul.f32 %v1169, %v541
      %v1171 = vsub.f32 %v1166, %v1170
      %v1172 = vmul.f32 %v1171, %v1171
      %v1173 = vsel %vm537, %v1172, 0.0
      %1174 = vadd.xlane.f32.xlu0 %v1173
      %v1175 = vpop.xlane.xlu0 %1174
      %v1176 = vmul.f32 %v1175, %v541
      %v1177 = vadd.f32 %v1176, 1e-05
      %v1178 = vrsqrt.pop %v1177
      %v1179 = vmul.f32 %v1171, %v1178
      %v1180 = vld [vmem:[%s8] sm:$0x1]
      %v1181 = vunpack.c.l.bf16 %v1180
      %v1182 = vlaneseq
      %v1183 = vshrl.u32 %v1182, 7
      %v1184 = vsub.s32 0, %v1183
      %v1185 = vrot.slane %v1181, %v1184
      %v1186 = vmul.f32 %v1179, %v1185
      %v1187 = vld [vmem:[%s9] sm:$0x1]
      %v1188 = vunpack.c.l.bf16 %v1187
      %v1189 = vlaneseq
      %v1190 = vshrl.u32 %v1189, 7
      %v1191 = vsub.s32 0, %v1190
      %v1192 = vrot.slane %v1188, %v1191
      %v1193 = vadd.f32 %v1186, %v1192
      %v1194 = vpack.c.bf16 %v1193, %v1193
      %v1195 = vld [vmem:[%s10] sm:$0xf]
      %v1196 = vld [vmem:[%s10 + $0x4] sm:$0xf]
      %v1197 = vld [vmem:[%s10 + $0x8] sm:$0xf]
      %v1198 = vld [vmem:[%s10 + $0xc] sm:$0xf]
      %v1199 = vld [vmem:[%s11] sm:$0x1]
      %v1200 = vunpack.c.l.bf16 %v1199
      %v1201 = vlaneseq
      %v1202 = vshrl.u32 %v1201, 7
      %v1203 = vsub.s32 0, %v1202
      %v1204 = vrot.slane %v1200, %v1203
      %v1209 = vunpack.c.l.b16 %v1195
      %v1210 = vunpack.c.l.b16 %v1196
      %v1211 = vunpack.c.l.b16 %v1197
      %v1212 = vunpack.c.l.b16 %v1198
      %v1213 = vpack.c.b16 %v1210, %v1209
      %v1214 = vpack.c.b16 %v1212, %v1211
      %v1218 = vsel %vm537, %v1194, 0
      %1220 = vmatprep.subr.bf16.mxu0 0
      %1221 = vmatpush1.bf16.msra.mxu0 %v1213
      %1222 = vmatprep.subr.bf16.mxu0 0
      %1223 = vmatpush1.bf16.msra.mxu0 %v1214
      %1224 = vmatprep.subr.bf16.mxu0 0
      %1225 = vmatpush1.bf16.msra.mxu0 0
      %1226 = vmatprep.subr.bf16.mxu0 0
      %1227 = vmatpush1.bf16.msra.mxu0 0
      %1228 = vmatprep.subr.bf16.mxu0 0
      %1229 = vmatpush1.bf16.msra.mxu0 0
      %1230 = vmatprep.subr.bf16.mxu0 0
      %1231 = vmatpush1.bf16.msra.mxu0 0
      %1232 = vmatprep.subr.bf16.mxu0 0
      %1233 = vmatpush1.bf16.msra.mxu0 0
      %1234 = vmatprep.subr.bf16.mxu0 0
      %1235 = vmatpush1.bf16.msra.mxu0 0
      %1236 = vmatprep.subr.bf16.mxu0 0
      %1237 = vmatpush1.bf16.msra.mxu0 0
      %1238 = vmatprep.subr.bf16.mxu0 0
      %1239 = vmatpush1.bf16.msra.mxu0 0
      %1240 = vmatprep.subr.bf16.mxu0 0
      %1241 = vmatpush1.bf16.msra.mxu0 0
      %1242 = vmatprep.subr.bf16.mxu0 0
      %1243 = vmatpush1.bf16.msra.mxu0 0
      %1244 = vmatprep.subr.bf16.mxu0 0
      %1245 = vmatpush1.bf16.msra.mxu0 0
      %1246 = vmatprep.subr.bf16.mxu0 0
      %1247 = vmatpush1.bf16.msra.mxu0 0
      %1248 = vmatprep.subr.bf16.mxu0 0
      %1249 = vmatpush1.bf16.msra.mxu0 0
      %1250 = vmatprep.subr.bf16.mxu0 0
      %1251 = vmatpush1.bf16.msra.mxu0 0
      %1252 = vmatprep.mubr.bf16.mxu0 0
      %1253 = vmatmul.mubr.bf16.gmra.mrb[0].mxu0 %v1218
      %v1254 = vpop.f32.mrb[0].mxu0
      %v1255 = vadd.f32 %v1204, %v1254
      %v1256 = vpop.f32.mrb[0].mxu0
      %v1257 = vpop.f32.mrb[0].mxu0
      %v1258 = vpop.f32.mrb[0].mxu0
      %1259 = vdwg.mxu0
      %v1260 = vmul.f32 %v1255, %v1255
      %v1261 = vmul.f32 %v1255, %v1260
      %v1262 = vmul.f32 %v1261, 0.044715
      %v1263 = vadd.f32 %v1255, %v1262
      %v1264 = vmul.f32 %v1263, 0.7978846
      %v1265 = vtanh.pop %v1264
      %v1266 = vadd.f32 %v1265, 1.0
      %v1267 = vmul.f32 %v1266, 0.5
      %v1268 = vmul.f32 %v1255, %v1267
      %v1269 = vpack.c.bf16 %v1268, %v1268
      %v1270 = vld [vmem:[%s12] sm:$0xf]
      %v1271 = vld [vmem:[%s12 + $0x4] sm:$0xf]
      %v1272 = vld [vmem:[%s12 + $0x8] sm:$0xf]
      %v1273 = vld [vmem:[%s12 + $0xc] sm:$0xf]
      %v1274 = vld [vmem:[%s12 + $0x10] sm:$0xf]
      %v1275 = vld [vmem:[%s12 + $0x14] sm:$0xf]
      %v1276 = vld [vmem:[%s12 + $0x18] sm:$0xf]
      %v1277 = vld [vmem:[%s12 + $0x1c] sm:$0xf]
      %v1278 = vld [vmem:[%s13] sm:$0x1]
      %v1279 = vunpack.c.l.bf16 %v1278
      %v1280 = vlaneseq
      %v1281 = vshrl.u32 %v1280, 7
      %v1282 = vsub.s32 0, %v1281
      %v1283 = vrot.slane %v1279, %v1282
      %v1292 = vunpack.c.l.b16 %v1270
      %v1293 = vunpack.c.l.b16 %v1271
      %v1294 = vunpack.c.l.b16 %v1272
      %v1295 = vunpack.c.l.b16 %v1273
      %v1296 = vunpack.c.l.b16 %v1274
      %v1297 = vunpack.c.l.b16 %v1275
      %v1298 = vunpack.c.l.b16 %v1276
      %v1299 = vunpack.c.l.b16 %v1277
      %v1300 = vpack.c.b16 %v1293, %v1292
      %v1301 = vpack.c.b16 %v1295, %v1294
      %v1302 = vpack.c.b16 %v1297, %v1296
      %v1303 = vpack.c.b16 %v1299, %v1298
      %vm1308 = vcmask 523264
      %v1310 = vsel %vm1308, %v1269, 0
      %1312 = vmatprep.subr.bf16.mxu0 0
      %1313 = vmatpush1.bf16.msra.mxu0 %v1300
      %1314 = vmatprep.subr.bf16.mxu0 0
      %1315 = vmatpush1.bf16.msra.mxu0 %v1301
      %1316 = vmatprep.subr.bf16.mxu0 0
      %1317 = vmatpush1.bf16.msra.mxu0 %v1302
      %1318 = vmatprep.subr.bf16.mxu0 0
      %1319 = vmatpush1.bf16.msra.mxu0 %v1303
      %1320 = vmatprep.subr.bf16.mxu0 0
      %1321 = vmatpush1.bf16.msra.mxu0 0
      %1322 = vmatprep.subr.bf16.mxu0 0
      %1323 = vmatpush1.bf16.msra.mxu0 0
      %1324 = vmatprep.subr.bf16.mxu0 0
      %1325 = vmatpush1.bf16.msra.mxu0 0
      %1326 = vmatprep.subr.bf16.mxu0 0
      %1327 = vmatpush1.bf16.msra.mxu0 0
      %1328 = vmatprep.subr.bf16.mxu0 0
      %1329 = vmatpush1.bf16.msra.mxu0 0
      %1330 = vmatprep.subr.bf16.mxu0 0
      %1331 = vmatpush1.bf16.msra.mxu0 0
      %1332 = vmatprep.subr.bf16.mxu0 0
      %1333 = vmatpush1.bf16.msra.mxu0 0
      %1334 = vmatprep.subr.bf16.mxu0 0
      %1335 = vmatpush1.bf16.msra.mxu0 0
      %1336 = vmatprep.subr.bf16.mxu0 0
      %1337 = vmatpush1.bf16.msra.mxu0 0
      %1338 = vmatprep.subr.bf16.mxu0 0
      %1339 = vmatpush1.bf16.msra.mxu0 0
      %1340 = vmatprep.subr.bf16.mxu0 0
      %1341 = vmatpush1.bf16.msra.mxu0 0
      %1342 = vmatprep.subr.bf16.mxu0 0
      %1343 = vmatpush1.bf16.msra.mxu0 0
      %1344 = vmatprep.mubr.bf16.mxu0 0
      %1345 = vmatmul.mubr.bf16.gmra.mrb[0].mxu0 %v1310
      %v1346 = vpop.f32.mrb[0].mxu0
      %v1347 = vadd.f32 %v1283, %v1346
      %v1348 = vpop.f32.mrb[0].mxu0
      %v1349 = vpop.f32.mrb[0].mxu0
      %v1350 = vpop.f32.mrb[0].mxu0
      %1351 = vdwg.mxu0
      %v1352 = vadd.f32 %v1193, %v1347
      %v1353 = vsel %vm537, %v1352, 0.0
      %1354 = vadd.xlane.f32.xlu0 %v1353
      %v1355 = vpop.xlane.xlu0 %1354
      %v1356 = vmul.f32 %v1355, %v541
      %v1357 = vsub.f32 %v1352, %v1356
      %v1358 = vmul.f32 %v1357, %v1357
      %v1359 = vsel %vm537, %v1358, 0.0
      %1360 = vadd.xlane.f32.xlu0 %v1359
      %v1361 = vpop.xlane.xlu0 %1360
      %v1362 = vmul.f32 %v1361, %v541
      %v1363 = vadd.f32 %v1362, 1e-05
      %v1364 = vrsqrt.pop %v1363
      %v1365 = vmul.f32 %v1357, %v1364
      %v1366 = vld [vmem:[%s14] sm:$0x1]
      %v1367 = vunpack.c.l.bf16 %v1366
      %v1368 = vlaneseq
      %v1369 = vshrl.u32 %v1368, 7
      %v1370 = vsub.s32 0, %v1369
      %v1371 = vrot.slane %v1367, %v1370
      %v1372 = vmul.f32 %v1365, %v1371
      %v1373 = vld [vmem:[%s15] sm:$0x1]
      %v1374 = vunpack.c.l.bf16 %v1373
      %v1375 = vlaneseq
      %v1376 = vshrl.u32 %v1375, 7
      %v1377 = vsub.s32 0, %v1376
      %v1378 = vrot.slane %v1374, %v1377
      %v1379 = vadd.f32 %v1372, %v1378
      %v1380 = vpack.c.bf16 %v1379, %v1379
      %vm1381 = vcmask 257024
      %1382 = vst.msk [vmem:[%s530] sm:$0xf] %vm1381, %v1380
      %p1383 = scmp.lt.s32.totalorder %s27, 1
      %s1384 = scalar_select %p1383, %s27, 1
      %s1385 = smul.addr %s1384, 4
      %s1386 = scalar_lea.vmem %s16, %s1385
      // Predicated region
      $region85: #{nere_forward.3} parent=83 // pred_check
        %p1387 = pneg %p391
      $region86: #{nere_forward.3} parent=83 // pred_check_branch
        %1389 = sbr.rel (%p1387) target = $region88
      $region87: #{nere_forward.3} parent=83 // pred_region
        _
      $region88: #{nere_forward.3} parent=83 // pred_fallthru
        _
    $region84: #{nere_forward.3} parent=5 // pred_fallthru
      _
    %p1390 = scmp.le.s32.totalorder 2, %s22
    // Predicated region
    $region89: #{nere_forward.3} parent=5 // pred_check
      %p1391 = pneg %p1390
    $region90: #{nere_forward.3} parent=5 // pred_check_branch
      %1393 = sbr.rel (%p1391) target = $region92
    $region91: #{nere_forward.3} parent=5 // pred_region
      %s1394 = ssub.s32 %s22, 2
      // Predicated region
      $region93: #{nere_forward.3} parent=91 // pred_check
        %p1395 = pneg %p397
      $region94: #{nere_forward.3} parent=91 // pred_check_branch
        %1397 = sbr.rel (%p1395) target = $region96
      $region95: #{nere_forward.3} parent=91 // pred_region
        %p1398 = scmp.lt.s32.totalorder %s28, 1
        %s1399 = scalar_select %p1398, %s28, 1
        %s1400 = smul.addr %s1399, 4
        %s1401 = scalar_lea.vmem %s16, %s1400
      $region96: #{nere_forward.3} parent=91 // pred_fallthru
        _
    $region92: #{nere_forward.3} parent=5 // pred_fallthru
      _
  $region6: #{nere_forward.3} parent=0 // loop_footer
    %s26 = sadd.s32 1, %s22
  $region7: #{nere_forward.3} parent=0 // loop_footer_branch
    %21 = sbr.rel target = $region3
  $region8: #{nere_forward.3} parent=0 // loop_exit
    _

// kernel: nere_forward.4
$region0: #{nere_forward.4}
  #allocation0 [shape = 'u32[]', space=smem, size = 0x4, offset = 0x4, fixed_abs, tag = 'smem constant byte address 0x4 - core index']
  #allocation1 [shape = 'u32[144,128]{1,0:T(1,128)}', space=vmem, size = 0x12000, scoped, tag = 'internal scratch']
  %s0 = inlined_call_operand.smem [shape: u32[30], index: -1, kind: input, shape index: {}]
  %s1 = sld [smem:[%s0]]
  %s2 = scalar_lea.smem %s0, 1
  %s3 = sld [smem:[%s2]]
  %s4 = scalar_lea.smem %s0, 2
  %s5 = sld [smem:[%s4]]
  %s6 = scalar_lea.smem %s0, 3
  %s7 = sld [smem:[%s6]]
  %s8 = scalar_lea.smem %s0, 4
  %s9 = sld [smem:[%s8]]
  %s10 = scalar_lea.smem %s0, 5
  %s11 = sld [smem:[%s10]]
  %s12 = scalar_lea.smem %s0, 6
  %s13 = sld [smem:[%s12]]
  %s14 = scalar_lea.smem %s0, 7
  %s15 = sld [smem:[%s14]]
  %s16 = scalar_lea.smem %s0, 8
  %s17 = sld [smem:[%s16]]
  %s18 = scalar_lea.smem %s0, 9
  %s19 = sld [smem:[%s18]]
  %s20 = scalar_lea.smem %s0, 10
  %s21 = sld [smem:[%s20]]
  %s22 = scalar_lea.smem %s0, 11
  %s23 = sld [smem:[%s22]]
  %s24 = scalar_lea.smem %s0, 12
  %s25 = sld [smem:[%s24]]
  %s26 = scalar_lea.smem %s0, 13
  %s27 = sld [smem:[%s26]]
  %s28 = scalar_lea.smem %s0, 14
  %s29 = sld [smem:[%s28]]
  %s30 = scalar_lea.smem %s0, 15
  %s31 = sld [smem:[%s30]]
  %s32 = scalar_lea.smem %s0, 16
  %s33 = sld [smem:[%s32]]
  %s34 = scalar_lea.smem %s0, 17
  %s35 = sld [smem:[%s34]]
  %s36 = scalar_lea.smem %s0, 18
  %s37 = sld [smem:[%s36]]
  %s38 = scalar_lea.smem %s0, 19
  %s39 = sld [smem:[%s38]]
  %s40 = scalar_lea.smem %s0, 20
  %s41 = sld [smem:[%s40]]
  %s42 = scalar_lea.smem %s0, 21
  %s43 = sld [smem:[%s42]]
  %s44 = scalar_lea.smem %s0, 22
  %s45 = sld [smem:[%s44]]
  %s46 = scalar_lea.smem %s0, 23
  %s47 = sld [smem:[%s46]]
  %s48 = scalar_lea.smem %s0, 24
  %s49 = sld [smem:[%s48]]
  %s50 = scalar_lea.smem %s0, 25
  %s51 = sld [smem:[%s50]]
  %s52 = scalar_lea.smem %s0, 26
  %s53 = sld [smem:[%s52]]
  %s54 = scalar_lea.smem %s0, 27
  %s55 = sld [smem:[%s54]]
  %s56 = scalar_lea.smem %s0, 28
  %s57 = sld [smem:[%s56]]
  %s58 = scalar_lea.smem %s0, 29
  %s59 = sld [smem:[%s58]]
  %60 = xla_tuple %s55, %s57, %s59
  %s61 = sld [smem:[#allocation0]]
  $region157: #{nere_forward.4} parent=0
    _
  %s63 = ssub.s32 1, %s61
  %s64 = scalar_select 0, %s63, %s61
  loop: start=0, step=1, limit=4
  $region2: #{nere_forward.4} parent=0 // loop_pre_header
    _
  $region3: #{nere_forward.4} parent=0 // loop_header
    %s66 = sphi 0, %s70
    %p67 = scmp.ge.s32.totalorder %s66, 4
    %s74 = sphi 0, %s74
    %s76 = sphi 0, %s74
    %s77 = sphi 0, %s76
    %s91 = sphi 0, %s77
    %s97 = sphi 0, %s99
    %s100 = sphi 0, %s97
    %s101 = sphi 0, %s100
    %s117 = sphi 0, %s101
    %s123 = sphi 0, %s125
    %s126 = sphi 0, %s123
    %s127 = sphi 0, %s126
    %s143 = sphi 0, %s127
    %s147 = sphi 0, %s147
    %s149 = sphi 0, %s147
    %s150 = sphi 0, %s149
    %s164 = sphi 0, %s150
    %s168 = sphi 0, %s168
    %s170 = sphi 0, %s168
    %s171 = sphi 0, %s170
    %s185 = sphi 0, %s171
    %s189 = sphi 0, %s189
    %s191 = sphi 0, %s189
    %s192 = sphi 0, %s191
    %s206 = sphi 0, %s192
    %s210 = sphi 0, %s210
    %s212 = sphi 0, %s210
    %s213 = sphi 0, %s212
    %s227 = sphi 0, %s213
    %s231 = sphi 0, %s231
    %s233 = sphi 0, %s231
    %s234 = sphi 0, %s233
    %s248 = sphi 0, %s234
    %s252 = sphi 0, %s252
    %s254 = sphi 0, %s252
    %s255 = sphi 0, %s254
    %s269 = sphi 0, %s255
    %s273 = sphi 0, %s273
    %s275 = sphi 0, %s273
    %s276 = sphi 0, %s275
    %s290 = sphi 0, %s276
    %s294 = sphi 0, %s294
    %s296 = sphi 0, %s294
    %s297 = sphi 0, %s296
    %s311 = sphi 0, %s297
    %s315 = sphi 0, %s315
    %s317 = sphi 0, %s315
    %s318 = sphi 0, %s317
    %s332 = sphi 0, %s318
    %s336 = sphi 0, %s336
    %s338 = sphi 0, %s336
    %s339 = sphi 0, %s338
    %s353 = sphi 0, %s339
    %s357 = sphi 0, %s357
    %s359 = sphi 0, %s357
    %s360 = sphi 0, %s359
    %s374 = sphi 0, %s360
    %s378 = sphi 0, %s378
    %s380 = sphi 0, %s378
    %s381 = sphi 0, %s380
    %s395 = sphi 0, %s381
    %s399 = sphi 0, %s399
    %s401 = sphi 0, %s399
    %s402 = sphi 0, %s401
    %s416 = sphi 0, %s402
    %s420 = sphi 0, %s420
    %s422 = sphi 0, %s420
    %s423 = sphi 0, %s422
    %s437 = sphi 0, %s423
    %s441 = sphi 0, %s441
    %s443 = sphi 0, %s441
    %s444 = sphi 0, %s443
    %s458 = sphi 0, %s444
    %s462 = sphi 0, %s462
    %s464 = sphi 0, %s462
    %s465 = sphi 0, %s464
    %s479 = sphi 0, %s465
    %s483 = sphi 0, %s483
    %s485 = sphi 0, %s483
    %s486 = sphi 0, %s485
    %s500 = sphi 0, %s486
    %s504 = sphi 0, %s504
    %s506 = sphi 0, %s504
    %s507 = sphi 0, %s506
    %s521 = sphi 0, %s507
    %s525 = sphi 0, %s525
    %s527 = sphi 0, %s525
    %s528 = sphi 0, %s527
    %s542 = sphi 0, %s528
    %s546 = sphi 0, %s546
    %s548 = sphi 0, %s546
    %s549 = sphi 0, %s548
    %s563 = sphi 0, %s549
    %s567 = sphi 0, %s567
    %s569 = sphi 0, %s567
    %s570 = sphi 0, %s569
    %s584 = sphi 0, %s570
    %s588 = sphi 0, %s588
    %s590 = sphi 0, %s588
    %s591 = sphi 0, %s590
    %s605 = sphi 0, %s591
    %s609 = sphi 0, %s609
    %s611 = sphi 0, %s609
    %s612 = sphi 0, %s611
    %s626 = sphi 0, %s612
    %s630 = sphi 0, %s630
    %s632 = sphi 0, %s630
    %s633 = sphi 0, %s632
    %s647 = sphi 0, %s633
    %s653 = sphi 0, %s655
    %s656 = sphi 0, %s653
    %s657 = sphi 0, %s656
    %s673 = sphi 0, %s657
    %s679 = sphi 0, %s681
    %s682 = sphi 0, %s679
    %s683 = sphi 0, %s682
    %s699 = sphi 0, %s683
    %s705 = sphi 0, %s707
    %s708 = sphi 0, %s705
    %s709 = sphi 0, %s708
    %s725 = sphi 0, %s709
  $region4: #{nere_forward.4} parent=0 // loop_header_branch
    %69 = sbr.rel (%p67) target = $region8
  $region5: #{nere_forward.4} parent=0 // loop_body
    %s71 = ssub.s32 %s66, 1
    %s72 = ssub.s32 %s66, 2
    %s73 = sadd.s32 %s66, 1
    %s75 = sadd.s32 %s74, 1
    %p78 = scmp.eq.s32.totalorder %s66, 1
    %p79 = scmp.ne.s32.totalorder %s74, %s76
    %p80 = scmp.eq.s32.totalorder %s66, 0
    %p81 = por %p79, %p80
    %p82 = scmp.ne.s32.totalorder %s74, %s76
    %p83 = scmp.eq.s32.totalorder %s71, 1
    %p84 = por %p82, %p83
    %p85 = scmp.ne.s32.totalorder %s76, %s77
    %p86 = scmp.eq.s32.totalorder %s71, 0
    %p87 = por %p85, %p86
    %p88 = scmp.ne.s32.totalorder %s76, %s77
    %p89 = scmp.eq.s32.totalorder %s72, 1
    %p90 = por %p88, %p89
    %p92 = scmp.ne.s32.totalorder %s77, %s91
    %p93 = scmp.eq.s32.totalorder %s72, 0
    %p94 = por %p92, %p93
    %s95 = ssub.s32 %s66, %s73
    %p96 = scmp.eq.s32.totalorder %s95, 0
    %s98 = sadd.s32 %s97, 1
    %s99 = scalar_select %p96, %s97, %s98
    %p102 = pneg %p96
    %p103 = scmp.eq.s32.totalorder %s66, 1
    %p104 = por %p102, %p103
    %p105 = scmp.ne.s32.totalorder %s97, %s100
    %p106 = scmp.eq.s32.totalorder %s66, 0
    %p107 = por %p105, %p106
    %p108 = scmp.ne.s32.totalorder %s97, %s100
    %p109 = scmp.eq.s32.totalorder %s71, 1
    %p110 = por %p108, %p109
    %p111 = scmp.ne.s32.totalorder %s100, %s101
    %p112 = scmp.eq.s32.totalorder %s71, 0
    %p113 = por %p111, %p112
    %p114 = scmp.ne.s32.totalorder %s100, %s101
    %p115 = scmp.eq.s32.totalorder %s72, 1
    %p116 = por %p114, %p115
    %p118 = scmp.ne.s32.totalorder %s101, %s117
    %p119 = scmp.eq.s32.totalorder %s72, 0
    %p120 = por %p118, %p119
    %s121 = ssub.s32 %s66, %s73
    %p122 = scmp.eq.s32.totalorder %s121, 0
    %s124 = sadd.s32 %s123, 1
    %s125 = scalar_select %p122, %s123, %s124
    %p128 = pneg %p122
    %p129 = scmp.eq.s32.totalorder %s66, 1
    %p130 = por %p128, %p129
    %p131 = scmp.ne.s32.totalorder %s123, %s126
    %p132 = scmp.eq.s32.totalorder %s66, 0
    %p133 = por %p131, %p132
    %p134 = scmp.ne.s32.totalorder %s123, %s126
    %p135 = scmp.eq.s32.totalorder %s71, 1
    %p136 = por %p134, %p135
    %p137 = scmp.ne.s32.totalorder %s126, %s127
    %p138 = scmp.eq.s32.totalorder %s71, 0
    %p139 = por %p137, %p138
    %p140 = scmp.ne.s32.totalorder %s126, %s127
    %p141 = scmp.eq.s32.totalorder %s72, 1
    %p142 = por %p140, %p141
    %p144 = scmp.ne.s32.totalorder %s127, %s143
    %p145 = scmp.eq.s32.totalorder %s72, 0
    %p146 = por %p144, %p145
    %s148 = sadd.s32 %s147, 1
    %p151 = scmp.eq.s32.totalorder %s66, 1
    %p152 = scmp.ne.s32.totalorder %s147, %s149
    %p153 = scmp.eq.s32.totalorder %s66, 0
    %p154 = por %p152, %p153
    %p155 = scmp.ne.s32.totalorder %s147, %s149
    %p156 = scmp.eq.s32.totalorder %s71, 1
    %p157 = por %p155, %p156
    %p158 = scmp.ne.s32.totalorder %s149, %s150
    %p159 = scmp.eq.s32.totalorder %s71, 0
    %p160 = por %p158, %p159
    %p161 = scmp.ne.s32.totalorder %s149, %s150
    %p162 = scmp.eq.s32.totalorder %s72, 1
    %p163 = por %p161, %p162
    %p165 = scmp.ne.s32.totalorder %s150, %s164
    %p166 = scmp.eq.s32.totalorder %s72, 0
    %p167 = por %p165, %p166
    %s169 = sadd.s32 %s168, 1
    %p172 = scmp.eq.s32.totalorder %s66, 1
    %p173 = scmp.ne.s32.totalorder %s168, %s170
    %p174 = scmp.eq.s32.totalorder %s66, 0
    %p175 = por %p173, %p174
    %p176 = scmp.ne.s32.totalorder %s168, %s170
    %p177 = scmp.eq.s32.totalorder %s71, 1
    %p178 = por %p176, %p177
    %p179 = scmp.ne.s32.totalorder %s170, %s171
    %p180 = scmp.eq.s32.totalorder %s71, 0
    %p181 = por %p179, %p180
    %p182 = scmp.ne.s32.totalorder %s170, %s171
    %p183 = scmp.eq.s32.totalorder %s72, 1
    %p184 = por %p182, %p183
    %p186 = scmp.ne.s32.totalorder %s171, %s185
    %p187 = scmp.eq.s32.totalorder %s72, 0
    %p188 = por %p186, %p187
    %s190 = sadd.s32 %s189, 1
    %p193 = scmp.eq.s32.totalorder %s66, 1
    %p194 = scmp.ne.s32.totalorder %s189, %s191
    %p195 = scmp.eq.s32.totalorder %s66, 0
    %p196 = por %p194, %p195
    %p197 = scmp.ne.s32.totalorder %s189, %s191
    %p198 = scmp.eq.s32.totalorder %s71, 1
    %p199 = por %p197, %p198
    %p200 = scmp.ne.s32.totalorder %s191, %s192
    %p201 = scmp.eq.s32.totalorder %s71, 0
    %p202 = por %p200, %p201
    %p203 = scmp.ne.s32.totalorder %s191, %s192
    %p204 = scmp.eq.s32.totalorder %s72, 1
    %p205 = por %p203, %p204
    %p207 = scmp.ne.s32.totalorder %s192, %s206
    %p208 = scmp.eq.s32.totalorder %s72, 0
    %p209 = por %p207, %p208
    %s211 = sadd.s32 %s210, 1
    %p214 = scmp.eq.s32.totalorder %s66, 1
    %p215 = scmp.ne.s32.totalorder %s210, %s212
    %p216 = scmp.eq.s32.totalorder %s66, 0
    %p217 = por %p215, %p216
    %p218 = scmp.ne.s32.totalorder %s210, %s212
    %p219 = scmp.eq.s32.totalorder %s71, 1
    %p220 = por %p218, %p219
    %p221 = scmp.ne.s32.totalorder %s212, %s213
    %p222 = scmp.eq.s32.totalorder %s71, 0
    %p223 = por %p221, %p222
    %p224 = scmp.ne.s32.totalorder %s212, %s213
    %p225 = scmp.eq.s32.totalorder %s72, 1
    %p226 = por %p224, %p225
    %p228 = scmp.ne.s32.totalorder %s213, %s227
    %p229 = scmp.eq.s32.totalorder %s72, 0
    %p230 = por %p228, %p229
    %s232 = sadd.s32 %s231, 1
    %p235 = scmp.eq.s32.totalorder %s66, 1
    %p236 = scmp.ne.s32.totalorder %s231, %s233
    %p237 = scmp.eq.s32.totalorder %s66, 0
    %p238 = por %p236, %p237
    %p239 = scmp.ne.s32.totalorder %s231, %s233
    %p240 = scmp.eq.s32.totalorder %s71, 1
    %p241 = por %p239, %p240
    %p242 = scmp.ne.s32.totalorder %s233, %s234
    %p243 = scmp.eq.s32.totalorder %s71, 0
    %p244 = por %p242, %p243
    %p245 = scmp.ne.s32.totalorder %s233, %s234
    %p246 = scmp.eq.s32.totalorder %s72, 1
    %p247 = por %p245, %p246
    %p249 = scmp.ne.s32.totalorder %s234, %s248
    %p250 = scmp.eq.s32.totalorder %s72, 0
    %p251 = por %p249, %p250
    %s253 = sadd.s32 %s252, 1
    %p256 = scmp.eq.s32.totalorder %s66, 1
    %p257 = scmp.ne.s32.totalorder %s252, %s254
    %p258 = scmp.eq.s32.totalorder %s66, 0
    %p259 = por %p257, %p258
    %p260 = scmp.ne.s32.totalorder %s252, %s254
    %p261 = scmp.eq.s32.totalorder %s71, 1
    %p262 = por %p260, %p261
    %p263 = scmp.ne.s32.totalorder %s254, %s255
    %p264 = scmp.eq.s32.totalorder %s71, 0
    %p265 = por %p263, %p264
    %p266 = scmp.ne.s32.totalorder %s254, %s255
    %p267 = scmp.eq.s32.totalorder %s72, 1
    %p268 = por %p266, %p267
    %p270 = scmp.ne.s32.totalorder %s255, %s269
    %p271 = scmp.eq.s32.totalorder %s72, 0
    %p272 = por %p270, %p271
    %s274 = sadd.s32 %s273, 1
    %p277 = scmp.eq.s32.totalorder %s66, 1
    %p278 = scmp.ne.s32.totalorder %s273, %s275
    %p279 = scmp.eq.s32.totalorder %s66, 0
    %p280 = por %p278, %p279
    %p281 = scmp.ne.s32.totalorder %s273, %s275
    %p282 = scmp.eq.s32.totalorder %s71, 1
    %p283 = por %p281, %p282
    %p284 = scmp.ne.s32.totalorder %s275, %s276
    %p285 = scmp.eq.s32.totalorder %s71, 0
    %p286 = por %p284, %p285
    %p287 = scmp.ne.s32.totalorder %s275, %s276
    %p288 = scmp.eq.s32.totalorder %s72, 1
    %p289 = por %p287, %p288
    %p291 = scmp.ne.s32.totalorder %s276, %s290
    %p292 = scmp.eq.s32.totalorder %s72, 0
    %p293 = por %p291, %p292
    %s295 = sadd.s32 %s294, 1
    %p298 = scmp.eq.s32.totalorder %s66, 1
    %p299 = scmp.ne.s32.totalorder %s294, %s296
    %p300 = scmp.eq.s32.totalorder %s66, 0
    %p301 = por %p299, %p300
    %p302 = scmp.ne.s32.totalorder %s294, %s296
    %p303 = scmp.eq.s32.totalorder %s71, 1
    %p304 = por %p302, %p303
    %p305 = scmp.ne.s32.totalorder %s296, %s297
    %p306 = scmp.eq.s32.totalorder %s71, 0
    %p307 = por %p305, %p306
    %p308 = scmp.ne.s32.totalorder %s296, %s297
    %p309 = scmp.eq.s32.totalorder %s72, 1
    %p310 = por %p308, %p309
    %p312 = scmp.ne.s32.totalorder %s297, %s311
    %p313 = scmp.eq.s32.totalorder %s72, 0
    %p314 = por %p312, %p313
    %s316 = sadd.s32 %s315, 1
    %p319 = scmp.eq.s32.totalorder %s66, 1
    %p320 = scmp.ne.s32.totalorder %s315, %s317
    %p321 = scmp.eq.s32.totalorder %s66, 0
    %p322 = por %p320, %p321
    %p323 = scmp.ne.s32.totalorder %s315, %s317
    %p324 = scmp.eq.s32.totalorder %s71, 1
    %p325 = por %p323, %p324
    %p326 = scmp.ne.s32.totalorder %s317, %s318
    %p327 = scmp.eq.s32.totalorder %s71, 0
    %p328 = por %p326, %p327
    %p329 = scmp.ne.s32.totalorder %s317, %s318
    %p330 = scmp.eq.s32.totalorder %s72, 1
    %p331 = por %p329, %p330
    %p333 = scmp.ne.s32.totalorder %s318, %s332
    %p334 = scmp.eq.s32.totalorder %s72, 0
    %p335 = por %p333, %p334
    %s337 = sadd.s32 %s336, 1
    %p340 = scmp.eq.s32.totalorder %s66, 1
    %p341 = scmp.ne.s32.totalorder %s336, %s338
    %p342 = scmp.eq.s32.totalorder %s66, 0
    %p343 = por %p341, %p342
    %p344 = scmp.ne.s32.totalorder %s336, %s338
    %p345 = scmp.eq.s32.totalorder %s71, 1
    %p346 = por %p344, %p345
    %p347 = scmp.ne.s32.totalorder %s338, %s339
    %p348 = scmp.eq.s32.totalorder %s71, 0
    %p349 = por %p347, %p348
    %p350 = scmp.ne.s32.totalorder %s338, %s339
    %p351 = scmp.eq.s32.totalorder %s72, 1
    %p352 = por %p350, %p351
    %p354 = scmp.ne.s32.totalorder %s339, %s353
    %p355 = scmp.eq.s32.totalorder %s72, 0
    %p356 = por %p354, %p355
    %s358 = sadd.s32 %s357, 1
    %p361 = scmp.eq.s32.totalorder %s66, 1
    %p362 = scmp.ne.s32.totalorder %s357, %s359
    %p363 = scmp.eq.s32.totalorder %s66, 0
    %p364 = por %p362, %p363
    %p365 = scmp.ne.s32.totalorder %s357, %s359
    %p366 = scmp.eq.s32.totalorder %s71, 1
    %p367 = por %p365, %p366
    %p368 = scmp.ne.s32.totalorder %s359, %s360
    %p369 = scmp.eq.s32.totalorder %s71, 0
    %p370 = por %p368, %p369
    %p371 = scmp.ne.s32.totalorder %s359, %s360
    %p372 = scmp.eq.s32.totalorder %s72, 1
    %p373 = por %p371, %p372
    %p375 = scmp.ne.s32.totalorder %s360, %s374
    %p376 = scmp.eq.s32.totalorder %s72, 0
    %p377 = por %p375, %p376
    %s379 = sadd.s32 %s378, 1
    %p382 = scmp.eq.s32.totalorder %s66, 1
    %p383 = scmp.ne.s32.totalorder %s378, %s380
    %p384 = scmp.eq.s32.totalorder %s66, 0
    %p385 = por %p383, %p384
    %p386 = scmp.ne.s32.totalorder %s378, %s380
    %p387 = scmp.eq.s32.totalorder %s71, 1
    %p388 = por %p386, %p387
    %p389 = scmp.ne.s32.totalorder %s380, %s381
    %p390 = scmp.eq.s32.totalorder %s71, 0
    %p391 = por %p389, %p390
    %p392 = scmp.ne.s32.totalorder %s380, %s381
    %p393 = scmp.eq.s32.totalorder %s72, 1
    %p394 = por %p392, %p393
    %p396 = scmp.ne.s32.totalorder %s381, %s395
    %p397 = scmp.eq.s32.totalorder %s72, 0
    %p398 = por %p396, %p397
    %s400 = sadd.s32 %s399, 1
    %p403 = scmp.eq.s32.totalorder %s66, 1
    %p404 = scmp.ne.s32.totalorder %s399, %s401
    %p405 = scmp.eq.s32.totalorder %s66, 0
    %p406 = por %p404, %p405
    %p407 = scmp.ne.s32.totalorder %s399, %s401
    %p408 = scmp.eq.s32.totalorder %s71, 1
    %p409 = por %p407, %p408
    %p410 = scmp.ne.s32.totalorder %s401, %s402
    %p411 = scmp.eq.s32.totalorder %s71, 0
    %p412 = por %p410, %p411
    %p413 = scmp.ne.s32.totalorder %s401, %s402
    %p414 = scmp.eq.s32.totalorder %s72, 1
    %p415 = por %p413, %p414
    %p417 = scmp.ne.s32.totalorder %s402, %s416
    %p418 = scmp.eq.s32.totalorder %s72, 0
    %p419 = por %p417, %p418
    %s421 = sadd.s32 %s420, 1
    %p424 = scmp.eq.s32.totalorder %s66, 1
    %p425 = scmp.ne.s32.totalorder %s420, %s422
    %p426 = scmp.eq.s32.totalorder %s66, 0
    %p427 = por %p425, %p426
    %p428 = scmp.ne.s32.totalorder %s420, %s422
    %p429 = scmp.eq.s32.totalorder %s71, 1
    %p430 = por %p428, %p429
    %p431 = scmp.ne.s32.totalorder %s422, %s423
    %p432 = scmp.eq.s32.totalorder %s71, 0
    %p433 = por %p431, %p432
    %p434 = scmp.ne.s32.totalorder %s422, %s423
    %p435 = scmp.eq.s32.totalorder %s72, 1
    %p436 = por %p434, %p435
    %p438 = scmp.ne.s32.totalorder %s423, %s437
    %p439 = scmp.eq.s32.totalorder %s72, 0
    %p440 = por %p438, %p439
    %s442 = sadd.s32 %s441, 1
    %p445 = scmp.eq.s32.totalorder %s66, 1
    %p446 = scmp.ne.s32.totalorder %s441, %s443
    %p447 = scmp.eq.s32.totalorder %s66, 0
    %p448 = por %p446, %p447
    %p449 = scmp.ne.s32.totalorder %s441, %s443
    %p450 = scmp.eq.s32.totalorder %s71, 1
    %p451 = por %p449, %p450
    %p452 = scmp.ne.s32.totalorder %s443, %s444
    %p453 = scmp.eq.s32.totalorder %s71, 0
    %p454 = por %p452, %p453
    %p455 = scmp.ne.s32.totalorder %s443, %s444
    %p456 = scmp.eq.s32.totalorder %s72, 1
    %p457 = por %p455, %p456
    %p459 = scmp.ne.s32.totalorder %s444, %s458
    %p460 = scmp.eq.s32.totalorder %s72, 0
    %p461 = por %p459, %p460
    %s463 = sadd.s32 %s462, 1
    %p466 = scmp.eq.s32.totalorder %s66, 1
    %p467 = scmp.ne.s32.totalorder %s462, %s464
    %p468 = scmp.eq.s32.totalorder %s66, 0
    %p469 = por %p467, %p468
    %p470 = scmp.ne.s32.totalorder %s462, %s464
    %p471 = scmp.eq.s32.totalorder %s71, 1
    %p472 = por %p470, %p471
    %p473 = scmp.ne.s32.totalorder %s464, %s465
    %p474 = scmp.eq.s32.totalorder %s71, 0
    %p475 = por %p473, %p474
    %p476 = scmp.ne.s32.totalorder %s464, %s465
    %p477 = scmp.eq.s32.totalorder %s72, 1
    %p478 = por %p476, %p477
    %p480 = scmp.ne.s32.totalorder %s465, %s479
    %p481 = scmp.eq.s32.totalorder %s72, 0
    %p482 = por %p480, %p481
    %s484 = sadd.s32 %s483, 1
    %p487 = scmp.eq.s32.totalorder %s66, 1
    %p488 = scmp.ne.s32.totalorder %s483, %s485
    %p489 = scmp.eq.s32.totalorder %s66, 0
    %p490 = por %p488, %p489
    %p491 = scmp.ne.s32.totalorder %s483, %s485
    %p492 = scmp.eq.s32.totalorder %s71, 1
    %p493 = por %p491, %p492
    %p494 = scmp.ne.s32.totalorder %s485, %s486
    %p495 = scmp.eq.s32.totalorder %s71, 0
    %p496 = por %p494, %p495
    %p497 = scmp.ne.s32.totalorder %s485, %s486
    %p498 = scmp.eq.s32.totalorder %s72, 1
    %p499 = por %p497, %p498
    %p501 = scmp.ne.s32.totalorder %s486, %s500
    %p502 = scmp.eq.s32.totalorder %s72, 0
    %p503 = por %p501, %p502
    %s505 = sadd.s32 %s504, 1
    %p508 = scmp.eq.s32.totalorder %s66, 1
    %p509 = scmp.ne.s32.totalorder %s504, %s506
    %p510 = scmp.eq.s32.totalorder %s66, 0
    %p511 = por %p509, %p510
    %p512 = scmp.ne.s32.totalorder %s504, %s506
    %p513 = scmp.eq.s32.totalorder %s71, 1
    %p514 = por %p512, %p513
    %p515 = scmp.ne.s32.totalorder %s506, %s507
    %p516 = scmp.eq.s32.totalorder %s71, 0
    %p517 = por %p515, %p516
    %p518 = scmp.ne.s32.totalorder %s506, %s507
    %p519 = scmp.eq.s32.totalorder %s72, 1
    %p520 = por %p518, %p519
    %p522 = scmp.ne.s32.totalorder %s507, %s521
    %p523 = scmp.eq.s32.totalorder %s72, 0
    %p524 = por %p522, %p523
    %s526 = sadd.s32 %s525, 1
    %p529 = scmp.eq.s32.totalorder %s66, 1
    %p530 = scmp.ne.s32.totalorder %s525, %s527
    %p531 = scmp.eq.s32.totalorder %s66, 0
    %p532 = por %p530, %p531
    %p533 = scmp.ne.s32.totalorder %s525, %s527
    %p534 = scmp.eq.s32.totalorder %s71, 1
    %p535 = por %p533, %p534
    %p536 = scmp.ne.s32.totalorder %s527, %s528
    %p537 = scmp.eq.s32.totalorder %s71, 0
    %p538 = por %p536, %p537
    %p539 = scmp.ne.s32.totalorder %s527, %s528
    %p540 = scmp.eq.s32.totalorder %s72, 1
    %p541 = por %p539, %p540
    %p543 = scmp.ne.s32.totalorder %s528, %s542
    %p544 = scmp.eq.s32.totalorder %s72, 0
    %p545 = por %p543, %p544
    %s547 = sadd.s32 %s546, 1
    %p550 = scmp.eq.s32.totalorder %s66, 1
    %p551 = scmp.ne.s32.totalorder %s546, %s548
    %p552 = scmp.eq.s32.totalorder %s66, 0
    %p553 = por %p551, %p552
    %p554 = scmp.ne.s32.totalorder %s546, %s548
    %p555 = scmp.eq.s32.totalorder %s71, 1
    %p556 = por %p554, %p555
    %p557 = scmp.ne.s32.totalorder %s548, %s549
    %p558 = scmp.eq.s32.totalorder %s71, 0
    %p559 = por %p557, %p558
    %p560 = scmp.ne.s32.totalorder %s548, %s549
    %p561 = scmp.eq.s32.totalorder %s72, 1
    %p562 = por %p560, %p561
    %p564 = scmp.ne.s32.totalorder %s549, %s563
    %p565 = scmp.eq.s32.totalorder %s72, 0
    %p566 = por %p564, %p565
    %s568 = sadd.s32 %s567, 1
    %p571 = scmp.eq.s32.totalorder %s66, 1
    %p572 = scmp.ne.s32.totalorder %s567, %s569
    %p573 = scmp.eq.s32.totalorder %s66, 0
    %p574 = por %p572, %p573
    %p575 = scmp.ne.s32.totalorder %s567, %s569
    %p576 = scmp.eq.s32.totalorder %s71, 1
    %p577 = por %p575, %p576
    %p578 = scmp.ne.s32.totalorder %s569, %s570
    %p579 = scmp.eq.s32.totalorder %s71, 0
    %p580 = por %p578, %p579
    %p581 = scmp.ne.s32.totalorder %s569, %s570
    %p582 = scmp.eq.s32.totalorder %s72, 1
    %p583 = por %p581, %p582
    %p585 = scmp.ne.s32.totalorder %s570, %s584
    %p586 = scmp.eq.s32.totalorder %s72, 0
    %p587 = por %p585, %p586
    %s589 = sadd.s32 %s588, 1
    %p592 = scmp.eq.s32.totalorder %s66, 1
    %p593 = scmp.ne.s32.totalorder %s588, %s590
    %p594 = scmp.eq.s32.totalorder %s66, 0
    %p595 = por %p593, %p594
    %p596 = scmp.ne.s32.totalorder %s588, %s590
    %p597 = scmp.eq.s32.totalorder %s71, 1
    %p598 = por %p596, %p597
    %p599 = scmp.ne.s32.totalorder %s590, %s591
    %p600 = scmp.eq.s32.totalorder %s71, 0
    %p601 = por %p599, %p600
    %p602 = scmp.ne.s32.totalorder %s590, %s591
    %p603 = scmp.eq.s32.totalorder %s72, 1
    %p604 = por %p602, %p603
    %p606 = scmp.ne.s32.totalorder %s591, %s605
    %p607 = scmp.eq.s32.totalorder %s72, 0
    %p608 = por %p606, %p607
    %s610 = sadd.s32 %s609, 1
    %p613 = scmp.eq.s32.totalorder %s66, 1
    %p614 = scmp.ne.s32.totalorder %s609, %s611
    %p615 = scmp.eq.s32.totalorder %s66, 0
    %p616 = por %p614, %p615
    %p617 = scmp.ne.s32.totalorder %s609, %s611
    %p618 = scmp.eq.s32.totalorder %s71, 1
    %p619 = por %p617, %p618
    %p620 = scmp.ne.s32.totalorder %s611, %s612
    %p621 = scmp.eq.s32.totalorder %s71, 0
    %p622 = por %p620, %p621
    %p623 = scmp.ne.s32.totalorder %s611, %s612
    %p624 = scmp.eq.s32.totalorder %s72, 1
    %p625 = por %p623, %p624
    %p627 = scmp.ne.s32.totalorder %s612, %s626
    %p628 = scmp.eq.s32.totalorder %s72, 0
    %p629 = por %p627, %p628
    %s631 = sadd.s32 %s630, 1
    %p634 = scmp.eq.s32.totalorder %s66, 1
    %p635 = scmp.ne.s32.totalorder %s630, %s632
    %p636 = scmp.eq.s32.totalorder %s66, 0
    %p637 = por %p635, %p636
    %p638 = scmp.ne.s32.totalorder %s630, %s632
    %p639 = scmp.eq.s32.totalorder %s71, 1
    %p640 = por %p638, %p639
    %p641 = scmp.ne.s32.totalorder %s632, %s633
    %p642 = scmp.eq.s32.totalorder %s71, 0
    %p643 = por %p641, %p642
    %p644 = scmp.ne.s32.totalorder %s632, %s633
    %p645 = scmp.eq.s32.totalorder %s72, 1
    %p646 = por %p644, %p645
    %p648 = scmp.ne.s32.totalorder %s633, %s647
    %p649 = scmp.eq.s32.totalorder %s72, 0
    %p650 = por %p648, %p649
    %s651 = ssub.s32 %s66, %s73
    %p652 = scmp.eq.s32.totalorder %s651, 0
    %s654 = sadd.s32 %s653, 1
    %s655 = scalar_select %p652, %s653, %s654
    %p658 = pneg %p652
    %p659 = scmp.eq.s32.totalorder %s66, 1
    %p660 = por %p658, %p659
    %p661 = scmp.ne.s32.totalorder %s653, %s656
    %p662 = scmp.eq.s32.totalorder %s66, 0
    %p663 = por %p661, %p662
    %p664 = scmp.ne.s32.totalorder %s653, %s656
    %p665 = scmp.eq.s32.totalorder %s71, 1
    %p666 = por %p664, %p665
    %p667 = scmp.ne.s32.totalorder %s656, %s657
    %p668 = scmp.eq.s32.totalorder %s71, 0
    %p669 = por %p667, %p668
    %p670 = scmp.ne.s32.totalorder %s656, %s657
    %p671 = scmp.eq.s32.totalorder %s72, 1
    %p672 = por %p670, %p671
    %p674 = scmp.ne.s32.totalorder %s657, %s673
    %p675 = scmp.eq.s32.totalorder %s72, 0
    %p676 = por %p674, %p675
    %s677 = ssub.s32 %s66, %s73
    %p678 = scmp.eq.s32.totalorder %s677, 0
    %s680 = sadd.s32 %s679, 1
    %s681 = scalar_select %p678, %s679, %s680
    %p684 = pneg %p678
    %p685 = scmp.eq.s32.totalorder %s66, 1
    %p686 = por %p684, %p685
    %p687 = scmp.ne.s32.totalorder %s679, %s682
    %p688 = scmp.eq.s32.totalorder %s66, 0
    %p689 = por %p687, %p688
    %p690 = scmp.ne.s32.totalorder %s679, %s682
    %p691 = scmp.eq.s32.totalorder %s71, 1
    %p692 = por %p690, %p691
    %p693 = scmp.ne.s32.totalorder %s682, %s683
    %p694 = scmp.eq.s32.totalorder %s71, 0
    %p695 = por %p693, %p694
    %p696 = scmp.ne.s32.totalorder %s682, %s683
    %p697 = scmp.eq.s32.totalorder %s72, 1
    %p698 = por %p696, %p697
    %p700 = scmp.ne.s32.totalorder %s683, %s699
    %p701 = scmp.eq.s32.totalorder %s72, 0
    %p702 = por %p700, %p701
    %s703 = ssub.s32 %s66, %s73
    %p704 = scmp.eq.s32.totalorder %s703, 0
    %s706 = sadd.s32 %s705, 1
    %s707 = scalar_select %p704, %s705, %s706
    %p710 = pneg %p704
    %p711 = scmp.eq.s32.totalorder %s66, 1
    %p712 = por %p710, %p711
    %p713 = scmp.ne.s32.totalorder %s705, %s708
    %p714 = scmp.eq.s32.totalorder %s66, 0
    %p715 = por %p713, %p714
    %p716 = scmp.ne.s32.totalorder %s705, %s708
    %p717 = scmp.eq.s32.totalorder %s71, 1
    %p718 = por %p716, %p717
    %p719 = scmp.ne.s32.totalorder %s708, %s709
    %p720 = scmp.eq.s32.totalorder %s71, 0
    %p721 = por %p719, %p720
    %p722 = scmp.ne.s32.totalorder %s708, %s709
    %p723 = scmp.eq.s32.totalorder %s72, 1
    %p724 = por %p722, %p723
    %p726 = scmp.ne.s32.totalorder %s709, %s725
    %p727 = scmp.eq.s32.totalorder %s72, 0
    %p728 = por %p726, %p727
    %p729 = scmp.le.s32.totalorder 1, %s66
    %p730 = scmp.lt.s32.totalorder %s66, 3
    %p731 = pnand %p729, %p730
    %p732 = pneg %p731
    // Predicated region
    $region9: #{nere_forward.4} parent=5 // pred_check
      _
    $region10: #{nere_forward.4} parent=5 // pred_check_branch
      %734 = sbr.rel (%p731) target = $region12
    $region11: #{nere_forward.4} parent=5 // pred_region
      %s735 = ssub.s32 %s66, 1
      // Predicated region
      $region13: #{nere_forward.4} parent=11 // pred_check
        %p736 = pneg %p87
      $region14: #{nere_forward.4} parent=11 // pred_check_branch
        %738 = sbr.rel (%p736) target = $region16
      $region15: #{nere_forward.4} parent=11 // pred_region
        _
      $region16: #{nere_forward.4} parent=11 // pred_fallthru
        _
      // Predicated region
      $region17: #{nere_forward.4} parent=11 // pred_check
        %p739 = pneg %p160
      $region18: #{nere_forward.4} parent=11 // pred_check_branch
        %741 = sbr.rel (%p739) target = $region20
      $region19: #{nere_forward.4} parent=11 // pred_region
        _
      $region20: #{nere_forward.4} parent=11 // pred_fallthru
        _
      // Predicated region
      $region21: #{nere_forward.4} parent=11 // pred_check
        %p742 = pneg %p181
      $region22: #{nere_forward.4} parent=11 // pred_check_branch
        %744 = sbr.rel (%p742) target = $region24
      $region23: #{nere_forward.4} parent=11 // pred_region
        _
      $region24: #{nere_forward.4} parent=11 // pred_fallthru
        _
      // Predicated region
      $region25: #{nere_forward.4} parent=11 // pred_check
        %p745 = pneg %p202
      $region26: #{nere_forward.4} parent=11 // pred_check_branch
        %747 = sbr.rel (%p745) target = $region28
      $region27: #{nere_forward.4} parent=11 // pred_region
        _
      $region28: #{nere_forward.4} parent=11 // pred_fallthru
        _
      // Predicated region
      $region29: #{nere_forward.4} parent=11 // pred_check
        %p748 = pneg %p223
      $region30: #{nere_forward.4} parent=11 // pred_check_branch
        %750 = sbr.rel (%p748) target = $region32
      $region31: #{nere_forward.4} parent=11 // pred_region
        _
      $region32: #{nere_forward.4} parent=11 // pred_fallthru
        _
      // Predicated region
      $region33: #{nere_forward.4} parent=11 // pred_check
        %p751 = pneg %p244
      $region34: #{nere_forward.4} parent=11 // pred_check_branch
        %753 = sbr.rel (%p751) target = $region36
      $region35: #{nere_forward.4} parent=11 // pred_region
        _
      $region36: #{nere_forward.4} parent=11 // pred_fallthru
        _
      // Predicated region
      $region37: #{nere_forward.4} parent=11 // pred_check
        %p754 = pneg %p265
      $region38: #{nere_forward.4} parent=11 // pred_check_branch
        %756 = sbr.rel (%p754) target = $region40
      $region39: #{nere_forward.4} parent=11 // pred_region
        _
      $region40: #{nere_forward.4} parent=11 // pred_fallthru
        _
      // Predicated region
      $region41: #{nere_forward.4} parent=11 // pred_check
        %p757 = pneg %p286
      $region42: #{nere_forward.4} parent=11 // pred_check_branch
        %759 = sbr.rel (%p757) target = $region44
      $region43: #{nere_forward.4} parent=11 // pred_region
        _
      $region44: #{nere_forward.4} parent=11 // pred_fallthru
        _
      // Predicated region
      $region45: #{nere_forward.4} parent=11 // pred_check
        %p760 = pneg %p307
      $region46: #{nere_forward.4} parent=11 // pred_check_branch
        %762 = sbr.rel (%p760) target = $region48
      $region47: #{nere_forward.4} parent=11 // pred_region
        _
      $region48: #{nere_forward.4} parent=11 // pred_fallthru
        _
      // Predicated region
      $region49: #{nere_forward.4} parent=11 // pred_check
        %p763 = pneg %p328
      $region50: #{nere_forward.4} parent=11 // pred_check_branch
        %765 = sbr.rel (%p763) target = $region52
      $region51: #{nere_forward.4} parent=11 // pred_region
        _
      $region52: #{nere_forward.4} parent=11 // pred_fallthru
        _
      // Predicated region
      $region53: #{nere_forward.4} parent=11 // pred_check
        %p766 = pneg %p349
      $region54: #{nere_forward.4} parent=11 // pred_check_branch
        %768 = sbr.rel (%p766) target = $region56
      $region55: #{nere_forward.4} parent=11 // pred_region
        _
      $region56: #{nere_forward.4} parent=11 // pred_fallthru
        _
      // Predicated region
      $region57: #{nere_forward.4} parent=11 // pred_check
        %p769 = pneg %p370
      $region58: #{nere_forward.4} parent=11 // pred_check_branch
        %771 = sbr.rel (%p769) target = $region60
      $region59: #{nere_forward.4} parent=11 // pred_region
        _
      $region60: #{nere_forward.4} parent=11 // pred_fallthru
        _
      // Predicated region
      $region61: #{nere_forward.4} parent=11 // pred_check
        %p772 = pneg %p391
      $region62: #{nere_forward.4} parent=11 // pred_check_branch
        %774 = sbr.rel (%p772) target = $region64
      $region63: #{nere_forward.4} parent=11 // pred_region
        _
      $region64: #{nere_forward.4} parent=11 // pred_fallthru
        _
      // Predicated region
      $region65: #{nere_forward.4} parent=11 // pred_check
        %p775 = pneg %p412
      $region66: #{nere_forward.4} parent=11 // pred_check_branch
        %777 = sbr.rel (%p775) target = $region68
      $region67: #{nere_forward.4} parent=11 // pred_region
        _
      $region68: #{nere_forward.4} parent=11 // pred_fallthru
        _
      // Predicated region
      $region69: #{nere_forward.4} parent=11 // pred_check
        %p778 = pneg %p433
      $region70: #{nere_forward.4} parent=11 // pred_check_branch
        %780 = sbr.rel (%p778) target = $region72
      $region71: #{nere_forward.4} parent=11 // pred_region
        _
      $region72: #{nere_forward.4} parent=11 // pred_fallthru
        _
      // Predicated region
      $region73: #{nere_forward.4} parent=11 // pred_check
        %p781 = pneg %p454
      $region74: #{nere_forward.4} parent=11 // pred_check_branch
        %783 = sbr.rel (%p781) target = $region76
      $region75: #{nere_forward.4} parent=11 // pred_region
        _
      $region76: #{nere_forward.4} parent=11 // pred_fallthru
        _
      // Predicated region
      $region77: #{nere_forward.4} parent=11 // pred_check
        %p784 = pneg %p475
      $region78: #{nere_forward.4} parent=11 // pred_check_branch
        %786 = sbr.rel (%p784) target = $region80
      $region79: #{nere_forward.4} parent=11 // pred_region
        _
      $region80: #{nere_forward.4} parent=11 // pred_fallthru
        _
      // Predicated region
      $region81: #{nere_forward.4} parent=11 // pred_check
        %p787 = pneg %p496
      $region82: #{nere_forward.4} parent=11 // pred_check_branch
        %789 = sbr.rel (%p787) target = $region84
      $region83: #{nere_forward.4} parent=11 // pred_region
        _
      $region84: #{nere_forward.4} parent=11 // pred_fallthru
        _
      // Predicated region
      $region85: #{nere_forward.4} parent=11 // pred_check
        %p790 = pneg %p517
      $region86: #{nere_forward.4} parent=11 // pred_check_branch
        %792 = sbr.rel (%p790) target = $region88
      $region87: #{nere_forward.4} parent=11 // pred_region
        _
      $region88: #{nere_forward.4} parent=11 // pred_fallthru
        _
      // Predicated region
      $region89: #{nere_forward.4} parent=11 // pred_check
        %p793 = pneg %p538
      $region90: #{nere_forward.4} parent=11 // pred_check_branch
        %795 = sbr.rel (%p793) target = $region92
      $region91: #{nere_forward.4} parent=11 // pred_region
        _
      $region92: #{nere_forward.4} parent=11 // pred_fallthru
        _
      // Predicated region
      $region93: #{nere_forward.4} parent=11 // pred_check
        %p796 = pneg %p559
      $region94: #{nere_forward.4} parent=11 // pred_check_branch
        %798 = sbr.rel (%p796) target = $region96
      $region95: #{nere_forward.4} parent=11 // pred_region
        _
      $region96: #{nere_forward.4} parent=11 // pred_fallthru
        _
      // Predicated region
      $region97: #{nere_forward.4} parent=11 // pred_check
        %p799 = pneg %p580
      $region98: #{nere_forward.4} parent=11 // pred_check_branch
        %801 = sbr.rel (%p799) target = $region100
      $region99: #{nere_forward.4} parent=11 // pred_region
        _
      $region100: #{nere_forward.4} parent=11 // pred_fallthru
        _
      // Predicated region
      $region101: #{nere_forward.4} parent=11 // pred_check
        %p802 = pneg %p601
      $region102: #{nere_forward.4} parent=11 // pred_check_branch
        %804 = sbr.rel (%p802) target = $region104
      $region103: #{nere_forward.4} parent=11 // pred_region
        _
      $region104: #{nere_forward.4} parent=11 // pred_fallthru
        _
      // Predicated region
      $region105: #{nere_forward.4} parent=11 // pred_check
        %p805 = pneg %p622
      $region106: #{nere_forward.4} parent=11 // pred_check_branch
        %807 = sbr.rel (%p805) target = $region108
      $region107: #{nere_forward.4} parent=11 // pred_region
        _
      $region108: #{nere_forward.4} parent=11 // pred_fallthru
        _
      // Predicated region
      $region109: #{nere_forward.4} parent=11 // pred_check
        %p808 = pneg %p643
      $region110: #{nere_forward.4} parent=11 // pred_check_branch
        %810 = sbr.rel (%p808) target = $region112
      $region111: #{nere_forward.4} parent=11 // pred_region
        _
      $region112: #{nere_forward.4} parent=11 // pred_fallthru
        _
    $region12: #{nere_forward.4} parent=5 // pred_fallthru
      _
    %p811 = scmp.lt.s32.totalorder %s66, 2
    // Predicated region
    $region113: #{nere_forward.4} parent=5 // pred_check
      %p812 = pneg %p811
    $region114: #{nere_forward.4} parent=5 // pred_check_branch
      %814 = sbr.rel (%p812) target = $region116
    $region115: #{nere_forward.4} parent=5 // pred_region
      // Predicated region
      $region117: #{nere_forward.4} parent=115 // pred_check
        %p815 = pneg %p107
      $region118: #{nere_forward.4} parent=115 // pred_check_branch
        %817 = sbr.rel (%p815) target = $region120
      $region119: #{nere_forward.4} parent=115 // pred_region
        %p818 = scmp.lt.s32.totalorder %s66, 1
        %s819 = scalar_select %p818, %s66, 1
        %s820 = smul.addr %s819, 4
        %s821 = scalar_lea.vmem %s3, %s820
      $region120: #{nere_forward.4} parent=115 // pred_fallthru
        _
      // Predicated region
      $region121: #{nere_forward.4} parent=115 // pred_check
        %p822 = pneg %p133
      $region122: #{nere_forward.4} parent=115 // pred_check_branch
        %824 = sbr.rel (%p822) target = $region124
      $region123: #{nere_forward.4} parent=115 // pred_region
        %p825 = scmp.lt.s32.totalorder %s66, 1
        %s826 = scalar_select %p825, %s66, 1
        %s827 = scalar_lea.vmem %s5, %s826
      $region124: #{nere_forward.4} parent=115 // pred_fallthru
        _
    $region116: #{nere_forward.4} parent=5 // pred_fallthru
      _
    %p828 = scmp.le.s32.totalorder 1, %s66
    %p829 = scmp.lt.s32.totalorder %s66, 3
    %p830 = pnand %p828, %p829
    %p831 = pneg %p830
    // Predicated region
    $region125: #{nere_forward.4} parent=5 // pred_check
      _
    $region126: #{nere_forward.4} parent=5 // pred_check_branch
      %833 = sbr.rel (%p830) target = $region128
    $region127: #{nere_forward.4} parent=5 // pred_region
      %s834 = ssub.s32 %s66, 1
      %p835 = pneg %p87
      %p836 = pneg %p84
      %p837 = scmp.lt.s32.totalorder %s71, 1
      %s838 = scalar_select %p837, %s71, 1
      %s839 = smul.addr %s838, 4
      %s840 = scalar_lea.vmem %s3, %s839
      %p841 = pneg %p113
      %p842 = pneg %p110
      %p843 = scmp.lt.s32.totalorder %s71, 1
      %s844 = scalar_select %p843, %s71, 1
      %s845 = scalar_lea.vmem %s5, %s844
      %p846 = pneg %p139
      %p847 = pneg %p136
      %p848 = pneg %p160
      %p849 = pneg %p157
      %p850 = pneg %p181
      %p851 = pneg %p178
      %p852 = pneg %p202
      %p853 = pneg %p199
      %p854 = pneg %p223
      %p855 = pneg %p220
      %p856 = pneg %p244
      %p857 = pneg %p241
      %p858 = pneg %p265
      %p859 = pneg %p262
      %p860 = pneg %p286
      %p861 = pneg %p283
      %p862 = pneg %p307
      %p863 = pneg %p304
      %p864 = pneg %p328
      %p865 = pneg %p325
      %p866 = pneg %p349
      %p867 = pneg %p346
      %p868 = pneg %p370
      %p869 = pneg %p367
      %p870 = pneg %p391
      %p871 = pneg %p388
      %p872 = pneg %p412
      %p873 = pneg %p409
      %p874 = pneg %p433
      %p875 = pneg %p430
      %p876 = pneg %p454
      %p877 = pneg %p451
      %p878 = pneg %p475
      %p879 = pneg %p472
      %p880 = pneg %p496
      %p881 = pneg %p493
      %p882 = pneg %p517
      %p883 = pneg %p514
      %p884 = pneg %p538
      %p885 = pneg %p535
      %p886 = pneg %p559
      %p887 = pneg %p556
      %p888 = pneg %p580
      %p889 = pneg %p577
      %p890 = pneg %p601
      %p891 = pneg %p598
      %p892 = pneg %p622
      %p893 = pneg %p619
      %p894 = pneg %p643
      %p895 = pneg %p640
      %p896 = pneg %p669
      %p897 = pneg %p666
      %p898 = scmp.lt.s32.totalorder %s71, 1
      %s899 = scalar_select %p898, %s71, 1
      %s900 = smul.addr %s899, 2
      %s901 = smul.addr %s900, 8
      %s902 = scalar_lea.vmem %s55, %s901
      %p903 = pneg %p695
      %p904 = pneg %p692
      %p905 = scmp.lt.s32.totalorder %s71, 1
      %s906 = scalar_select %p905, %s71, 1
      %s907 = smul.addr %s906, 2
      %s908 = smul.addr %s907, 4
      %s909 = scalar_lea.vmem %s57, %s908
      %p910 = pneg %p721
      %p911 = pneg %p718
      %p912 = scmp.lt.s32.totalorder %s71, 1
      %s913 = scalar_select %p912, %s71, 1
      %s914 = smul.addr %s913, 2
      %s915 = smul.addr %s914, 8
      %s916 = scalar_lea.vmem %s59, %s915
      %p917 = scmp.lt.s32.totalorder %s71, 1
      %s918 = scalar_select %p917, %s71, 1
      %s919 = smul.addr %s918, 4
      %s920 = scalar_lea.vmem %s3, %s919
      %p921 = scmp.lt.s32.totalorder %s71, 1
      %s922 = scalar_select %p921, %s71, 1
      %s923 = scalar_lea.vmem %s5, %s922
      %p924 = scmp.lt.s32.totalorder %s71, 1
      %s925 = scalar_select %p924, %s71, 1
      %s926 = smul.addr %s925, 2
      %s927 = smul.addr %s926, 8
      %s928 = scalar_lea.vmem %s55, %s927
      %p929 = scmp.lt.s32.totalorder %s71, 1
      %s930 = scalar_select %p929, %s71, 1
      %s931 = smul.addr %s930, 2
      %s932 = smul.addr %s931, 4
      %s933 = scalar_lea.vmem %s57, %s932
      %p934 = scmp.lt.s32.totalorder %s71, 1
      %s935 = scalar_select %p934, %s71, 1
      %s936 = smul.addr %s935, 2
      %s937 = smul.addr %s936, 8
      %s938 = scalar_lea.vmem %s59, %s937
      %v940 = vld [vmem:[%s920] sm:$0xf]
      %v941 = vld [vmem:[%s923] sm:$0x1]
      %vm942 = vcmp.gt.f32.partialorder %v941, 0.0
      %v943 = vsel %vm942, 0.0, -1e+09
      %v944 = vld [vmem:[%s1] sm:$0xf]
      %v945 = vld [vmem:[%s1 + $0x4] sm:$0x1]
      %v946 = vunpack.c.l.bf16 %v944
      %v947 = vunpack.c.l.bf16 %v945
      %vm948 = vcmask 261120
      %v949 = vsel %vm948, %v946, 0.0
      %950 = vadd.xlane.f32.xlu0 %v949
      %v951 = vpop.xlane.xlu0 %950
      %vm952 = vcmask 254976
      %v953 = vsel %vm952, %v947, 0.0
      %954 = vadd.xlane.f32.xlu0 %v953
      %v955 = vpop.xlane.xlu0 %954
      %v956 = vrcp.pop 32.0
      %v957 = vmul.f32 %v951, %v956
      %v958 = vmul.f32 %v955, %v956
      %v959 = vsub.f32 %v946, %v957
      %v960 = vsub.f32 %v947, %v958
      %v961 = vmul.f32 %v959, %v959
      %v962 = vmul.f32 %v960, %v960
      %v963 = vsel %vm948, %v961, 0.0
      %964 = vadd.xlane.f32.xlu0 %v963
      %v965 = vpop.xlane.xlu0 %964
      %v966 = vsel %vm952, %v962, 0.0
      %967 = vadd.xlane.f32.xlu0 %v966
      %v968 = vpop.xlane.xlu0 %967
      %v969 = vmul.f32 %v965, %v956
      %v970 = vmul.f32 %v968, %v956
      %v971 = vadd.f32 %v969, 1e-05
      %v972 = vadd.f32 %v970, 1e-05
      %v973 = vrsqrt.pop %v971
      %v974 = vrsqrt.pop %v972
      %v975 = vmul.f32 %v959, %v973
      %v976 = vmul.f32 %v960, %v974
      %v977 = vld [vmem:[%s7] sm:$0x1]
      %v978 = vunpack.c.l.bf16 %v977
      %v979 = vlaneseq
      %v980 = vshrl.u32 %v979, 7
      %v981 = vsub.s32 0, %v980
      %v982 = vrot.slane %v978, %v981
      %v983 = vmul.f32 %v975, %v982
      %v984 = vmul.f32 %v976, %v982
      %v985 = vld [vmem:[%s9] sm:$0x1]
      %v986 = vunpack.c.l.bf16 %v985
      %v987 = vlaneseq
      %v988 = vshrl.u32 %v987, 7
      %v989 = vsub.s32 0, %v988
      %v990 = vrot.slane %v986, %v989
      %v991 = vadd.f32 %v983, %v990
      %v992 = vadd.f32 %v984, %v990
      %v993 = vpack.c.bf16 %v992, %v991
      %v994 = vld [vmem:[%s11] sm:$0xf]
      %v995 = vld [vmem:[%s11 + $0x4] sm:$0xf]
      %v996 = vld [vmem:[%s11 + $0x8] sm:$0xf]
      %v997 = vld [vmem:[%s11 + $0xc] sm:$0xf]
      %v998 = vld [vmem:[%s13] sm:$0x1]
      %v999 = vunpack.c.l.bf16 %v998
      %v1000 = vlaneseq
      %v1001 = vshrl.u32 %v1000, 7
      %v1002 = vsub.s32 0, %v1001
      %v1003 = vrot.slane %v999, %v1002
      %v1008 = vunpack.c.l.b16 %v994
      %v1009 = vunpack.c.l.b16 %v995
      %v1010 = vunpack.c.l.b16 %v996
      %v1011 = vunpack.c.l.b16 %v997
      %v1012 = vpack.c.b16 %v1009, %v1008
      %v1013 = vpack.c.b16 %v1011, %v1010
      %v1017 = vsel %vm948, %v993, 0
      %1019 = vmatprep.subr.bf16.mxu0 0
      %1020 = vmatpush1.bf16.msra.mxu0 %v1012
      %1021 = vmatprep.subr.bf16.mxu0 0
      %1022 = vmatpush1.bf16.msra.mxu0 %v1013
      %1023 = vmatprep.subr.bf16.mxu0 0
      %1024 = vmatpush1.bf16.msra.mxu0 0
      %1025 = vmatprep.subr.bf16.mxu0 0
      %1026 = vmatpush1.bf16.msra.mxu0 0
      %1027 = vmatprep.subr.bf16.mxu0 0
      %1028 = vmatpush1.bf16.msra.mxu0 0
      %1029 = vmatprep.subr.bf16.mxu0 0
      %1030 = vmatpush1.bf16.msra.mxu0 0
      %1031 = vmatprep.subr.bf16.mxu0 0
      %1032 = vmatpush1.bf16.msra.mxu0 0
      %1033 = vmatprep.subr.bf16.mxu0 0
      %1034 = vmatpush1.bf16.msra.mxu0 0
      %1035 = vmatprep.subr.bf16.mxu0 0
      %1036 = vmatpush1.bf16.msra.mxu0 0
      %1037 = vmatprep.subr.bf16.mxu0 0
      %1038 = vmatpush1.bf16.msra.mxu0 0
      %1039 = vmatprep.subr.bf16.mxu0 0
      %1040 = vmatpush1.bf16.msra.mxu0 0
      %1041 = vmatprep.subr.bf16.mxu0 0
      %1042 = vmatpush1.bf16.msra.mxu0 0
      %1043 = vmatprep.subr.bf16.mxu0 0
      %1044 = vmatpush1.bf16.msra.mxu0 0
      %1045 = vmatprep.subr.bf16.mxu0 0
      %1046 = vmatpush1.bf16.msra.mxu0 0
      %1047 = vmatprep.subr.bf16.mxu0 0
      %1048 = vmatpush1.bf16.msra.mxu0 0
      %1049 = vmatprep.subr.bf16.mxu0 0
      %1050 = vmatpush1.bf16.msra.mxu0 0
      %1051 = vmatprep.mubr.bf16.mxu0 0
      %1052 = vmatmul.mubr.bf16.gmra.mrb[0].mxu0 %v1017
      %v1053 = vpop.f32.mrb[0].mxu0
      %v1054 = vadd.f32 %v1003, %v1053
      %v1055 = vpop.f32.mrb[0].mxu0
      %v1056 = vpop.f32.mrb[0].mxu0
      %v1057 = vadd.f32 %v1003, %v1056
      %v1058 = vpop.f32.mrb[0].mxu0
      %1059 = vdwg.mxu0
      %v1060 = vlaneseq
      %v1061 = vshrl.u32 %v1060, 7
      %v1062 = vadd.s32 %v1061, 8
      %v1063 = vlaneseq
      %v1064 = vand.u32 %v1063, 127
      %vm1065 = vcmp.ge.s32.totalorder %v1061, %v1064
      %vm1066 = vcmp.ge.s32.totalorder %v1062, %v1064
      %v1067 = vsel %vm1065, 0.0, -1e+09
      %v1068 = vsel %vm1066, 0.0, -1e+09
      %v1069 = vmul.f32 %v1054, 0.35355338
      %v1070 = vmul.f32 %v1057, 0.35355338
      %v1071 = vpack.c.bf16 %v1070, %v1069
      %v1072 = vpack.c.bf16 %v1057, %v1054
      %1074 = vrot.lane.b32.xlu0 %v1072, 96
      %v1075 = vpop.permute.xlu0 %1074
      %vm1076 = vcmask 64512
      %v1078 = vsel %vm1076, %v1071, 0
      %v1081 = vsel %vm1076, %v1075, 0
      %1083 = vmatprep.subr.bf16.mxu0 0
      %1084 = vmatpush1.bf16.xpose.msra.mxu0 %v1081
      %1085 = vmatprep.subr.bf16.mxu0 0
      %1086 = vmatpush1.bf16.xpose.msra.mxu0 0
      %1087 = vmatprep.subr.bf16.mxu0 0
      %1088 = vmatpush1.bf16.xpose.msra.mxu0 0
      %1089 = vmatprep.subr.bf16.mxu0 0
      %1090 = vmatpush1.bf16.xpose.msra.mxu0 0
      %1091 = vmatprep.subr.bf16.mxu0 0
      %1092 = vmatpush1.bf16.xpose.msra.mxu0 0
      %1093 = vmatprep.subr.bf16.mxu0 0
      %1094 = vmatpush1.bf16.xpose.msra.mxu0 0
      %1095 = vmatprep.subr.bf16.mxu0 0
      %1096 = vmatpush1.bf16.xpose.msra.mxu0 0
      %1097 = vmatprep.subr.bf16.mxu0 0
      %1098 = vmatpush1.bf16.xpose.msra.mxu0 0
      %1099 = vmatprep.subr.bf16.mxu0 0
      %1100 = vmatpush1.bf16.xpose.msra.mxu0 0
      %1101 = vmatprep.subr.bf16.mxu0 0
      %1102 = vmatpush1.bf16.xpose.msra.mxu0 0
      %1103 = vmatprep.subr.bf16.mxu0 0
      %1104 = vmatpush1.bf16.xpose.msra.mxu0 0
      %1105 = vmatprep.subr.bf16.mxu0 0
      %1106 = vmatpush1.bf16.xpose.msra.mxu0 0
      %1107 = vmatprep.subr.bf16.mxu0 0
      %1108 = vmatpush1.bf16.xpose.msra.mxu0 0
      %1109 = vmatprep.subr.bf16.mxu0 0
      %1110 = vmatpush1.bf16.xpose.msra.mxu0 0
      %1111 = vmatprep.subr.bf16.mxu0 0
      %1112 = vmatpush1.bf16.xpose.msra.mxu0 0
      %1113 = vmatprep.subr.bf16.mxu0 0
      %1114 = vmatpush1.bf16.xpose.msra.mxu0 0
      %1115 = vmatprep.mubr.bf16.mxu0 0
      %1116 = vmatmul.mubr.bf16.gmra.mrb[0].mxu0 %v1078
      %v1117 = vpop.f32.mrb[0].mxu0
      %v1118 = vadd.f32 %v1067, %v1117
      %v1119 = vpop.f32.mrb[0].mxu0
      %v1120 = vpop.f32.mrb[0].mxu0
      %v1121 = vadd.f32 %v1068, %v1120
      %v1122 = vpop.f32.mrb[0].mxu0
      %1123 = vdwg.mxu0
      %vm1124 = vcmask 80896
      %v1125 = vsel %vm1124, %v1118, -inf
      %1126 = vmax.xlane.f32.xlu0 %v1125
      %v1127 = vpop.xlane.xlu0 %1126
      %vm1128 = vcmask 74752
      %v1129 = vsel %vm1128, %v1121, -inf
      %1130 = vmax.xlane.f32.xlu0 %v1129
      %v1131 = vpop.xlane.xlu0 %1130
      %v1132 = vsub.f32 %v1118, %v1127
      %v1133 = vsub.f32 %v1121, %v1131
      %v1134 = vmul.f32 %v1132, 1.442695
      %v1135 = vpow.pop %v1134
      %v1136 = vmul.f32 %v1133, 1.442695
      %v1137 = vpow.pop %v1136
      %v1138 = vsel %vm1124, %v1135, 0.0
      %1139 = vadd.xlane.f32.xlu0 %v1138
      %v1140 = vpop.xlane.xlu0 %1139
      %v1141 = vsel %vm1128, %v1137, 0.0
      %1142 = vadd.xlane.f32.xlu0 %v1141
      %v1143 = vpop.xlane.xlu0 %1142
      %v1144 = vrcp.pop %v1140
      %v1145 = vrcp.pop %v1143
      %v1146 = vmul.f32 %v1135, %v1144
      %v1147 = vmul.f32 %v1137, %v1145
      %v1148 = vpack.c.bf16 %v1147, %v1146
      %1149 = vrot.lane.b32.xlu0 %v1072, 64
      %v1150 = vpop.permute.xlu0 %1149
      %v1152 = vsel %vm1124, %v1148, 0
      %vm1154 = vcmask 1044480
      %v1156 = vsel %vm1154, %v1150, 0
      %1158 = vmatprep.subr.bf16.mxu0 0
      %1159 = vmatpush1.bf16.msra.mxu0 %v1156
      %1160 = vmatprep.subr.bf16.mxu0 0
      %1161 = vmatpush1.bf16.msra.mxu0 0
      %1162 = vmatprep.subr.bf16.mxu0 0
      %1163 = vmatpush1.bf16.msra.mxu0 0
      %1164 = vmatprep.subr.bf16.mxu0 0
      %1165 = vmatpush1.bf16.msra.mxu0 0
      %1166 = vmatprep.subr.bf16.mxu0 0
      %1167 = vmatpush1.bf16.msra.mxu0 0
      %1168 = vmatprep.subr.bf16.mxu0 0
      %1169 = vmatpush1.bf16.msra.mxu0 0
      %1170 = vmatprep.subr.bf16.mxu0 0
      %1171 = vmatpush1.bf16.msra.mxu0 0
      %1172 = vmatprep.subr.bf16.mxu0 0
      %1173 = vmatpush1.bf16.msra.mxu0 0
      %1174 = vmatprep.subr.bf16.mxu0 0
      %1175 = vmatpush1.bf16.msra.mxu0 0
      %1176 = vmatprep.subr.bf16.mxu0 0
      %1177 = vmatpush1.bf16.msra.mxu0 0
      %1178 = vmatprep.subr.bf16.mxu0 0
      %1179 = vmatpush1.bf16.msra.mxu0 0
      %1180 = vmatprep.subr.bf16.mxu0 0
      %1181 = vmatpush1.bf16.msra.mxu0 0
      %1182 = vmatprep.subr.bf16.mxu0 0
      %1183 = vmatpush1.bf16.msra.mxu0 0
      %1184 = vmatprep.subr.bf16.mxu0 0
      %1185 = vmatpush1.bf16.msra.mxu0 0
      %1186 = vmatprep.subr.bf16.mxu0 0
      %1187 = vmatpush1.bf16.msra.mxu0 0
      %1188 = vmatprep.subr.bf16.mxu0 0
      %1189 = vmatpush1.bf16.msra.mxu0 0
      %1190 = vmatprep.mubr.bf16.mxu0 0
      %1191 = vmatmul.mubr.bf16.gmra.mrb[0].mxu0 %v1152
      %v1192 = vpop.f32.mrb[0].mxu0
      %v1193 = vadd.f32 0.0, %v1192
      %v1194 = vpop.f32.mrb[0].mxu0
      %v1195 = vpop.f32.mrb[0].mxu0
      %v1196 = vadd.f32 0.0, %v1195
      %v1197 = vpop.f32.mrb[0].mxu0
      %1198 = vdwg.mxu0
      %1200 = vrot.lane.b32.xlu0 %v1071, 120
      %v1201 = vpop.permute.xlu0 %1200
      %1202 = vrot.lane.b32.xlu0 %v1072, 88
      %v1203 = vpop.permute.xlu0 %1202
      %v1205 = vsel %vm1076, %v1201, 0
      %v1208 = vsel %vm1076, %v1203, 0
      %1210 = vmatprep.subr.bf16.mxu0 0
      %1211 = vmatpush1.bf16.xpose.msra.mxu0 %v1208
      %1212 = vmatprep.subr.bf16.mxu0 0
      %1213 = vmatpush1.bf16.xpose.msra.mxu0 0
      %1214 = vmatprep.subr.bf16.mxu0 0
      %1215 = vmatpush1.bf16.xpose.msra.mxu0 0
      %1216 = vmatprep.subr.bf16.mxu0 0
      %1217 = vmatpush1.bf16.xpose.msra.mxu0 0
      %1218 = vmatprep.subr.bf16.mxu0 0
      %1219 = vmatpush1.bf16.xpose.msra.mxu0 0
      %1220 = vmatprep.subr.bf16.mxu0 0
      %1221 = vmatpush1.bf16.xpose.msra.mxu0 0
      %1222 = vmatprep.subr.bf16.mxu0 0
      %1223 = vmatpush1.bf16.xpose.msra.mxu0 0
      %1224 = vmatprep.subr.bf16.mxu0 0
      %1225 = vmatpush1.bf16.xpose.msra.mxu0 0
      %1226 = vmatprep.subr.bf16.mxu0 0
      %1227 = vmatpush1.bf16.xpose.msra.mxu0 0
      %1228 = vmatprep.subr.bf16.mxu0 0
      %1229 = vmatpush1.bf16.xpose.msra.mxu0 0
      %1230 = vmatprep.subr.bf16.mxu0 0
      %1231 = vmatpush1.bf16.xpose.msra.mxu0 0
      %1232 = vmatprep.subr.bf16.mxu0 0
      %1233 = vmatpush1.bf16.xpose.msra.mxu0 0
      %1234 = vmatprep.subr.bf16.mxu0 0
      %1235 = vmatpush1.bf16.xpose.msra.mxu0 0
      %1236 = vmatprep.subr.bf16.mxu0 0
      %1237 = vmatpush1.bf16.xpose.msra.mxu0 0
      %1238 = vmatprep.subr.bf16.mxu0 0
      %1239 = vmatpush1.bf16.xpose.msra.mxu0 0
      %1240 = vmatprep.subr.bf16.mxu0 0
      %1241 = vmatpush1.bf16.xpose.msra.mxu0 0
      %1242 = vmatprep.mubr.bf16.mxu0 0
      %1243 = vmatmul.mubr.bf16.gmra.mrb[0].mxu0 %v1205
      %v1244 = vpop.f32.mrb[0].mxu0
      %v1245 = vadd.f32 %v1067, %v1244
      %v1246 = vpop.f32.mrb[0].mxu0
      %v1247 = vpop.f32.mrb[0].mxu0
      %v1248 = vadd.f32 %v1068, %v1247
      %v1249 = vpop.f32.mrb[0].mxu0
      %1250 = vdwg.mxu0
      %v1251 = vsel %vm1124, %v1245, -inf
      %1252 = vmax.xlane.f32.xlu0 %v1251
      %v1253 = vpop.xlane.xlu0 %1252
      %v1254 = vsel %vm1128, %v1248, -inf
      %1255 = vmax.xlane.f32.xlu0 %v1254
      %v1256 = vpop.xlane.xlu0 %1255
      %v1257 = vsub.f32 %v1245, %v1253
      %v1258 = vsub.f32 %v1248, %v1256
      %v1259 = vmul.f32 %v1257, 1.442695
      %v1260 = vpow.pop %v1259
      %v1261 = vmul.f32 %v1258, 1.442695
      %v1262 = vpow.pop %v1261
      %v1263 = vsel %vm1124, %v1260, 0.0
      %1264 = vadd.xlane.f32.xlu0 %v1263
      %v1265 = vpop.xlane.xlu0 %1264
      %v1266 = vsel %vm1128, %v1262, 0.0
      %1267 = vadd.xlane.f32.xlu0 %v1266
      %v1268 = vpop.xlane.xlu0 %1267
      %v1269 = vrcp.pop %v1265
      %v1270 = vrcp.pop %v1268
      %v1271 = vmul.f32 %v1260, %v1269
      %v1272 = vmul.f32 %v1262, %v1270
      %v1273 = vpack.c.bf16 %v1272, %v1271
      %1274 = vrot.lane.b32.xlu0 %v1072, 56
      %v1275 = vpop.permute.xlu0 %1274
      %v1277 = vsel %vm1124, %v1273, 0
      %v1280 = vsel %vm1154, %v1275, 0
      %1282 = vmatprep.subr.bf16.mxu0 0
      %1283 = vmatpush1.bf16.msra.mxu0 %v1280
      %1284 = vmatprep.subr.bf16.mxu0 0
      %1285 = vmatpush1.bf16.msra.mxu0 0
      %1286 = vmatprep.subr.bf16.mxu0 0
      %1287 = vmatpush1.bf16.msra.mxu0 0
      %1288 = vmatprep.subr.bf16.mxu0 0
      %1289 = vmatpush1.bf16.msra.mxu0 0
      %1290 = vmatprep.subr.bf16.mxu0 0
      %1291 = vmatpush1.bf16.msra.mxu0 0
      %1292 = vmatprep.subr.bf16.mxu0 0
      %1293 = vmatpush1.bf16.msra.mxu0 0
      %1294 = vmatprep.subr.bf16.mxu0 0
      %1295 = vmatpush1.bf16.msra.mxu0 0
      %1296 = vmatprep.subr.bf16.mxu0 0
      %1297 = vmatpush1.bf16.msra.mxu0 0
      %1298 = vmatprep.subr.bf16.mxu0 0
      %1299 = vmatpush1.bf16.msra.mxu0 0
      %1300 = vmatprep.subr.bf16.mxu0 0
      %1301 = vmatpush1.bf16.msra.mxu0 0
      %1302 = vmatprep.subr.bf16.mxu0 0
      %1303 = vmatpush1.bf16.msra.mxu0 0
      %1304 = vmatprep.subr.bf16.mxu0 0
      %1305 = vmatpush1.bf16.msra.mxu0 0
      %1306 = vmatprep.subr.bf16.mxu0 0
      %1307 = vmatpush1.bf16.msra.mxu0 0
      %1308 = vmatprep.subr.bf16.mxu0 0
      %1309 = vmatpush1.bf16.msra.mxu0 0
      %1310 = vmatprep.subr.bf16.mxu0 0
      %1311 = vmatpush1.bf16.msra.mxu0 0
      %1312 = vmatprep.subr.bf16.mxu0 0
      %1313 = vmatpush1.bf16.msra.mxu0 0
      %1314 = vmatprep.mubr.bf16.mxu0 0
      %1315 = vmatmul.mubr.bf16.gmra.mrb[0].mxu0 %v1277
      %v1316 = vpop.f32.mrb[0].mxu0
      %v1317 = vadd.f32 0.0, %v1316
      %v1318 = vpop.f32.mrb[0].mxu0
      %v1319 = vpop.f32.mrb[0].mxu0
      %v1320 = vadd.f32 0.0, %v1319
      %v1321 = vpop.f32.mrb[0].mxu0
      %1322 = vdwg.mxu0
      %1323 = vrot.lane.b32.xlu0 %v1071, 112
      %v1324 = vpop.permute.xlu0 %1323
      %1325 = vrot.lane.b32.xlu0 %v1072, 80
      %v1326 = vpop.permute.xlu0 %1325
      %v1328 = vsel %vm1076, %v1324, 0
      %v1331 = vsel %vm1076, %v1326, 0
      %1333 = vmatprep.subr.bf16.mxu0 0
      %1334 = vmatpush1.bf16.xpose.msra.mxu0 %v1331
      %1335 = vmatprep.subr.bf16.mxu0 0
      %1336 = vmatpush1.bf16.xpose.msra.mxu0 0
      %1337 = vmatprep.subr.bf16.mxu0 0
      %1338 = vmatpush1.bf16.xpose.msra.mxu0 0
      %1339 = vmatprep.subr.bf16.mxu0 0
      %1340 = vmatpush1.bf16.xpose.msra.mxu0 0
      %1341 = vmatprep.subr.bf16.mxu0 0
      %1342 = vmatpush1.bf16.xpose.msra.mxu0 0
      %1343 = vmatprep.subr.bf16.mxu0 0
      %1344 = vmatpush1.bf16.xpose.msra.mxu0 0
      %1345 = vmatprep.subr.bf16.mxu0 0
      %1346 = vmatpush1.bf16.xpose.msra.mxu0 0
      %1347 = vmatprep.subr.bf16.mxu0 0
      %1348 = vmatpush1.bf16.xpose.msra.mxu0 0
      %1349 = vmatprep.subr.bf16.mxu0 0
      %1350 = vmatpush1.bf16.xpose.msra.mxu0 0
      %1351 = vmatprep.subr.bf16.mxu0 0
      %1352 = vmatpush1.bf16.xpose.msra.mxu0 0
      %1353 = vmatprep.subr.bf16.mxu0 0
      %1354 = vmatpush1.bf16.xpose.msra.mxu0 0
      %1355 = vmatprep.subr.bf16.mxu0 0
      %1356 = vmatpush1.bf16.xpose.msra.mxu0 0
      %1357 = vmatprep.subr.bf16.mxu0 0
      %1358 = vmatpush1.bf16.xpose.msra.mxu0 0
      %1359 = vmatprep.subr.bf16.mxu0 0
      %1360 = vmatpush1.bf16.xpose.msra.mxu0 0
      %1361 = vmatprep.subr.bf16.mxu0 0
      %1362 = vmatpush1.bf16.xpose.msra.mxu0 0
      %1363 = vmatprep.subr.bf16.mxu0 0
      %1364 = vmatpush1.bf16.xpose.msra.mxu0 0
      %1365 = vmatprep.mubr.bf16.mxu0 0
      %1366 = vmatmul.mubr.bf16.gmra.mrb[0].mxu0 %v1328
      %v1367 = vpop.f32.mrb[0].mxu0
      %v1368 = vadd.f32 %v1067, %v1367
      %v1369 = vpop.f32.mrb[0].mxu0
      %v1370 = vpop.f32.mrb[0].mxu0
      %v1371 = vadd.f32 %v1068, %v1370
      %v1372 = vpop.f32.mrb[0].mxu0
      %1373 = vdwg.mxu0
      %v1374 = vsel %vm1124, %v1368, -inf
      %1375 = vmax.xlane.f32.xlu0 %v1374
      %v1376 = vpop.xlane.xlu0 %1375
      %v1377 = vsel %vm1128, %v1371, -inf
      %1378 = vmax.xlane.f32.xlu0 %v1377
      %v1379 = vpop.xlane.xlu0 %1378
      %v1380 = vsub.f32 %v1368, %v1376
      %v1381 = vsub.f32 %v1371, %v1379
      %v1382 = vmul.f32 %v1380, 1.442695
      %v1383 = vpow.pop %v1382
      %v1384 = vmul.f32 %v1381, 1.442695
      %v1385 = vpow.pop %v1384
      %v1386 = vsel %vm1124, %v1383, 0.0
      %1387 = vadd.xlane.f32.xlu0 %v1386
      %v1388 = vpop.xlane.xlu0 %1387
      %v1389 = vsel %vm1128, %v1385, 0.0
      %1390 = vadd.xlane.f32.xlu0 %v1389
      %v1391 = vpop.xlane.xlu0 %1390
      %v1392 = vrcp.pop %v1388
      %v1393 = vrcp.pop %v1391
      %v1394 = vmul.f32 %v1383, %v1392
      %v1395 = vmul.f32 %v1385, %v1393
      %v1396 = vpack.c.bf16 %v1395, %v1394
      %1397 = vrot.lane.b32.xlu0 %v1072, 48
      %v1398 = vpop.permute.xlu0 %1397
      %v1400 = vsel %vm1124, %v1396, 0
      %v1403 = vsel %vm1154, %v1398, 0
      %1405 = vmatprep.subr.bf16.mxu0 0
      %1406 = vmatpush1.bf16.msra.mxu0 %v1403
      %1407 = vmatprep.subr.bf16.mxu0 0
      %1408 = vmatpush1.bf16.msra.mxu0 0
      %1409 = vmatprep.subr.bf16.mxu0 0
      %1410 = vmatpush1.bf16.msra.mxu0 0
      %1411 = vmatprep.subr.bf16.mxu0 0
      %1412 = vmatpush1.bf16.msra.mxu0 0
      %1413 = vmatprep.subr.bf16.mxu0 0
      %1414 = vmatpush1.bf16.msra.mxu0 0
      %1415 = vmatprep.subr.bf16.mxu0 0
      %1416 = vmatpush1.bf16.msra.mxu0 0
      %1417 = vmatprep.subr.bf16.mxu0 0
      %1418 = vmatpush1.bf16.msra.mxu0 0
      %1419 = vmatprep.subr.bf16.mxu0 0
      %1420 = vmatpush1.bf16.msra.mxu0 0
      %1421 = vmatprep.subr.bf16.mxu0 0
      %1422 = vmatpush1.bf16.msra.mxu0 0
      %1423 = vmatprep.subr.bf16.mxu0 0
      %1424 = vmatpush1.bf16.msra.mxu0 0
      %1425 = vmatprep.subr.bf16.mxu0 0
      %1426 = vmatpush1.bf16.msra.mxu0 0
      %1427 = vmatprep.subr.bf16.mxu0 0
      %1428 = vmatpush1.bf16.msra.mxu0 0
      %1429 = vmatprep.subr.bf16.mxu0 0
      %1430 = vmatpush1.bf16.msra.mxu0 0
      %1431 = vmatprep.subr.bf16.mxu0 0
      %1432 = vmatpush1.bf16.msra.mxu0 0
      %1433 = vmatprep.subr.bf16.mxu0 0
      %1434 = vmatpush1.bf16.msra.mxu0 0
      %1435 = vmatprep.subr.bf16.mxu0 0
      %1436 = vmatpush1.bf16.msra.mxu0 0
      %1437 = vmatprep.mubr.bf16.mxu0 0
      %1438 = vmatmul.mubr.bf16.gmra.mrb[0].mxu0 %v1400
      %v1439 = vpop.f32.mrb[0].mxu0
      %v1440 = vadd.f32 0.0, %v1439
      %v1441 = vpop.f32.mrb[0].mxu0
      %v1442 = vpop.f32.mrb[0].mxu0
      %v1443 = vadd.f32 0.0, %v1442
      %v1444 = vpop.f32.mrb[0].mxu0
      %1445 = vdwg.mxu0
      %1446 = vrot.lane.b32.xlu0 %v1071, 104
      %v1447 = vpop.permute.xlu0 %1446
      %1448 = vrot.lane.b32.xlu0 %v1072, 72
      %v1449 = vpop.permute.xlu0 %1448
      %v1451 = vsel %vm1076, %v1447, 0
      %v1454 = vsel %vm1076, %v1449, 0
      %1456 = vmatprep.subr.bf16.mxu0 0
      %1457 = vmatpush1.bf16.xpose.msra.mxu0 %v1454
      %1458 = vmatprep.subr.bf16.mxu0 0
      %1459 = vmatpush1.bf16.xpose.msra.mxu0 0
      %1460 = vmatprep.subr.bf16.mxu0 0
      %1461 = vmatpush1.bf16.xpose.msra.mxu0 0
      %1462 = vmatprep.subr.bf16.mxu0 0
      %1463 = vmatpush1.bf16.xpose.msra.mxu0 0
      %1464 = vmatprep.subr.bf16.mxu0 0
      %1465 = vmatpush1.bf16.xpose.msra.mxu0 0
      %1466 = vmatprep.subr.bf16.mxu0 0
      %1467 = vmatpush1.bf16.xpose.msra.mxu0 0
      %1468 = vmatprep.subr.bf16.mxu0 0
      %1469 = vmatpush1.bf16.xpose.msra.mxu0 0
      %1470 = vmatprep.subr.bf16.mxu0 0
      %1471 = vmatpush1.bf16.xpose.msra.mxu0 0
      %1472 = vmatprep.subr.bf16.mxu0 0
      %1473 = vmatpush1.bf16.xpose.msra.mxu0 0
      %1474 = vmatprep.subr.bf16.mxu0 0
      %1475 = vmatpush1.bf16.xpose.msra.mxu0 0
      %1476 = vmatprep.subr.bf16.mxu0 0
      %1477 = vmatpush1.bf16.xpose.msra.mxu0 0
      %1478 = vmatprep.subr.bf16.mxu0 0
      %1479 = vmatpush1.bf16.xpose.msra.mxu0 0
      %1480 = vmatprep.subr.bf16.mxu0 0
      %1481 = vmatpush1.bf16.xpose.msra.mxu0 0
      %1482 = vmatprep.subr.bf16.mxu0 0
      %1483 = vmatpush1.bf16.xpose.msra.mxu0 0
      %1484 = vmatprep.subr.bf16.mxu0 0
      %1485 = vmatpush1.bf16.xpose.msra.mxu0 0
      %1486 = vmatprep.subr.bf16.mxu0 0
      %1487 = vmatpush1.bf16.xpose.msra.mxu0 0
      %1488 = vmatprep.mubr.bf16.mxu0 0
      %1489 = vmatmul.mubr.bf16.gmra.mrb[0].mxu0 %v1451
      %v1490 = vpop.f32.mrb[0].mxu0
      %v1491 = vadd.f32 %v1067, %v1490
      %v1492 = vpop.f32.mrb[0].mxu0
      %v1493 = vpop.f32.mrb[0].mxu0
      %v1494 = vadd.f32 %v1068, %v1493
      %v1495 = vpop.f32.mrb[0].mxu0
      %1496 = vdwg.mxu0
      %v1497 = vsel %vm1124, %v1491, -inf
      %1498 = vmax.xlane.f32.xlu0 %v1497
      %v1499 = vpop.xlane.xlu0 %1498
      %v1500 = vsel %vm1128, %v1494, -inf
      %1501 = vmax.xlane.f32.xlu0 %v1500
      %v1502 = vpop.xlane.xlu0 %1501
      %v1503 = vsub.f32 %v1491, %v1499
      %v1504 = vsub.f32 %v1494, %v1502
      %v1505 = vmul.f32 %v1503, 1.442695
      %v1506 = vpow.pop %v1505
      %v1507 = vmul.f32 %v1504, 1.442695
      %v1508 = vpow.pop %v1507
      %v1509 = vsel %vm1124, %v1506, 0.0
      %1510 = vadd.xlane.f32.xlu0 %v1509
      %v1511 = vpop.xlane.xlu0 %1510
      %v1512 = vsel %vm1128, %v1508, 0.0
      %1513 = vadd.xlane.f32.xlu0 %v1512
      %v1514 = vpop.xlane.xlu0 %1513
      %v1515 = vrcp.pop %v1511
      %v1516 = vrcp.pop %v1514
      %v1517 = vmul.f32 %v1506, %v1515
      %v1518 = vmul.f32 %v1508, %v1516
      %v1519 = vpack.c.bf16 %v1518, %v1517
      %1520 = vrot.lane.b32.xlu0 %v1072, 40
      %v1521 = vpop.permute.xlu0 %1520
      %v1523 = vsel %vm1124, %v1519, 0
      %v1526 = vsel %vm1154, %v1521, 0
      %1528 = vmatprep.subr.bf16.mxu0 0
      %1529 = vmatpush1.bf16.msra.mxu0 %v1526
      %1530 = vmatprep.subr.bf16.mxu0 0
      %1531 = vmatpush1.bf16.msra.mxu0 0
      %1532 = vmatprep.subr.bf16.mxu0 0
      %1533 = vmatpush1.bf16.msra.mxu0 0
      %1534 = vmatprep.subr.bf16.mxu0 0
      %1535 = vmatpush1.bf16.msra.mxu0 0
      %1536 = vmatprep.subr.bf16.mxu0 0
      %1537 = vmatpush1.bf16.msra.mxu0 0
      %1538 = vmatprep.subr.bf16.mxu0 0
      %1539 = vmatpush1.bf16.msra.mxu0 0
      %1540 = vmatprep.subr.bf16.mxu0 0
      %1541 = vmatpush1.bf16.msra.mxu0 0
      %1542 = vmatprep.subr.bf16.mxu0 0
      %1543 = vmatpush1.bf16.msra.mxu0 0
      %1544 = vmatprep.subr.bf16.mxu0 0
      %1545 = vmatpush1.bf16.msra.mxu0 0
      %1546 = vmatprep.subr.bf16.mxu0 0
      %1547 = vmatpush1.bf16.msra.mxu0 0
      %1548 = vmatprep.subr.bf16.mxu0 0
      %1549 = vmatpush1.bf16.msra.mxu0 0
      %1550 = vmatprep.subr.bf16.mxu0 0
      %1551 = vmatpush1.bf16.msra.mxu0 0
      %1552 = vmatprep.subr.bf16.mxu0 0
      %1553 = vmatpush1.bf16.msra.mxu0 0
      %1554 = vmatprep.subr.bf16.mxu0 0
      %1555 = vmatpush1.bf16.msra.mxu0 0
      %1556 = vmatprep.subr.bf16.mxu0 0
      %1557 = vmatpush1.bf16.msra.mxu0 0
      %1558 = vmatprep.subr.bf16.mxu0 0
      %1559 = vmatpush1.bf16.msra.mxu0 0
      %1560 = vmatprep.mubr.bf16.mxu0 0
      %1561 = vmatmul.mubr.bf16.gmra.mrb[0].mxu0 %v1523
      %v1562 = vpop.f32.mrb[0].mxu0
      %v1563 = vadd.f32 0.0, %v1562
      %v1564 = vpop.f32.mrb[0].mxu0
      %v1565 = vpop.f32.mrb[0].mxu0
      %v1566 = vadd.f32 0.0, %v1565
      %v1567 = vpop.f32.mrb[0].mxu0
      %1568 = vdwg.mxu0
      %1571 = vrot.lane.b32.xlu0 %v1317, 8
      %v1572 = vpop.permute.xlu0 %1571
      %1573 = vrot.lane.b32.xlu0 %v1320, 8
      %v1574 = vpop.permute.xlu0 %1573
      %1579 = vrot.lane.b32.xlu0 %v1440, 16
      %v1580 = vpop.permute.xlu0 %1579
      %1581 = vrot.lane.b32.xlu0 %v1443, 16
      %v1582 = vpop.permute.xlu0 %1581
      %1587 = vrot.lane.b32.xlu0 %v1563, 24
      %v1588 = vpop.permute.xlu0 %1587
      %1589 = vrot.lane.b32.xlu0 %v1566, 24
      %v1590 = vpop.permute.xlu0 %1589
      %v1593 = vsel %vm1076, %v1193, %v1572
      %v1594 = vsel %vm1076, %v1196, %v1574
      %vm1595 = vcmask 130048
      %v1596 = vsel %vm1595, %v1593, %v1580
      %v1597 = vsel %vm1595, %v1594, %v1582
      %vm1598 = vcmask 195584
      %v1599 = vsel %vm1598, %v1596, %v1588
      %v1600 = vsel %vm1598, %v1597, %v1590
      %v1601 = vpack.c.bf16 %v1600, %v1599
      %v1602 = vld [vmem:[%s15] sm:$0xf]
      %v1603 = vld [vmem:[%s15 + $0x4] sm:$0xf]
      %v1604 = vld [vmem:[%s15 + $0x8] sm:$0xf]
      %v1605 = vld [vmem:[%s15 + $0xc] sm:$0xf]
      %v1606 = vld [vmem:[%s17] sm:$0x1]
      %v1607 = vunpack.c.l.bf16 %v1606
      %v1608 = vlaneseq
      %v1609 = vshrl.u32 %v1608, 7
      %v1610 = vsub.s32 0, %v1609
      %v1611 = vrot.slane %v1607, %v1610
      %v1616 = vunpack.c.l.b16 %v1602
      %v1617 = vunpack.c.l.b16 %v1603
      %v1618 = vunpack.c.l.b16 %v1604
      %v1619 = vunpack.c.l.b16 %v1605
      %v1620 = vpack.c.b16 %v1617, %v1616
      %v1621 = vpack.c.b16 %v1619, %v1618
      %v1625 = vsel %vm948, %v1601, 0
      %1627 = vmatprep.subr.bf16.mxu0 0
      %1628 = vmatpush1.bf16.msra.mxu0 %v1620
      %1629 = vmatprep.subr.bf16.mxu0 0
      %1630 = vmatpush1.bf16.msra.mxu0 %v1621
      %1631 = vmatprep.subr.bf16.mxu0 0
      %1632 = vmatpush1.bf16.msra.mxu0 0
      %1633 = vmatprep.subr.bf16.mxu0 0
      %1634 = vmatpush1.bf16.msra.mxu0 0
      %1635 = vmatprep.subr.bf16.mxu0 0
      %1636 = vmatpush1.bf16.msra.mxu0 0
      %1637 = vmatprep.subr.bf16.mxu0 0
      %1638 = vmatpush1.bf16.msra.mxu0 0
      %1639 = vmatprep.subr.bf16.mxu0 0
      %1640 = vmatpush1.bf16.msra.mxu0 0
      %1641 = vmatprep.subr.bf16.mxu0 0
      %1642 = vmatpush1.bf16.msra.mxu0 0
      %1643 = vmatprep.subr.bf16.mxu0 0
      %1644 = vmatpush1.bf16.msra.mxu0 0
      %1645 = vmatprep.subr.bf16.mxu0 0
      %1646 = vmatpush1.bf16.msra.mxu0 0
      %1647 = vmatprep.subr.bf16.mxu0 0
      %1648 = vmatpush1.bf16.msra.mxu0 0
      %1649 = vmatprep.subr.bf16.mxu0 0
      %1650 = vmatpush1.bf16.msra.mxu0 0
      %1651 = vmatprep.subr.bf16.mxu0 0
      %1652 = vmatpush1.bf16.msra.mxu0 0
      %1653 = vmatprep.subr.bf16.mxu0 0
      %1654 = vmatpush1.bf16.msra.mxu0 0
      %1655 = vmatprep.subr.bf16.mxu0 0
      %1656 = vmatpush1.bf16.msra.mxu0 0
      %1657 = vmatprep.subr.bf16.mxu0 0
      %1658 = vmatpush1.bf16.msra.mxu0 0
      %1659 = vmatprep.mubr.bf16.mxu0 0
      %1660 = vmatmul.mubr.bf16.gmra.mrb[0].mxu0 %v1625
      %v1661 = vpop.f32.mrb[0].mxu0
      %v1662 = vadd.f32 %v1611, %v1661
      %v1663 = vpop.f32.mrb[0].mxu0
      %v1664 = vpop.f32.mrb[0].mxu0
      %v1665 = vadd.f32 %v1611, %v1664
      %v1666 = vpop.f32.mrb[0].mxu0
      %1667 = vdwg.mxu0
      %v1668 = vadd.f32 %v991, %v1662
      %v1669 = vadd.f32 %v992, %v1665
      %v1670 = vsel %vm948, %v1668, 0.0
      %1671 = vadd.xlane.f32.xlu0 %v1670
      %v1672 = vpop.xlane.xlu0 %1671
      %v1673 = vsel %vm952, %v1669, 0.0
      %1674 = vadd.xlane.f32.xlu0 %v1673
      %v1675 = vpop.xlane.xlu0 %1674
      %v1676 = vmul.f32 %v1672, %v956
      %v1677 = vmul.f32 %v1675, %v956
      %v1678 = vsub.f32 %v1668, %v1676
      %v1679 = vsub.f32 %v1669, %v1677
      %v1680 = vmul.f32 %v1678, %v1678
      %v1681 = vmul.f32 %v1679, %v1679
      %v1682 = vsel %vm948, %v1680, 0.0
      %1683 = vadd.xlane.f32.xlu0 %v1682
      %v1684 = vpop.xlane.xlu0 %1683
      %v1685 = vsel %vm952, %v1681, 0.0
      %1686 = vadd.xlane.f32.xlu0 %v1685
      %v1687 = vpop.xlane.xlu0 %1686
      %v1688 = vmul.f32 %v1684, %v956
      %v1689 = vmul.f32 %v1687, %v956
      %v1690 = vadd.f32 %v1688, 1e-05
      %v1691 = vadd.f32 %v1689, 1e-05
      %v1692 = vrsqrt.pop %v1690
      %v1693 = vrsqrt.pop %v1691
      %v1694 = vmul.f32 %v1678, %v1692
      %v1695 = vmul.f32 %v1679, %v1693
      %v1696 = vld [vmem:[%s19] sm:$0x1]
      %v1697 = vunpack.c.l.bf16 %v1696
      %v1698 = vlaneseq
      %v1699 = vshrl.u32 %v1698, 7
      %v1700 = vsub.s32 0, %v1699
      %v1701 = vrot.slane %v1697, %v1700
      %v1702 = vmul.f32 %v1694, %v1701
      %v1703 = vmul.f32 %v1695, %v1701
      %v1704 = vld [vmem:[%s21] sm:$0x1]
      %v1705 = vunpack.c.l.bf16 %v1704
      %v1706 = vlaneseq
      %v1707 = vshrl.u32 %v1706, 7
      %v1708 = vsub.s32 0, %v1707
      %v1709 = vrot.slane %v1705, %v1708
      %v1710 = vadd.f32 %v1702, %v1709
      %v1711 = vadd.f32 %v1703, %v1709
      %v1712 = vpack.c.bf16 %v1711, %v1710
      %v1713 = vld [vmem:[%s23] sm:$0xf]
      %v1714 = vld [vmem:[%s23 + $0x4] sm:$0xf]
      %v1715 = vld [vmem:[%s23 + $0x8] sm:$0xf]
      %v1716 = vld [vmem:[%s23 + $0xc] sm:$0xf]
      %v1717 = vld [vmem:[%s25] sm:$0x1]
      %v1718 = vunpack.c.l.bf16 %v1717
      %v1719 = vlaneseq
      %v1720 = vshrl.u32 %v1719, 7
      %v1721 = vsub.s32 0, %v1720
      %v1722 = vrot.slane %v1718, %v1721
      %v1727 = vunpack.c.l.b16 %v1713
      %v1728 = vunpack.c.l.b16 %v1714
      %v1729 = vunpack.c.l.b16 %v1715
      %v1730 = vunpack.c.l.b16 %v1716
      %v1731 = vpack.c.b16 %v1728, %v1727
      %v1732 = vpack.c.b16 %v1730, %v1729
      %v1736 = vsel %vm948, %v1712, 0
      %1738 = vmatprep.subr.bf16.mxu0 0
      %1739 = vmatpush1.bf16.msra.mxu0 %v1731
      %1740 = vmatprep.subr.bf16.mxu0 0
      %1741 = vmatpush1.bf16.msra.mxu0 %v1732
      %1742 = vmatprep.subr.bf16.mxu0 0
      %1743 = vmatpush1.bf16.msra.mxu0 0
      %1744 = vmatprep.subr.bf16.mxu0 0
      %1745 = vmatpush1.bf16.msra.mxu0 0
      %1746 = vmatprep.subr.bf16.mxu0 0
      %1747 = vmatpush1.bf16.msra.mxu0 0
      %1748 = vmatprep.subr.bf16.mxu0 0
      %1749 = vmatpush1.bf16.msra.mxu0 0
      %1750 = vmatprep.subr.bf16.mxu0 0
      %1751 = vmatpush1.bf16.msra.mxu0 0
      %1752 = vmatprep.subr.bf16.mxu0 0
      %1753 = vmatpush1.bf16.msra.mxu0 0
      %1754 = vmatprep.subr.bf16.mxu0 0
      %1755 = vmatpush1.bf16.msra.mxu0 0
      %1756 = vmatprep.subr.bf16.mxu0 0
      %1757 = vmatpush1.bf16.msra.mxu0 0
      %1758 = vmatprep.subr.bf16.mxu0 0
      %1759 = vmatpush1.bf16.msra.mxu0 0
      %1760 = vmatprep.subr.bf16.mxu0 0
      %1761 = vmatpush1.bf16.msra.mxu0 0
      %1762 = vmatprep.subr.bf16.mxu0 0
      %1763 = vmatpush1.bf16.msra.mxu0 0
      %1764 = vmatprep.subr.bf16.mxu0 0
      %1765 = vmatpush1.bf16.msra.mxu0 0
      %1766 = vmatprep.subr.bf16.mxu0 0
      %1767 = vmatpush1.bf16.msra.mxu0 0
      %1768 = vmatprep.subr.bf16.mxu0 0
      %1769 = vmatpush1.bf16.msra.mxu0 0
      %1770 = vmatprep.mubr.bf16.mxu0 0
      %1771 = vmatmul.mubr.bf16.gmra.mrb[0].mxu0 %v1736
      %v1772 = vpop.f32.mrb[0].mxu0
      %v1773 = vadd.f32 %v1722, %v1772
      %v1774 = vpop.f32.mrb[0].mxu0
      %v1775 = vpop.f32.mrb[0].mxu0
      %v1776 = vadd.f32 %v1722, %v1775
      %v1777 = vpop.f32.mrb[0].mxu0
      %1778 = vdwg.mxu0
      %v1779 = vld [vmem:[%s27] sm:$0xf]
      %v1780 = vld [vmem:[%s27 + $0x4] sm:$0xf]
      %v1781 = vld [vmem:[%s27 + $0x8] sm:$0xf]
      %v1782 = vld [vmem:[%s27 + $0xc] sm:$0xf]
      %v1783 = vld [vmem:[%s29] sm:$0x1]
      %v1784 = vunpack.c.l.bf16 %v1783
      %v1785 = vlaneseq
      %v1786 = vshrl.u32 %v1785, 7
      %v1787 = vsub.s32 0, %v1786
      %v1788 = vrot.slane %v1784, %v1787
      %v1793 = vunpack.c.l.b16 %v1779
      %v1794 = vunpack.c.l.b16 %v1780
      %v1795 = vunpack.c.l.b16 %v1781
      %v1796 = vunpack.c.l.b16 %v1782
      %v1797 = vpack.c.b16 %v1794, %v1793
      %v1798 = vpack.c.b16 %v1796, %v1795
      %v1802 = vsel %vm948, %v940, 0
      %1804 = vmatprep.subr.bf16.mxu0 0
      %1805 = vmatpush1.bf16.msra.mxu0 %v1797
      %1806 = vmatprep.subr.bf16.mxu0 0
      %1807 = vmatpush1.bf16.msra.mxu0 %v1798
      %1808 = vmatprep.subr.bf16.mxu0 0
      %1809 = vmatpush1.bf16.msra.mxu0 0
      %1810 = vmatprep.subr.bf16.mxu0 0
      %1811 = vmatpush1.bf16.msra.mxu0 0
      %1812 = vmatprep.subr.bf16.mxu0 0
      %1813 = vmatpush1.bf16.msra.mxu0 0
      %1814 = vmatprep.subr.bf16.mxu0 0
      %1815 = vmatpush1.bf16.msra.mxu0 0
      %1816 = vmatprep.subr.bf16.mxu0 0
      %1817 = vmatpush1.bf16.msra.mxu0 0
      %1818 = vmatprep.subr.bf16.mxu0 0
      %1819 = vmatpush1.bf16.msra.mxu0 0
      %1820 = vmatprep.subr.bf16.mxu0 0
      %1821 = vmatpush1.bf16.msra.mxu0 0
      %1822 = vmatprep.subr.bf16.mxu0 0
      %1823 = vmatpush1.bf16.msra.mxu0 0
      %1824 = vmatprep.subr.bf16.mxu0 0
      %1825 = vmatpush1.bf16.msra.mxu0 0
      %1826 = vmatprep.subr.bf16.mxu0 0
      %1827 = vmatpush1.bf16.msra.mxu0 0
      %1828 = vmatprep.subr.bf16.mxu0 0
      %1829 = vmatpush1.bf16.msra.mxu0 0
      %1830 = vmatprep.subr.bf16.mxu0 0
      %1831 = vmatpush1.bf16.msra.mxu0 0
      %1832 = vmatprep.subr.bf16.mxu0 0
      %1833 = vmatpush1.bf16.msra.mxu0 0
      %1834 = vmatprep.subr.bf16.mxu0 0
      %1835 = vmatpush1.bf16.msra.mxu0 0
      %1836 = vmatprep.mubr.bf16.mxu0 0
      %1837 = vmatmul.mubr.bf16.gmra.mrb[0].mxu0 %v1802
      %v1838 = vpop.f32.mrb[0].mxu0
      %v1839 = vadd.f32 %v1788, %v1838
      %v1840 = vpop.f32.mrb[0].mxu0
      %v1841 = vpop.f32.mrb[0].mxu0
      %v1842 = vpop.f32.mrb[0].mxu0
      %1843 = vdwg.mxu0
      %v1844 = vmul.f32 %v1773, 0.35355338
      %v1845 = vmul.f32 %v1776, 0.35355338
      %v1846 = vpack.c.bf16 %v1845, %v1844
      %v1847 = vpack.c.bf16 %v1839, %v1839
      %v1849 = vlaneseq
      %v1850 = vshrl.u32 %v1849, 7
      %v1851 = vsub.s32 0, %v1850
      %v1852 = vrot.slane %v943, %v1851
      %v1855 = vsel %vm1076, %v1846, 0
      %v1858 = vsel %vm1076, %v1847, 0
      %1860 = vmatprep.subr.bf16.mxu0 0
      %1861 = vmatpush1.bf16.xpose.msra.mxu0 %v1858
      %1862 = vmatprep.subr.bf16.mxu0 0
      %1863 = vmatpush1.bf16.xpose.msra.mxu0 0
      %1864 = vmatprep.subr.bf16.mxu0 0
      %1865 = vmatpush1.bf16.xpose.msra.mxu0 0
      %1866 = vmatprep.subr.bf16.mxu0 0
      %1867 = vmatpush1.bf16.xpose.msra.mxu0 0
      %1868 = vmatprep.subr.bf16.mxu0 0
      %1869 = vmatpush1.bf16.xpose.msra.mxu0 0
      %1870 = vmatprep.subr.bf16.mxu0 0
      %1871 = vmatpush1.bf16.xpose.msra.mxu0 0
      %1872 = vmatprep.subr.bf16.mxu0 0
      %1873 = vmatpush1.bf16.xpose.msra.mxu0 0
      %1874 = vmatprep.subr.bf16.mxu0 0
      %1875 = vmatpush1.bf16.xpose.msra.mxu0 0
      %1876 = vmatprep.subr.bf16.mxu0 0
      %1877 = vmatpush1.bf16.xpose.msra.mxu0 0
      %1878 = vmatprep.subr.bf16.mxu0 0
      %1879 = vmatpush1.bf16.xpose.msra.mxu0 0
      %1880 = vmatprep.subr.bf16.mxu0 0
      %1881 = vmatpush1.bf16.xpose.msra.mxu0 0
      %1882 = vmatprep.subr.bf16.mxu0 0
      %1883 = vmatpush1.bf16.xpose.msra.mxu0 0
      %1884 = vmatprep.subr.bf16.mxu0 0
      %1885 = vmatpush1.bf16.xpose.msra.mxu0 0
      %1886 = vmatprep.subr.bf16.mxu0 0
      %1887 = vmatpush1.bf16.xpose.msra.mxu0 0
      %1888 = vmatprep.subr.bf16.mxu0 0
      %1889 = vmatpush1.bf16.xpose.msra.mxu0 0
      %1890 = vmatprep.subr.bf16.mxu0 0
      %1891 = vmatpush1.bf16.xpose.msra.mxu0 0
      %1892 = vmatprep.mubr.bf16.mxu0 0
      %1893 = vmatmul.mubr.bf16.gmra.mrb[0].mxu0 %v1855
      %v1894 = vpop.f32.mrb[0].mxu0
      %v1895 = vadd.f32 %v1852, %v1894
      %v1896 = vpop.f32.mrb[0].mxu0
      %v1897 = vpop.f32.mrb[0].mxu0
      %v1898 = vadd.f32 %v1852, %v1897
      %v1899 = vpop.f32.mrb[0].mxu0
      %1900 = vdwg.mxu0
      %v1901 = vsel %vm1076, %v1895, -inf
      %1902 = vmax.xlane.f32.xlu0 %v1901
      %v1903 = vpop.xlane.xlu0 %1902
      %vm1904 = vcmask 58368
      %v1905 = vsel %vm1904, %v1898, -inf
      %1906 = vmax.xlane.f32.xlu0 %v1905
      %v1907 = vpop.xlane.xlu0 %1906
      %v1908 = vsub.f32 %v1895, %v1903
      %v1909 = vsub.f32 %v1898, %v1907
      %v1910 = vmul.f32 %v1908, 1.442695
      %v1911 = vpow.pop %v1910
      %v1912 = vmul.f32 %v1909, 1.442695
      %v1913 = vpow.pop %v1912
      %v1914 = vsel %vm1076, %v1911, 0.0
      %1915 = vadd.xlane.f32.xlu0 %v1914
      %v1916 = vpop.xlane.xlu0 %1915
      %v1917 = vsel %vm1904, %v1913, 0.0
      %1918 = vadd.xlane.f32.xlu0 %v1917
      %v1919 = vpop.xlane.xlu0 %1918
      %v1920 = vrcp.pop %v1916
      %v1921 = vrcp.pop %v1919
      %v1922 = vmul.f32 %v1911, %v1920
      %v1923 = vmul.f32 %v1913, %v1921
      %v1924 = vpack.c.bf16 %v1923, %v1922
      %1926 = vrot.lane.b32.xlu0 %v1847, 96
      %v1927 = vpop.permute.xlu0 %1926
      %v1929 = vsel %vm1076, %v1924, 0
      %vm1931 = vcmask 1043456
      %v1933 = vsel %vm1931, %v1927, 0
      %1935 = vmatprep.subr.bf16.mxu0 0
      %1936 = vmatpush1.bf16.msra.mxu0 %v1933
      %1937 = vmatprep.subr.bf16.mxu0 0
      %1938 = vmatpush1.bf16.msra.mxu0 0
      %1939 = vmatprep.subr.bf16.mxu0 0
      %1940 = vmatpush1.bf16.msra.mxu0 0
      %1941 = vmatprep.subr.bf16.mxu0 0
      %1942 = vmatpush1.bf16.msra.mxu0 0
      %1943 = vmatprep.subr.bf16.mxu0 0
      %1944 = vmatpush1.bf16.msra.mxu0 0
      %1945 = vmatprep.subr.bf16.mxu0 0
      %1946 = vmatpush1.bf16.msra.mxu0 0
      %1947 = vmatprep.subr.bf16.mxu0 0
      %1948 = vmatpush1.bf16.msra.mxu0 0
      %1949 = vmatprep.subr.bf16.mxu0 0
      %1950 = vmatpush1.bf16.msra.mxu0 0
      %1951 = vmatprep.subr.bf16.mxu0 0
      %1952 = vmatpush1.bf16.msra.mxu0 0
      %1953 = vmatprep.subr.bf16.mxu0 0
      %1954 = vmatpush1.bf16.msra.mxu0 0
      %1955 = vmatprep.subr.bf16.mxu0 0
      %1956 = vmatpush1.bf16.msra.mxu0 0
      %1957 = vmatprep.subr.bf16.mxu0 0
      %1958 = vmatpush1.bf16.msra.mxu0 0
      %1959 = vmatprep.subr.bf16.mxu0 0
      %1960 = vmatpush1.bf16.msra.mxu0 0
      %1961 = vmatprep.subr.bf16.mxu0 0
      %1962 = vmatpush1.bf16.msra.mxu0 0
      %1963 = vmatprep.subr.bf16.mxu0 0
      %1964 = vmatpush1.bf16.msra.mxu0 0
      %1965 = vmatprep.subr.bf16.mxu0 0
      %1966 = vmatpush1.bf16.msra.mxu0 0
      %1967 = vmatprep.mubr.bf16.mxu0 0
      %1968 = vmatmul.mubr.bf16.gmra.mrb[0].mxu0 %v1929
      %v1969 = vpop.f32.mrb[0].mxu0
      %v1970 = vadd.f32 0.0, %v1969
      %v1971 = vpop.f32.mrb[0].mxu0
      %v1972 = vpop.f32.mrb[0].mxu0
      %v1973 = vadd.f32 0.0, %v1972
      %v1974 = vpop.f32.mrb[0].mxu0
      %1975 = vdwg.mxu0
      %1977 = vrot.lane.b32.xlu0 %v1846, 120
      %v1978 = vpop.permute.xlu0 %1977
      %1979 = vrot.lane.b32.xlu0 %v1847, 120
      %v1980 = vpop.permute.xlu0 %1979
      %v1982 = vsel %vm1076, %v1978, 0
      %v1985 = vsel %vm1076, %v1980, 0
      %1987 = vmatprep.subr.bf16.mxu0 0
      %1988 = vmatpush1.bf16.xpose.msra.mxu0 %v1985
      %1989 = vmatprep.subr.bf16.mxu0 0
      %1990 = vmatpush1.bf16.xpose.msra.mxu0 0
      %1991 = vmatprep.subr.bf16.mxu0 0
      %1992 = vmatpush1.bf16.xpose.msra.mxu0 0
      %1993 = vmatprep.subr.bf16.mxu0 0
      %1994 = vmatpush1.bf16.xpose.msra.mxu0 0
      %1995 = vmatprep.subr.bf16.mxu0 0
      %1996 = vmatpush1.bf16.xpose.msra.mxu0 0
      %1997 = vmatprep.subr.bf16.mxu0 0
      %1998 = vmatpush1.bf16.xpose.msra.mxu0 0
      %1999 = vmatprep.subr.bf16.mxu0 0
      %2000 = vmatpush1.bf16.xpose.msra.mxu0 0
      %2001 = vmatprep.subr.bf16.mxu0 0
      %2002 = vmatpush1.bf16.xpose.msra.mxu0 0
      %2003 = vmatprep.subr.bf16.mxu0 0
      %2004 = vmatpush1.bf16.xpose.msra.mxu0 0
      %2005 = vmatprep.subr.bf16.mxu0 0
      %2006 = vmatpush1.bf16.xpose.msra.mxu0 0
      %2007 = vmatprep.subr.bf16.mxu0 0
      %2008 = vmatpush1.bf16.xpose.msra.mxu0 0
      %2009 = vmatprep.subr.bf16.mxu0 0
      %2010 = vmatpush1.bf16.xpose.msra.mxu0 0
      %2011 = vmatprep.subr.bf16.mxu0 0
      %2012 = vmatpush1.bf16.xpose.msra.mxu0 0
      %2013 = vmatprep.subr.bf16.mxu0 0
      %2014 = vmatpush1.bf16.xpose.msra.mxu0 0
      %2015 = vmatprep.subr.bf16.mxu0 0
      %2016 = vmatpush1.bf16.xpose.msra.mxu0 0
      %2017 = vmatprep.subr.bf16.mxu0 0
      %2018 = vmatpush1.bf16.xpose.msra.mxu0 0
      %2019 = vmatprep.mubr.bf16.mxu0 0
      %2020 = vmatmul.mubr.bf16.gmra.mrb[0].mxu0 %v1982
      %v2021 = vpop.f32.mrb[0].mxu0
      %v2022 = vadd.f32 %v1852, %v2021
      %v2023 = vpop.f32.mrb[0].mxu0
      %v2024 = vpop.f32.mrb[0].mxu0
      %v2025 = vadd.f32 %v1852, %v2024
      %v2026 = vpop.f32.mrb[0].mxu0
      %2027 = vdwg.mxu0
      %v2028 = vsel %vm1076, %v2022, -inf
      %2029 = vmax.xlane.f32.xlu0 %v2028
      %v2030 = vpop.xlane.xlu0 %2029
      %v2031 = vsel %vm1904, %v2025, -inf
      %2032 = vmax.xlane.f32.xlu0 %v2031
      %v2033 = vpop.xlane.xlu0 %2032
      %v2034 = vsub.f32 %v2022, %v2030
      %v2035 = vsub.f32 %v2025, %v2033
      %v2036 = vmul.f32 %v2034, 1.442695
      %v2037 = vpow.pop %v2036
      %v2038 = vmul.f32 %v2035, 1.442695
      %v2039 = vpow.pop %v2038
      %v2040 = vsel %vm1076, %v2037, 0.0
      %2041 = vadd.xlane.f32.xlu0 %v2040
      %v2042 = vpop.xlane.xlu0 %2041
      %v2043 = vsel %vm1904, %v2039, 0.0
      %2044 = vadd.xlane.f32.xlu0 %v2043
      %v2045 = vpop.xlane.xlu0 %2044
      %v2046 = vrcp.pop %v2042
      %v2047 = vrcp.pop %v2045
      %v2048 = vmul.f32 %v2037, %v2046
      %v2049 = vmul.f32 %v2039, %v2047
      %v2050 = vpack.c.bf16 %v2049, %v2048
      %2051 = vrot.lane.b32.xlu0 %v1847, 88
      %v2052 = vpop.permute.xlu0 %2051
      %v2054 = vsel %vm1076, %v2050, 0
      %v2057 = vsel %vm1931, %v2052, 0
      %2059 = vmatprep.subr.bf16.mxu0 0
      %2060 = vmatpush1.bf16.msra.mxu0 %v2057
      %2061 = vmatprep.subr.bf16.mxu0 0
      %2062 = vmatpush1.bf16.msra.mxu0 0
      %2063 = vmatprep.subr.bf16.mxu0 0
      %2064 = vmatpush1.bf16.msra.mxu0 0
      %2065 = vmatprep.subr.bf16.mxu0 0
      %2066 = vmatpush1.bf16.msra.mxu0 0
      %2067 = vmatprep.subr.bf16.mxu0 0
      %2068 = vmatpush1.bf16.msra.mxu0 0
      %2069 = vmatprep.subr.bf16.mxu0 0
      %2070 = vmatpush1.bf16.msra.mxu0 0
      %2071 = vmatprep.subr.bf16.mxu0 0
      %2072 = vmatpush1.bf16.msra.mxu0 0
      %2073 = vmatprep.subr.bf16.mxu0 0
      %2074 = vmatpush1.bf16.msra.mxu0 0
      %2075 = vmatprep.subr.bf16.mxu0 0
      %2076 = vmatpush1.bf16.msra.mxu0 0
      %2077 = vmatprep.subr.bf16.mxu0 0
      %2078 = vmatpush1.bf16.msra.mxu0 0
      %2079 = vmatprep.subr.bf16.mxu0 0
      %2080 = vmatpush1.bf16.msra.mxu0 0
      %2081 = vmatprep.subr.bf16.mxu0 0
      %2082 = vmatpush1.bf16.msra.mxu0 0
      %2083 = vmatprep.subr.bf16.mxu0 0
      %2084 = vmatpush1.bf16.msra.mxu0 0
      %2085 = vmatprep.subr.bf16.mxu0 0
      %2086 = vmatpush1.bf16.msra.mxu0 0
      %2087 = vmatprep.subr.bf16.mxu0 0
      %2088 = vmatpush1.bf16.msra.mxu0 0
      %2089 = vmatprep.subr.bf16.mxu0 0
      %2090 = vmatpush1.bf16.msra.mxu0 0
      %2091 = vmatprep.mubr.bf16.mxu0 0
      %2092 = vmatmul.mubr.bf16.gmra.mrb[0].mxu0 %v2054
      %v2093 = vpop.f32.mrb[0].mxu0
      %v2094 = vadd.f32 0.0, %v2093
      %v2095 = vpop.f32.mrb[0].mxu0
      %v2096 = vpop.f32.mrb[0].mxu0
      %v2097 = vadd.f32 0.0, %v2096
      %v2098 = vpop.f32.mrb[0].mxu0
      %2099 = vdwg.mxu0
      %2100 = vrot.lane.b32.xlu0 %v1846, 112
      %v2101 = vpop.permute.xlu0 %2100
      %2102 = vrot.lane.b32.xlu0 %v1847, 112
      %v2103 = vpop.permute.xlu0 %2102
      %v2105 = vsel %vm1076, %v2101, 0
      %v2108 = vsel %vm1076, %v2103, 0
      %2110 = vmatprep.subr.bf16.mxu0 0
      %2111 = vmatpush1.bf16.xpose.msra.mxu0 %v2108
      %2112 = vmatprep.subr.bf16.mxu0 0
      %2113 = vmatpush1.bf16.xpose.msra.mxu0 0
      %2114 = vmatprep.subr.bf16.mxu0 0
      %2115 = vmatpush1.bf16.xpose.msra.mxu0 0
      %2116 = vmatprep.subr.bf16.mxu0 0
      %2117 = vmatpush1.bf16.xpose.msra.mxu0 0
      %2118 = vmatprep.subr.bf16.mxu0 0
      %2119 = vmatpush1.bf16.xpose.msra.mxu0 0
      %2120 = vmatprep.subr.bf16.mxu0 0
      %2121 = vmatpush1.bf16.xpose.msra.mxu0 0
      %2122 = vmatprep.subr.bf16.mxu0 0
      %2123 = vmatpush1.bf16.xpose.msra.mxu0 0
      %2124 = vmatprep.subr.bf16.mxu0 0
      %2125 = vmatpush1.bf16.xpose.msra.mxu0 0
      %2126 = vmatprep.subr.bf16.mxu0 0
      %2127 = vmatpush1.bf16.xpose.msra.mxu0 0
      %2128 = vmatprep.subr.bf16.mxu0 0
      %2129 = vmatpush1.bf16.xpose.msra.mxu0 0
      %2130 = vmatprep.subr.bf16.mxu0 0
      %2131 = vmatpush1.bf16.xpose.msra.mxu0 0
      %2132 = vmatprep.subr.bf16.mxu0 0
      %2133 = vmatpush1.bf16.xpose.msra.mxu0 0
      %2134 = vmatprep.subr.bf16.mxu0 0
      %2135 = vmatpush1.bf16.xpose.msra.mxu0 0
      %2136 = vmatprep.subr.bf16.mxu0 0
      %2137 = vmatpush1.bf16.xpose.msra.mxu0 0
      %2138 = vmatprep.subr.bf16.mxu0 0
      %2139 = vmatpush1.bf16.xpose.msra.mxu0 0
      %2140 = vmatprep.subr.bf16.mxu0 0
      %2141 = vmatpush1.bf16.xpose.msra.mxu0 0
      %2142 = vmatprep.mubr.bf16.mxu0 0
      %2143 = vmatmul.mubr.bf16.gmra.mrb[0].mxu0 %v2105
      %v2144 = vpop.f32.mrb[0].mxu0
      %v2145 = vadd.f32 %v1852, %v2144
      %v2146 = vpop.f32.mrb[0].mxu0
      %v2147 = vpop.f32.mrb[0].mxu0
      %v2148 = vadd.f32 %v1852, %v2147
      %v2149 = vpop.f32.mrb[0].mxu0
      %2150 = vdwg.mxu0
      %v2151 = vsel %vm1076, %v2145, -inf
      %2152 = vmax.xlane.f32.xlu0 %v2151
      %v2153 = vpop.xlane.xlu0 %2152
      %v2154 = vsel %vm1904, %v2148, -inf
      %2155 = vmax.xlane.f32.xlu0 %v2154
      %v2156 = vpop.xlane.xlu0 %2155
      %v2157 = vsub.f32 %v2145, %v2153
      %v2158 = vsub.f32 %v2148, %v2156
      %v2159 = vmul.f32 %v2157, 1.442695
      %v2160 = vpow.pop %v2159
      %v2161 = vmul.f32 %v2158, 1.442695
      %v2162 = vpow.pop %v2161
      %v2163 = vsel %vm1076, %v2160, 0.0
      %2164 = vadd.xlane.f32.xlu0 %v2163
      %v2165 = vpop.xlane.xlu0 %2164
      %v2166 = vsel %vm1904, %v2162, 0.0
      %2167 = vadd.xlane.f32.xlu0 %v2166
      %v2168 = vpop.xlane.xlu0 %2167
      %v2169 = vrcp.pop %v2165
      %v2170 = vrcp.pop %v2168
      %v2171 = vmul.f32 %v2160, %v2169
      %v2172 = vmul.f32 %v2162, %v2170
      %v2173 = vpack.c.bf16 %v2172, %v2171
      %2174 = vrot.lane.b32.xlu0 %v1847, 80
      %v2175 = vpop.permute.xlu0 %2174
      %v2177 = vsel %vm1076, %v2173, 0
      %v2180 = vsel %vm1931, %v2175, 0
      %2182 = vmatprep.subr.bf16.mxu0 0
      %2183 = vmatpush1.bf16.msra.mxu0 %v2180
      %2184 = vmatprep.subr.bf16.mxu0 0
      %2185 = vmatpush1.bf16.msra.mxu0 0
      %2186 = vmatprep.subr.bf16.mxu0 0
      %2187 = vmatpush1.bf16.msra.mxu0 0
      %2188 = vmatprep.subr.bf16.mxu0 0
      %2189 = vmatpush1.bf16.msra.mxu0 0
      %2190 = vmatprep.subr.bf16.mxu0 0
      %2191 = vmatpush1.bf16.msra.mxu0 0
      %2192 = vmatprep.subr.bf16.mxu0 0
      %2193 = vmatpush1.bf16.msra.mxu0 0
      %2194 = vmatprep.subr.bf16.mxu0 0
      %2195 = vmatpush1.bf16.msra.mxu0 0
      %2196 = vmatprep.subr.bf16.mxu0 0
      %2197 = vmatpush1.bf16.msra.mxu0 0
      %2198 = vmatprep.subr.bf16.mxu0 0
      %2199 = vmatpush1.bf16.msra.mxu0 0
      %2200 = vmatprep.subr.bf16.mxu0 0
      %2201 = vmatpush1.bf16.msra.mxu0 0
      %2202 = vmatprep.subr.bf16.mxu0 0
      %2203 = vmatpush1.bf16.msra.mxu0 0
      %2204 = vmatprep.subr.bf16.mxu0 0
      %2205 = vmatpush1.bf16.msra.mxu0 0
      %2206 = vmatprep.subr.bf16.mxu0 0
      %2207 = vmatpush1.bf16.msra.mxu0 0
      %2208 = vmatprep.subr.bf16.mxu0 0
      %2209 = vmatpush1.bf16.msra.mxu0 0
      %2210 = vmatprep.subr.bf16.mxu0 0
      %2211 = vmatpush1.bf16.msra.mxu0 0
      %2212 = vmatprep.subr.bf16.mxu0 0
      %2213 = vmatpush1.bf16.msra.mxu0 0
      %2214 = vmatprep.mubr.bf16.mxu0 0
      %2215 = vmatmul.mubr.bf16.gmra.mrb[0].mxu0 %v2177
      %v2216 = vpop.f32.mrb[0].mxu0
      %v2217 = vadd.f32 0.0, %v2216
      %v2218 = vpop.f32.mrb[0].mxu0
      %v2219 = vpop.f32.mrb[0].mxu0
      %v2220 = vadd.f32 0.0, %v2219
      %v2221 = vpop.f32.mrb[0].mxu0
      %2222 = vdwg.mxu0
      %2223 = vrot.lane.b32.xlu0 %v1846, 104
      %v2224 = vpop.permute.xlu0 %2223
      %2225 = vrot.lane.b32.xlu0 %v1847, 104
      %v2226 = vpop.permute.xlu0 %2225
      %v2228 = vsel %vm1076, %v2224, 0
      %v2231 = vsel %vm1076, %v2226, 0
      %2233 = vmatprep.subr.bf16.mxu0 0
      %2234 = vmatpush1.bf16.xpose.msra.mxu0 %v2231
      %2235 = vmatprep.subr.bf16.mxu0 0
      %2236 = vmatpush1.bf16.xpose.msra.mxu0 0
      %2237 = vmatprep.subr.bf16.mxu0 0
      %2238 = vmatpush1.bf16.xpose.msra.mxu0 0
      %2239 = vmatprep.subr.bf16.mxu0 0
      %2240 = vmatpush1.bf16.xpose.msra.mxu0 0
      %2241 = vmatprep.subr.bf16.mxu0 0
      %2242 = vmatpush1.bf16.xpose.msra.mxu0 0
      %2243 = vmatprep.subr.bf16.mxu0 0
      %2244 = vmatpush1.bf16.xpose.msra.mxu0 0
      %2245 = vmatprep.subr.bf16.mxu0 0
      %2246 = vmatpush1.bf16.xpose.msra.mxu0 0
      %2247 = vmatprep.subr.bf16.mxu0 0
      %2248 = vmatpush1.bf16.xpose.msra.mxu0 0
      %2249 = vmatprep.subr.bf16.mxu0 0
      %2250 = vmatpush1.bf16.xpose.msra.mxu0 0
      %2251 = vmatprep.subr.bf16.mxu0 0
      %2252 = vmatpush1.bf16.xpose.msra.mxu0 0
      %2253 = vmatprep.subr.bf16.mxu0 0
      %2254 = vmatpush1.bf16.xpose.msra.mxu0 0
      %2255 = vmatprep.subr.bf16.mxu0 0
      %2256 = vmatpush1.bf16.xpose.msra.mxu0 0
      %2257 = vmatprep.subr.bf16.mxu0 0
      %2258 = vmatpush1.bf16.xpose.msra.mxu0 0
      %2259 = vmatprep.subr.bf16.mxu0 0
      %2260 = vmatpush1.bf16.xpose.msra.mxu0 0
      %2261 = vmatprep.subr.bf16.mxu0 0
      %2262 = vmatpush1.bf16.xpose.msra.mxu0 0
      %2263 = vmatprep.subr.bf16.mxu0 0
      %2264 = vmatpush1.bf16.xpose.msra.mxu0 0
      %2265 = vmatprep.mubr.bf16.mxu0 0
      %2266 = vmatmul.mubr.bf16.gmra.mrb[0].mxu0 %v2228
      %v2267 = vpop.f32.mrb[0].mxu0
      %v2268 = vadd.f32 %v1852, %v2267
      %v2269 = vpop.f32.mrb[0].mxu0
      %v2270 = vpop.f32.mrb[0].mxu0
      %v2271 = vadd.f32 %v1852, %v2270
      %v2272 = vpop.f32.mrb[0].mxu0
      %2273 = vdwg.mxu0
      %v2274 = vsel %vm1076, %v2268, -inf
      %2275 = vmax.xlane.f32.xlu0 %v2274
      %v2276 = vpop.xlane.xlu0 %2275
      %v2277 = vsel %vm1904, %v2271, -inf
      %2278 = vmax.xlane.f32.xlu0 %v2277
      %v2279 = vpop.xlane.xlu0 %2278
      %v2280 = vsub.f32 %v2268, %v2276
      %v2281 = vsub.f32 %v2271, %v2279
      %v2282 = vmul.f32 %v2280, 1.442695
      %v2283 = vpow.pop %v2282
      %v2284 = vmul.f32 %v2281, 1.442695
      %v2285 = vpow.pop %v2284
      %v2286 = vsel %vm1076, %v2283, 0.0
      %2287 = vadd.xlane.f32.xlu0 %v2286
      %v2288 = vpop.xlane.xlu0 %2287
      %v2289 = vsel %vm1904, %v2285, 0.0
      %2290 = vadd.xlane.f32.xlu0 %v2289
      %v2291 = vpop.xlane.xlu0 %2290
      %v2292 = vrcp.pop %v2288
      %v2293 = vrcp.pop %v2291
      %v2294 = vmul.f32 %v2283, %v2292
      %v2295 = vmul.f32 %v2285, %v2293
      %v2296 = vpack.c.bf16 %v2295, %v2294
      %2297 = vrot.lane.b32.xlu0 %v1847, 72
      %v2298 = vpop.permute.xlu0 %2297
      %v2300 = vsel %vm1076, %v2296, 0
      %v2303 = vsel %vm1931, %v2298, 0
      %2305 = vmatprep.subr.bf16.mxu0 0
      %2306 = vmatpush1.bf16.msra.mxu0 %v2303
      %2307 = vmatprep.subr.bf16.mxu0 0
      %2308 = vmatpush1.bf16.msra.mxu0 0
      %2309 = vmatprep.subr.bf16.mxu0 0
      %2310 = vmatpush1.bf16.msra.mxu0 0
      %2311 = vmatprep.subr.bf16.mxu0 0
      %2312 = vmatpush1.bf16.msra.mxu0 0
      %2313 = vmatprep.subr.bf16.mxu0 0
      %2314 = vmatpush1.bf16.msra.mxu0 0
      %2315 = vmatprep.subr.bf16.mxu0 0
      %2316 = vmatpush1.bf16.msra.mxu0 0
      %2317 = vmatprep.subr.bf16.mxu0 0
      %2318 = vmatpush1.bf16.msra.mxu0 0
      %2319 = vmatprep.subr.bf16.mxu0 0
      %2320 = vmatpush1.bf16.msra.mxu0 0
      %2321 = vmatprep.subr.bf16.mxu0 0
      %2322 = vmatpush1.bf16.msra.mxu0 0
      %2323 = vmatprep.subr.bf16.mxu0 0
      %2324 = vmatpush1.bf16.msra.mxu0 0
      %2325 = vmatprep.subr.bf16.mxu0 0
      %2326 = vmatpush1.bf16.msra.mxu0 0
      %2327 = vmatprep.subr.bf16.mxu0 0
      %2328 = vmatpush1.bf16.msra.mxu0 0
      %2329 = vmatprep.subr.bf16.mxu0 0
      %2330 = vmatpush1.bf16.msra.mxu0 0
      %2331 = vmatprep.subr.bf16.mxu0 0
      %2332 = vmatpush1.bf16.msra.mxu0 0
      %2333 = vmatprep.subr.bf16.mxu0 0
      %2334 = vmatpush1.bf16.msra.mxu0 0
      %2335 = vmatprep.subr.bf16.mxu0 0
      %2336 = vmatpush1.bf16.msra.mxu0 0
      %2337 = vmatprep.mubr.bf16.mxu0 0
      %2338 = vmatmul.mubr.bf16.gmra.mrb[0].mxu0 %v2300
      %v2339 = vpop.f32.mrb[0].mxu0
      %v2340 = vadd.f32 0.0, %v2339
      %v2341 = vpop.f32.mrb[0].mxu0
      %v2342 = vpop.f32.mrb[0].mxu0
      %v2343 = vadd.f32 0.0, %v2342
      %v2344 = vpop.f32.mrb[0].mxu0
      %2345 = vdwg.mxu0
      %2348 = vrot.lane.b32.xlu0 %v2094, 8
      %v2349 = vpop.permute.xlu0 %2348
      %2350 = vrot.lane.b32.xlu0 %v2097, 8
      %v2351 = vpop.permute.xlu0 %2350
      %2356 = vrot.lane.b32.xlu0 %v2217, 16
      %v2357 = vpop.permute.xlu0 %2356
      %2358 = vrot.lane.b32.xlu0 %v2220, 16
      %v2359 = vpop.permute.xlu0 %2358
      %2364 = vrot.lane.b32.xlu0 %v2340, 24
      %v2365 = vpop.permute.xlu0 %2364
      %2366 = vrot.lane.b32.xlu0 %v2343, 24
      %v2367 = vpop.permute.xlu0 %2366
      %v2370 = vsel %vm1076, %v1970, %v2349
      %v2371 = vsel %vm1076, %v1973, %v2351
      %v2372 = vsel %vm1595, %v2370, %v2357
      %v2373 = vsel %vm1595, %v2371, %v2359
      %v2374 = vsel %vm1598, %v2372, %v2365
      %v2375 = vsel %vm1598, %v2373, %v2367
      %v2376 = vpack.c.bf16 %v2375, %v2374
      %v2377 = vld [vmem:[%s31] sm:$0xf]
      %v2378 = vld [vmem:[%s31 + $0x4] sm:$0xf]
      %v2379 = vld [vmem:[%s31 + $0x8] sm:$0xf]
      %v2380 = vld [vmem:[%s31 + $0xc] sm:$0xf]
      %v2381 = vld [vmem:[%s33] sm:$0x1]
      %v2382 = vunpack.c.l.bf16 %v2381
      %v2383 = vlaneseq
      %v2384 = vshrl.u32 %v2383, 7
      %v2385 = vsub.s32 0, %v2384
      %v2386 = vrot.slane %v2382, %v2385
      %v2391 = vunpack.c.l.b16 %v2377
      %v2392 = vunpack.c.l.b16 %v2378
      %v2393 = vunpack.c.l.b16 %v2379
      %v2394 = vunpack.c.l.b16 %v2380
      %v2395 = vpack.c.b16 %v2392, %v2391
      %v2396 = vpack.c.b16 %v2394, %v2393
      %v2400 = vsel %vm948, %v2376, 0
      %2402 = vmatprep.subr.bf16.mxu0 0
      %2403 = vmatpush1.bf16.msra.mxu0 %v2395
      %2404 = vmatprep.subr.bf16.mxu0 0
      %2405 = vmatpush1.bf16.msra.mxu0 %v2396
      %2406 = vmatprep.subr.bf16.mxu0 0
      %2407 = vmatpush1.bf16.msra.mxu0 0
      %2408 = vmatprep.subr.bf16.mxu0 0
      %2409 = vmatpush1.bf16.msra.mxu0 0
      %2410 = vmatprep.subr.bf16.mxu0 0
      %2411 = vmatpush1.bf16.msra.mxu0 0
      %2412 = vmatprep.subr.bf16.mxu0 0
      %2413 = vmatpush1.bf16.msra.mxu0 0
      %2414 = vmatprep.subr.bf16.mxu0 0
      %2415 = vmatpush1.bf16.msra.mxu0 0
      %2416 = vmatprep.subr.bf16.mxu0 0
      %2417 = vmatpush1.bf16.msra.mxu0 0
      %2418 = vmatprep.subr.bf16.mxu0 0
      %2419 = vmatpush1.bf16.msra.mxu0 0
      %2420 = vmatprep.subr.bf16.mxu0 0
      %2421 = vmatpush1.bf16.msra.mxu0 0
      %2422 = vmatprep.subr.bf16.mxu0 0
      %2423 = vmatpush1.bf16.msra.mxu0 0
      %2424 = vmatprep.subr.bf16.mxu0 0
      %2425 = vmatpush1.bf16.msra.mxu0 0
      %2426 = vmatprep.subr.bf16.mxu0 0
      %2427 = vmatpush1.bf16.msra.mxu0 0
      %2428 = vmatprep.subr.bf16.mxu0 0
      %2429 = vmatpush1.bf16.msra.mxu0 0
      %2430 = vmatprep.subr.bf16.mxu0 0
      %2431 = vmatpush1.bf16.msra.mxu0 0
      %2432 = vmatprep.subr.bf16.mxu0 0
      %2433 = vmatpush1.bf16.msra.mxu0 0
      %2434 = vmatprep.mubr.bf16.mxu0 0
      %2435 = vmatmul.mubr.bf16.gmra.mrb[0].mxu0 %v2400
      %v2436 = vpop.f32.mrb[0].mxu0
      %v2437 = vadd.f32 %v2386, %v2436
      %v2438 = vpop.f32.mrb[0].mxu0
      %v2439 = vpop.f32.mrb[0].mxu0
      %v2440 = vadd.f32 %v2386, %v2439
      %v2441 = vpop.f32.mrb[0].mxu0
      %2442 = vdwg.mxu0
      %v2443 = vadd.f32 %v1710, %v2437
      %v2444 = vadd.f32 %v1711, %v2440
      %v2445 = vsel %vm948, %v2443, 0.0
      %2446 = vadd.xlane.f32.xlu0 %v2445
      %v2447 = vpop.xlane.xlu0 %2446
      %v2448 = vsel %vm952, %v2444, 0.0
      %2449 = vadd.xlane.f32.xlu0 %v2448
      %v2450 = vpop.xlane.xlu0 %2449
      %v2451 = vmul.f32 %v2447, %v956
      %v2452 = vmul.f32 %v2450, %v956
      %v2453 = vsub.f32 %v2443, %v2451
      %v2454 = vsub.f32 %v2444, %v2452
      %v2455 = vmul.f32 %v2453, %v2453
      %v2456 = vmul.f32 %v2454, %v2454
      %v2457 = vsel %vm948, %v2455, 0.0
      %2458 = vadd.xlane.f32.xlu0 %v2457
      %v2459 = vpop.xlane.xlu0 %2458
      %v2460 = vsel %vm952, %v2456, 0.0
      %2461 = vadd.xlane.f32.xlu0 %v2460
      %v2462 = vpop.xlane.xlu0 %2461
      %v2463 = vmul.f32 %v2459, %v956
      %v2464 = vmul.f32 %v2462, %v956
      %v2465 = vadd.f32 %v2463, 1e-05
      %v2466 = vadd.f32 %v2464, 1e-05
      %v2467 = vrsqrt.pop %v2465
      %v2468 = vrsqrt.pop %v2466
      %v2469 = vmul.f32 %v2453, %v2467
      %v2470 = vmul.f32 %v2454, %v2468
      %v2471 = vld [vmem:[%s35] sm:$0x1]
      %v2472 = vunpack.c.l.bf16 %v2471
      %v2473 = vlaneseq
      %v2474 = vshrl.u32 %v2473, 7
      %v2475 = vsub.s32 0, %v2474
      %v2476 = vrot.slane %v2472, %v2475
      %v2477 = vmul.f32 %v2469, %v2476
      %v2478 = vmul.f32 %v2470, %v2476
      %v2479 = vld [vmem:[%s37] sm:$0x1]
      %v2480 = vunpack.c.l.bf16 %v2479
      %v2481 = vlaneseq
      %v2482 = vshrl.u32 %v2481, 7
      %v2483 = vsub.s32 0, %v2482
      %v2484 = vrot.slane %v2480, %v2483
      %v2485 = vadd.f32 %v2477, %v2484
      %v2486 = vadd.f32 %v2478, %v2484
      %v2487 = vpack.c.bf16 %v2486, %v2485
      %v2488 = vld [vmem:[%s39] sm:$0xf]
      %v2489 = vld [vmem:[%s39 + $0x4] sm:$0xf]
      %v2490 = vld [vmem:[%s39 + $0x8] sm:$0xf]
      %v2491 = vld [vmem:[%s39 + $0xc] sm:$0xf]
      %v2492 = vld [vmem:[%s41] sm:$0x1]
      %v2493 = vunpack.c.l.bf16 %v2492
      %v2494 = vlaneseq
      %v2495 = vshrl.u32 %v2494, 7
      %v2496 = vsub.s32 0, %v2495
      %v2497 = vrot.slane %v2493, %v2496
      %v2502 = vunpack.c.l.b16 %v2488
      %v2503 = vunpack.c.l.b16 %v2489
      %v2504 = vunpack.c.l.b16 %v2490
      %v2505 = vunpack.c.l.b16 %v2491
      %v2506 = vpack.c.b16 %v2503, %v2502
      %v2507 = vpack.c.b16 %v2505, %v2504
      %v2511 = vsel %vm948, %v2487, 0
      %2513 = vmatprep.subr.bf16.mxu0 0
      %2514 = vmatpush1.bf16.msra.mxu0 %v2506
      %2515 = vmatprep.subr.bf16.mxu0 0
      %2516 = vmatpush1.bf16.msra.mxu0 %v2507
      %2517 = vmatprep.subr.bf16.mxu0 0
      %2518 = vmatpush1.bf16.msra.mxu0 0
      %2519 = vmatprep.subr.bf16.mxu0 0
      %2520 = vmatpush1.bf16.msra.mxu0 0
      %2521 = vmatprep.subr.bf16.mxu0 0
      %2522 = vmatpush1.bf16.msra.mxu0 0
      %2523 = vmatprep.subr.bf16.mxu0 0
      %2524 = vmatpush1.bf16.msra.mxu0 0
      %2525 = vmatprep.subr.bf16.mxu0 0
      %2526 = vmatpush1.bf16.msra.mxu0 0
      %2527 = vmatprep.subr.bf16.mxu0 0
      %2528 = vmatpush1.bf16.msra.mxu0 0
      %2529 = vmatprep.subr.bf16.mxu0 0
      %2530 = vmatpush1.bf16.msra.mxu0 0
      %2531 = vmatprep.subr.bf16.mxu0 0
      %2532 = vmatpush1.bf16.msra.mxu0 0
      %2533 = vmatprep.subr.bf16.mxu0 0
      %2534 = vmatpush1.bf16.msra.mxu0 0
      %2535 = vmatprep.subr.bf16.mxu0 0
      %2536 = vmatpush1.bf16.msra.mxu0 0
      %2537 = vmatprep.subr.bf16.mxu0 0
      %2538 = vmatpush1.bf16.msra.mxu0 0
      %2539 = vmatprep.subr.bf16.mxu0 0
      %2540 = vmatpush1.bf16.msra.mxu0 0
      %2541 = vmatprep.subr.bf16.mxu0 0
      %2542 = vmatpush1.bf16.msra.mxu0 0
      %2543 = vmatprep.subr.bf16.mxu0 0
      %2544 = vmatpush1.bf16.msra.mxu0 0
      %2545 = vmatprep.mubr.bf16.mxu0 0
      %2546 = vmatmul.mubr.bf16.gmra.mrb[0].mxu0 %v2511
      %v2547 = vpop.f32.mrb[0].mxu0
      %v2548 = vadd.f32 %v2497, %v2547
      %v2549 = vpop.f32.mrb[0].mxu0
      %v2550 = vpop.f32.mrb[0].mxu0
      %v2551 = vadd.f32 %v2497, %v2550
      %v2552 = vpop.f32.mrb[0].mxu0
      %2553 = vdwg.mxu0
      %v2554 = vmul.f32 %v2548, %v2548
      %v2555 = vmul.f32 %v2551, %v2551
      %v2556 = vmul.f32 %v2548, %v2554
      %v2557 = vmul.f32 %v2551, %v2555
      %v2558 = vmul.f32 %v2556, 0.044715
      %v2559 = vmul.f32 %v2557, 0.044715
      %v2560 = vadd.f32 %v2548, %v2558
      %v2561 = vadd.f32 %v2551, %v2559
      %v2562 = vmul.f32 %v2560, 0.7978846
      %v2563 = vmul.f32 %v2561, 0.7978846
      %v2564 = vtanh.pop %v2562
      %v2565 = vtanh.pop %v2563
      %v2566 = vadd.f32 %v2564, 1.0
      %v2567 = vadd.f32 %v2565, 1.0
      %v2568 = vmul.f32 %v2566, 0.5
      %v2569 = vmul.f32 %v2567, 0.5
      %v2570 = vmul.f32 %v2548, %v2568
      %v2571 = vmul.f32 %v2551, %v2569
      %v2572 = vpack.c.bf16 %v2571, %v2570
      %v2573 = vld [vmem:[%s43] sm:$0xf]
      %v2574 = vld [vmem:[%s43 + $0x4] sm:$0xf]
      %v2575 = vld [vmem:[%s43 + $0x8] sm:$0xf]
      %v2576 = vld [vmem:[%s43 + $0xc] sm:$0xf]
      %v2577 = vld [vmem:[%s43 + $0x10] sm:$0xf]
      %v2578 = vld [vmem:[%s43 + $0x14] sm:$0xf]
      %v2579 = vld [vmem:[%s43 + $0x18] sm:$0xf]
      %v2580 = vld [vmem:[%s43 + $0x1c] sm:$0xf]
      %v2581 = vld [vmem:[%s45] sm:$0x1]
      %v2582 = vunpack.c.l.bf16 %v2581
      %v2583 = vlaneseq
      %v2584 = vshrl.u32 %v2583, 7
      %v2585 = vsub.s32 0, %v2584
      %v2586 = vrot.slane %v2582, %v2585
      %v2595 = vunpack.c.l.b16 %v2573
      %v2596 = vunpack.c.l.b16 %v2574
      %v2597 = vunpack.c.l.b16 %v2575
      %v2598 = vunpack.c.l.b16 %v2576
      %v2599 = vunpack.c.l.b16 %v2577
      %v2600 = vunpack.c.l.b16 %v2578
      %v2601 = vunpack.c.l.b16 %v2579
      %v2602 = vunpack.c.l.b16 %v2580
      %v2603 = vpack.c.b16 %v2596, %v2595
      %v2604 = vpack.c.b16 %v2598, %v2597
      %v2605 = vpack.c.b16 %v2600, %v2599
      %v2606 = vpack.c.b16 %v2602, %v2601
      %vm2611 = vcmask 523264
      %v2613 = vsel %vm2611, %v2572, 0
      %2615 = vmatprep.subr.bf16.mxu0 0
      %2616 = vmatpush1.bf16.msra.mxu0 %v2603
      %2617 = vmatprep.subr.bf16.mxu0 0
      %2618 = vmatpush1.bf16.msra.mxu0 %v2604
      %2619 = vmatprep.subr.bf16.mxu0 0
      %2620 = vmatpush1.bf16.msra.mxu0 %v2605
      %2621 = vmatprep.subr.bf16.mxu0 0
      %2622 = vmatpush1.bf16.msra.mxu0 %v2606
      %2623 = vmatprep.subr.bf16.mxu0 0
      %2624 = vmatpush1.bf16.msra.mxu0 0
      %2625 = vmatprep.subr.bf16.mxu0 0
      %2626 = vmatpush1.bf16.msra.mxu0 0
      %2627 = vmatprep.subr.bf16.mxu0 0
      %2628 = vmatpush1.bf16.msra.mxu0 0
      %2629 = vmatprep.subr.bf16.mxu0 0
      %2630 = vmatpush1.bf16.msra.mxu0 0
      %2631 = vmatprep.subr.bf16.mxu0 0
      %2632 = vmatpush1.bf16.msra.mxu0 0
      %2633 = vmatprep.subr.bf16.mxu0 0
      %2634 = vmatpush1.bf16.msra.mxu0 0
      %2635 = vmatprep.subr.bf16.mxu0 0
      %2636 = vmatpush1.bf16.msra.mxu0 0
      %2637 = vmatprep.subr.bf16.mxu0 0
      %2638 = vmatpush1.bf16.msra.mxu0 0
      %2639 = vmatprep.subr.bf16.mxu0 0
      %2640 = vmatpush1.bf16.msra.mxu0 0
      %2641 = vmatprep.subr.bf16.mxu0 0
      %2642 = vmatpush1.bf16.msra.mxu0 0
      %2643 = vmatprep.subr.bf16.mxu0 0
      %2644 = vmatpush1.bf16.msra.mxu0 0
      %2645 = vmatprep.subr.bf16.mxu0 0
      %2646 = vmatpush1.bf16.msra.mxu0 0
      %2647 = vmatprep.mubr.bf16.mxu0 0
      %2648 = vmatmul.mubr.bf16.gmra.mrb[0].mxu0 %v2613
      %v2649 = vpop.f32.mrb[0].mxu0
      %v2650 = vadd.f32 %v2586, %v2649
      %v2651 = vpop.f32.mrb[0].mxu0
      %v2652 = vpop.f32.mrb[0].mxu0
      %v2653 = vadd.f32 %v2586, %v2652
      %v2654 = vpop.f32.mrb[0].mxu0
      %2655 = vdwg.mxu0
      %v2656 = vadd.f32 %v2485, %v2650
      %v2657 = vadd.f32 %v2486, %v2653
      %v2658 = vsel %vm948, %v2656, 0.0
      %2659 = vadd.xlane.f32.xlu0 %v2658
      %v2660 = vpop.xlane.xlu0 %2659
      %v2661 = vsel %vm952, %v2657, 0.0
      %2662 = vadd.xlane.f32.xlu0 %v2661
      %v2663 = vpop.xlane.xlu0 %2662
      %v2664 = vmul.f32 %v2660, %v956
      %v2665 = vmul.f32 %v2663, %v956
      %v2666 = vsub.f32 %v2656, %v2664
      %v2667 = vsub.f32 %v2657, %v2665
      %v2668 = vmul.f32 %v2666, %v2666
      %v2669 = vmul.f32 %v2667, %v2667
      %v2670 = vsel %vm948, %v2668, 0.0
      %2671 = vadd.xlane.f32.xlu0 %v2670
      %v2672 = vpop.xlane.xlu0 %2671
      %v2673 = vsel %vm952, %v2669, 0.0
      %2674 = vadd.xlane.f32.xlu0 %v2673
      %v2675 = vpop.xlane.xlu0 %2674
      %v2676 = vmul.f32 %v2672, %v956
      %v2677 = vmul.f32 %v2675, %v956
      %v2678 = vadd.f32 %v2676, 1e-05
      %v2679 = vadd.f32 %v2677, 1e-05
      %v2680 = vrsqrt.pop %v2678
      %v2681 = vrsqrt.pop %v2679
      %v2682 = vmul.f32 %v2666, %v2680
      %v2683 = vmul.f32 %v2667, %v2681
      %v2684 = vld [vmem:[%s47] sm:$0x1]
      %v2685 = vunpack.c.l.bf16 %v2684
      %v2686 = vlaneseq
      %v2687 = vshrl.u32 %v2686, 7
      %v2688 = vsub.s32 0, %v2687
      %v2689 = vrot.slane %v2685, %v2688
      %v2690 = vmul.f32 %v2682, %v2689
      %v2691 = vmul.f32 %v2683, %v2689
      %v2692 = vld [vmem:[%s49] sm:$0x1]
      %v2693 = vunpack.c.l.bf16 %v2692
      %v2694 = vlaneseq
      %v2695 = vshrl.u32 %v2694, 7
      %v2696 = vsub.s32 0, %v2695
      %v2697 = vrot.slane %v2693, %v2696
      %v2698 = vadd.f32 %v2690, %v2697
      %v2699 = vadd.f32 %v2691, %v2697
      %v2700 = vpack.c.bf16 %v2699, %v2698
      %v2701 = vld [vmem:[%s51] sm:$0xf]
      %v2702 = vld [vmem:[%s51 + $0x4] sm:$0xf]
      %v2703 = vld [vmem:[%s51 + $0x8] sm:$0xf]
      %v2704 = vld [vmem:[%s51 + $0xc] sm:$0xf]
      %v2705 = vld [vmem:[%s53] sm:$0x1]
      %v2706 = vunpack.c.l.bf16 %v2705
      %v2707 = vlaneseq
      %v2708 = vshrl.u32 %v2707, 7
      %v2709 = vsub.s32 0, %v2708
      %v2710 = vrot.slane %v2706, %v2709
      %v2715 = vunpack.c.l.b16 %v2701
      %v2716 = vunpack.c.l.b16 %v2702
      %v2717 = vunpack.c.l.b16 %v2703
      %v2718 = vunpack.c.l.b16 %v2704
      %v2719 = vpack.c.b16 %v2716, %v2715
      %v2720 = vpack.c.b16 %v2718, %v2717
      %v2724 = vsel %vm948, %v2700, 0
      %2726 = vmatprep.subr.bf16.mxu0 0
      %2727 = vmatpush1.bf16.msra.mxu0 %v2719
      %2728 = vmatprep.subr.bf16.mxu0 0
      %2729 = vmatpush1.bf16.msra.mxu0 %v2720
      %2730 = vmatprep.subr.bf16.mxu0 0
      %2731 = vmatpush1.bf16.msra.mxu0 0
      %2732 = vmatprep.subr.bf16.mxu0 0
      %2733 = vmatpush1.bf16.msra.mxu0 0
      %2734 = vmatprep.subr.bf16.mxu0 0
      %2735 = vmatpush1.bf16.msra.mxu0 0
      %2736 = vmatprep.subr.bf16.mxu0 0
      %2737 = vmatpush1.bf16.msra.mxu0 0
      %2738 = vmatprep.subr.bf16.mxu0 0
      %2739 = vmatpush1.bf16.msra.mxu0 0
      %2740 = vmatprep.subr.bf16.mxu0 0
      %2741 = vmatpush1.bf16.msra.mxu0 0
      %2742 = vmatprep.subr.bf16.mxu0 0
      %2743 = vmatpush1.bf16.msra.mxu0 0
      %2744 = vmatprep.subr.bf16.mxu0 0
      %2745 = vmatpush1.bf16.msra.mxu0 0
      %2746 = vmatprep.subr.bf16.mxu0 0
      %2747 = vmatpush1.bf16.msra.mxu0 0
      %2748 = vmatprep.subr.bf16.mxu0 0
      %2749 = vmatpush1.bf16.msra.mxu0 0
      %2750 = vmatprep.subr.bf16.mxu0 0
      %2751 = vmatpush1.bf16.msra.mxu0 0
      %2752 = vmatprep.subr.bf16.mxu0 0
      %2753 = vmatpush1.bf16.msra.mxu0 0
      %2754 = vmatprep.subr.bf16.mxu0 0
      %2755 = vmatpush1.bf16.msra.mxu0 0
      %2756 = vmatprep.subr.bf16.mxu0 0
      %2757 = vmatpush1.bf16.msra.mxu0 0
      %2758 = vmatprep.mubr.bf16.mxu0 0
      %2759 = vmatmul.mubr.bf16.gmra.mrb[0].mxu0 %v2724
      %v2760 = vpop.f32.mrb[0].mxu0
      %v2761 = vadd.f32 %v2710, %v2760
      %v2762 = vpop.f32.mrb[0].mxu0
      %v2763 = vpop.f32.mrb[0].mxu0
      %v2764 = vadd.f32 %v2710, %v2763
      %v2765 = vpop.f32.mrb[0].mxu0
      %2766 = vdwg.mxu0
      %vm2767 = vcmask 293888
      %2768 = vst.msk [vmem:[%s928] sm:$0xff] %vm2767, %v2761
      %vm2769 = vcmask 287744
      %2770 = vst.msk [vmem:[%s928 + $0x8] sm:$0x3] %vm2769, %v2764
      %v2771 = vsel %vm1595, %v2761, -inf
      %2772 = vmax.xlane.f32.xlu0 %v2771
      %v2773 = vpop.xlane.xlu0 %2772
      %vm2774 = vcmask 123904
      %v2775 = vsel %vm2774, %v2764, -inf
      %2776 = vmax.xlane.f32.xlu0 %v2775
      %v2777 = vpop.xlane.xlu0 %2776
      %v2778 = vcvt.s32.f32 %v1064
      %vm2779 = vcmp.ge.f32.partialorder %v2761, %v2773
      %vm2780 = vcmp.ge.f32.partialorder %v2764, %v2777
      %v2781 = vsel %vm2779, %v2778, 16.0
      %v2782 = vsel %vm2780, %v2778, 16.0
      %v2783 = vsel %vm1595, %v2781, inf
      %2784 = vmin.xlane.f32.xlu0 %v2783
      %v2785 = vpop.xlane.xlu0 %2784
      %v2786 = vsel %vm2774, %v2782, inf
      %2787 = vmin.xlane.f32.xlu0 %v2786
      %v2788 = vpop.xlane.xlu0 %2787
      %v2789 = vcvt.f32.s32.to.zero.pseudo %v2785
      %v2790 = vcvt.f32.s32.to.zero.pseudo %v2788
      %vm2791 = vcmask 261248
      %v2792 = vsel %vm2791, %v2761, -inf
      %2793 = vmax.xlane.f32.xlu0 %v2792
      %v2794 = vpop.xlane.xlu0 %2793
      %vm2795 = vcmask 255104
      %v2796 = vsel %vm2795, %v2764, -inf
      %2797 = vmax.xlane.f32.xlu0 %v2796
      %v2798 = vpop.xlane.xlu0 %2797
      %vm2799 = vcmp.ge.f32.partialorder %v2761, %v2794
      %vm2800 = vcmp.ge.f32.partialorder %v2764, %v2798
      %2802 = vrot.lane.b32.xlu0 %v2778, 16
      %v2803 = vpop.permute.xlu0 %2802
      %v2805 = vsel %vm2799, %v2803, 16.0
      %v2806 = vsel %vm2800, %v2803, 16.0
      %v2807 = vsel %vm2791, %v2805, inf
      %2808 = vmin.xlane.f32.xlu0 %v2807
      %v2809 = vpop.xlane.xlu0 %2808
      %v2810 = vsel %vm2795, %v2806, inf
      %2811 = vmin.xlane.f32.xlu0 %v2810
      %v2812 = vpop.xlane.xlu0 %2811
      %v2813 = vcvt.f32.s32.to.zero.pseudo %v2809
      %v2814 = vcvt.f32.s32.to.zero.pseudo %v2812
      %vm2815 = vcmask 294144
      %v2816 = vsel %vm2815, %v2761, -inf
      %2817 = vmax.xlane.f32.xlu0 %v2816
      %v2818 = vpop.xlane.xlu0 %2817
      %vm2819 = vcmask 288000
      %v2820 = vsel %vm2819, %v2764, -inf
      %2821 = vmax.xlane.f32.xlu0 %v2820
      %v2822 = vpop.xlane.xlu0 %2821
      %vm2823 = vcmp.ge.f32.partialorder %v2761, %v2818
      %vm2824 = vcmp.ge.f32.partialorder %v2764, %v2822
      %2825 = vrot.lane.b32.xlu0 %v2778, 32
      %v2826 = vpop.permute.xlu0 %2825
      %v2828 = vsel %vm2823, %v2826, 4.0
      %v2829 = vsel %vm2824, %v2826, 4.0
      %v2830 = vsel %vm2815, %v2828, inf
      %2831 = vmin.xlane.f32.xlu0 %v2830
      %v2832 = vpop.xlane.xlu0 %2831
      %v2833 = vsel %vm2819, %v2829, inf
      %2834 = vmin.xlane.f32.xlu0 %v2833
      %v2835 = vpop.xlane.xlu0 %2834
      %v2836 = vcvt.f32.s32.to.zero.pseudo %v2832
      %v2837 = vcvt.f32.s32.to.zero.pseudo %v2835
      %vm2838 = vcmp.lt.s32.totalorder %v2836, 3
      %vm2839 = vcmp.lt.s32.totalorder %v2837, 3
      %vm2840 = vcmp.lt.s32.totalorder %v2789, %v2813
      %vm2841 = vcmp.lt.s32.totalorder %v2790, %v2814
      %vm2842 = vmand %vm2838, %vm2840
      %vm2843 = vmand %vm2839, %vm2841
      %v2844 = vsel %vm2842, 1, 0
      %v2845 = vsel %vm2843, 1, 0
      %vm2846 = vcmask 7168
      %2847 = vst.msk [vmem:[%s938] sm:$0xff] %vm2846, %v2844
      %vm2848 = vcmask 1024
      %2849 = vst.msk [vmem:[%s938 + $0x8] sm:$0x3] %vm2848, %v2845
      %vm2850 = vcmp.ge.s32.totalorder %v1064, %v2789
      %vm2851 = vcmp.ge.s32.totalorder %v1064, %v2790
      %vm2852 = vcmp.lt.s32.totalorder %v1064, %v2813
      %vm2853 = vcmp.lt.s32.totalorder %v1064, %v2814
      %vm2854 = vmand %vm2850, %vm2852
      %vm2855 = vmand %vm2851, %vm2853
      %v2856 = vsel %vm2854, 1, 0
      %v2857 = vsel %vm2855, 1, 0
      %v2858 = vcvt.s32.f32 %v2856
      %v2859 = vcvt.s32.f32 %v2857
      %v2860 = vsel %vm1076, %v2858, 0.0
      %2861 = vadd.xlane.f32.xlu0 %v2860
      %v2862 = vpop.xlane.xlu0 %2861
      %v2863 = vsel %vm1904, %v2859, 0.0
      %2864 = vadd.xlane.f32.xlu0 %v2863
      %v2865 = vpop.xlane.xlu0 %2864
      %v2866 = vpack.c.bf16 %v2859, %v2858
      %v2868 = vsel %vm1076, %v2866, 0
      %v2870 = vsel %vm1931, %v940, 0
      %2872 = vmatprep.subr.bf16.mxu0 0
      %2873 = vmatpush1.bf16.msra.mxu0 %v2870
      %2874 = vmatprep.subr.bf16.mxu0 0
      %2875 = vmatpush1.bf16.msra.mxu0 0
      %2876 = vmatprep.subr.bf16.mxu0 0
      %2877 = vmatpush1.bf16.msra.mxu0 0
      %2878 = vmatprep.subr.bf16.mxu0 0
      %2879 = vmatpush1.bf16.msra.mxu0 0
      %2880 = vmatprep.subr.bf16.mxu0 0
      %2881 = vmatpush1.bf16.msra.mxu0 0
      %2882 = vmatprep.subr.bf16.mxu0 0
      %2883 = vmatpush1.bf16.msra.mxu0 0
      %2884 = vmatprep.subr.bf16.mxu0 0
      %2885 = vmatpush1.bf16.msra.mxu0 0
      %2886 = vmatprep.subr.bf16.mxu0 0
      %2887 = vmatpush1.bf16.msra.mxu0 0
      %2888 = vmatprep.subr.bf16.mxu0 0
      %2889 = vmatpush1.bf16.msra.mxu0 0
      %2890 = vmatprep.subr.bf16.mxu0 0
      %2891 = vmatpush1.bf16.msra.mxu0 0
      %2892 = vmatprep.subr.bf16.mxu0 0
      %2893 = vmatpush1.bf16.msra.mxu0 0
      %2894 = vmatprep.subr.bf16.mxu0 0
      %2895 = vmatpush1.bf16.msra.mxu0 0
      %2896 = vmatprep.subr.bf16.mxu0 0
      %2897 = vmatpush1.bf16.msra.mxu0 0
      %2898 = vmatprep.subr.bf16.mxu0 0
      %2899 = vmatpush1.bf16.msra.mxu0 0
      %2900 = vmatprep.subr.bf16.mxu0 0
      %2901 = vmatpush1.bf16.msra.mxu0 0
      %2902 = vmatprep.subr.bf16.mxu0 0
      %2903 = vmatpush1.bf16.msra.mxu0 0
      %2904 = vmatprep.mubr.bf16.mxu0 0
      %2905 = vmatmul.mubr.bf16.gmra.mrb[0].mxu0 %v2868
      %v2906 = vpop.f32.mrb[0].mxu0
      %v2907 = vadd.f32 0.0, %v2906
      %v2908 = vpop.f32.mrb[0].mxu0
      %v2909 = vpop.f32.mrb[0].mxu0
      %v2910 = vadd.f32 0.0, %v2909
      %v2911 = vpop.f32.mrb[0].mxu0
      %2912 = vdwg.mxu0
      %v2913 = vmax.f32 %v2862, 1.0
      %v2914 = vmax.f32 %v2865, 1.0
      %v2915 = vrcp.pop %v2913
      %v2916 = vmul.f32 %v2907, %v2915
      %v2917 = vrcp.pop %v2914
      %v2918 = vmul.f32 %v2910, %v2917
      %v2919 = vpack.c.bf16 %v2918, %v2916
      %v2921 = vunpack.c.l.b16 %v2919
      %v2922 = vunpack.c.h.b16 %v2919
      %v2923 = vpack.c.b16 %v2921, %v2921
      %v2924 = vpack.c.b16 %v2922, %v2922
      %vm2927 = vcmask 257024
      %2928 = vst.msk [vmem:[%s933] sm:$0xf] %vm2927, %v2923
      %vm2929 = vcmask 253952
      %2930 = vst.msk [vmem:[%s933 + $0x4] sm:$0x1] %vm2929, %v2924
      %p2931 = scmp.lt.s32.totalorder %s71, 1
      %s2932 = scalar_select %p2931, %s71, 1
      %s2933 = smul.addr %s2932, 2
      %s2934 = smul.addr %s2933, 8
      %s2935 = scalar_lea.vmem %s55, %s2934
      %p2936 = scmp.lt.s32.totalorder %s71, 1
      %s2937 = scalar_select %p2936, %s71, 1
      %s2938 = smul.addr %s2937, 2
      %s2939 = smul.addr %s2938, 4
      %s2940 = scalar_lea.vmem %s57, %s2939
      %p2941 = scmp.lt.s32.totalorder %s71, 1
      %s2942 = scalar_select %p2941, %s71, 1
      %s2943 = smul.addr %s2942, 2
      %s2944 = smul.addr %s2943, 8
      %s2945 = scalar_lea.vmem %s59, %s2944
      // Predicated region
      $region129: #{nere_forward.4} parent=127 // pred_check
        %p2946 = pneg %p666
      $region130: #{nere_forward.4} parent=127 // pred_check_branch
        %2948 = sbr.rel (%p2946) target = $region132
      $region131: #{nere_forward.4} parent=127 // pred_region
        _
      $region132: #{nere_forward.4} parent=127 // pred_fallthru
        _
      // Predicated region
      $region133: #{nere_forward.4} parent=127 // pred_check
        %p2949 = pneg %p692
      $region134: #{nere_forward.4} parent=127 // pred_check_branch
        %2951 = sbr.rel (%p2949) target = $region136
      $region135: #{nere_forward.4} parent=127 // pred_region
        _
      $region136: #{nere_forward.4} parent=127 // pred_fallthru
        _
      // Predicated region
      $region137: #{nere_forward.4} parent=127 // pred_check
        %p2952 = pneg %p718
      $region138: #{nere_forward.4} parent=127 // pred_check_branch
        %2954 = sbr.rel (%p2952) target = $region140
      $region139: #{nere_forward.4} parent=127 // pred_region
        _
      $region140: #{nere_forward.4} parent=127 // pred_fallthru
        _
    $region128: #{nere_forward.4} parent=5 // pred_fallthru
      _
    %p2955 = scmp.le.s32.totalorder 2, %s66
    // Predicated region
    $region141: #{nere_forward.4} parent=5 // pred_check
      %p2956 = pneg %p2955
    $region142: #{nere_forward.4} parent=5 // pred_check_branch
      %2958 = sbr.rel (%p2956) target = $region144
    $region143: #{nere_forward.4} parent=5 // pred_region
      %s2959 = ssub.s32 %s66, 2
      // Predicated region
      $region145: #{nere_forward.4} parent=143 // pred_check
        %p2960 = pneg %p672
      $region146: #{nere_forward.4} parent=143 // pred_check_branch
        %2962 = sbr.rel (%p2960) target = $region148
      $region147: #{nere_forward.4} parent=143 // pred_region
        %p2963 = scmp.lt.s32.totalorder %s72, 1
        %s2964 = scalar_select %p2963, %s72, 1
        %s2965 = smul.addr %s2964, 2
        %s2966 = smul.addr %s2965, 8
        %s2967 = scalar_lea.vmem %s55, %s2966
      $region148: #{nere_forward.4} parent=143 // pred_fallthru
        _
      // Predicated region
      $region149: #{nere_forward.4} parent=143 // pred_check
        %p2968 = pneg %p698
      $region150: #{nere_forward.4} parent=143 // pred_check_branch
        %2970 = sbr.rel (%p2968) target = $region152
      $region151: #{nere_forward.4} parent=143 // pred_region
        %p2971 = scmp.lt.s32.totalorder %s72, 1
        %s2972 = scalar_select %p2971, %s72, 1
        %s2973 = smul.addr %s2972, 2
        %s2974 = smul.addr %s2973, 4
        %s2975 = scalar_lea.vmem %s57, %s2974
      $region152: #{nere_forward.4} parent=143 // pred_fallthru
        _
      // Predicated region
      $region153: #{nere_forward.4} parent=143 // pred_check
        %p2976 = pneg %p724
      $region154: #{nere_forward.4} parent=143 // pred_check_branch
        %2978 = sbr.rel (%p2976) target = $region156
      $region155: #{nere_forward.4} parent=143 // pred_region
        %p2979 = scmp.lt.s32.totalorder %s72, 1
        %s2980 = scalar_select %p2979, %s72, 1
        %s2981 = smul.addr %s2980, 2
        %s2982 = smul.addr %s2981, 8
        %s2983 = scalar_lea.vmem %s59, %s2982
      $region156: #{nere_forward.4} parent=143 // pred_fallthru
        _
    $region144: #{nere_forward.4} parent=5 // pred_fallthru
      _
  $region6: #{nere_forward.4} parent=0 // loop_footer
    %s70 = sadd.s32 1, %s66
  $region7: #{nere_forward.4} parent=0 // loop_footer_branch
    %65 = sbr.rel target = $region3
  $region8: #{nere_forward.4} parent=0 // loop_exit
    _

// kernel: nere_forward.5
$region0: #{nere_forward.5}
  #allocation0 [shape = 'u32[]', space=smem, size = 0x4, offset = 0x4, fixed_abs, tag = 'smem constant byte address 0x4 - core index']
  #allocation1 [shape = 'u32[144,128]{1,0:T(1,128)}', space=vmem, size = 0x12000, scoped, tag = 'internal scratch']
  %s0 = inlined_call_operand.vmem [shape: bf16[1,10,32], index: 0, kind: input, shape index: {}]
  %s1 = inlined_call_operand.vmem [shape: bf16[2,10,32], index: 1, kind: input, shape index: {}]
  %s2 = inlined_call_operand.vmem [shape: f32[2,1,10], index: 2, kind: input, shape index: {}]
  %s3 = inlined_call_operand.vmem [shape: bf16[1,32], index: 3, kind: input, shape index: {}]
  %s4 = inlined_call_operand.vmem [shape: bf16[1,32], index: 4, kind: input, shape index: {}]
  %s5 = inlined_call_operand.vmem [shape: bf16[32,96], index: 5, kind: input, shape index: {}]
  %s6 = inlined_call_operand.vmem [shape: bf16[1,96], index: 6, kind: input, shape index: {}]
  %s7 = inlined_call_operand.vmem [shape: bf16[32,32], index: 7, kind: input, shape index: {}]
  %s8 = inlined_call_operand.vmem [shape: bf16[1,32], index: 8, kind: input, shape index: {}]
  %s9 = inlined_call_operand.vmem [shape: bf16[1,32], index: 9, kind: input, shape index: {}]
  %s10 = inlined_call_operand.vmem [shape: bf16[1,32], index: 10, kind: input, shape index: {}]
  %s11 = inlined_call_operand.vmem [shape: bf16[32,32], index: 11, kind: input, shape index: {}]
  %s12 = inlined_call_operand.vmem [shape: bf16[1,32], index: 12, kind: input, shape index: {}]
  %s13 = inlined_call_operand.vmem [shape: bf16[32,64], index: 13, kind: input, shape index: {}]
  %s14 = inlined_call_operand.vmem [shape: bf16[1,64], index: 14, kind: input, shape index: {}]
  %s15 = inlined_call_operand.vmem [shape: bf16[32,32], index: 15, kind: input, shape index: {}]
  %s16 = inlined_call_operand.vmem [shape: bf16[1,32], index: 16, kind: input, shape index: {}]
  %s17 = inlined_call_operand.vmem [shape: bf16[1,32], index: 17, kind: input, shape index: {}]
  %s18 = inlined_call_operand.vmem [shape: bf16[1,32], index: 18, kind: input, shape index: {}]
  %s19 = inlined_call_operand.vmem [shape: bf16[32,64], index: 19, kind: input, shape index: {}]
  %s20 = inlined_call_operand.vmem [shape: bf16[1,64], index: 20, kind: input, shape index: {}]
  %s21 = inlined_call_operand.vmem [shape: bf16[64,32], index: 21, kind: input, shape index: {}]
  %s22 = inlined_call_operand.vmem [shape: bf16[1,32], index: 22, kind: input, shape index: {}]
  %s23 = inlined_call_operand.vmem [shape: bf16[1,32], index: 23, kind: input, shape index: {}]
  %s24 = inlined_call_operand.vmem [shape: bf16[1,32], index: 24, kind: input, shape index: {}]
  %s25 = inlined_call_operand.vmem [shape: bf16[32,23], index: 25, kind: input, shape index: {}]
  %s26 = inlined_call_operand.vmem [shape: bf16[1,23], index: 26, kind: input, shape index: {}]
  %s27 = inlined_call_operand.vmem [shape: f32[2,10,23], index: 27, kind: output, shape index: {}]
  %s28 = sld [smem:[#allocation0]]
  $region141: #{nere_forward.5} parent=0
    _
  %s30 = ssub.s32 1, %s28
  %s31 = scalar_select 0, %s30, %s28
  loop: start=0, step=1, limit=4
  $region2: #{nere_forward.5} parent=0 // loop_pre_header
    _
  $region3: #{nere_forward.5} parent=0 // loop_header
    %s33 = sphi 0, %s37
    %p34 = scmp.ge.s32.totalorder %s33, 4
    %s41 = sphi 0, %s41
    %s43 = sphi 0, %s41
    %s44 = sphi 0, %s43
    %s58 = sphi 0, %s44
    %s64 = sphi 0, %s66
    %s67 = sphi 0, %s64
    %s68 = sphi 0, %s67
    %s84 = sphi 0, %s68
    %s90 = sphi 0, %s92
    %s93 = sphi 0, %s90
    %s94 = sphi 0, %s93
    %s110 = sphi 0, %s94
    %s114 = sphi 0, %s114
    %s116 = sphi 0, %s114
    %s117 = sphi 0, %s116
    %s131 = sphi 0, %s117
    %s135 = sphi 0, %s135
    %s137 = sphi 0, %s135
    %s138 = sphi 0, %s137
    %s152 = sphi 0, %s138
    %s156 = sphi 0, %s156
    %s158 = sphi 0, %s156
    %s159 = sphi 0, %s158
    %s173 = sphi 0, %s159
    %s177 = sphi 0, %s177
    %s179 = sphi 0, %s177
    %s180 = sphi 0, %s179
    %s194 = sphi 0, %s180
    %s198 = sphi 0, %s198
    %s200 = sphi 0, %s198
    %s201 = sphi 0, %s200
    %s215 = sphi 0, %s201
    %s219 = sphi 0, %s219
    %s221 = sphi 0, %s219
    %s222 = sphi 0, %s221
    %s236 = sphi 0, %s222
    %s240 = sphi 0, %s240
    %s242 = sphi 0, %s240
    %s243 = sphi 0, %s242
    %s257 = sphi 0, %s243
    %s261 = sphi 0, %s261
    %s263 = sphi 0, %s261
    %s264 = sphi 0, %s263
    %s278 = sphi 0, %s264
    %s282 = sphi 0, %s282
    %s284 = sphi 0, %s282
    %s285 = sphi 0, %s284
    %s299 = sphi 0, %s285
    %s303 = sphi 0, %s303
    %s305 = sphi 0, %s303
    %s306 = sphi 0, %s305
    %s320 = sphi 0, %s306
    %s324 = sphi 0, %s324
    %s326 = sphi 0, %s324
    %s327 = sphi 0, %s326
    %s341 = sphi 0, %s327
    %s345 = sphi 0, %s345
    %s347 = sphi 0, %s345
    %s348 = sphi 0, %s347
    %s362 = sphi 0, %s348
    %s366 = sphi 0, %s366
    %s368 = sphi 0, %s366
    %s369 = sphi 0, %s368
    %s383 = sphi 0, %s369
    %s387 = sphi 0, %s387
    %s389 = sphi 0, %s387
    %s390 = sphi 0, %s389
    %s404 = sphi 0, %s390
    %s408 = sphi 0, %s408
    %s410 = sphi 0, %s408
    %s411 = sphi 0, %s410
    %s425 = sphi 0, %s411
    %s429 = sphi 0, %s429
    %s431 = sphi 0, %s429
    %s432 = sphi 0, %s431
    %s446 = sphi 0, %s432
    %s450 = sphi 0, %s450
    %s452 = sphi 0, %s450
    %s453 = sphi 0, %s452
    %s467 = sphi 0, %s453
    %s471 = sphi 0, %s471
    %s473 = sphi 0, %s471
    %s474 = sphi 0, %s473
    %s488 = sphi 0, %s474
    %s492 = sphi 0, %s492
    %s494 = sphi 0, %s492
    %s495 = sphi 0, %s494
    %s509 = sphi 0, %s495
    %s513 = sphi 0, %s513
    %s515 = sphi 0, %s513
    %s516 = sphi 0, %s515
    %s530 = sphi 0, %s516
    %s534 = sphi 0, %s534
    %s536 = sphi 0, %s534
    %s537 = sphi 0, %s536
    %s551 = sphi 0, %s537
    %s555 = sphi 0, %s555
    %s557 = sphi 0, %s555
    %s558 = sphi 0, %s557
    %s572 = sphi 0, %s558
    %s576 = sphi 0, %s576
    %s578 = sphi 0, %s576
    %s579 = sphi 0, %s578
    %s593 = sphi 0, %s579
    %s597 = sphi 0, %s597
    %s599 = sphi 0, %s597
    %s600 = sphi 0, %s599
    %s614 = sphi 0, %s600
    %s620 = sphi 0, %s622
    %s623 = sphi 0, %s620
    %s624 = sphi 0, %s623
    %s640 = sphi 0, %s624
  $region4: #{nere_forward.5} parent=0 // loop_header_branch
    %36 = sbr.rel (%p34) target = $region8
  $region5: #{nere_forward.5} parent=0 // loop_body
    %s38 = ssub.s32 %s33, 1
    %s39 = ssub.s32 %s33, 2
    %s40 = sadd.s32 %s33, 1
    %s42 = sadd.s32 %s41, 1
    %p45 = scmp.eq.s32.totalorder %s33, 1
    %p46 = scmp.ne.s32.totalorder %s41, %s43
    %p47 = scmp.eq.s32.totalorder %s33, 0
    %p48 = por %p46, %p47
    %p49 = scmp.ne.s32.totalorder %s41, %s43
    %p50 = scmp.eq.s32.totalorder %s38, 1
    %p51 = por %p49, %p50
    %p52 = scmp.ne.s32.totalorder %s43, %s44
    %p53 = scmp.eq.s32.totalorder %s38, 0
    %p54 = por %p52, %p53
    %p55 = scmp.ne.s32.totalorder %s43, %s44
    %p56 = scmp.eq.s32.totalorder %s39, 1
    %p57 = por %p55, %p56
    %p59 = scmp.ne.s32.totalorder %s44, %s58
    %p60 = scmp.eq.s32.totalorder %s39, 0
    %p61 = por %p59, %p60
    %s62 = ssub.s32 %s33, %s40
    %p63 = scmp.eq.s32.totalorder %s62, 0
    %s65 = sadd.s32 %s64, 1
    %s66 = scalar_select %p63, %s64, %s65
    %p69 = pneg %p63
    %p70 = scmp.eq.s32.totalorder %s33, 1
    %p71 = por %p69, %p70
    %p72 = scmp.ne.s32.totalorder %s64, %s67
    %p73 = scmp.eq.s32.totalorder %s33, 0
    %p74 = por %p72, %p73
    %p75 = scmp.ne.s32.totalorder %s64, %s67
    %p76 = scmp.eq.s32.totalorder %s38, 1
    %p77 = por %p75, %p76
    %p78 = scmp.ne.s32.totalorder %s67, %s68
    %p79 = scmp.eq.s32.totalorder %s38, 0
    %p80 = por %p78, %p79
    %p81 = scmp.ne.s32.totalorder %s67, %s68
    %p82 = scmp.eq.s32.totalorder %s39, 1
    %p83 = por %p81, %p82
    %p85 = scmp.ne.s32.totalorder %s68, %s84
    %p86 = scmp.eq.s32.totalorder %s39, 0
    %p87 = por %p85, %p86
    %s88 = ssub.s32 %s33, %s40
    %p89 = scmp.eq.s32.totalorder %s88, 0
    %s91 = sadd.s32 %s90, 1
    %s92 = scalar_select %p89, %s90, %s91
    %p95 = pneg %p89
    %p96 = scmp.eq.s32.totalorder %s33, 1
    %p97 = por %p95, %p96
    %p98 = scmp.ne.s32.totalorder %s90, %s93
    %p99 = scmp.eq.s32.totalorder %s33, 0
    %p100 = por %p98, %p99
    %p101 = scmp.ne.s32.totalorder %s90, %s93
    %p102 = scmp.eq.s32.totalorder %s38, 1
    %p103 = por %p101, %p102
    %p104 = scmp.ne.s32.totalorder %s93, %s94
    %p105 = scmp.eq.s32.totalorder %s38, 0
    %p106 = por %p104, %p105
    %p107 = scmp.ne.s32.totalorder %s93, %s94
    %p108 = scmp.eq.s32.totalorder %s39, 1
    %p109 = por %p107, %p108
    %p111 = scmp.ne.s32.totalorder %s94, %s110
    %p112 = scmp.eq.s32.totalorder %s39, 0
    %p113 = por %p111, %p112
    %s115 = sadd.s32 %s114, 1
    %p118 = scmp.eq.s32.totalorder %s33, 1
    %p119 = scmp.ne.s32.totalorder %s114, %s116
    %p120 = scmp.eq.s32.totalorder %s33, 0
    %p121 = por %p119, %p120
    %p122 = scmp.ne.s32.totalorder %s114, %s116
    %p123 = scmp.eq.s32.totalorder %s38, 1
    %p124 = por %p122, %p123
    %p125 = scmp.ne.s32.totalorder %s116, %s117
    %p126 = scmp.eq.s32.totalorder %s38, 0
    %p127 = por %p125, %p126
    %p128 = scmp.ne.s32.totalorder %s116, %s117
    %p129 = scmp.eq.s32.totalorder %s39, 1
    %p130 = por %p128, %p129
    %p132 = scmp.ne.s32.totalorder %s117, %s131
    %p133 = scmp.eq.s32.totalorder %s39, 0
    %p134 = por %p132, %p133
    %s136 = sadd.s32 %s135, 1
    %p139 = scmp.eq.s32.totalorder %s33, 1
    %p140 = scmp.ne.s32.totalorder %s135, %s137
    %p141 = scmp.eq.s32.totalorder %s33, 0
    %p142 = por %p140, %p141
    %p143 = scmp.ne.s32.totalorder %s135, %s137
    %p144 = scmp.eq.s32.totalorder %s38, 1
    %p145 = por %p143, %p144
    %p146 = scmp.ne.s32.totalorder %s137, %s138
    %p147 = scmp.eq.s32.totalorder %s38, 0
    %p148 = por %p146, %p147
    %p149 = scmp.ne.s32.totalorder %s137, %s138
    %p150 = scmp.eq.s32.totalorder %s39, 1
    %p151 = por %p149, %p150
    %p153 = scmp.ne.s32.totalorder %s138, %s152
    %p154 = scmp.eq.s32.totalorder %s39, 0
    %p155 = por %p153, %p154
    %s157 = sadd.s32 %s156, 1
    %p160 = scmp.eq.s32.totalorder %s33, 1
    %p161 = scmp.ne.s32.totalorder %s156, %s158
    %p162 = scmp.eq.s32.totalorder %s33, 0
    %p163 = por %p161, %p162
    %p164 = scmp.ne.s32.totalorder %s156, %s158
    %p165 = scmp.eq.s32.totalorder %s38, 1
    %p166 = por %p164, %p165
    %p167 = scmp.ne.s32.totalorder %s158, %s159
    %p168 = scmp.eq.s32.totalorder %s38, 0
    %p169 = por %p167, %p168
    %p170 = scmp.ne.s32.totalorder %s158, %s159
    %p171 = scmp.eq.s32.totalorder %s39, 1
    %p172 = por %p170, %p171
    %p174 = scmp.ne.s32.totalorder %s159, %s173
    %p175 = scmp.eq.s32.totalorder %s39, 0
    %p176 = por %p174, %p175
    %s178 = sadd.s32 %s177, 1
    %p181 = scmp.eq.s32.totalorder %s33, 1
    %p182 = scmp.ne.s32.totalorder %s177, %s179
    %p183 = scmp.eq.s32.totalorder %s33, 0
    %p184 = por %p182, %p183
    %p185 = scmp.ne.s32.totalorder %s177, %s179
    %p186 = scmp.eq.s32.totalorder %s38, 1
    %p187 = por %p185, %p186
    %p188 = scmp.ne.s32.totalorder %s179, %s180
    %p189 = scmp.eq.s32.totalorder %s38, 0
    %p190 = por %p188, %p189
    %p191 = scmp.ne.s32.totalorder %s179, %s180
    %p192 = scmp.eq.s32.totalorder %s39, 1
    %p193 = por %p191, %p192
    %p195 = scmp.ne.s32.totalorder %s180, %s194
    %p196 = scmp.eq.s32.totalorder %s39, 0
    %p197 = por %p195, %p196
    %s199 = sadd.s32 %s198, 1
    %p202 = scmp.eq.s32.totalorder %s33, 1
    %p203 = scmp.ne.s32.totalorder %s198, %s200
    %p204 = scmp.eq.s32.totalorder %s33, 0
    %p205 = por %p203, %p204
    %p206 = scmp.ne.s32.totalorder %s198, %s200
    %p207 = scmp.eq.s32.totalorder %s38, 1
    %p208 = por %p206, %p207
    %p209 = scmp.ne.s32.totalorder %s200, %s201
    %p210 = scmp.eq.s32.totalorder %s38, 0
    %p211 = por %p209, %p210
    %p212 = scmp.ne.s32.totalorder %s200, %s201
    %p213 = scmp.eq.s32.totalorder %s39, 1
    %p214 = por %p212, %p213
    %p216 = scmp.ne.s32.totalorder %s201, %s215
    %p217 = scmp.eq.s32.totalorder %s39, 0
    %p218 = por %p216, %p217
    %s220 = sadd.s32 %s219, 1
    %p223 = scmp.eq.s32.totalorder %s33, 1
    %p224 = scmp.ne.s32.totalorder %s219, %s221
    %p225 = scmp.eq.s32.totalorder %s33, 0
    %p226 = por %p224, %p225
    %p227 = scmp.ne.s32.totalorder %s219, %s221
    %p228 = scmp.eq.s32.totalorder %s38, 1
    %p229 = por %p227, %p228
    %p230 = scmp.ne.s32.totalorder %s221, %s222
    %p231 = scmp.eq.s32.totalorder %s38, 0
    %p232 = por %p230, %p231
    %p233 = scmp.ne.s32.totalorder %s221, %s222
    %p234 = scmp.eq.s32.totalorder %s39, 1
    %p235 = por %p233, %p234
    %p237 = scmp.ne.s32.totalorder %s222, %s236
    %p238 = scmp.eq.s32.totalorder %s39, 0
    %p239 = por %p237, %p238
    %s241 = sadd.s32 %s240, 1
    %p244 = scmp.eq.s32.totalorder %s33, 1
    %p245 = scmp.ne.s32.totalorder %s240, %s242
    %p246 = scmp.eq.s32.totalorder %s33, 0
    %p247 = por %p245, %p246
    %p248 = scmp.ne.s32.totalorder %s240, %s242
    %p249 = scmp.eq.s32.totalorder %s38, 1
    %p250 = por %p248, %p249
    %p251 = scmp.ne.s32.totalorder %s242, %s243
    %p252 = scmp.eq.s32.totalorder %s38, 0
    %p253 = por %p251, %p252
    %p254 = scmp.ne.s32.totalorder %s242, %s243
    %p255 = scmp.eq.s32.totalorder %s39, 1
    %p256 = por %p254, %p255
    %p258 = scmp.ne.s32.totalorder %s243, %s257
    %p259 = scmp.eq.s32.totalorder %s39, 0
    %p260 = por %p258, %p259
    %s262 = sadd.s32 %s261, 1
    %p265 = scmp.eq.s32.totalorder %s33, 1
    %p266 = scmp.ne.s32.totalorder %s261, %s263
    %p267 = scmp.eq.s32.totalorder %s33, 0
    %p268 = por %p266, %p267
    %p269 = scmp.ne.s32.totalorder %s261, %s263
    %p270 = scmp.eq.s32.totalorder %s38, 1
    %p271 = por %p269, %p270
    %p272 = scmp.ne.s32.totalorder %s263, %s264
    %p273 = scmp.eq.s32.totalorder %s38, 0
    %p274 = por %p272, %p273
    %p275 = scmp.ne.s32.totalorder %s263, %s264
    %p276 = scmp.eq.s32.totalorder %s39, 1
    %p277 = por %p275, %p276
    %p279 = scmp.ne.s32.totalorder %s264, %s278
    %p280 = scmp.eq.s32.totalorder %s39, 0
    %p281 = por %p279, %p280
    %s283 = sadd.s32 %s282, 1
    %p286 = scmp.eq.s32.totalorder %s33, 1
    %p287 = scmp.ne.s32.totalorder %s282, %s284
    %p288 = scmp.eq.s32.totalorder %s33, 0
    %p289 = por %p287, %p288
    %p290 = scmp.ne.s32.totalorder %s282, %s284
    %p291 = scmp.eq.s32.totalorder %s38, 1
    %p292 = por %p290, %p291
    %p293 = scmp.ne.s32.totalorder %s284, %s285
    %p294 = scmp.eq.s32.totalorder %s38, 0
    %p295 = por %p293, %p294
    %p296 = scmp.ne.s32.totalorder %s284, %s285
    %p297 = scmp.eq.s32.totalorder %s39, 1
    %p298 = por %p296, %p297
    %p300 = scmp.ne.s32.totalorder %s285, %s299
    %p301 = scmp.eq.s32.totalorder %s39, 0
    %p302 = por %p300, %p301
    %s304 = sadd.s32 %s303, 1
    %p307 = scmp.eq.s32.totalorder %s33, 1
    %p308 = scmp.ne.s32.totalorder %s303, %s305
    %p309 = scmp.eq.s32.totalorder %s33, 0
    %p310 = por %p308, %p309
    %p311 = scmp.ne.s32.totalorder %s303, %s305
    %p312 = scmp.eq.s32.totalorder %s38, 1
    %p313 = por %p311, %p312
    %p314 = scmp.ne.s32.totalorder %s305, %s306
    %p315 = scmp.eq.s32.totalorder %s38, 0
    %p316 = por %p314, %p315
    %p317 = scmp.ne.s32.totalorder %s305, %s306
    %p318 = scmp.eq.s32.totalorder %s39, 1
    %p319 = por %p317, %p318
    %p321 = scmp.ne.s32.totalorder %s306, %s320
    %p322 = scmp.eq.s32.totalorder %s39, 0
    %p323 = por %p321, %p322
    %s325 = sadd.s32 %s324, 1
    %p328 = scmp.eq.s32.totalorder %s33, 1
    %p329 = scmp.ne.s32.totalorder %s324, %s326
    %p330 = scmp.eq.s32.totalorder %s33, 0
    %p331 = por %p329, %p330
    %p332 = scmp.ne.s32.totalorder %s324, %s326
    %p333 = scmp.eq.s32.totalorder %s38, 1
    %p334 = por %p332, %p333
    %p335 = scmp.ne.s32.totalorder %s326, %s327
    %p336 = scmp.eq.s32.totalorder %s38, 0
    %p337 = por %p335, %p336
    %p338 = scmp.ne.s32.totalorder %s326, %s327
    %p339 = scmp.eq.s32.totalorder %s39, 1
    %p340 = por %p338, %p339
    %p342 = scmp.ne.s32.totalorder %s327, %s341
    %p343 = scmp.eq.s32.totalorder %s39, 0
    %p344 = por %p342, %p343
    %s346 = sadd.s32 %s345, 1
    %p349 = scmp.eq.s32.totalorder %s33, 1
    %p350 = scmp.ne.s32.totalorder %s345, %s347
    %p351 = scmp.eq.s32.totalorder %s33, 0
    %p352 = por %p350, %p351
    %p353 = scmp.ne.s32.totalorder %s345, %s347
    %p354 = scmp.eq.s32.totalorder %s38, 1
    %p355 = por %p353, %p354
    %p356 = scmp.ne.s32.totalorder %s347, %s348
    %p357 = scmp.eq.s32.totalorder %s38, 0
    %p358 = por %p356, %p357
    %p359 = scmp.ne.s32.totalorder %s347, %s348
    %p360 = scmp.eq.s32.totalorder %s39, 1
    %p361 = por %p359, %p360
    %p363 = scmp.ne.s32.totalorder %s348, %s362
    %p364 = scmp.eq.s32.totalorder %s39, 0
    %p365 = por %p363, %p364
    %s367 = sadd.s32 %s366, 1
    %p370 = scmp.eq.s32.totalorder %s33, 1
    %p371 = scmp.ne.s32.totalorder %s366, %s368
    %p372 = scmp.eq.s32.totalorder %s33, 0
    %p373 = por %p371, %p372
    %p374 = scmp.ne.s32.totalorder %s366, %s368
    %p375 = scmp.eq.s32.totalorder %s38, 1
    %p376 = por %p374, %p375
    %p377 = scmp.ne.s32.totalorder %s368, %s369
    %p378 = scmp.eq.s32.totalorder %s38, 0
    %p379 = por %p377, %p378
    %p380 = scmp.ne.s32.totalorder %s368, %s369
    %p381 = scmp.eq.s32.totalorder %s39, 1
    %p382 = por %p380, %p381
    %p384 = scmp.ne.s32.totalorder %s369, %s383
    %p385 = scmp.eq.s32.totalorder %s39, 0
    %p386 = por %p384, %p385
    %s388 = sadd.s32 %s387, 1
    %p391 = scmp.eq.s32.totalorder %s33, 1
    %p392 = scmp.ne.s32.totalorder %s387, %s389
    %p393 = scmp.eq.s32.totalorder %s33, 0
    %p394 = por %p392, %p393
    %p395 = scmp.ne.s32.totalorder %s387, %s389
    %p396 = scmp.eq.s32.totalorder %s38, 1
    %p397 = por %p395, %p396
    %p398 = scmp.ne.s32.totalorder %s389, %s390
    %p399 = scmp.eq.s32.totalorder %s38, 0
    %p400 = por %p398, %p399
    %p401 = scmp.ne.s32.totalorder %s389, %s390
    %p402 = scmp.eq.s32.totalorder %s39, 1
    %p403 = por %p401, %p402
    %p405 = scmp.ne.s32.totalorder %s390, %s404
    %p406 = scmp.eq.s32.totalorder %s39, 0
    %p407 = por %p405, %p406
    %s409 = sadd.s32 %s408, 1
    %p412 = scmp.eq.s32.totalorder %s33, 1
    %p413 = scmp.ne.s32.totalorder %s408, %s410
    %p414 = scmp.eq.s32.totalorder %s33, 0
    %p415 = por %p413, %p414
    %p416 = scmp.ne.s32.totalorder %s408, %s410
    %p417 = scmp.eq.s32.totalorder %s38, 1
    %p418 = por %p416, %p417
    %p419 = scmp.ne.s32.totalorder %s410, %s411
    %p420 = scmp.eq.s32.totalorder %s38, 0
    %p421 = por %p419, %p420
    %p422 = scmp.ne.s32.totalorder %s410, %s411
    %p423 = scmp.eq.s32.totalorder %s39, 1
    %p424 = por %p422, %p423
    %p426 = scmp.ne.s32.totalorder %s411, %s425
    %p427 = scmp.eq.s32.totalorder %s39, 0
    %p428 = por %p426, %p427
    %s430 = sadd.s32 %s429, 1
    %p433 = scmp.eq.s32.totalorder %s33, 1
    %p434 = scmp.ne.s32.totalorder %s429, %s431
    %p435 = scmp.eq.s32.totalorder %s33, 0
    %p436 = por %p434, %p435
    %p437 = scmp.ne.s32.totalorder %s429, %s431
    %p438 = scmp.eq.s32.totalorder %s38, 1
    %p439 = por %p437, %p438
    %p440 = scmp.ne.s32.totalorder %s431, %s432
    %p441 = scmp.eq.s32.totalorder %s38, 0
    %p442 = por %p440, %p441
    %p443 = scmp.ne.s32.totalorder %s431, %s432
    %p444 = scmp.eq.s32.totalorder %s39, 1
    %p445 = por %p443, %p444
    %p447 = scmp.ne.s32.totalorder %s432, %s446
    %p448 = scmp.eq.s32.totalorder %s39, 0
    %p449 = por %p447, %p448
    %s451 = sadd.s32 %s450, 1
    %p454 = scmp.eq.s32.totalorder %s33, 1
    %p455 = scmp.ne.s32.totalorder %s450, %s452
    %p456 = scmp.eq.s32.totalorder %s33, 0
    %p457 = por %p455, %p456
    %p458 = scmp.ne.s32.totalorder %s450, %s452
    %p459 = scmp.eq.s32.totalorder %s38, 1
    %p460 = por %p458, %p459
    %p461 = scmp.ne.s32.totalorder %s452, %s453
    %p462 = scmp.eq.s32.totalorder %s38, 0
    %p463 = por %p461, %p462
    %p464 = scmp.ne.s32.totalorder %s452, %s453
    %p465 = scmp.eq.s32.totalorder %s39, 1
    %p466 = por %p464, %p465
    %p468 = scmp.ne.s32.totalorder %s453, %s467
    %p469 = scmp.eq.s32.totalorder %s39, 0
    %p470 = por %p468, %p469
    %s472 = sadd.s32 %s471, 1
    %p475 = scmp.eq.s32.totalorder %s33, 1
    %p476 = scmp.ne.s32.totalorder %s471, %s473
    %p477 = scmp.eq.s32.totalorder %s33, 0
    %p478 = por %p476, %p477
    %p479 = scmp.ne.s32.totalorder %s471, %s473
    %p480 = scmp.eq.s32.totalorder %s38, 1
    %p481 = por %p479, %p480
    %p482 = scmp.ne.s32.totalorder %s473, %s474
    %p483 = scmp.eq.s32.totalorder %s38, 0
    %p484 = por %p482, %p483
    %p485 = scmp.ne.s32.totalorder %s473, %s474
    %p486 = scmp.eq.s32.totalorder %s39, 1
    %p487 = por %p485, %p486
    %p489 = scmp.ne.s32.totalorder %s474, %s488
    %p490 = scmp.eq.s32.totalorder %s39, 0
    %p491 = por %p489, %p490
    %s493 = sadd.s32 %s492, 1
    %p496 = scmp.eq.s32.totalorder %s33, 1
    %p497 = scmp.ne.s32.totalorder %s492, %s494
    %p498 = scmp.eq.s32.totalorder %s33, 0
    %p499 = por %p497, %p498
    %p500 = scmp.ne.s32.totalorder %s492, %s494
    %p501 = scmp.eq.s32.totalorder %s38, 1
    %p502 = por %p500, %p501
    %p503 = scmp.ne.s32.totalorder %s494, %s495
    %p504 = scmp.eq.s32.totalorder %s38, 0
    %p505 = por %p503, %p504
    %p506 = scmp.ne.s32.totalorder %s494, %s495
    %p507 = scmp.eq.s32.totalorder %s39, 1
    %p508 = por %p506, %p507
    %p510 = scmp.ne.s32.totalorder %s495, %s509
    %p511 = scmp.eq.s32.totalorder %s39, 0
    %p512 = por %p510, %p511
    %s514 = sadd.s32 %s513, 1
    %p517 = scmp.eq.s32.totalorder %s33, 1
    %p518 = scmp.ne.s32.totalorder %s513, %s515
    %p519 = scmp.eq.s32.totalorder %s33, 0
    %p520 = por %p518, %p519
    %p521 = scmp.ne.s32.totalorder %s513, %s515
    %p522 = scmp.eq.s32.totalorder %s38, 1
    %p523 = por %p521, %p522
    %p524 = scmp.ne.s32.totalorder %s515, %s516
    %p525 = scmp.eq.s32.totalorder %s38, 0
    %p526 = por %p524, %p525
    %p527 = scmp.ne.s32.totalorder %s515, %s516
    %p528 = scmp.eq.s32.totalorder %s39, 1
    %p529 = por %p527, %p528
    %p531 = scmp.ne.s32.totalorder %s516, %s530
    %p532 = scmp.eq.s32.totalorder %s39, 0
    %p533 = por %p531, %p532
    %s535 = sadd.s32 %s534, 1
    %p538 = scmp.eq.s32.totalorder %s33, 1
    %p539 = scmp.ne.s32.totalorder %s534, %s536
    %p540 = scmp.eq.s32.totalorder %s33, 0
    %p541 = por %p539, %p540
    %p542 = scmp.ne.s32.totalorder %s534, %s536
    %p543 = scmp.eq.s32.totalorder %s38, 1
    %p544 = por %p542, %p543
    %p545 = scmp.ne.s32.totalorder %s536, %s537
    %p546 = scmp.eq.s32.totalorder %s38, 0
    %p547 = por %p545, %p546
    %p548 = scmp.ne.s32.totalorder %s536, %s537
    %p549 = scmp.eq.s32.totalorder %s39, 1
    %p550 = por %p548, %p549
    %p552 = scmp.ne.s32.totalorder %s537, %s551
    %p553 = scmp.eq.s32.totalorder %s39, 0
    %p554 = por %p552, %p553
    %s556 = sadd.s32 %s555, 1
    %p559 = scmp.eq.s32.totalorder %s33, 1
    %p560 = scmp.ne.s32.totalorder %s555, %s557
    %p561 = scmp.eq.s32.totalorder %s33, 0
    %p562 = por %p560, %p561
    %p563 = scmp.ne.s32.totalorder %s555, %s557
    %p564 = scmp.eq.s32.totalorder %s38, 1
    %p565 = por %p563, %p564
    %p566 = scmp.ne.s32.totalorder %s557, %s558
    %p567 = scmp.eq.s32.totalorder %s38, 0
    %p568 = por %p566, %p567
    %p569 = scmp.ne.s32.totalorder %s557, %s558
    %p570 = scmp.eq.s32.totalorder %s39, 1
    %p571 = por %p569, %p570
    %p573 = scmp.ne.s32.totalorder %s558, %s572
    %p574 = scmp.eq.s32.totalorder %s39, 0
    %p575 = por %p573, %p574
    %s577 = sadd.s32 %s576, 1
    %p580 = scmp.eq.s32.totalorder %s33, 1
    %p581 = scmp.ne.s32.totalorder %s576, %s578
    %p582 = scmp.eq.s32.totalorder %s33, 0
    %p583 = por %p581, %p582
    %p584 = scmp.ne.s32.totalorder %s576, %s578
    %p585 = scmp.eq.s32.totalorder %s38, 1
    %p586 = por %p584, %p585
    %p587 = scmp.ne.s32.totalorder %s578, %s579
    %p588 = scmp.eq.s32.totalorder %s38, 0
    %p589 = por %p587, %p588
    %p590 = scmp.ne.s32.totalorder %s578, %s579
    %p591 = scmp.eq.s32.totalorder %s39, 1
    %p592 = por %p590, %p591
    %p594 = scmp.ne.s32.totalorder %s579, %s593
    %p595 = scmp.eq.s32.totalorder %s39, 0
    %p596 = por %p594, %p595
    %s598 = sadd.s32 %s597, 1
    %p601 = scmp.eq.s32.totalorder %s33, 1
    %p602 = scmp.ne.s32.totalorder %s597, %s599
    %p603 = scmp.eq.s32.totalorder %s33, 0
    %p604 = por %p602, %p603
    %p605 = scmp.ne.s32.totalorder %s597, %s599
    %p606 = scmp.eq.s32.totalorder %s38, 1
    %p607 = por %p605, %p606
    %p608 = scmp.ne.s32.totalorder %s599, %s600
    %p609 = scmp.eq.s32.totalorder %s38, 0
    %p610 = por %p608, %p609
    %p611 = scmp.ne.s32.totalorder %s599, %s600
    %p612 = scmp.eq.s32.totalorder %s39, 1
    %p613 = por %p611, %p612
    %p615 = scmp.ne.s32.totalorder %s600, %s614
    %p616 = scmp.eq.s32.totalorder %s39, 0
    %p617 = por %p615, %p616
    %s618 = ssub.s32 %s33, %s40
    %p619 = scmp.eq.s32.totalorder %s618, 0
    %s621 = sadd.s32 %s620, 1
    %s622 = scalar_select %p619, %s620, %s621
    %p625 = pneg %p619
    %p626 = scmp.eq.s32.totalorder %s33, 1
    %p627 = por %p625, %p626
    %p628 = scmp.ne.s32.totalorder %s620, %s623
    %p629 = scmp.eq.s32.totalorder %s33, 0
    %p630 = por %p628, %p629
    %p631 = scmp.ne.s32.totalorder %s620, %s623
    %p632 = scmp.eq.s32.totalorder %s38, 1
    %p633 = por %p631, %p632
    %p634 = scmp.ne.s32.totalorder %s623, %s624
    %p635 = scmp.eq.s32.totalorder %s38, 0
    %p636 = por %p634, %p635
    %p637 = scmp.ne.s32.totalorder %s623, %s624
    %p638 = scmp.eq.s32.totalorder %s39, 1
    %p639 = por %p637, %p638
    %p641 = scmp.ne.s32.totalorder %s624, %s640
    %p642 = scmp.eq.s32.totalorder %s39, 0
    %p643 = por %p641, %p642
    %p644 = scmp.le.s32.totalorder 1, %s33
    %p645 = scmp.lt.s32.totalorder %s33, 3
    %p646 = pnand %p644, %p645
    %p647 = pneg %p646
    // Predicated region
    $region9: #{nere_forward.5} parent=5 // pred_check
      _
    $region10: #{nere_forward.5} parent=5 // pred_check_branch
      %649 = sbr.rel (%p646) target = $region12
    $region11: #{nere_forward.5} parent=5 // pred_region
      %s650 = ssub.s32 %s33, 1
      // Predicated region
      $region13: #{nere_forward.5} parent=11 // pred_check
        %p651 = pneg %p54
      $region14: #{nere_forward.5} parent=11 // pred_check_branch
        %653 = sbr.rel (%p651) target = $region16
      $region15: #{nere_forward.5} parent=11 // pred_region
        _
      $region16: #{nere_forward.5} parent=11 // pred_fallthru
        _
      // Predicated region
      $region17: #{nere_forward.5} parent=11 // pred_check
        %p654 = pneg %p127
      $region18: #{nere_forward.5} parent=11 // pred_check_branch
        %656 = sbr.rel (%p654) target = $region20
      $region19: #{nere_forward.5} parent=11 // pred_region
        _
      $region20: #{nere_forward.5} parent=11 // pred_fallthru
        _
      // Predicated region
      $region21: #{nere_forward.5} parent=11 // pred_check
        %p657 = pneg %p148
      $region22: #{nere_forward.5} parent=11 // pred_check_branch
        %659 = sbr.rel (%p657) target = $region24
      $region23: #{nere_forward.5} parent=11 // pred_region
        _
      $region24: #{nere_forward.5} parent=11 // pred_fallthru
        _
      // Predicated region
      $region25: #{nere_forward.5} parent=11 // pred_check
        %p660 = pneg %p169
      $region26: #{nere_forward.5} parent=11 // pred_check_branch
        %662 = sbr.rel (%p660) target = $region28
      $region27: #{nere_forward.5} parent=11 // pred_region
        _
      $region28: #{nere_forward.5} parent=11 // pred_fallthru
        _
      // Predicated region
      $region29: #{nere_forward.5} parent=11 // pred_check
        %p663 = pneg %p190
      $region30: #{nere_forward.5} parent=11 // pred_check_branch
        %665 = sbr.rel (%p663) target = $region32
      $region31: #{nere_forward.5} parent=11 // pred_region
        _
      $region32: #{nere_forward.5} parent=11 // pred_fallthru
        _
      // Predicated region
      $region33: #{nere_forward.5} parent=11 // pred_check
        %p666 = pneg %p211
      $region34: #{nere_forward.5} parent=11 // pred_check_branch
        %668 = sbr.rel (%p666) target = $region36
      $region35: #{nere_forward.5} parent=11 // pred_region
        _
      $region36: #{nere_forward.5} parent=11 // pred_fallthru
        _
      // Predicated region
      $region37: #{nere_forward.5} parent=11 // pred_check
        %p669 = pneg %p232
      $region38: #{nere_forward.5} parent=11 // pred_check_branch
        %671 = sbr.rel (%p669) target = $region40
      $region39: #{nere_forward.5} parent=11 // pred_region
        _
      $region40: #{nere_forward.5} parent=11 // pred_fallthru
        _
      // Predicated region
      $region41: #{nere_forward.5} parent=11 // pred_check
        %p672 = pneg %p253
      $region42: #{nere_forward.5} parent=11 // pred_check_branch
        %674 = sbr.rel (%p672) target = $region44
      $region43: #{nere_forward.5} parent=11 // pred_region
        _
      $region44: #{nere_forward.5} parent=11 // pred_fallthru
        _
      // Predicated region
      $region45: #{nere_forward.5} parent=11 // pred_check
        %p675 = pneg %p274
      $region46: #{nere_forward.5} parent=11 // pred_check_branch
        %677 = sbr.rel (%p675) target = $region48
      $region47: #{nere_forward.5} parent=11 // pred_region
        _
      $region48: #{nere_forward.5} parent=11 // pred_fallthru
        _
      // Predicated region
      $region49: #{nere_forward.5} parent=11 // pred_check
        %p678 = pneg %p295
      $region50: #{nere_forward.5} parent=11 // pred_check_branch
        %680 = sbr.rel (%p678) target = $region52
      $region51: #{nere_forward.5} parent=11 // pred_region
        _
      $region52: #{nere_forward.5} parent=11 // pred_fallthru
        _
      // Predicated region
      $region53: #{nere_forward.5} parent=11 // pred_check
        %p681 = pneg %p316
      $region54: #{nere_forward.5} parent=11 // pred_check_branch
        %683 = sbr.rel (%p681) target = $region56
      $region55: #{nere_forward.5} parent=11 // pred_region
        _
      $region56: #{nere_forward.5} parent=11 // pred_fallthru
        _
      // Predicated region
      $region57: #{nere_forward.5} parent=11 // pred_check
        %p684 = pneg %p337
      $region58: #{nere_forward.5} parent=11 // pred_check_branch
        %686 = sbr.rel (%p684) target = $region60
      $region59: #{nere_forward.5} parent=11 // pred_region
        _
      $region60: #{nere_forward.5} parent=11 // pred_fallthru
        _
      // Predicated region
      $region61: #{nere_forward.5} parent=11 // pred_check
        %p687 = pneg %p358
      $region62: #{nere_forward.5} parent=11 // pred_check_branch
        %689 = sbr.rel (%p687) target = $region64
      $region63: #{nere_forward.5} parent=11 // pred_region
        _
      $region64: #{nere_forward.5} parent=11 // pred_fallthru
        _
      // Predicated region
      $region65: #{nere_forward.5} parent=11 // pred_check
        %p690 = pneg %p379
      $region66: #{nere_forward.5} parent=11 // pred_check_branch
        %692 = sbr.rel (%p690) target = $region68
      $region67: #{nere_forward.5} parent=11 // pred_region
        _
      $region68: #{nere_forward.5} parent=11 // pred_fallthru
        _
      // Predicated region
      $region69: #{nere_forward.5} parent=11 // pred_check
        %p693 = pneg %p400
      $region70: #{nere_forward.5} parent=11 // pred_check_branch
        %695 = sbr.rel (%p693) target = $region72
      $region71: #{nere_forward.5} parent=11 // pred_region
        _
      $region72: #{nere_forward.5} parent=11 // pred_fallthru
        _
      // Predicated region
      $region73: #{nere_forward.5} parent=11 // pred_check
        %p696 = pneg %p421
      $region74: #{nere_forward.5} parent=11 // pred_check_branch
        %698 = sbr.rel (%p696) target = $region76
      $region75: #{nere_forward.5} parent=11 // pred_region
        _
      $region76: #{nere_forward.5} parent=11 // pred_fallthru
        _
      // Predicated region
      $region77: #{nere_forward.5} parent=11 // pred_check
        %p699 = pneg %p442
      $region78: #{nere_forward.5} parent=11 // pred_check_branch
        %701 = sbr.rel (%p699) target = $region80
      $region79: #{nere_forward.5} parent=11 // pred_region
        _
      $region80: #{nere_forward.5} parent=11 // pred_fallthru
        _
      // Predicated region
      $region81: #{nere_forward.5} parent=11 // pred_check
        %p702 = pneg %p463
      $region82: #{nere_forward.5} parent=11 // pred_check_branch
        %704 = sbr.rel (%p702) target = $region84
      $region83: #{nere_forward.5} parent=11 // pred_region
        _
      $region84: #{nere_forward.5} parent=11 // pred_fallthru
        _
      // Predicated region
      $region85: #{nere_forward.5} parent=11 // pred_check
        %p705 = pneg %p484
      $region86: #{nere_forward.5} parent=11 // pred_check_branch
        %707 = sbr.rel (%p705) target = $region88
      $region87: #{nere_forward.5} parent=11 // pred_region
        _
      $region88: #{nere_forward.5} parent=11 // pred_fallthru
        _
      // Predicated region
      $region89: #{nere_forward.5} parent=11 // pred_check
        %p708 = pneg %p505
      $region90: #{nere_forward.5} parent=11 // pred_check_branch
        %710 = sbr.rel (%p708) target = $region92
      $region91: #{nere_forward.5} parent=11 // pred_region
        _
      $region92: #{nere_forward.5} parent=11 // pred_fallthru
        _
      // Predicated region
      $region93: #{nere_forward.5} parent=11 // pred_check
        %p711 = pneg %p526
      $region94: #{nere_forward.5} parent=11 // pred_check_branch
        %713 = sbr.rel (%p711) target = $region96
      $region95: #{nere_forward.5} parent=11 // pred_region
        _
      $region96: #{nere_forward.5} parent=11 // pred_fallthru
        _
      // Predicated region
      $region97: #{nere_forward.5} parent=11 // pred_check
        %p714 = pneg %p547
      $region98: #{nere_forward.5} parent=11 // pred_check_branch
        %716 = sbr.rel (%p714) target = $region100
      $region99: #{nere_forward.5} parent=11 // pred_region
        _
      $region100: #{nere_forward.5} parent=11 // pred_fallthru
        _
      // Predicated region
      $region101: #{nere_forward.5} parent=11 // pred_check
        %p717 = pneg %p568
      $region102: #{nere_forward.5} parent=11 // pred_check_branch
        %719 = sbr.rel (%p717) target = $region104
      $region103: #{nere_forward.5} parent=11 // pred_region
        _
      $region104: #{nere_forward.5} parent=11 // pred_fallthru
        _
      // Predicated region
      $region105: #{nere_forward.5} parent=11 // pred_check
        %p720 = pneg %p589
      $region106: #{nere_forward.5} parent=11 // pred_check_branch
        %722 = sbr.rel (%p720) target = $region108
      $region107: #{nere_forward.5} parent=11 // pred_region
        _
      $region108: #{nere_forward.5} parent=11 // pred_fallthru
        _
      // Predicated region
      $region109: #{nere_forward.5} parent=11 // pred_check
        %p723 = pneg %p610
      $region110: #{nere_forward.5} parent=11 // pred_check_branch
        %725 = sbr.rel (%p723) target = $region112
      $region111: #{nere_forward.5} parent=11 // pred_region
        _
      $region112: #{nere_forward.5} parent=11 // pred_fallthru
        _
    $region12: #{nere_forward.5} parent=5 // pred_fallthru
      _
    %p726 = scmp.lt.s32.totalorder %s33, 2
    // Predicated region
    $region113: #{nere_forward.5} parent=5 // pred_check
      %p727 = pneg %p726
    $region114: #{nere_forward.5} parent=5 // pred_check_branch
      %729 = sbr.rel (%p727) target = $region116
    $region115: #{nere_forward.5} parent=5 // pred_region
      // Predicated region
      $region117: #{nere_forward.5} parent=115 // pred_check
        %p730 = pneg %p74
      $region118: #{nere_forward.5} parent=115 // pred_check_branch
        %732 = sbr.rel (%p730) target = $region120
      $region119: #{nere_forward.5} parent=115 // pred_region
        %p733 = scmp.lt.s32.totalorder %s33, 1
        %s734 = scalar_select %p733, %s33, 1
        %s735 = smul.addr %s734, 2
        %s736 = smul.addr %s735, 4
        %s737 = scalar_lea.vmem %s1, %s736
      $region120: #{nere_forward.5} parent=115 // pred_fallthru
        _
      // Predicated region
      $region121: #{nere_forward.5} parent=115 // pred_check
        %p738 = pneg %p100
      $region122: #{nere_forward.5} parent=115 // pred_check_branch
        %740 = sbr.rel (%p738) target = $region124
      $region123: #{nere_forward.5} parent=115 // pred_region
        %p741 = scmp.lt.s32.totalorder %s33, 1
        %s742 = scalar_select %p741, %s33, 1
        %s743 = scalar_lea.vmem %s2, %s742
      $region124: #{nere_forward.5} parent=115 // pred_fallthru
        _
    $region116: #{nere_forward.5} parent=5 // pred_fallthru
      _
    %p744 = scmp.le.s32.totalorder 1, %s33
    %p745 = scmp.lt.s32.totalorder %s33, 3
    %p746 = pnand %p744, %p745
    %p747 = pneg %p746
    // Predicated region
    $region125: #{nere_forward.5} parent=5 // pred_check
      _
    $region126: #{nere_forward.5} parent=5 // pred_check_branch
      %749 = sbr.rel (%p746) target = $region128
    $region127: #{nere_forward.5} parent=5 // pred_region
      %s750 = ssub.s32 %s33, 1
      %p751 = pneg %p54
      %p752 = pneg %p51
      %p753 = scmp.lt.s32.totalorder %s38, 1
      %s754 = scalar_select %p753, %s38, 1
      %s755 = smul.addr %s754, 2
      %s756 = smul.addr %s755, 4
      %s757 = scalar_lea.vmem %s1, %s756
      %p758 = pneg %p80
      %p759 = pneg %p77
      %p760 = scmp.lt.s32.totalorder %s38, 1
      %s761 = scalar_select %p760, %s38, 1
      %s762 = scalar_lea.vmem %s2, %s761
      %p763 = pneg %p106
      %p764 = pneg %p103
      %p765 = pneg %p127
      %p766 = pneg %p124
      %p767 = pneg %p148
      %p768 = pneg %p145
      %p769 = pneg %p169
      %p770 = pneg %p166
      %p771 = pneg %p190
      %p772 = pneg %p187
      %p773 = pneg %p211
      %p774 = pneg %p208
      %p775 = pneg %p232
      %p776 = pneg %p229
      %p777 = pneg %p253
      %p778 = pneg %p250
      %p779 = pneg %p274
      %p780 = pneg %p271
      %p781 = pneg %p295
      %p782 = pneg %p292
      %p783 = pneg %p316
      %p784 = pneg %p313
      %p785 = pneg %p337
      %p786 = pneg %p334
      %p787 = pneg %p358
      %p788 = pneg %p355
      %p789 = pneg %p379
      %p790 = pneg %p376
      %p791 = pneg %p400
      %p792 = pneg %p397
      %p793 = pneg %p421
      %p794 = pneg %p418
      %p795 = pneg %p442
      %p796 = pneg %p439
      %p797 = pneg %p463
      %p798 = pneg %p460
      %p799 = pneg %p484
      %p800 = pneg %p481
      %p801 = pneg %p505
      %p802 = pneg %p502
      %p803 = pneg %p526
      %p804 = pneg %p523
      %p805 = pneg %p547
      %p806 = pneg %p544
      %p807 = pneg %p568
      %p808 = pneg %p565
      %p809 = pneg %p589
      %p810 = pneg %p586
      %p811 = pneg %p610
      %p812 = pneg %p607
      %p813 = pneg %p636
      %p814 = pneg %p633
      %p815 = scmp.lt.s32.totalorder %s38, 1
      %s816 = scalar_select %p815, %s38, 1
      %s817 = smul.addr %s816, 2
      %s818 = smul.addr %s817, 8
      %s819 = scalar_lea.vmem %s27, %s818
      %p820 = scmp.lt.s32.totalorder %s38, 1
      %s821 = scalar_select %p820, %s38, 1
      %s822 = smul.addr %s821, 2
      %s823 = smul.addr %s822, 4
      %s824 = scalar_lea.vmem %s1, %s823
      %p825 = scmp.lt.s32.totalorder %s38, 1
      %s826 = scalar_select %p825, %s38, 1
      %s827 = scalar_lea.vmem %s2, %s826
      %p828 = scmp.lt.s32.totalorder %s38, 1
      %s829 = scalar_select %p828, %s38, 1
      %s830 = smul.addr %s829, 2
      %s831 = smul.addr %s830, 8
      %s832 = scalar_lea.vmem %s27, %s831
      %v834 = vld [vmem:[%s824] sm:$0xf]
      %v835 = vld [vmem:[%s824 + $0x4] sm:$0x1]
      %v836 = vld [vmem:[%s827] sm:$0x1]
      %vm837 = vcmp.gt.f32.partialorder %v836, 0.0
      %v838 = vsel %vm837, 0.0, -1e+09
      %v839 = vld [vmem:[%s0] sm:$0xf]
      %v840 = vld [vmem:[%s0 + $0x4] sm:$0x1]
      %v841 = vunpack.c.l.bf16 %v839
      %v842 = vunpack.c.l.bf16 %v840
      %vm843 = vcmask 261120
      %v844 = vsel %vm843, %v841, 0.0
      %845 = vadd.xlane.f32.xlu0 %v844
      %v846 = vpop.xlane.xlu0 %845
      %vm847 = vcmask 254976
      %v848 = vsel %vm847, %v842, 0.0
      %849 = vadd.xlane.f32.xlu0 %v848
      %v850 = vpop.xlane.xlu0 %849
      %v851 = vrcp.pop 32.0
      %v852 = vmul.f32 %v846, %v851
      %v853 = vmul.f32 %v850, %v851
      %v854 = vsub.f32 %v841, %v852
      %v855 = vsub.f32 %v842, %v853
      %v856 = vmul.f32 %v854, %v854
      %v857 = vmul.f32 %v855, %v855
      %v858 = vsel %vm843, %v856, 0.0
      %859 = vadd.xlane.f32.xlu0 %v858
      %v860 = vpop.xlane.xlu0 %859
      %v861 = vsel %vm847, %v857, 0.0
      %862 = vadd.xlane.f32.xlu0 %v861
      %v863 = vpop.xlane.xlu0 %862
      %v864 = vmul.f32 %v860, %v851
      %v865 = vmul.f32 %v863, %v851
      %v866 = vadd.f32 %v864, 1e-05
      %v867 = vadd.f32 %v865, 1e-05
      %v868 = vrsqrt.pop %v866
      %v869 = vrsqrt.pop %v867
      %v870 = vmul.f32 %v854, %v868
      %v871 = vmul.f32 %v855, %v869
      %v872 = vld [vmem:[%s3] sm:$0x1]
      %v873 = vunpack.c.l.bf16 %v872
      %v874 = vlaneseq
      %v875 = vshrl.u32 %v874, 7
      %v876 = vsub.s32 0, %v875
      %v877 = vrot.slane %v873, %v876
      %v878 = vmul.f32 %v870, %v877
      %v879 = vmul.f32 %v871, %v877
      %v880 = vld [vmem:[%s4] sm:$0x1]
      %v881 = vunpack.c.l.bf16 %v880
      %v882 = vlaneseq
      %v883 = vshrl.u32 %v882, 7
      %v884 = vsub.s32 0, %v883
      %v885 = vrot.slane %v881, %v884
      %v886 = vadd.f32 %v878, %v885
      %v887 = vadd.f32 %v879, %v885
      %v888 = vpack.c.bf16 %v887, %v886
      %v889 = vld [vmem:[%s5] sm:$0xf]
      %v890 = vld [vmem:[%s5 + $0x4] sm:$0xf]
      %v891 = vld [vmem:[%s5 + $0x8] sm:$0xf]
      %v892 = vld [vmem:[%s5 + $0xc] sm:$0xf]
      %v893 = vld [vmem:[%s6] sm:$0x1]
      %v894 = vunpack.c.l.bf16 %v893
      %v895 = vlaneseq
      %v896 = vshrl.u32 %v895, 7
      %v897 = vsub.s32 0, %v896
      %v898 = vrot.slane %v894, %v897
      %v903 = vunpack.c.l.b16 %v889
      %v904 = vunpack.c.l.b16 %v890
      %v905 = vunpack.c.l.b16 %v891
      %v906 = vunpack.c.l.b16 %v892
      %v907 = vpack.c.b16 %v904, %v903
      %v908 = vpack.c.b16 %v906, %v905
      %v912 = vsel %vm843, %v888, 0
      %914 = vmatprep.subr.bf16.mxu0 0
      %915 = vmatpush1.bf16.msra.mxu0 %v907
      %916 = vmatprep.subr.bf16.mxu0 0
      %917 = vmatpush1.bf16.msra.mxu0 %v908
      %918 = vmatprep.subr.bf16.mxu0 0
      %919 = vmatpush1.bf16.msra.mxu0 0
      %920 = vmatprep.subr.bf16.mxu0 0
      %921 = vmatpush1.bf16.msra.mxu0 0
      %922 = vmatprep.subr.bf16.mxu0 0
      %923 = vmatpush1.bf16.msra.mxu0 0
      %924 = vmatprep.subr.bf16.mxu0 0
      %925 = vmatpush1.bf16.msra.mxu0 0
      %926 = vmatprep.subr.bf16.mxu0 0
      %927 = vmatpush1.bf16.msra.mxu0 0
      %928 = vmatprep.subr.bf16.mxu0 0
      %929 = vmatpush1.bf16.msra.mxu0 0
      %930 = vmatprep.subr.bf16.mxu0 0
      %931 = vmatpush1.bf16.msra.mxu0 0
      %932 = vmatprep.subr.bf16.mxu0 0
      %933 = vmatpush1.bf16.msra.mxu0 0
      %934 = vmatprep.subr.bf16.mxu0 0
      %935 = vmatpush1.bf16.msra.mxu0 0
      %936 = vmatprep.subr.bf16.mxu0 0
      %937 = vmatpush1.bf16.msra.mxu0 0
      %938 = vmatprep.subr.bf16.mxu0 0
      %939 = vmatpush1.bf16.msra.mxu0 0
      %940 = vmatprep.subr.bf16.mxu0 0
      %941 = vmatpush1.bf16.msra.mxu0 0
      %942 = vmatprep.subr.bf16.mxu0 0
      %943 = vmatpush1.bf16.msra.mxu0 0
      %944 = vmatprep.subr.bf16.mxu0 0
      %945 = vmatpush1.bf16.msra.mxu0 0
      %946 = vmatprep.mubr.bf16.mxu0 0
      %947 = vmatmul.mubr.bf16.gmra.mrb[0].mxu0 %v912
      %v948 = vpop.f32.mrb[0].mxu0
      %v949 = vadd.f32 %v898, %v948
      %v950 = vpop.f32.mrb[0].mxu0
      %v951 = vpop.f32.mrb[0].mxu0
      %v952 = vadd.f32 %v898, %v951
      %v953 = vpop.f32.mrb[0].mxu0
      %954 = vdwg.mxu0
      %v955 = vlaneseq
      %v956 = vshrl.u32 %v955, 7
      %v957 = vadd.s32 %v956, 8
      %v958 = vlaneseq
      %v959 = vand.u32 %v958, 127
      %vm960 = vcmp.ge.s32.totalorder %v956, %v959
      %vm961 = vcmp.ge.s32.totalorder %v957, %v959
      %v962 = vsel %vm960, 0.0, -1e+09
      %v963 = vsel %vm961, 0.0, -1e+09
      %v964 = vmul.f32 %v949, 0.35355338
      %v965 = vmul.f32 %v952, 0.35355338
      %v966 = vpack.c.bf16 %v965, %v964
      %v967 = vpack.c.bf16 %v952, %v949
      %969 = vrot.lane.b32.xlu0 %v967, 96
      %v970 = vpop.permute.xlu0 %969
      %vm971 = vcmask 64512
      %v973 = vsel %vm971, %v966, 0
      %v976 = vsel %vm971, %v970, 0
      %978 = vmatprep.subr.bf16.mxu0 0
      %979 = vmatpush1.bf16.xpose.msra.mxu0 %v976
      %980 = vmatprep.subr.bf16.mxu0 0
      %981 = vmatpush1.bf16.xpose.msra.mxu0 0
      %982 = vmatprep.subr.bf16.mxu0 0
      %983 = vmatpush1.bf16.xpose.msra.mxu0 0
      %984 = vmatprep.subr.bf16.mxu0 0
      %985 = vmatpush1.bf16.xpose.msra.mxu0 0
      %986 = vmatprep.subr.bf16.mxu0 0
      %987 = vmatpush1.bf16.xpose.msra.mxu0 0
      %988 = vmatprep.subr.bf16.mxu0 0
      %989 = vmatpush1.bf16.xpose.msra.mxu0 0
      %990 = vmatprep.subr.bf16.mxu0 0
      %991 = vmatpush1.bf16.xpose.msra.mxu0 0
      %992 = vmatprep.subr.bf16.mxu0 0
      %993 = vmatpush1.bf16.xpose.msra.mxu0 0
      %994 = vmatprep.subr.bf16.mxu0 0
      %995 = vmatpush1.bf16.xpose.msra.mxu0 0
      %996 = vmatprep.subr.bf16.mxu0 0
      %997 = vmatpush1.bf16.xpose.msra.mxu0 0
      %998 = vmatprep.subr.bf16.mxu0 0
      %999 = vmatpush1.bf16.xpose.msra.mxu0 0
      %1000 = vmatprep.subr.bf16.mxu0 0
      %1001 = vmatpush1.bf16.xpose.msra.mxu0 0
      %1002 = vmatprep.subr.bf16.mxu0 0
      %1003 = vmatpush1.bf16.xpose.msra.mxu0 0
      %1004 = vmatprep.subr.bf16.mxu0 0
      %1005 = vmatpush1.bf16.xpose.msra.mxu0 0
      %1006 = vmatprep.subr.bf16.mxu0 0
      %1007 = vmatpush1.bf16.xpose.msra.mxu0 0
      %1008 = vmatprep.subr.bf16.mxu0 0
      %1009 = vmatpush1.bf16.xpose.msra.mxu0 0
      %1010 = vmatprep.mubr.bf16.mxu0 0
      %1011 = vmatmul.mubr.bf16.gmra.mrb[0].mxu0 %v973
      %v1012 = vpop.f32.mrb[0].mxu0
      %v1013 = vadd.f32 %v962, %v1012
      %v1014 = vpop.f32.mrb[0].mxu0
      %v1015 = vpop.f32.mrb[0].mxu0
      %v1016 = vadd.f32 %v963, %v1015
      %v1017 = vpop.f32.mrb[0].mxu0
      %1018 = vdwg.mxu0
      %vm1019 = vcmask 80896
      %v1020 = vsel %vm1019, %v1013, -inf
      %1021 = vmax.xlane.f32.xlu0 %v1020
      %v1022 = vpop.xlane.xlu0 %1021
      %vm1023 = vcmask 74752
      %v1024 = vsel %vm1023, %v1016, -inf
      %1025 = vmax.xlane.f32.xlu0 %v1024
      %v1026 = vpop.xlane.xlu0 %1025
      %v1027 = vsub.f32 %v1013, %v1022
      %v1028 = vsub.f32 %v1016, %v1026
      %v1029 = vmul.f32 %v1027, 1.442695
      %v1030 = vpow.pop %v1029
      %v1031 = vmul.f32 %v1028, 1.442695
      %v1032 = vpow.pop %v1031
      %v1033 = vsel %vm1019, %v1030, 0.0
      %1034 = vadd.xlane.f32.xlu0 %v1033
      %v1035 = vpop.xlane.xlu0 %1034
      %v1036 = vsel %vm1023, %v1032, 0.0
      %1037 = vadd.xlane.f32.xlu0 %v1036
      %v1038 = vpop.xlane.xlu0 %1037
      %v1039 = vrcp.pop %v1035
      %v1040 = vrcp.pop %v1038
      %v1041 = vmul.f32 %v1030, %v1039
      %v1042 = vmul.f32 %v1032, %v1040
      %v1043 = vpack.c.bf16 %v1042, %v1041
      %1044 = vrot.lane.b32.xlu0 %v967, 64
      %v1045 = vpop.permute.xlu0 %1044
      %v1047 = vsel %vm1019, %v1043, 0
      %vm1049 = vcmask 1044480
      %v1051 = vsel %vm1049, %v1045, 0
      %1053 = vmatprep.subr.bf16.mxu0 0
      %1054 = vmatpush1.bf16.msra.mxu0 %v1051
      %1055 = vmatprep.subr.bf16.mxu0 0
      %1056 = vmatpush1.bf16.msra.mxu0 0
      %1057 = vmatprep.subr.bf16.mxu0 0
      %1058 = vmatpush1.bf16.msra.mxu0 0
      %1059 = vmatprep.subr.bf16.mxu0 0
      %1060 = vmatpush1.bf16.msra.mxu0 0
      %1061 = vmatprep.subr.bf16.mxu0 0
      %1062 = vmatpush1.bf16.msra.mxu0 0
      %1063 = vmatprep.subr.bf16.mxu0 0
      %1064 = vmatpush1.bf16.msra.mxu0 0
      %1065 = vmatprep.subr.bf16.mxu0 0
      %1066 = vmatpush1.bf16.msra.mxu0 0
      %1067 = vmatprep.subr.bf16.mxu0 0
      %1068 = vmatpush1.bf16.msra.mxu0 0
      %1069 = vmatprep.subr.bf16.mxu0 0
      %1070 = vmatpush1.bf16.msra.mxu0 0
      %1071 = vmatprep.subr.bf16.mxu0 0
      %1072 = vmatpush1.bf16.msra.mxu0 0
      %1073 = vmatprep.subr.bf16.mxu0 0
      %1074 = vmatpush1.bf16.msra.mxu0 0
      %1075 = vmatprep.subr.bf16.mxu0 0
      %1076 = vmatpush1.bf16.msra.mxu0 0
      %1077 = vmatprep.subr.bf16.mxu0 0
      %1078 = vmatpush1.bf16.msra.mxu0 0
      %1079 = vmatprep.subr.bf16.mxu0 0
      %1080 = vmatpush1.bf16.msra.mxu0 0
      %1081 = vmatprep.subr.bf16.mxu0 0
      %1082 = vmatpush1.bf16.msra.mxu0 0
      %1083 = vmatprep.subr.bf16.mxu0 0
      %1084 = vmatpush1.bf16.msra.mxu0 0
      %1085 = vmatprep.mubr.bf16.mxu0 0
      %1086 = vmatmul.mubr.bf16.gmra.mrb[0].mxu0 %v1047
      %v1087 = vpop.f32.mrb[0].mxu0
      %v1088 = vadd.f32 0.0, %v1087
      %v1089 = vpop.f32.mrb[0].mxu0
      %v1090 = vpop.f32.mrb[0].mxu0
      %v1091 = vadd.f32 0.0, %v1090
      %v1092 = vpop.f32.mrb[0].mxu0
      %1093 = vdwg.mxu0
      %1095 = vrot.lane.b32.xlu0 %v966, 120
      %v1096 = vpop.permute.xlu0 %1095
      %1097 = vrot.lane.b32.xlu0 %v967, 88
      %v1098 = vpop.permute.xlu0 %1097
      %v1100 = vsel %vm971, %v1096, 0
      %v1103 = vsel %vm971, %v1098, 0
      %1105 = vmatprep.subr.bf16.mxu0 0
      %1106 = vmatpush1.bf16.xpose.msra.mxu0 %v1103
      %1107 = vmatprep.subr.bf16.mxu0 0
      %1108 = vmatpush1.bf16.xpose.msra.mxu0 0
      %1109 = vmatprep.subr.bf16.mxu0 0
      %1110 = vmatpush1.bf16.xpose.msra.mxu0 0
      %1111 = vmatprep.subr.bf16.mxu0 0
      %1112 = vmatpush1.bf16.xpose.msra.mxu0 0
      %1113 = vmatprep.subr.bf16.mxu0 0
      %1114 = vmatpush1.bf16.xpose.msra.mxu0 0
      %1115 = vmatprep.subr.bf16.mxu0 0
      %1116 = vmatpush1.bf16.xpose.msra.mxu0 0
      %1117 = vmatprep.subr.bf16.mxu0 0
      %1118 = vmatpush1.bf16.xpose.msra.mxu0 0
      %1119 = vmatprep.subr.bf16.mxu0 0
      %1120 = vmatpush1.bf16.xpose.msra.mxu0 0
      %1121 = vmatprep.subr.bf16.mxu0 0
      %1122 = vmatpush1.bf16.xpose.msra.mxu0 0
      %1123 = vmatprep.subr.bf16.mxu0 0
      %1124 = vmatpush1.bf16.xpose.msra.mxu0 0
      %1125 = vmatprep.subr.bf16.mxu0 0
      %1126 = vmatpush1.bf16.xpose.msra.mxu0 0
      %1127 = vmatprep.subr.bf16.mxu0 0
      %1128 = vmatpush1.bf16.xpose.msra.mxu0 0
      %1129 = vmatprep.subr.bf16.mxu0 0
      %1130 = vmatpush1.bf16.xpose.msra.mxu0 0
      %1131 = vmatprep.subr.bf16.mxu0 0
      %1132 = vmatpush1.bf16.xpose.msra.mxu0 0
      %1133 = vmatprep.subr.bf16.mxu0 0
      %1134 = vmatpush1.bf16.xpose.msra.mxu0 0
      %1135 = vmatprep.subr.bf16.mxu0 0
      %1136 = vmatpush1.bf16.xpose.msra.mxu0 0
      %1137 = vmatprep.mubr.bf16.mxu0 0
      %1138 = vmatmul.mubr.bf16.gmra.mrb[0].mxu0 %v1100
      %v1139 = vpop.f32.mrb[0].mxu0
      %v1140 = vadd.f32 %v962, %v1139
      %v1141 = vpop.f32.mrb[0].mxu0
      %v1142 = vpop.f32.mrb[0].mxu0
      %v1143 = vadd.f32 %v963, %v1142
      %v1144 = vpop.f32.mrb[0].mxu0
      %1145 = vdwg.mxu0
      %v1146 = vsel %vm1019, %v1140, -inf
      %1147 = vmax.xlane.f32.xlu0 %v1146
      %v1148 = vpop.xlane.xlu0 %1147
      %v1149 = vsel %vm1023, %v1143, -inf
      %1150 = vmax.xlane.f32.xlu0 %v1149
      %v1151 = vpop.xlane.xlu0 %1150
      %v1152 = vsub.f32 %v1140, %v1148
      %v1153 = vsub.f32 %v1143, %v1151
      %v1154 = vmul.f32 %v1152, 1.442695
      %v1155 = vpow.pop %v1154
      %v1156 = vmul.f32 %v1153, 1.442695
      %v1157 = vpow.pop %v1156
      %v1158 = vsel %vm1019, %v1155, 0.0
      %1159 = vadd.xlane.f32.xlu0 %v1158
      %v1160 = vpop.xlane.xlu0 %1159
      %v1161 = vsel %vm1023, %v1157, 0.0
      %1162 = vadd.xlane.f32.xlu0 %v1161
      %v1163 = vpop.xlane.xlu0 %1162
      %v1164 = vrcp.pop %v1160
      %v1165 = vrcp.pop %v1163
      %v1166 = vmul.f32 %v1155, %v1164
      %v1167 = vmul.f32 %v1157, %v1165
      %v1168 = vpack.c.bf16 %v1167, %v1166
      %1169 = vrot.lane.b32.xlu0 %v967, 56
      %v1170 = vpop.permute.xlu0 %1169
      %v1172 = vsel %vm1019, %v1168, 0
      %v1175 = vsel %vm1049, %v1170, 0
      %1177 = vmatprep.subr.bf16.mxu0 0
      %1178 = vmatpush1.bf16.msra.mxu0 %v1175
      %1179 = vmatprep.subr.bf16.mxu0 0
      %1180 = vmatpush1.bf16.msra.mxu0 0
      %1181 = vmatprep.subr.bf16.mxu0 0
      %1182 = vmatpush1.bf16.msra.mxu0 0
      %1183 = vmatprep.subr.bf16.mxu0 0
      %1184 = vmatpush1.bf16.msra.mxu0 0
      %1185 = vmatprep.subr.bf16.mxu0 0
      %1186 = vmatpush1.bf16.msra.mxu0 0
      %1187 = vmatprep.subr.bf16.mxu0 0
      %1188 = vmatpush1.bf16.msra.mxu0 0
      %1189 = vmatprep.subr.bf16.mxu0 0
      %1190 = vmatpush1.bf16.msra.mxu0 0
      %1191 = vmatprep.subr.bf16.mxu0 0
      %1192 = vmatpush1.bf16.msra.mxu0 0
      %1193 = vmatprep.subr.bf16.mxu0 0
      %1194 = vmatpush1.bf16.msra.mxu0 0
      %1195 = vmatprep.subr.bf16.mxu0 0
      %1196 = vmatpush1.bf16.msra.mxu0 0
      %1197 = vmatprep.subr.bf16.mxu0 0
      %1198 = vmatpush1.bf16.msra.mxu0 0
      %1199 = vmatprep.subr.bf16.mxu0 0
      %1200 = vmatpush1.bf16.msra.mxu0 0
      %1201 = vmatprep.subr.bf16.mxu0 0
      %1202 = vmatpush1.bf16.msra.mxu0 0
      %1203 = vmatprep.subr.bf16.mxu0 0
      %1204 = vmatpush1.bf16.msra.mxu0 0
      %1205 = vmatprep.subr.bf16.mxu0 0
      %1206 = vmatpush1.bf16.msra.mxu0 0
      %1207 = vmatprep.subr.bf16.mxu0 0
      %1208 = vmatpush1.bf16.msra.mxu0 0
      %1209 = vmatprep.mubr.bf16.mxu0 0
      %1210 = vmatmul.mubr.bf16.gmra.mrb[0].mxu0 %v1172
      %v1211 = vpop.f32.mrb[0].mxu0
      %v1212 = vadd.f32 0.0, %v1211
      %v1213 = vpop.f32.mrb[0].mxu0
      %v1214 = vpop.f32.mrb[0].mxu0
      %v1215 = vadd.f32 0.0, %v1214
      %v1216 = vpop.f32.mrb[0].mxu0
      %1217 = vdwg.mxu0
      %1218 = vrot.lane.b32.xlu0 %v966, 112
      %v1219 = vpop.permute.xlu0 %1218
      %1220 = vrot.lane.b32.xlu0 %v967, 80
      %v1221 = vpop.permute.xlu0 %1220
      %v1223 = vsel %vm971, %v1219, 0
      %v1226 = vsel %vm971, %v1221, 0
      %1228 = vmatprep.subr.bf16.mxu0 0
      %1229 = vmatpush1.bf16.xpose.msra.mxu0 %v1226
      %1230 = vmatprep.subr.bf16.mxu0 0
      %1231 = vmatpush1.bf16.xpose.msra.mxu0 0
      %1232 = vmatprep.subr.bf16.mxu0 0
      %1233 = vmatpush1.bf16.xpose.msra.mxu0 0
      %1234 = vmatprep.subr.bf16.mxu0 0
      %1235 = vmatpush1.bf16.xpose.msra.mxu0 0
      %1236 = vmatprep.subr.bf16.mxu0 0
      %1237 = vmatpush1.bf16.xpose.msra.mxu0 0
      %1238 = vmatprep.subr.bf16.mxu0 0
      %1239 = vmatpush1.bf16.xpose.msra.mxu0 0
      %1240 = vmatprep.subr.bf16.mxu0 0
      %1241 = vmatpush1.bf16.xpose.msra.mxu0 0
      %1242 = vmatprep.subr.bf16.mxu0 0
      %1243 = vmatpush1.bf16.xpose.msra.mxu0 0
      %1244 = vmatprep.subr.bf16.mxu0 0
      %1245 = vmatpush1.bf16.xpose.msra.mxu0 0
      %1246 = vmatprep.subr.bf16.mxu0 0
      %1247 = vmatpush1.bf16.xpose.msra.mxu0 0
      %1248 = vmatprep.subr.bf16.mxu0 0
      %1249 = vmatpush1.bf16.xpose.msra.mxu0 0
      %1250 = vmatprep.subr.bf16.mxu0 0
      %1251 = vmatpush1.bf16.xpose.msra.mxu0 0
      %1252 = vmatprep.subr.bf16.mxu0 0
      %1253 = vmatpush1.bf16.xpose.msra.mxu0 0
      %1254 = vmatprep.subr.bf16.mxu0 0
      %1255 = vmatpush1.bf16.xpose.msra.mxu0 0
      %1256 = vmatprep.subr.bf16.mxu0 0
      %1257 = vmatpush1.bf16.xpose.msra.mxu0 0
      %1258 = vmatprep.subr.bf16.mxu0 0
      %1259 = vmatpush1.bf16.xpose.msra.mxu0 0
      %1260 = vmatprep.mubr.bf16.mxu0 0
      %1261 = vmatmul.mubr.bf16.gmra.mrb[0].mxu0 %v1223
      %v1262 = vpop.f32.mrb[0].mxu0
      %v1263 = vadd.f32 %v962, %v1262
      %v1264 = vpop.f32.mrb[0].mxu0
      %v1265 = vpop.f32.mrb[0].mxu0
      %v1266 = vadd.f32 %v963, %v1265
      %v1267 = vpop.f32.mrb[0].mxu0
      %1268 = vdwg.mxu0
      %v1269 = vsel %vm1019, %v1263, -inf
      %1270 = vmax.xlane.f32.xlu0 %v1269
      %v1271 = vpop.xlane.xlu0 %1270
      %v1272 = vsel %vm1023, %v1266, -inf
      %1273 = vmax.xlane.f32.xlu0 %v1272
      %v1274 = vpop.xlane.xlu0 %1273
      %v1275 = vsub.f32 %v1263, %v1271
      %v1276 = vsub.f32 %v1266, %v1274
      %v1277 = vmul.f32 %v1275, 1.442695
      %v1278 = vpow.pop %v1277
      %v1279 = vmul.f32 %v1276, 1.442695
      %v1280 = vpow.pop %v1279
      %v1281 = vsel %vm1019, %v1278, 0.0
      %1282 = vadd.xlane.f32.xlu0 %v1281
      %v1283 = vpop.xlane.xlu0 %1282
      %v1284 = vsel %vm1023, %v1280, 0.0
      %1285 = vadd.xlane.f32.xlu0 %v1284
      %v1286 = vpop.xlane.xlu0 %1285
      %v1287 = vrcp.pop %v1283
      %v1288 = vrcp.pop %v1286
      %v1289 = vmul.f32 %v1278, %v1287
      %v1290 = vmul.f32 %v1280, %v1288
      %v1291 = vpack.c.bf16 %v1290, %v1289
      %1292 = vrot.lane.b32.xlu0 %v967, 48
      %v1293 = vpop.permute.xlu0 %1292
      %v1295 = vsel %vm1019, %v1291, 0
      %v1298 = vsel %vm1049, %v1293, 0
      %1300 = vmatprep.subr.bf16.mxu0 0
      %1301 = vmatpush1.bf16.msra.mxu0 %v1298
      %1302 = vmatprep.subr.bf16.mxu0 0
      %1303 = vmatpush1.bf16.msra.mxu0 0
      %1304 = vmatprep.subr.bf16.mxu0 0
      %1305 = vmatpush1.bf16.msra.mxu0 0
      %1306 = vmatprep.subr.bf16.mxu0 0
      %1307 = vmatpush1.bf16.msra.mxu0 0
      %1308 = vmatprep.subr.bf16.mxu0 0
      %1309 = vmatpush1.bf16.msra.mxu0 0
      %1310 = vmatprep.subr.bf16.mxu0 0
      %1311 = vmatpush1.bf16.msra.mxu0 0
      %1312 = vmatprep.subr.bf16.mxu0 0
      %1313 = vmatpush1.bf16.msra.mxu0 0
      %1314 = vmatprep.subr.bf16.mxu0 0
      %1315 = vmatpush1.bf16.msra.mxu0 0
      %1316 = vmatprep.subr.bf16.mxu0 0
      %1317 = vmatpush1.bf16.msra.mxu0 0
      %1318 = vmatprep.subr.bf16.mxu0 0
      %1319 = vmatpush1.bf16.msra.mxu0 0
      %1320 = vmatprep.subr.bf16.mxu0 0
      %1321 = vmatpush1.bf16.msra.mxu0 0
      %1322 = vmatprep.subr.bf16.mxu0 0
      %1323 = vmatpush1.bf16.msra.mxu0 0
      %1324 = vmatprep.subr.bf16.mxu0 0
      %1325 = vmatpush1.bf16.msra.mxu0 0
      %1326 = vmatprep.subr.bf16.mxu0 0
      %1327 = vmatpush1.bf16.msra.mxu0 0
      %1328 = vmatprep.subr.bf16.mxu0 0
      %1329 = vmatpush1.bf16.msra.mxu0 0
      %1330 = vmatprep.subr.bf16.mxu0 0
      %1331 = vmatpush1.bf16.msra.mxu0 0
      %1332 = vmatprep.mubr.bf16.mxu0 0
      %1333 = vmatmul.mubr.bf16.gmra.mrb[0].mxu0 %v1295
      %v1334 = vpop.f32.mrb[0].mxu0
      %v1335 = vadd.f32 0.0, %v1334
      %v1336 = vpop.f32.mrb[0].mxu0
      %v1337 = vpop.f32.mrb[0].mxu0
      %v1338 = vadd.f32 0.0, %v1337
      %v1339 = vpop.f32.mrb[0].mxu0
      %1340 = vdwg.mxu0
      %1341 = vrot.lane.b32.xlu0 %v966, 104
      %v1342 = vpop.permute.xlu0 %1341
      %1343 = vrot.lane.b32.xlu0 %v967, 72
      %v1344 = vpop.permute.xlu0 %1343
      %v1346 = vsel %vm971, %v1342, 0
      %v1349 = vsel %vm971, %v1344, 0
      %1351 = vmatprep.subr.bf16.mxu0 0
      %1352 = vmatpush1.bf16.xpose.msra.mxu0 %v1349
      %1353 = vmatprep.subr.bf16.mxu0 0
      %1354 = vmatpush1.bf16.xpose.msra.mxu0 0
      %1355 = vmatprep.subr.bf16.mxu0 0
      %1356 = vmatpush1.bf16.xpose.msra.mxu0 0
      %1357 = vmatprep.subr.bf16.mxu0 0
      %1358 = vmatpush1.bf16.xpose.msra.mxu0 0
      %1359 = vmatprep.subr.bf16.mxu0 0
      %1360 = vmatpush1.bf16.xpose.msra.mxu0 0
      %1361 = vmatprep.subr.bf16.mxu0 0
      %1362 = vmatpush1.bf16.xpose.msra.mxu0 0
      %1363 = vmatprep.subr.bf16.mxu0 0
      %1364 = vmatpush1.bf16.xpose.msra.mxu0 0
      %1365 = vmatprep.subr.bf16.mxu0 0
      %1366 = vmatpush1.bf16.xpose.msra.mxu0 0
      %1367 = vmatprep.subr.bf16.mxu0 0
      %1368 = vmatpush1.bf16.xpose.msra.mxu0 0
      %1369 = vmatprep.subr.bf16.mxu0 0
      %1370 = vmatpush1.bf16.xpose.msra.mxu0 0
      %1371 = vmatprep.subr.bf16.mxu0 0
      %1372 = vmatpush1.bf16.xpose.msra.mxu0 0
      %1373 = vmatprep.subr.bf16.mxu0 0
      %1374 = vmatpush1.bf16.xpose.msra.mxu0 0
      %1375 = vmatprep.subr.bf16.mxu0 0
      %1376 = vmatpush1.bf16.xpose.msra.mxu0 0
      %1377 = vmatprep.subr.bf16.mxu0 0
      %1378 = vmatpush1.bf16.xpose.msra.mxu0 0
      %1379 = vmatprep.subr.bf16.mxu0 0
      %1380 = vmatpush1.bf16.xpose.msra.mxu0 0
      %1381 = vmatprep.subr.bf16.mxu0 0
      %1382 = vmatpush1.bf16.xpose.msra.mxu0 0
      %1383 = vmatprep.mubr.bf16.mxu0 0
      %1384 = vmatmul.mubr.bf16.gmra.mrb[0].mxu0 %v1346
      %v1385 = vpop.f32.mrb[0].mxu0
      %v1386 = vadd.f32 %v962, %v1385
      %v1387 = vpop.f32.mrb[0].mxu0
      %v1388 = vpop.f32.mrb[0].mxu0
      %v1389 = vadd.f32 %v963, %v1388
      %v1390 = vpop.f32.mrb[0].mxu0
      %1391 = vdwg.mxu0
      %v1392 = vsel %vm1019, %v1386, -inf
      %1393 = vmax.xlane.f32.xlu0 %v1392
      %v1394 = vpop.xlane.xlu0 %1393
      %v1395 = vsel %vm1023, %v1389, -inf
      %1396 = vmax.xlane.f32.xlu0 %v1395
      %v1397 = vpop.xlane.xlu0 %1396
      %v1398 = vsub.f32 %v1386, %v1394
      %v1399 = vsub.f32 %v1389, %v1397
      %v1400 = vmul.f32 %v1398, 1.442695
      %v1401 = vpow.pop %v1400
      %v1402 = vmul.f32 %v1399, 1.442695
      %v1403 = vpow.pop %v1402
      %v1404 = vsel %vm1019, %v1401, 0.0
      %1405 = vadd.xlane.f32.xlu0 %v1404
      %v1406 = vpop.xlane.xlu0 %1405
      %v1407 = vsel %vm1023, %v1403, 0.0
      %1408 = vadd.xlane.f32.xlu0 %v1407
      %v1409 = vpop.xlane.xlu0 %1408
      %v1410 = vrcp.pop %v1406
      %v1411 = vrcp.pop %v1409
      %v1412 = vmul.f32 %v1401, %v1410
      %v1413 = vmul.f32 %v1403, %v1411
      %v1414 = vpack.c.bf16 %v1413, %v1412
      %1415 = vrot.lane.b32.xlu0 %v967, 40
      %v1416 = vpop.permute.xlu0 %1415
      %v1418 = vsel %vm1019, %v1414, 0
      %v1421 = vsel %vm1049, %v1416, 0
      %1423 = vmatprep.subr.bf16.mxu0 0
      %1424 = vmatpush1.bf16.msra.mxu0 %v1421
      %1425 = vmatprep.subr.bf16.mxu0 0
      %1426 = vmatpush1.bf16.msra.mxu0 0
      %1427 = vmatprep.subr.bf16.mxu0 0
      %1428 = vmatpush1.bf16.msra.mxu0 0
      %1429 = vmatprep.subr.bf16.mxu0 0
      %1430 = vmatpush1.bf16.msra.mxu0 0
      %1431 = vmatprep.subr.bf16.mxu0 0
      %1432 = vmatpush1.bf16.msra.mxu0 0
      %1433 = vmatprep.subr.bf16.mxu0 0
      %1434 = vmatpush1.bf16.msra.mxu0 0
      %1435 = vmatprep.subr.bf16.mxu0 0
      %1436 = vmatpush1.bf16.msra.mxu0 0
      %1437 = vmatprep.subr.bf16.mxu0 0
      %1438 = vmatpush1.bf16.msra.mxu0 0
      %1439 = vmatprep.subr.bf16.mxu0 0
      %1440 = vmatpush1.bf16.msra.mxu0 0
      %1441 = vmatprep.subr.bf16.mxu0 0
      %1442 = vmatpush1.bf16.msra.mxu0 0
      %1443 = vmatprep.subr.bf16.mxu0 0
      %1444 = vmatpush1.bf16.msra.mxu0 0
      %1445 = vmatprep.subr.bf16.mxu0 0
      %1446 = vmatpush1.bf16.msra.mxu0 0
      %1447 = vmatprep.subr.bf16.mxu0 0
      %1448 = vmatpush1.bf16.msra.mxu0 0
      %1449 = vmatprep.subr.bf16.mxu0 0
      %1450 = vmatpush1.bf16.msra.mxu0 0
      %1451 = vmatprep.subr.bf16.mxu0 0
      %1452 = vmatpush1.bf16.msra.mxu0 0
      %1453 = vmatprep.subr.bf16.mxu0 0
      %1454 = vmatpush1.bf16.msra.mxu0 0
      %1455 = vmatprep.mubr.bf16.mxu0 0
      %1456 = vmatmul.mubr.bf16.gmra.mrb[0].mxu0 %v1418
      %v1457 = vpop.f32.mrb[0].mxu0
      %v1458 = vadd.f32 0.0, %v1457
      %v1459 = vpop.f32.mrb[0].mxu0
      %v1460 = vpop.f32.mrb[0].mxu0
      %v1461 = vadd.f32 0.0, %v1460
      %v1462 = vpop.f32.mrb[0].mxu0
      %1463 = vdwg.mxu0
      %1466 = vrot.lane.b32.xlu0 %v1212, 8
      %v1467 = vpop.permute.xlu0 %1466
      %1468 = vrot.lane.b32.xlu0 %v1215, 8
      %v1469 = vpop.permute.xlu0 %1468
      %1474 = vrot.lane.b32.xlu0 %v1335, 16
      %v1475 = vpop.permute.xlu0 %1474
      %1476 = vrot.lane.b32.xlu0 %v1338, 16
      %v1477 = vpop.permute.xlu0 %1476
      %1482 = vrot.lane.b32.xlu0 %v1458, 24
      %v1483 = vpop.permute.xlu0 %1482
      %1484 = vrot.lane.b32.xlu0 %v1461, 24
      %v1485 = vpop.permute.xlu0 %1484
      %v1488 = vsel %vm971, %v1088, %v1467
      %v1489 = vsel %vm971, %v1091, %v1469
      %vm1490 = vcmask 130048
      %v1491 = vsel %vm1490, %v1488, %v1475
      %v1492 = vsel %vm1490, %v1489, %v1477
      %vm1493 = vcmask 195584
      %v1494 = vsel %vm1493, %v1491, %v1483
      %v1495 = vsel %vm1493, %v1492, %v1485
      %v1496 = vpack.c.bf16 %v1495, %v1494
      %v1497 = vld [vmem:[%s7] sm:$0xf]
      %v1498 = vld [vmem:[%s7 + $0x4] sm:$0xf]
      %v1499 = vld [vmem:[%s7 + $0x8] sm:$0xf]
      %v1500 = vld [vmem:[%s7 + $0xc] sm:$0xf]
      %v1501 = vld [vmem:[%s8] sm:$0x1]
      %v1502 = vunpack.c.l.bf16 %v1501
      %v1503 = vlaneseq
      %v1504 = vshrl.u32 %v1503, 7
      %v1505 = vsub.s32 0, %v1504
      %v1506 = vrot.slane %v1502, %v1505
      %v1511 = vunpack.c.l.b16 %v1497
      %v1512 = vunpack.c.l.b16 %v1498
      %v1513 = vunpack.c.l.b16 %v1499
      %v1514 = vunpack.c.l.b16 %v1500
      %v1515 = vpack.c.b16 %v1512, %v1511
      %v1516 = vpack.c.b16 %v1514, %v1513
      %v1520 = vsel %vm843, %v1496, 0
      %1522 = vmatprep.subr.bf16.mxu0 0
      %1523 = vmatpush1.bf16.msra.mxu0 %v1515
      %1524 = vmatprep.subr.bf16.mxu0 0
      %1525 = vmatpush1.bf16.msra.mxu0 %v1516
      %1526 = vmatprep.subr.bf16.mxu0 0
      %1527 = vmatpush1.bf16.msra.mxu0 0
      %1528 = vmatprep.subr.bf16.mxu0 0
      %1529 = vmatpush1.bf16.msra.mxu0 0
      %1530 = vmatprep.subr.bf16.mxu0 0
      %1531 = vmatpush1.bf16.msra.mxu0 0
      %1532 = vmatprep.subr.bf16.mxu0 0
      %1533 = vmatpush1.bf16.msra.mxu0 0
      %1534 = vmatprep.subr.bf16.mxu0 0
      %1535 = vmatpush1.bf16.msra.mxu0 0
      %1536 = vmatprep.subr.bf16.mxu0 0
      %1537 = vmatpush1.bf16.msra.mxu0 0
      %1538 = vmatprep.subr.bf16.mxu0 0
      %1539 = vmatpush1.bf16.msra.mxu0 0
      %1540 = vmatprep.subr.bf16.mxu0 0
      %1541 = vmatpush1.bf16.msra.mxu0 0
      %1542 = vmatprep.subr.bf16.mxu0 0
      %1543 = vmatpush1.bf16.msra.mxu0 0
      %1544 = vmatprep.subr.bf16.mxu0 0
      %1545 = vmatpush1.bf16.msra.mxu0 0
      %1546 = vmatprep.subr.bf16.mxu0 0
      %1547 = vmatpush1.bf16.msra.mxu0 0
      %1548 = vmatprep.subr.bf16.mxu0 0
      %1549 = vmatpush1.bf16.msra.mxu0 0
      %1550 = vmatprep.subr.bf16.mxu0 0
      %1551 = vmatpush1.bf16.msra.mxu0 0
      %1552 = vmatprep.subr.bf16.mxu0 0
      %1553 = vmatpush1.bf16.msra.mxu0 0
      %1554 = vmatprep.mubr.bf16.mxu0 0
      %1555 = vmatmul.mubr.bf16.gmra.mrb[0].mxu0 %v1520
      %v1556 = vpop.f32.mrb[0].mxu0
      %v1557 = vadd.f32 %v1506, %v1556
      %v1558 = vpop.f32.mrb[0].mxu0
      %v1559 = vpop.f32.mrb[0].mxu0
      %v1560 = vadd.f32 %v1506, %v1559
      %v1561 = vpop.f32.mrb[0].mxu0
      %1562 = vdwg.mxu0
      %v1563 = vadd.f32 %v886, %v1557
      %v1564 = vadd.f32 %v887, %v1560
      %v1565 = vsel %vm843, %v1563, 0.0
      %1566 = vadd.xlane.f32.xlu0 %v1565
      %v1567 = vpop.xlane.xlu0 %1566
      %v1568 = vsel %vm847, %v1564, 0.0
      %1569 = vadd.xlane.f32.xlu0 %v1568
      %v1570 = vpop.xlane.xlu0 %1569
      %v1571 = vmul.f32 %v1567, %v851
      %v1572 = vmul.f32 %v1570, %v851
      %v1573 = vsub.f32 %v1563, %v1571
      %v1574 = vsub.f32 %v1564, %v1572
      %v1575 = vmul.f32 %v1573, %v1573
      %v1576 = vmul.f32 %v1574, %v1574
      %v1577 = vsel %vm843, %v1575, 0.0
      %1578 = vadd.xlane.f32.xlu0 %v1577
      %v1579 = vpop.xlane.xlu0 %1578
      %v1580 = vsel %vm847, %v1576, 0.0
      %1581 = vadd.xlane.f32.xlu0 %v1580
      %v1582 = vpop.xlane.xlu0 %1581
      %v1583 = vmul.f32 %v1579, %v851
      %v1584 = vmul.f32 %v1582, %v851
      %v1585 = vadd.f32 %v1583, 1e-05
      %v1586 = vadd.f32 %v1584, 1e-05
      %v1587 = vrsqrt.pop %v1585
      %v1588 = vrsqrt.pop %v1586
      %v1589 = vmul.f32 %v1573, %v1587
      %v1590 = vmul.f32 %v1574, %v1588
      %v1591 = vld [vmem:[%s9] sm:$0x1]
      %v1592 = vunpack.c.l.bf16 %v1591
      %v1593 = vlaneseq
      %v1594 = vshrl.u32 %v1593, 7
      %v1595 = vsub.s32 0, %v1594
      %v1596 = vrot.slane %v1592, %v1595
      %v1597 = vmul.f32 %v1589, %v1596
      %v1598 = vmul.f32 %v1590, %v1596
      %v1599 = vld [vmem:[%s10] sm:$0x1]
      %v1600 = vunpack.c.l.bf16 %v1599
      %v1601 = vlaneseq
      %v1602 = vshrl.u32 %v1601, 7
      %v1603 = vsub.s32 0, %v1602
      %v1604 = vrot.slane %v1600, %v1603
      %v1605 = vadd.f32 %v1597, %v1604
      %v1606 = vadd.f32 %v1598, %v1604
      %v1607 = vpack.c.bf16 %v1606, %v1605
      %v1608 = vld [vmem:[%s11] sm:$0xf]
      %v1609 = vld [vmem:[%s11 + $0x4] sm:$0xf]
      %v1610 = vld [vmem:[%s11 + $0x8] sm:$0xf]
      %v1611 = vld [vmem:[%s11 + $0xc] sm:$0xf]
      %v1612 = vld [vmem:[%s12] sm:$0x1]
      %v1613 = vunpack.c.l.bf16 %v1612
      %v1614 = vlaneseq
      %v1615 = vshrl.u32 %v1614, 7
      %v1616 = vsub.s32 0, %v1615
      %v1617 = vrot.slane %v1613, %v1616
      %v1622 = vunpack.c.l.b16 %v1608
      %v1623 = vunpack.c.l.b16 %v1609
      %v1624 = vunpack.c.l.b16 %v1610
      %v1625 = vunpack.c.l.b16 %v1611
      %v1626 = vpack.c.b16 %v1623, %v1622
      %v1627 = vpack.c.b16 %v1625, %v1624
      %v1631 = vsel %vm843, %v1607, 0
      %1633 = vmatprep.subr.bf16.mxu0 0
      %1634 = vmatpush1.bf16.msra.mxu0 %v1626
      %1635 = vmatprep.subr.bf16.mxu0 0
      %1636 = vmatpush1.bf16.msra.mxu0 %v1627
      %1637 = vmatprep.subr.bf16.mxu0 0
      %1638 = vmatpush1.bf16.msra.mxu0 0
      %1639 = vmatprep.subr.bf16.mxu0 0
      %1640 = vmatpush1.bf16.msra.mxu0 0
      %1641 = vmatprep.subr.bf16.mxu0 0
      %1642 = vmatpush1.bf16.msra.mxu0 0
      %1643 = vmatprep.subr.bf16.mxu0 0
      %1644 = vmatpush1.bf16.msra.mxu0 0
      %1645 = vmatprep.subr.bf16.mxu0 0
      %1646 = vmatpush1.bf16.msra.mxu0 0
      %1647 = vmatprep.subr.bf16.mxu0 0
      %1648 = vmatpush1.bf16.msra.mxu0 0
      %1649 = vmatprep.subr.bf16.mxu0 0
      %1650 = vmatpush1.bf16.msra.mxu0 0
      %1651 = vmatprep.subr.bf16.mxu0 0
      %1652 = vmatpush1.bf16.msra.mxu0 0
      %1653 = vmatprep.subr.bf16.mxu0 0
      %1654 = vmatpush1.bf16.msra.mxu0 0
      %1655 = vmatprep.subr.bf16.mxu0 0
      %1656 = vmatpush1.bf16.msra.mxu0 0
      %1657 = vmatprep.subr.bf16.mxu0 0
      %1658 = vmatpush1.bf16.msra.mxu0 0
      %1659 = vmatprep.subr.bf16.mxu0 0
      %1660 = vmatpush1.bf16.msra.mxu0 0
      %1661 = vmatprep.subr.bf16.mxu0 0
      %1662 = vmatpush1.bf16.msra.mxu0 0
      %1663 = vmatprep.subr.bf16.mxu0 0
      %1664 = vmatpush1.bf16.msra.mxu0 0
      %1665 = vmatprep.mubr.bf16.mxu0 0
      %1666 = vmatmul.mubr.bf16.gmra.mrb[0].mxu0 %v1631
      %v1667 = vpop.f32.mrb[0].mxu0
      %v1668 = vadd.f32 %v1617, %v1667
      %v1669 = vpop.f32.mrb[0].mxu0
      %v1670 = vpop.f32.mrb[0].mxu0
      %v1671 = vadd.f32 %v1617, %v1670
      %v1672 = vpop.f32.mrb[0].mxu0
      %1673 = vdwg.mxu0
      %v1674 = vld [vmem:[%s13] sm:$0xf]
      %v1675 = vld [vmem:[%s13 + $0x4] sm:$0xf]
      %v1676 = vld [vmem:[%s13 + $0x8] sm:$0xf]
      %v1677 = vld [vmem:[%s13 + $0xc] sm:$0xf]
      %v1678 = vld [vmem:[%s14] sm:$0x1]
      %v1679 = vunpack.c.l.bf16 %v1678
      %v1680 = vlaneseq
      %v1681 = vshrl.u32 %v1680, 7
      %v1682 = vsub.s32 0, %v1681
      %v1683 = vrot.slane %v1679, %v1682
      %v1686 = vunpack.c.l.b16 %v834
      %v1687 = vunpack.c.l.b16 %v835
      %v1688 = vpack.c.b16 %v1687, %v1686
      %v1693 = vunpack.c.l.b16 %v1674
      %v1694 = vunpack.c.l.b16 %v1675
      %v1695 = vunpack.c.l.b16 %v1676
      %v1696 = vunpack.c.l.b16 %v1677
      %v1697 = vpack.c.b16 %v1694, %v1693
      %v1698 = vpack.c.b16 %v1696, %v1695
      %v1702 = vsel %vm843, %v1688, 0
      %1704 = vmatprep.subr.bf16.mxu0 0
      %1705 = vmatpush1.bf16.msra.mxu0 %v1697
      %1706 = vmatprep.subr.bf16.mxu0 0
      %1707 = vmatpush1.bf16.msra.mxu0 %v1698
      %1708 = vmatprep.subr.bf16.mxu0 0
      %1709 = vmatpush1.bf16.msra.mxu0 0
      %1710 = vmatprep.subr.bf16.mxu0 0
      %1711 = vmatpush1.bf16.msra.mxu0 0
      %1712 = vmatprep.subr.bf16.mxu0 0
      %1713 = vmatpush1.bf16.msra.mxu0 0
      %1714 = vmatprep.subr.bf16.mxu0 0
      %1715 = vmatpush1.bf16.msra.mxu0 0
      %1716 = vmatprep.subr.bf16.mxu0 0
      %1717 = vmatpush1.bf16.msra.mxu0 0
      %1718 = vmatprep.subr.bf16.mxu0 0
      %1719 = vmatpush1.bf16.msra.mxu0 0
      %1720 = vmatprep.subr.bf16.mxu0 0
      %1721 = vmatpush1.bf16.msra.mxu0 0
      %1722 = vmatprep.subr.bf16.mxu0 0
      %1723 = vmatpush1.bf16.msra.mxu0 0
      %1724 = vmatprep.subr.bf16.mxu0 0
      %1725 = vmatpush1.bf16.msra.mxu0 0
      %1726 = vmatprep.subr.bf16.mxu0 0
      %1727 = vmatpush1.bf16.msra.mxu0 0
      %1728 = vmatprep.subr.bf16.mxu0 0
      %1729 = vmatpush1.bf16.msra.mxu0 0
      %1730 = vmatprep.subr.bf16.mxu0 0
      %1731 = vmatpush1.bf16.msra.mxu0 0
      %1732 = vmatprep.subr.bf16.mxu0 0
      %1733 = vmatpush1.bf16.msra.mxu0 0
      %1734 = vmatprep.subr.bf16.mxu0 0
      %1735 = vmatpush1.bf16.msra.mxu0 0
      %1736 = vmatprep.mubr.bf16.mxu0 0
      %1737 = vmatmul.mubr.bf16.gmra.mrb[0].mxu0 %v1702
      %v1738 = vpop.f32.mrb[0].mxu0
      %v1739 = vadd.f32 %v1683, %v1738
      %v1740 = vpop.f32.mrb[0].mxu0
      %v1741 = vpop.f32.mrb[0].mxu0
      %v1742 = vadd.f32 %v1683, %v1741
      %v1743 = vpop.f32.mrb[0].mxu0
      %1744 = vdwg.mxu0
      %v1745 = vmul.f32 %v1668, 0.35355338
      %v1746 = vmul.f32 %v1671, 0.35355338
      %v1747 = vpack.c.bf16 %v1746, %v1745
      %v1748 = vpack.c.bf16 %v1742, %v1739
      %v1750 = vlaneseq
      %v1751 = vshrl.u32 %v1750, 7
      %v1752 = vsub.s32 0, %v1751
      %v1753 = vrot.slane %v838, %v1752
      %v1756 = vsel %vm971, %v1747, 0
      %v1759 = vsel %vm971, %v1748, 0
      %1761 = vmatprep.subr.bf16.mxu0 0
      %1762 = vmatpush1.bf16.xpose.msra.mxu0 %v1759
      %1763 = vmatprep.subr.bf16.mxu0 0
      %1764 = vmatpush1.bf16.xpose.msra.mxu0 0
      %1765 = vmatprep.subr.bf16.mxu0 0
      %1766 = vmatpush1.bf16.xpose.msra.mxu0 0
      %1767 = vmatprep.subr.bf16.mxu0 0
      %1768 = vmatpush1.bf16.xpose.msra.mxu0 0
      %1769 = vmatprep.subr.bf16.mxu0 0
      %1770 = vmatpush1.bf16.xpose.msra.mxu0 0
      %1771 = vmatprep.subr.bf16.mxu0 0
      %1772 = vmatpush1.bf16.xpose.msra.mxu0 0
      %1773 = vmatprep.subr.bf16.mxu0 0
      %1774 = vmatpush1.bf16.xpose.msra.mxu0 0
      %1775 = vmatprep.subr.bf16.mxu0 0
      %1776 = vmatpush1.bf16.xpose.msra.mxu0 0
      %1777 = vmatprep.subr.bf16.mxu0 0
      %1778 = vmatpush1.bf16.xpose.msra.mxu0 0
      %1779 = vmatprep.subr.bf16.mxu0 0
      %1780 = vmatpush1.bf16.xpose.msra.mxu0 0
      %1781 = vmatprep.subr.bf16.mxu0 0
      %1782 = vmatpush1.bf16.xpose.msra.mxu0 0
      %1783 = vmatprep.subr.bf16.mxu0 0
      %1784 = vmatpush1.bf16.xpose.msra.mxu0 0
      %1785 = vmatprep.subr.bf16.mxu0 0
      %1786 = vmatpush1.bf16.xpose.msra.mxu0 0
      %1787 = vmatprep.subr.bf16.mxu0 0
      %1788 = vmatpush1.bf16.xpose.msra.mxu0 0
      %1789 = vmatprep.subr.bf16.mxu0 0
      %1790 = vmatpush1.bf16.xpose.msra.mxu0 0
      %1791 = vmatprep.subr.bf16.mxu0 0
      %1792 = vmatpush1.bf16.xpose.msra.mxu0 0
      %1793 = vmatprep.mubr.bf16.mxu0 0
      %1794 = vmatmul.mubr.bf16.gmra.mrb[0].mxu0 %v1756
      %v1795 = vpop.f32.mrb[0].mxu0
      %v1796 = vadd.f32 %v1753, %v1795
      %v1797 = vpop.f32.mrb[0].mxu0
      %v1798 = vpop.f32.mrb[0].mxu0
      %v1799 = vadd.f32 %v1753, %v1798
      %v1800 = vpop.f32.mrb[0].mxu0
      %1801 = vdwg.mxu0
      %v1802 = vsel %vm1019, %v1796, -inf
      %1803 = vmax.xlane.f32.xlu0 %v1802
      %v1804 = vpop.xlane.xlu0 %1803
      %v1805 = vsel %vm1023, %v1799, -inf
      %1806 = vmax.xlane.f32.xlu0 %v1805
      %v1807 = vpop.xlane.xlu0 %1806
      %v1808 = vsub.f32 %v1796, %v1804
      %v1809 = vsub.f32 %v1799, %v1807
      %v1810 = vmul.f32 %v1808, 1.442695
      %v1811 = vpow.pop %v1810
      %v1812 = vmul.f32 %v1809, 1.442695
      %v1813 = vpow.pop %v1812
      %v1814 = vsel %vm1019, %v1811, 0.0
      %1815 = vadd.xlane.f32.xlu0 %v1814
      %v1816 = vpop.xlane.xlu0 %1815
      %v1817 = vsel %vm1023, %v1813, 0.0
      %1818 = vadd.xlane.f32.xlu0 %v1817
      %v1819 = vpop.xlane.xlu0 %1818
      %v1820 = vrcp.pop %v1816
      %v1821 = vrcp.pop %v1819
      %v1822 = vmul.f32 %v1811, %v1820
      %v1823 = vmul.f32 %v1813, %v1821
      %v1824 = vpack.c.bf16 %v1823, %v1822
      %1826 = vrot.lane.b32.xlu0 %v1748, 96
      %v1827 = vpop.permute.xlu0 %1826
      %v1829 = vsel %vm1019, %v1824, 0
      %v1832 = vsel %vm1049, %v1827, 0
      %1834 = vmatprep.subr.bf16.mxu0 0
      %1835 = vmatpush1.bf16.msra.mxu0 %v1832
      %1836 = vmatprep.subr.bf16.mxu0 0
      %1837 = vmatpush1.bf16.msra.mxu0 0
      %1838 = vmatprep.subr.bf16.mxu0 0
      %1839 = vmatpush1.bf16.msra.mxu0 0
      %1840 = vmatprep.subr.bf16.mxu0 0
      %1841 = vmatpush1.bf16.msra.mxu0 0
      %1842 = vmatprep.subr.bf16.mxu0 0
      %1843 = vmatpush1.bf16.msra.mxu0 0
      %1844 = vmatprep.subr.bf16.mxu0 0
      %1845 = vmatpush1.bf16.msra.mxu0 0
      %1846 = vmatprep.subr.bf16.mxu0 0
      %1847 = vmatpush1.bf16.msra.mxu0 0
      %1848 = vmatprep.subr.bf16.mxu0 0
      %1849 = vmatpush1.bf16.msra.mxu0 0
      %1850 = vmatprep.subr.bf16.mxu0 0
      %1851 = vmatpush1.bf16.msra.mxu0 0
      %1852 = vmatprep.subr.bf16.mxu0 0
      %1853 = vmatpush1.bf16.msra.mxu0 0
      %1854 = vmatprep.subr.bf16.mxu0 0
      %1855 = vmatpush1.bf16.msra.mxu0 0
      %1856 = vmatprep.subr.bf16.mxu0 0
      %1857 = vmatpush1.bf16.msra.mxu0 0
      %1858 = vmatprep.subr.bf16.mxu0 0
      %1859 = vmatpush1.bf16.msra.mxu0 0
      %1860 = vmatprep.subr.bf16.mxu0 0
      %1861 = vmatpush1.bf16.msra.mxu0 0
      %1862 = vmatprep.subr.bf16.mxu0 0
      %1863 = vmatpush1.bf16.msra.mxu0 0
      %1864 = vmatprep.subr.bf16.mxu0 0
      %1865 = vmatpush1.bf16.msra.mxu0 0
      %1866 = vmatprep.mubr.bf16.mxu0 0
      %1867 = vmatmul.mubr.bf16.gmra.mrb[0].mxu0 %v1829
      %v1868 = vpop.f32.mrb[0].mxu0
      %v1869 = vadd.f32 0.0, %v1868
      %v1870 = vpop.f32.mrb[0].mxu0
      %v1871 = vpop.f32.mrb[0].mxu0
      %v1872 = vadd.f32 0.0, %v1871
      %v1873 = vpop.f32.mrb[0].mxu0
      %1874 = vdwg.mxu0
      %1876 = vrot.lane.b32.xlu0 %v1747, 120
      %v1877 = vpop.permute.xlu0 %1876
      %1878 = vrot.lane.b32.xlu0 %v1748, 120
      %v1879 = vpop.permute.xlu0 %1878
      %v1881 = vsel %vm971, %v1877, 0
      %v1884 = vsel %vm971, %v1879, 0
      %1886 = vmatprep.subr.bf16.mxu0 0
      %1887 = vmatpush1.bf16.xpose.msra.mxu0 %v1884
      %1888 = vmatprep.subr.bf16.mxu0 0
      %1889 = vmatpush1.bf16.xpose.msra.mxu0 0
      %1890 = vmatprep.subr.bf16.mxu0 0
      %1891 = vmatpush1.bf16.xpose.msra.mxu0 0
      %1892 = vmatprep.subr.bf16.mxu0 0
      %1893 = vmatpush1.bf16.xpose.msra.mxu0 0
      %1894 = vmatprep.subr.bf16.mxu0 0
      %1895 = vmatpush1.bf16.xpose.msra.mxu0 0
      %1896 = vmatprep.subr.bf16.mxu0 0
      %1897 = vmatpush1.bf16.xpose.msra.mxu0 0
      %1898 = vmatprep.subr.bf16.mxu0 0
      %1899 = vmatpush1.bf16.xpose.msra.mxu0 0
      %1900 = vmatprep.subr.bf16.mxu0 0
      %1901 = vmatpush1.bf16.xpose.msra.mxu0 0
      %1902 = vmatprep.subr.bf16.mxu0 0
      %1903 = vmatpush1.bf16.xpose.msra.mxu0 0
      %1904 = vmatprep.subr.bf16.mxu0 0
      %1905 = vmatpush1.bf16.xpose.msra.mxu0 0
      %1906 = vmatprep.subr.bf16.mxu0 0
      %1907 = vmatpush1.bf16.xpose.msra.mxu0 0
      %1908 = vmatprep.subr.bf16.mxu0 0
      %1909 = vmatpush1.bf16.xpose.msra.mxu0 0
      %1910 = vmatprep.subr.bf16.mxu0 0
      %1911 = vmatpush1.bf16.xpose.msra.mxu0 0
      %1912 = vmatprep.subr.bf16.mxu0 0
      %1913 = vmatpush1.bf16.xpose.msra.mxu0 0
      %1914 = vmatprep.subr.bf16.mxu0 0
      %1915 = vmatpush1.bf16.xpose.msra.mxu0 0
      %1916 = vmatprep.subr.bf16.mxu0 0
      %1917 = vmatpush1.bf16.xpose.msra.mxu0 0
      %1918 = vmatprep.mubr.bf16.mxu0 0
      %1919 = vmatmul.mubr.bf16.gmra.mrb[0].mxu0 %v1881
      %v1920 = vpop.f32.mrb[0].mxu0
      %v1921 = vadd.f32 %v1753, %v1920
      %v1922 = vpop.f32.mrb[0].mxu0
      %v1923 = vpop.f32.mrb[0].mxu0
      %v1924 = vadd.f32 %v1753, %v1923
      %v1925 = vpop.f32.mrb[0].mxu0
      %1926 = vdwg.mxu0
      %v1927 = vsel %vm1019, %v1921, -inf
      %1928 = vmax.xlane.f32.xlu0 %v1927
      %v1929 = vpop.xlane.xlu0 %1928
      %v1930 = vsel %vm1023, %v1924, -inf
      %1931 = vmax.xlane.f32.xlu0 %v1930
      %v1932 = vpop.xlane.xlu0 %1931
      %v1933 = vsub.f32 %v1921, %v1929
      %v1934 = vsub.f32 %v1924, %v1932
      %v1935 = vmul.f32 %v1933, 1.442695
      %v1936 = vpow.pop %v1935
      %v1937 = vmul.f32 %v1934, 1.442695
      %v1938 = vpow.pop %v1937
      %v1939 = vsel %vm1019, %v1936, 0.0
      %1940 = vadd.xlane.f32.xlu0 %v1939
      %v1941 = vpop.xlane.xlu0 %1940
      %v1942 = vsel %vm1023, %v1938, 0.0
      %1943 = vadd.xlane.f32.xlu0 %v1942
      %v1944 = vpop.xlane.xlu0 %1943
      %v1945 = vrcp.pop %v1941
      %v1946 = vrcp.pop %v1944
      %v1947 = vmul.f32 %v1936, %v1945
      %v1948 = vmul.f32 %v1938, %v1946
      %v1949 = vpack.c.bf16 %v1948, %v1947
      %1950 = vrot.lane.b32.xlu0 %v1748, 88
      %v1951 = vpop.permute.xlu0 %1950
      %v1953 = vsel %vm1019, %v1949, 0
      %v1956 = vsel %vm1049, %v1951, 0
      %1958 = vmatprep.subr.bf16.mxu0 0
      %1959 = vmatpush1.bf16.msra.mxu0 %v1956
      %1960 = vmatprep.subr.bf16.mxu0 0
      %1961 = vmatpush1.bf16.msra.mxu0 0
      %1962 = vmatprep.subr.bf16.mxu0 0
      %1963 = vmatpush1.bf16.msra.mxu0 0
      %1964 = vmatprep.subr.bf16.mxu0 0
      %1965 = vmatpush1.bf16.msra.mxu0 0
      %1966 = vmatprep.subr.bf16.mxu0 0
      %1967 = vmatpush1.bf16.msra.mxu0 0
      %1968 = vmatprep.subr.bf16.mxu0 0
      %1969 = vmatpush1.bf16.msra.mxu0 0
      %1970 = vmatprep.subr.bf16.mxu0 0
      %1971 = vmatpush1.bf16.msra.mxu0 0
      %1972 = vmatprep.subr.bf16.mxu0 0
      %1973 = vmatpush1.bf16.msra.mxu0 0
      %1974 = vmatprep.subr.bf16.mxu0 0
      %1975 = vmatpush1.bf16.msra.mxu0 0
      %1976 = vmatprep.subr.bf16.mxu0 0
      %1977 = vmatpush1.bf16.msra.mxu0 0
      %1978 = vmatprep.subr.bf16.mxu0 0
      %1979 = vmatpush1.bf16.msra.mxu0 0
      %1980 = vmatprep.subr.bf16.mxu0 0
      %1981 = vmatpush1.bf16.msra.mxu0 0
      %1982 = vmatprep.subr.bf16.mxu0 0
      %1983 = vmatpush1.bf16.msra.mxu0 0
      %1984 = vmatprep.subr.bf16.mxu0 0
      %1985 = vmatpush1.bf16.msra.mxu0 0
      %1986 = vmatprep.subr.bf16.mxu0 0
      %1987 = vmatpush1.bf16.msra.mxu0 0
      %1988 = vmatprep.subr.bf16.mxu0 0
      %1989 = vmatpush1.bf16.msra.mxu0 0
      %1990 = vmatprep.mubr.bf16.mxu0 0
      %1991 = vmatmul.mubr.bf16.gmra.mrb[0].mxu0 %v1953
      %v1992 = vpop.f32.mrb[0].mxu0
      %v1993 = vadd.f32 0.0, %v1992
      %v1994 = vpop.f32.mrb[0].mxu0
      %v1995 = vpop.f32.mrb[0].mxu0
      %v1996 = vadd.f32 0.0, %v1995
      %v1997 = vpop.f32.mrb[0].mxu0
      %1998 = vdwg.mxu0
      %1999 = vrot.lane.b32.xlu0 %v1747, 112
      %v2000 = vpop.permute.xlu0 %1999
      %2001 = vrot.lane.b32.xlu0 %v1748, 112
      %v2002 = vpop.permute.xlu0 %2001
      %v2004 = vsel %vm971, %v2000, 0
      %v2007 = vsel %vm971, %v2002, 0
      %2009 = vmatprep.subr.bf16.mxu0 0
      %2010 = vmatpush1.bf16.xpose.msra.mxu0 %v2007
      %2011 = vmatprep.subr.bf16.mxu0 0
      %2012 = vmatpush1.bf16.xpose.msra.mxu0 0
      %2013 = vmatprep.subr.bf16.mxu0 0
      %2014 = vmatpush1.bf16.xpose.msra.mxu0 0
      %2015 = vmatprep.subr.bf16.mxu0 0
      %2016 = vmatpush1.bf16.xpose.msra.mxu0 0
      %2017 = vmatprep.subr.bf16.mxu0 0
      %2018 = vmatpush1.bf16.xpose.msra.mxu0 0
      %2019 = vmatprep.subr.bf16.mxu0 0
      %2020 = vmatpush1.bf16.xpose.msra.mxu0 0
      %2021 = vmatprep.subr.bf16.mxu0 0
      %2022 = vmatpush1.bf16.xpose.msra.mxu0 0
      %2023 = vmatprep.subr.bf16.mxu0 0
      %2024 = vmatpush1.bf16.xpose.msra.mxu0 0
      %2025 = vmatprep.subr.bf16.mxu0 0
      %2026 = vmatpush1.bf16.xpose.msra.mxu0 0
      %2027 = vmatprep.subr.bf16.mxu0 0
      %2028 = vmatpush1.bf16.xpose.msra.mxu0 0
      %2029 = vmatprep.subr.bf16.mxu0 0
      %2030 = vmatpush1.bf16.xpose.msra.mxu0 0
      %2031 = vmatprep.subr.bf16.mxu0 0
      %2032 = vmatpush1.bf16.xpose.msra.mxu0 0
      %2033 = vmatprep.subr.bf16.mxu0 0
      %2034 = vmatpush1.bf16.xpose.msra.mxu0 0
      %2035 = vmatprep.subr.bf16.mxu0 0
      %2036 = vmatpush1.bf16.xpose.msra.mxu0 0
      %2037 = vmatprep.subr.bf16.mxu0 0
      %2038 = vmatpush1.bf16.xpose.msra.mxu0 0
      %2039 = vmatprep.subr.bf16.mxu0 0
      %2040 = vmatpush1.bf16.xpose.msra.mxu0 0
      %2041 = vmatprep.mubr.bf16.mxu0 0
      %2042 = vmatmul.mubr.bf16.gmra.mrb[0].mxu0 %v2004
      %v2043 = vpop.f32.mrb[0].mxu0
      %v2044 = vadd.f32 %v1753, %v2043
      %v2045 = vpop.f32.mrb[0].mxu0
      %v2046 = vpop.f32.mrb[0].mxu0
      %v2047 = vadd.f32 %v1753, %v2046
      %v2048 = vpop.f32.mrb[0].mxu0
      %2049 = vdwg.mxu0
      %v2050 = vsel %vm1019, %v2044, -inf
      %2051 = vmax.xlane.f32.xlu0 %v2050
      %v2052 = vpop.xlane.xlu0 %2051
      %v2053 = vsel %vm1023, %v2047, -inf
      %2054 = vmax.xlane.f32.xlu0 %v2053
      %v2055 = vpop.xlane.xlu0 %2054
      %v2056 = vsub.f32 %v2044, %v2052
      %v2057 = vsub.f32 %v2047, %v2055
      %v2058 = vmul.f32 %v2056, 1.442695
      %v2059 = vpow.pop %v2058
      %v2060 = vmul.f32 %v2057, 1.442695
      %v2061 = vpow.pop %v2060
      %v2062 = vsel %vm1019, %v2059, 0.0
      %2063 = vadd.xlane.f32.xlu0 %v2062
      %v2064 = vpop.xlane.xlu0 %2063
      %v2065 = vsel %vm1023, %v2061, 0.0
      %2066 = vadd.xlane.f32.xlu0 %v2065
      %v2067 = vpop.xlane.xlu0 %2066
      %v2068 = vrcp.pop %v2064
      %v2069 = vrcp.pop %v2067
      %v2070 = vmul.f32 %v2059, %v2068
      %v2071 = vmul.f32 %v2061, %v2069
      %v2072 = vpack.c.bf16 %v2071, %v2070
      %2073 = vrot.lane.b32.xlu0 %v1748, 80
      %v2074 = vpop.permute.xlu0 %2073
      %v2076 = vsel %vm1019, %v2072, 0
      %v2079 = vsel %vm1049, %v2074, 0
      %2081 = vmatprep.subr.bf16.mxu0 0
      %2082 = vmatpush1.bf16.msra.mxu0 %v2079
      %2083 = vmatprep.subr.bf16.mxu0 0
      %2084 = vmatpush1.bf16.msra.mxu0 0
      %2085 = vmatprep.subr.bf16.mxu0 0
      %2086 = vmatpush1.bf16.msra.mxu0 0
      %2087 = vmatprep.subr.bf16.mxu0 0
      %2088 = vmatpush1.bf16.msra.mxu0 0
      %2089 = vmatprep.subr.bf16.mxu0 0
      %2090 = vmatpush1.bf16.msra.mxu0 0
      %2091 = vmatprep.subr.bf16.mxu0 0
      %2092 = vmatpush1.bf16.msra.mxu0 0
      %2093 = vmatprep.subr.bf16.mxu0 0
      %2094 = vmatpush1.bf16.msra.mxu0 0
      %2095 = vmatprep.subr.bf16.mxu0 0
      %2096 = vmatpush1.bf16.msra.mxu0 0
      %2097 = vmatprep.subr.bf16.mxu0 0
      %2098 = vmatpush1.bf16.msra.mxu0 0
      %2099 = vmatprep.subr.bf16.mxu0 0
      %2100 = vmatpush1.bf16.msra.mxu0 0
      %2101 = vmatprep.subr.bf16.mxu0 0
      %2102 = vmatpush1.bf16.msra.mxu0 0
      %2103 = vmatprep.subr.bf16.mxu0 0
      %2104 = vmatpush1.bf16.msra.mxu0 0
      %2105 = vmatprep.subr.bf16.mxu0 0
      %2106 = vmatpush1.bf16.msra.mxu0 0
      %2107 = vmatprep.subr.bf16.mxu0 0
      %2108 = vmatpush1.bf16.msra.mxu0 0
      %2109 = vmatprep.subr.bf16.mxu0 0
      %2110 = vmatpush1.bf16.msra.mxu0 0
      %2111 = vmatprep.subr.bf16.mxu0 0
      %2112 = vmatpush1.bf16.msra.mxu0 0
      %2113 = vmatprep.mubr.bf16.mxu0 0
      %2114 = vmatmul.mubr.bf16.gmra.mrb[0].mxu0 %v2076
      %v2115 = vpop.f32.mrb[0].mxu0
      %v2116 = vadd.f32 0.0, %v2115
      %v2117 = vpop.f32.mrb[0].mxu0
      %v2118 = vpop.f32.mrb[0].mxu0
      %v2119 = vadd.f32 0.0, %v2118
      %v2120 = vpop.f32.mrb[0].mxu0
      %2121 = vdwg.mxu0
      %2122 = vrot.lane.b32.xlu0 %v1747, 104
      %v2123 = vpop.permute.xlu0 %2122
      %2124 = vrot.lane.b32.xlu0 %v1748, 104
      %v2125 = vpop.permute.xlu0 %2124
      %v2127 = vsel %vm971, %v2123, 0
      %v2130 = vsel %vm971, %v2125, 0
      %2132 = vmatprep.subr.bf16.mxu0 0
      %2133 = vmatpush1.bf16.xpose.msra.mxu0 %v2130
      %2134 = vmatprep.subr.bf16.mxu0 0
      %2135 = vmatpush1.bf16.xpose.msra.mxu0 0
      %2136 = vmatprep.subr.bf16.mxu0 0
      %2137 = vmatpush1.bf16.xpose.msra.mxu0 0
      %2138 = vmatprep.subr.bf16.mxu0 0
      %2139 = vmatpush1.bf16.xpose.msra.mxu0 0
      %2140 = vmatprep.subr.bf16.mxu0 0
      %2141 = vmatpush1.bf16.xpose.msra.mxu0 0
      %2142 = vmatprep.subr.bf16.mxu0 0
      %2143 = vmatpush1.bf16.xpose.msra.mxu0 0
      %2144 = vmatprep.subr.bf16.mxu0 0
      %2145 = vmatpush1.bf16.xpose.msra.mxu0 0
      %2146 = vmatprep.subr.bf16.mxu0 0
      %2147 = vmatpush1.bf16.xpose.msra.mxu0 0
      %2148 = vmatprep.subr.bf16.mxu0 0
      %2149 = vmatpush1.bf16.xpose.msra.mxu0 0
      %2150 = vmatprep.subr.bf16.mxu0 0
      %2151 = vmatpush1.bf16.xpose.msra.mxu0 0
      %2152 = vmatprep.subr.bf16.mxu0 0
      %2153 = vmatpush1.bf16.xpose.msra.mxu0 0
      %2154 = vmatprep.subr.bf16.mxu0 0
      %2155 = vmatpush1.bf16.xpose.msra.mxu0 0
      %2156 = vmatprep.subr.bf16.mxu0 0
      %2157 = vmatpush1.bf16.xpose.msra.mxu0 0
      %2158 = vmatprep.subr.bf16.mxu0 0
      %2159 = vmatpush1.bf16.xpose.msra.mxu0 0
      %2160 = vmatprep.subr.bf16.mxu0 0
      %2161 = vmatpush1.bf16.xpose.msra.mxu0 0
      %2162 = vmatprep.subr.bf16.mxu0 0
      %2163 = vmatpush1.bf16.xpose.msra.mxu0 0
      %2164 = vmatprep.mubr.bf16.mxu0 0
      %2165 = vmatmul.mubr.bf16.gmra.mrb[0].mxu0 %v2127
      %v2166 = vpop.f32.mrb[0].mxu0
      %v2167 = vadd.f32 %v1753, %v2166
      %v2168 = vpop.f32.mrb[0].mxu0
      %v2169 = vpop.f32.mrb[0].mxu0
      %v2170 = vadd.f32 %v1753, %v2169
      %v2171 = vpop.f32.mrb[0].mxu0
      %2172 = vdwg.mxu0
      %v2173 = vsel %vm1019, %v2167, -inf
      %2174 = vmax.xlane.f32.xlu0 %v2173
      %v2175 = vpop.xlane.xlu0 %2174
      %v2176 = vsel %vm1023, %v2170, -inf
      %2177 = vmax.xlane.f32.xlu0 %v2176
      %v2178 = vpop.xlane.xlu0 %2177
      %v2179 = vsub.f32 %v2167, %v2175
      %v2180 = vsub.f32 %v2170, %v2178
      %v2181 = vmul.f32 %v2179, 1.442695
      %v2182 = vpow.pop %v2181
      %v2183 = vmul.f32 %v2180, 1.442695
      %v2184 = vpow.pop %v2183
      %v2185 = vsel %vm1019, %v2182, 0.0
      %2186 = vadd.xlane.f32.xlu0 %v2185
      %v2187 = vpop.xlane.xlu0 %2186
      %v2188 = vsel %vm1023, %v2184, 0.0
      %2189 = vadd.xlane.f32.xlu0 %v2188
      %v2190 = vpop.xlane.xlu0 %2189
      %v2191 = vrcp.pop %v2187
      %v2192 = vrcp.pop %v2190
      %v2193 = vmul.f32 %v2182, %v2191
      %v2194 = vmul.f32 %v2184, %v2192
      %v2195 = vpack.c.bf16 %v2194, %v2193
      %2196 = vrot.lane.b32.xlu0 %v1748, 72
      %v2197 = vpop.permute.xlu0 %2196
      %v2199 = vsel %vm1019, %v2195, 0
      %v2202 = vsel %vm1049, %v2197, 0
      %2204 = vmatprep.subr.bf16.mxu0 0
      %2205 = vmatpush1.bf16.msra.mxu0 %v2202
      %2206 = vmatprep.subr.bf16.mxu0 0
      %2207 = vmatpush1.bf16.msra.mxu0 0
      %2208 = vmatprep.subr.bf16.mxu0 0
      %2209 = vmatpush1.bf16.msra.mxu0 0
      %2210 = vmatprep.subr.bf16.mxu0 0
      %2211 = vmatpush1.bf16.msra.mxu0 0
      %2212 = vmatprep.subr.bf16.mxu0 0
      %2213 = vmatpush1.bf16.msra.mxu0 0
      %2214 = vmatprep.subr.bf16.mxu0 0
      %2215 = vmatpush1.bf16.msra.mxu0 0
      %2216 = vmatprep.subr.bf16.mxu0 0
      %2217 = vmatpush1.bf16.msra.mxu0 0
      %2218 = vmatprep.subr.bf16.mxu0 0
      %2219 = vmatpush1.bf16.msra.mxu0 0
      %2220 = vmatprep.subr.bf16.mxu0 0
      %2221 = vmatpush1.bf16.msra.mxu0 0
      %2222 = vmatprep.subr.bf16.mxu0 0
      %2223 = vmatpush1.bf16.msra.mxu0 0
      %2224 = vmatprep.subr.bf16.mxu0 0
      %2225 = vmatpush1.bf16.msra.mxu0 0
      %2226 = vmatprep.subr.bf16.mxu0 0
      %2227 = vmatpush1.bf16.msra.mxu0 0
      %2228 = vmatprep.subr.bf16.mxu0 0
      %2229 = vmatpush1.bf16.msra.mxu0 0
      %2230 = vmatprep.subr.bf16.mxu0 0
      %2231 = vmatpush1.bf16.msra.mxu0 0
      %2232 = vmatprep.subr.bf16.mxu0 0
      %2233 = vmatpush1.bf16.msra.mxu0 0
      %2234 = vmatprep.subr.bf16.mxu0 0
      %2235 = vmatpush1.bf16.msra.mxu0 0
      %2236 = vmatprep.mubr.bf16.mxu0 0
      %2237 = vmatmul.mubr.bf16.gmra.mrb[0].mxu0 %v2199
      %v2238 = vpop.f32.mrb[0].mxu0
      %v2239 = vadd.f32 0.0, %v2238
      %v2240 = vpop.f32.mrb[0].mxu0
      %v2241 = vpop.f32.mrb[0].mxu0
      %v2242 = vadd.f32 0.0, %v2241
      %v2243 = vpop.f32.mrb[0].mxu0
      %2244 = vdwg.mxu0
      %2247 = vrot.lane.b32.xlu0 %v1993, 8
      %v2248 = vpop.permute.xlu0 %2247
      %2249 = vrot.lane.b32.xlu0 %v1996, 8
      %v2250 = vpop.permute.xlu0 %2249
      %2255 = vrot.lane.b32.xlu0 %v2116, 16
      %v2256 = vpop.permute.xlu0 %2255
      %2257 = vrot.lane.b32.xlu0 %v2119, 16
      %v2258 = vpop.permute.xlu0 %2257
      %2263 = vrot.lane.b32.xlu0 %v2239, 24
      %v2264 = vpop.permute.xlu0 %2263
      %2265 = vrot.lane.b32.xlu0 %v2242, 24
      %v2266 = vpop.permute.xlu0 %2265
      %v2269 = vsel %vm971, %v1869, %v2248
      %v2270 = vsel %vm971, %v1872, %v2250
      %v2271 = vsel %vm1490, %v2269, %v2256
      %v2272 = vsel %vm1490, %v2270, %v2258
      %v2273 = vsel %vm1493, %v2271, %v2264
      %v2274 = vsel %vm1493, %v2272, %v2266
      %v2275 = vpack.c.bf16 %v2274, %v2273
      %v2276 = vld [vmem:[%s15] sm:$0xf]
      %v2277 = vld [vmem:[%s15 + $0x4] sm:$0xf]
      %v2278 = vld [vmem:[%s15 + $0x8] sm:$0xf]
      %v2279 = vld [vmem:[%s15 + $0xc] sm:$0xf]
      %v2280 = vld [vmem:[%s16] sm:$0x1]
      %v2281 = vunpack.c.l.bf16 %v2280
      %v2282 = vlaneseq
      %v2283 = vshrl.u32 %v2282, 7
      %v2284 = vsub.s32 0, %v2283
      %v2285 = vrot.slane %v2281, %v2284
      %v2290 = vunpack.c.l.b16 %v2276
      %v2291 = vunpack.c.l.b16 %v2277
      %v2292 = vunpack.c.l.b16 %v2278
      %v2293 = vunpack.c.l.b16 %v2279
      %v2294 = vpack.c.b16 %v2291, %v2290
      %v2295 = vpack.c.b16 %v2293, %v2292
      %v2299 = vsel %vm843, %v2275, 0
      %2301 = vmatprep.subr.bf16.mxu0 0
      %2302 = vmatpush1.bf16.msra.mxu0 %v2294
      %2303 = vmatprep.subr.bf16.mxu0 0
      %2304 = vmatpush1.bf16.msra.mxu0 %v2295
      %2305 = vmatprep.subr.bf16.mxu0 0
      %2306 = vmatpush1.bf16.msra.mxu0 0
      %2307 = vmatprep.subr.bf16.mxu0 0
      %2308 = vmatpush1.bf16.msra.mxu0 0
      %2309 = vmatprep.subr.bf16.mxu0 0
      %2310 = vmatpush1.bf16.msra.mxu0 0
      %2311 = vmatprep.subr.bf16.mxu0 0
      %2312 = vmatpush1.bf16.msra.mxu0 0
      %2313 = vmatprep.subr.bf16.mxu0 0
      %2314 = vmatpush1.bf16.msra.mxu0 0
      %2315 = vmatprep.subr.bf16.mxu0 0
      %2316 = vmatpush1.bf16.msra.mxu0 0
      %2317 = vmatprep.subr.bf16.mxu0 0
      %2318 = vmatpush1.bf16.msra.mxu0 0
      %2319 = vmatprep.subr.bf16.mxu0 0
      %2320 = vmatpush1.bf16.msra.mxu0 0
      %2321 = vmatprep.subr.bf16.mxu0 0
      %2322 = vmatpush1.bf16.msra.mxu0 0
      %2323 = vmatprep.subr.bf16.mxu0 0
      %2324 = vmatpush1.bf16.msra.mxu0 0
      %2325 = vmatprep.subr.bf16.mxu0 0
      %2326 = vmatpush1.bf16.msra.mxu0 0
      %2327 = vmatprep.subr.bf16.mxu0 0
      %2328 = vmatpush1.bf16.msra.mxu0 0
      %2329 = vmatprep.subr.bf16.mxu0 0
      %2330 = vmatpush1.bf16.msra.mxu0 0
      %2331 = vmatprep.subr.bf16.mxu0 0
      %2332 = vmatpush1.bf16.msra.mxu0 0
      %2333 = vmatprep.mubr.bf16.mxu0 0
      %2334 = vmatmul.mubr.bf16.gmra.mrb[0].mxu0 %v2299
      %v2335 = vpop.f32.mrb[0].mxu0
      %v2336 = vadd.f32 %v2285, %v2335
      %v2337 = vpop.f32.mrb[0].mxu0
      %v2338 = vpop.f32.mrb[0].mxu0
      %v2339 = vadd.f32 %v2285, %v2338
      %v2340 = vpop.f32.mrb[0].mxu0
      %2341 = vdwg.mxu0
      %v2342 = vadd.f32 %v1605, %v2336
      %v2343 = vadd.f32 %v1606, %v2339
      %v2344 = vsel %vm843, %v2342, 0.0
      %2345 = vadd.xlane.f32.xlu0 %v2344
      %v2346 = vpop.xlane.xlu0 %2345
      %v2347 = vsel %vm847, %v2343, 0.0
      %2348 = vadd.xlane.f32.xlu0 %v2347
      %v2349 = vpop.xlane.xlu0 %2348
      %v2350 = vmul.f32 %v2346, %v851
      %v2351 = vmul.f32 %v2349, %v851
      %v2352 = vsub.f32 %v2342, %v2350
      %v2353 = vsub.f32 %v2343, %v2351
      %v2354 = vmul.f32 %v2352, %v2352
      %v2355 = vmul.f32 %v2353, %v2353
      %v2356 = vsel %vm843, %v2354, 0.0
      %2357 = vadd.xlane.f32.xlu0 %v2356
      %v2358 = vpop.xlane.xlu0 %2357
      %v2359 = vsel %vm847, %v2355, 0.0
      %2360 = vadd.xlane.f32.xlu0 %v2359
      %v2361 = vpop.xlane.xlu0 %2360
      %v2362 = vmul.f32 %v2358, %v851
      %v2363 = vmul.f32 %v2361, %v851
      %v2364 = vadd.f32 %v2362, 1e-05
      %v2365 = vadd.f32 %v2363, 1e-05
      %v2366 = vrsqrt.pop %v2364
      %v2367 = vrsqrt.pop %v2365
      %v2368 = vmul.f32 %v2352, %v2366
      %v2369 = vmul.f32 %v2353, %v2367
      %v2370 = vld [vmem:[%s17] sm:$0x1]
      %v2371 = vunpack.c.l.bf16 %v2370
      %v2372 = vlaneseq
      %v2373 = vshrl.u32 %v2372, 7
      %v2374 = vsub.s32 0, %v2373
      %v2375 = vrot.slane %v2371, %v2374
      %v2376 = vmul.f32 %v2368, %v2375
      %v2377 = vmul.f32 %v2369, %v2375
      %v2378 = vld [vmem:[%s18] sm:$0x1]
      %v2379 = vunpack.c.l.bf16 %v2378
      %v2380 = vlaneseq
      %v2381 = vshrl.u32 %v2380, 7
      %v2382 = vsub.s32 0, %v2381
      %v2383 = vrot.slane %v2379, %v2382
      %v2384 = vadd.f32 %v2376, %v2383
      %v2385 = vadd.f32 %v2377, %v2383
      %v2386 = vpack.c.bf16 %v2385, %v2384
      %v2387 = vld [vmem:[%s19] sm:$0xf]
      %v2388 = vld [vmem:[%s19 + $0x4] sm:$0xf]
      %v2389 = vld [vmem:[%s19 + $0x8] sm:$0xf]
      %v2390 = vld [vmem:[%s19 + $0xc] sm:$0xf]
      %v2391 = vld [vmem:[%s20] sm:$0x1]
      %v2392 = vunpack.c.l.bf16 %v2391
      %v2393 = vlaneseq
      %v2394 = vshrl.u32 %v2393, 7
      %v2395 = vsub.s32 0, %v2394
      %v2396 = vrot.slane %v2392, %v2395
      %v2401 = vunpack.c.l.b16 %v2387
      %v2402 = vunpack.c.l.b16 %v2388
      %v2403 = vunpack.c.l.b16 %v2389
      %v2404 = vunpack.c.l.b16 %v2390
      %v2405 = vpack.c.b16 %v2402, %v2401
      %v2406 = vpack.c.b16 %v2404, %v2403
      %v2410 = vsel %vm843, %v2386, 0
      %2412 = vmatprep.subr.bf16.mxu0 0
      %2413 = vmatpush1.bf16.msra.mxu0 %v2405
      %2414 = vmatprep.subr.bf16.mxu0 0
      %2415 = vmatpush1.bf16.msra.mxu0 %v2406
      %2416 = vmatprep.subr.bf16.mxu0 0
      %2417 = vmatpush1.bf16.msra.mxu0 0
      %2418 = vmatprep.subr.bf16.mxu0 0
      %2419 = vmatpush1.bf16.msra.mxu0 0
      %2420 = vmatprep.subr.bf16.mxu0 0
      %2421 = vmatpush1.bf16.msra.mxu0 0
      %2422 = vmatprep.subr.bf16.mxu0 0
      %2423 = vmatpush1.bf16.msra.mxu0 0
      %2424 = vmatprep.subr.bf16.mxu0 0
      %2425 = vmatpush1.bf16.msra.mxu0 0
      %2426 = vmatprep.subr.bf16.mxu0 0
      %2427 = vmatpush1.bf16.msra.mxu0 0
      %2428 = vmatprep.subr.bf16.mxu0 0
      %2429 = vmatpush1.bf16.msra.mxu0 0
      %2430 = vmatprep.subr.bf16.mxu0 0
      %2431 = vmatpush1.bf16.msra.mxu0 0
      %2432 = vmatprep.subr.bf16.mxu0 0
      %2433 = vmatpush1.bf16.msra.mxu0 0
      %2434 = vmatprep.subr.bf16.mxu0 0
      %2435 = vmatpush1.bf16.msra.mxu0 0
      %2436 = vmatprep.subr.bf16.mxu0 0
      %2437 = vmatpush1.bf16.msra.mxu0 0
      %2438 = vmatprep.subr.bf16.mxu0 0
      %2439 = vmatpush1.bf16.msra.mxu0 0
      %2440 = vmatprep.subr.bf16.mxu0 0
      %2441 = vmatpush1.bf16.msra.mxu0 0
      %2442 = vmatprep.subr.bf16.mxu0 0
      %2443 = vmatpush1.bf16.msra.mxu0 0
      %2444 = vmatprep.mubr.bf16.mxu0 0
      %2445 = vmatmul.mubr.bf16.gmra.mrb[0].mxu0 %v2410
      %v2446 = vpop.f32.mrb[0].mxu0
      %v2447 = vadd.f32 %v2396, %v2446
      %v2448 = vpop.f32.mrb[0].mxu0
      %v2449 = vpop.f32.mrb[0].mxu0
      %v2450 = vadd.f32 %v2396, %v2449
      %v2451 = vpop.f32.mrb[0].mxu0
      %2452 = vdwg.mxu0
      %v2453 = vmul.f32 %v2447, %v2447
      %v2454 = vmul.f32 %v2450, %v2450
      %v2455 = vmul.f32 %v2447, %v2453
      %v2456 = vmul.f32 %v2450, %v2454
      %v2457 = vmul.f32 %v2455, 0.044715
      %v2458 = vmul.f32 %v2456, 0.044715
      %v2459 = vadd.f32 %v2447, %v2457
      %v2460 = vadd.f32 %v2450, %v2458
      %v2461 = vmul.f32 %v2459, 0.7978846
      %v2462 = vmul.f32 %v2460, 0.7978846
      %v2463 = vtanh.pop %v2461
      %v2464 = vtanh.pop %v2462
      %v2465 = vadd.f32 %v2463, 1.0
      %v2466 = vadd.f32 %v2464, 1.0
      %v2467 = vmul.f32 %v2465, 0.5
      %v2468 = vmul.f32 %v2466, 0.5
      %v2469 = vmul.f32 %v2447, %v2467
      %v2470 = vmul.f32 %v2450, %v2468
      %v2471 = vpack.c.bf16 %v2470, %v2469
      %v2472 = vld [vmem:[%s21] sm:$0xf]
      %v2473 = vld [vmem:[%s21 + $0x4] sm:$0xf]
      %v2474 = vld [vmem:[%s21 + $0x8] sm:$0xf]
      %v2475 = vld [vmem:[%s21 + $0xc] sm:$0xf]
      %v2476 = vld [vmem:[%s21 + $0x10] sm:$0xf]
      %v2477 = vld [vmem:[%s21 + $0x14] sm:$0xf]
      %v2478 = vld [vmem:[%s21 + $0x18] sm:$0xf]
      %v2479 = vld [vmem:[%s21 + $0x1c] sm:$0xf]
      %v2480 = vld [vmem:[%s22] sm:$0x1]
      %v2481 = vunpack.c.l.bf16 %v2480
      %v2482 = vlaneseq
      %v2483 = vshrl.u32 %v2482, 7
      %v2484 = vsub.s32 0, %v2483
      %v2485 = vrot.slane %v2481, %v2484
      %v2494 = vunpack.c.l.b16 %v2472
      %v2495 = vunpack.c.l.b16 %v2473
      %v2496 = vunpack.c.l.b16 %v2474
      %v2497 = vunpack.c.l.b16 %v2475
      %v2498 = vunpack.c.l.b16 %v2476
      %v2499 = vunpack.c.l.b16 %v2477
      %v2500 = vunpack.c.l.b16 %v2478
      %v2501 = vunpack.c.l.b16 %v2479
      %v2502 = vpack.c.b16 %v2495, %v2494
      %v2503 = vpack.c.b16 %v2497, %v2496
      %v2504 = vpack.c.b16 %v2499, %v2498
      %v2505 = vpack.c.b16 %v2501, %v2500
      %vm2510 = vcmask 523264
      %v2512 = vsel %vm2510, %v2471, 0
      %2514 = vmatprep.subr.bf16.mxu0 0
      %2515 = vmatpush1.bf16.msra.mxu0 %v2502
      %2516 = vmatprep.subr.bf16.mxu0 0
      %2517 = vmatpush1.bf16.msra.mxu0 %v2503
      %2518 = vmatprep.subr.bf16.mxu0 0
      %2519 = vmatpush1.bf16.msra.mxu0 %v2504
      %2520 = vmatprep.subr.bf16.mxu0 0
      %2521 = vmatpush1.bf16.msra.mxu0 %v2505
      %2522 = vmatprep.subr.bf16.mxu0 0
      %2523 = vmatpush1.bf16.msra.mxu0 0
      %2524 = vmatprep.subr.bf16.mxu0 0
      %2525 = vmatpush1.bf16.msra.mxu0 0
      %2526 = vmatprep.subr.bf16.mxu0 0
      %2527 = vmatpush1.bf16.msra.mxu0 0
      %2528 = vmatprep.subr.bf16.mxu0 0
      %2529 = vmatpush1.bf16.msra.mxu0 0
      %2530 = vmatprep.subr.bf16.mxu0 0
      %2531 = vmatpush1.bf16.msra.mxu0 0
      %2532 = vmatprep.subr.bf16.mxu0 0
      %2533 = vmatpush1.bf16.msra.mxu0 0
      %2534 = vmatprep.subr.bf16.mxu0 0
      %2535 = vmatpush1.bf16.msra.mxu0 0
      %2536 = vmatprep.subr.bf16.mxu0 0
      %2537 = vmatpush1.bf16.msra.mxu0 0
      %2538 = vmatprep.subr.bf16.mxu0 0
      %2539 = vmatpush1.bf16.msra.mxu0 0
      %2540 = vmatprep.subr.bf16.mxu0 0
      %2541 = vmatpush1.bf16.msra.mxu0 0
      %2542 = vmatprep.subr.bf16.mxu0 0
      %2543 = vmatpush1.bf16.msra.mxu0 0
      %2544 = vmatprep.subr.bf16.mxu0 0
      %2545 = vmatpush1.bf16.msra.mxu0 0
      %2546 = vmatprep.mubr.bf16.mxu0 0
      %2547 = vmatmul.mubr.bf16.gmra.mrb[0].mxu0 %v2512
      %v2548 = vpop.f32.mrb[0].mxu0
      %v2549 = vadd.f32 %v2485, %v2548
      %v2550 = vpop.f32.mrb[0].mxu0
      %v2551 = vpop.f32.mrb[0].mxu0
      %v2552 = vadd.f32 %v2485, %v2551
      %v2553 = vpop.f32.mrb[0].mxu0
      %2554 = vdwg.mxu0
      %v2555 = vadd.f32 %v2384, %v2549
      %v2556 = vadd.f32 %v2385, %v2552
      %v2557 = vsel %vm843, %v2555, 0.0
      %2558 = vadd.xlane.f32.xlu0 %v2557
      %v2559 = vpop.xlane.xlu0 %2558
      %v2560 = vsel %vm847, %v2556, 0.0
      %2561 = vadd.xlane.f32.xlu0 %v2560
      %v2562 = vpop.xlane.xlu0 %2561
      %v2563 = vmul.f32 %v2559, %v851
      %v2564 = vmul.f32 %v2562, %v851
      %v2565 = vsub.f32 %v2555, %v2563
      %v2566 = vsub.f32 %v2556, %v2564
      %v2567 = vmul.f32 %v2565, %v2565
      %v2568 = vmul.f32 %v2566, %v2566
      %v2569 = vsel %vm843, %v2567, 0.0
      %2570 = vadd.xlane.f32.xlu0 %v2569
      %v2571 = vpop.xlane.xlu0 %2570
      %v2572 = vsel %vm847, %v2568, 0.0
      %2573 = vadd.xlane.f32.xlu0 %v2572
      %v2574 = vpop.xlane.xlu0 %2573
      %v2575 = vmul.f32 %v2571, %v851
      %v2576 = vmul.f32 %v2574, %v851
      %v2577 = vadd.f32 %v2575, 1e-05
      %v2578 = vadd.f32 %v2576, 1e-05
      %v2579 = vrsqrt.pop %v2577
      %v2580 = vrsqrt.pop %v2578
      %v2581 = vmul.f32 %v2565, %v2579
      %v2582 = vmul.f32 %v2566, %v2580
      %v2583 = vld [vmem:[%s23] sm:$0x1]
      %v2584 = vunpack.c.l.bf16 %v2583
      %v2585 = vlaneseq
      %v2586 = vshrl.u32 %v2585, 7
      %v2587 = vsub.s32 0, %v2586
      %v2588 = vrot.slane %v2584, %v2587
      %v2589 = vmul.f32 %v2581, %v2588
      %v2590 = vmul.f32 %v2582, %v2588
      %v2591 = vld [vmem:[%s24] sm:$0x1]
      %v2592 = vunpack.c.l.bf16 %v2591
      %v2593 = vlaneseq
      %v2594 = vshrl.u32 %v2593, 7
      %v2595 = vsub.s32 0, %v2594
      %v2596 = vrot.slane %v2592, %v2595
      %v2597 = vadd.f32 %v2589, %v2596
      %v2598 = vadd.f32 %v2590, %v2596
      %v2599 = vpack.c.bf16 %v2598, %v2597
      %v2600 = vld [vmem:[%s25] sm:$0xf]
      %v2601 = vld [vmem:[%s25 + $0x4] sm:$0xf]
      %v2602 = vld [vmem:[%s25 + $0x8] sm:$0xf]
      %v2603 = vld [vmem:[%s25 + $0xc] sm:$0xf]
      %v2604 = vld [vmem:[%s26] sm:$0x1]
      %v2605 = vunpack.c.l.bf16 %v2604
      %v2606 = vlaneseq
      %v2607 = vshrl.u32 %v2606, 7
      %v2608 = vsub.s32 0, %v2607
      %v2609 = vrot.slane %v2605, %v2608
      %v2614 = vunpack.c.l.b16 %v2600
      %v2615 = vunpack.c.l.b16 %v2601
      %v2616 = vunpack.c.l.b16 %v2602
      %v2617 = vunpack.c.l.b16 %v2603
      %v2618 = vpack.c.b16 %v2615, %v2614
      %v2619 = vpack.c.b16 %v2617, %v2616
      %v2623 = vsel %vm843, %v2599, 0
      %2625 = vmatprep.subr.bf16.mxu0 0
      %2626 = vmatpush1.bf16.msra.mxu0 %v2618
      %2627 = vmatprep.subr.bf16.mxu0 0
      %2628 = vmatpush1.bf16.msra.mxu0 %v2619
      %2629 = vmatprep.subr.bf16.mxu0 0
      %2630 = vmatpush1.bf16.msra.mxu0 0
      %2631 = vmatprep.subr.bf16.mxu0 0
      %2632 = vmatpush1.bf16.msra.mxu0 0
      %2633 = vmatprep.subr.bf16.mxu0 0
      %2634 = vmatpush1.bf16.msra.mxu0 0
      %2635 = vmatprep.subr.bf16.mxu0 0
      %2636 = vmatpush1.bf16.msra.mxu0 0
      %2637 = vmatprep.subr.bf16.mxu0 0
      %2638 = vmatpush1.bf16.msra.mxu0 0
      %2639 = vmatprep.subr.bf16.mxu0 0
      %2640 = vmatpush1.bf16.msra.mxu0 0
      %2641 = vmatprep.subr.bf16.mxu0 0
      %2642 = vmatpush1.bf16.msra.mxu0 0
      %2643 = vmatprep.subr.bf16.mxu0 0
      %2644 = vmatpush1.bf16.msra.mxu0 0
      %2645 = vmatprep.subr.bf16.mxu0 0
      %2646 = vmatpush1.bf16.msra.mxu0 0
      %2647 = vmatprep.subr.bf16.mxu0 0
      %2648 = vmatpush1.bf16.msra.mxu0 0
      %2649 = vmatprep.subr.bf16.mxu0 0
      %2650 = vmatpush1.bf16.msra.mxu0 0
      %2651 = vmatprep.subr.bf16.mxu0 0
      %2652 = vmatpush1.bf16.msra.mxu0 0
      %2653 = vmatprep.subr.bf16.mxu0 0
      %2654 = vmatpush1.bf16.msra.mxu0 0
      %2655 = vmatprep.subr.bf16.mxu0 0
      %2656 = vmatpush1.bf16.msra.mxu0 0
      %2657 = vmatprep.mubr.bf16.mxu0 0
      %2658 = vmatmul.mubr.bf16.gmra.mrb[0].mxu0 %v2623
      %v2659 = vpop.f32.mrb[0].mxu0
      %v2660 = vadd.f32 %v2609, %v2659
      %v2661 = vpop.f32.mrb[0].mxu0
      %v2662 = vpop.f32.mrb[0].mxu0
      %v2663 = vadd.f32 %v2609, %v2662
      %v2664 = vpop.f32.mrb[0].mxu0
      %2665 = vdwg.mxu0
      %vm2666 = vcmask 187392
      %2667 = vst.msk [vmem:[%s832] sm:$0xff] %vm2666, %v2660
      %vm2668 = vcmask 181248
      %2669 = vst.msk [vmem:[%s832 + $0x8] sm:$0x3] %vm2668, %v2663
      %p2670 = scmp.lt.s32.totalorder %s38, 1
      %s2671 = scalar_select %p2670, %s38, 1
      %s2672 = smul.addr %s2671, 2
      %s2673 = smul.addr %s2672, 8
      %s2674 = scalar_lea.vmem %s27, %s2673
      // Predicated region
      $region129: #{nere_forward.5} parent=127 // pred_check
        %p2675 = pneg %p633
      $region130: #{nere_forward.5} parent=127 // pred_check_branch
        %2677 = sbr.rel (%p2675) target = $region132
      $region131: #{nere_forward.5} parent=127 // pred_region
        _
      $region132: #{nere_forward.5} parent=127 // pred_fallthru
        _
    $region128: #{nere_forward.5} parent=5 // pred_fallthru
      _
    %p2678 = scmp.le.s32.totalorder 2, %s33
    // Predicated region
    $region133: #{nere_forward.5} parent=5 // pred_check
      %p2679 = pneg %p2678
    $region134: #{nere_forward.5} parent=5 // pred_check_branch
      %2681 = sbr.rel (%p2679) target = $region136
    $region135: #{nere_forward.5} parent=5 // pred_region
      %s2682 = ssub.s32 %s33, 2
      // Predicated region
      $region137: #{nere_forward.5} parent=135 // pred_check
        %p2683 = pneg %p639
      $region138: #{nere_forward.5} parent=135 // pred_check_branch
        %2685 = sbr.rel (%p2683) target = $region140
      $region139: #{nere_forward.5} parent=135 // pred_region
        %p2686 = scmp.lt.s32.totalorder %s39, 1
        %s2687 = scalar_select %p2686, %s39, 1
        %s2688 = smul.addr %s2687, 2
        %s2689 = smul.addr %s2688, 8
        %s2690 = scalar_lea.vmem %s27, %s2689
      $region140: #{nere_forward.5} parent=135 // pred_fallthru
        _
    $region136: #{nere_forward.5} parent=5 // pred_fallthru
      _
  $region6: #{nere_forward.5} parent=0 // loop_footer
    %s37 = sadd.s32 1, %s33
  $region7: #{nere_forward.5} parent=0 // loop_footer_branch
    %32 = sbr.rel target = $region3
  $region8: #{nere_forward.5} parent=0 // loop_exit
    _

</llo_original>
